<compile_context>
chip_gen: v5e
topology: v5e:2x2
jax: 0.10.0
libtpu: 0.0.40
codegen_flags: <defaults>
</compile_context>

<pallas_src>
import numpy as np
import jax
import jax.numpy as jnp
from jax.experimental import pallas as pl
from jax.experimental.pallas import tpu as pltpu

INPUT_SIZE = 32            # small stand-in for the original 128 (must be divisible by 8)
NUM_CLASSES = 10
BATCH = 2
PAD_CLASSES = 128          # fc2 output padded to one full lane width
C1, C2, C3, HID = 32, 64, 128, 256
S1, S2, S3, S4 = INPUT_SIZE, INPUT_SIZE // 2, INPUT_SIZE // 4, INPUT_SIZE // 8
K1 = 32                    # stage-1 contracted dim: 9*3=27 padded to 32
FEAT = S4 * S4 * C3        # flattened feature size fed to fc1


# ----------------------------------------------------------------------------
# One-hot pooling / halo-layout selection matrices (host-side, one time).
# S @ m does the column-pair selection AND lays the result out as the next
# stage's zero-bordered halo slab (its all-zero rows (re)write the border).
# ----------------------------------------------------------------------------
def _pool_select(ho, wo, w_in, out_rows, out_cols, row_off, col_off, parity):
    s = np.zeros((out_rows * out_cols, ho * w_in), np.float32)
    for a in range(ho):
        for o in range(wo):
            s[(row_off + a) * out_cols + col_off + o, a * w_in + 2 * o + parity] = 1.0
    return jnp.asarray(s, dtype=jnp.bfloat16)     # exact in bf16 (0/1 entries)


# ----------------------------------------------------------------------------
# Kernel 1: conv stages (one image per grid step)
# ----------------------------------------------------------------------------
def feature_kernel(col1_ref, w1_ref, b1_ref, w2_ref, b2_ref, w3_ref, b3_ref,
                   s2e_ref, s2o_ref, s3e_ref, s3o_ref, s4e_ref, s4o_ref,
                   feat_ref, pad2, pad3):
    f32, bf16 = jnp.float32, jnp.bfloat16

    def pool_rows(z, h_out, w_in, c):
        # z: (2*h_out*w_in, c) f32, rows in (h, w) order -> row-pair max over h.
        zr = z.reshape(h_out, 2, w_in, c)          # free: w_in is a multiple of 8
        return jnp.maximum(zr[:, 0], zr[:, 1]).reshape(h_out * w_in, c)

    def pool_cols(m_bf16, se_ref, so_ref):
        # Column-pair max + stride-2 selection (+ halo layout) as two one-hot matmuls.
        return jnp.maximum(
            jnp.dot(se_ref[...], m_bf16, preferred_element_type=f32),
            jnp.dot(so_ref[...], m_bf16, preferred_element_type=f32))

    def conv9(pad_ref, w_ref, b_ref, h, cin):
        # 'same' 3x3 conv as 9 accumulating shifted matmuls read straight from the
        # zero-bordered halo slab (interior lives at [1:h+1, 8:8+h, :]).
        acc = None
        for dh in range(3):
            for dw in range(3):
                k = dh * 3 + dw
                tap = pad_ref[dh:dh + h, 7 + dw:7 + dw + h, :].reshape(h * h, cin)
                d = jnp.dot(tap.astype(bf16), w_ref[k * cin:(k + 1) * cin, :],
                            preferred_element_type=f32)
                acc = d if acc is None else acc + d
        return jnp.maximum(acc + b_ref[...], 0.0)   # bias + ReLU, (h*h, cout) f32

    # ---- stage 1: precomputed lane-dense im2col -> one deep-K matmul ----------------
    z1 = jnp.dot(col1_ref[0], w1_ref[...], preferred_element_type=f32) + b1_ref[...]
    z1 = jnp.maximum(z1, 0.0)                                        # (S1*S1, C1)
    m1 = pool_rows(z1, S2, S1, C1).astype(bf16)                      # (S2*S1, C1)
    pad2[...] = pool_cols(m1, s2e_ref, s2o_ref).reshape(S2 + 2, S2 + 16, C1)

    # ---- stage 2 ---------------------------------------------------------------------
    z2 = conv9(pad2, w2_ref, b2_ref, S2, C1)                         # (S2*S2, C2)
    m2 = pool_rows(z2, S3, S2, C2).astype(bf16)
    pad3[...] = pool_cols(m2, s3e_ref, s3o_ref).reshape(S3 + 2, S3 + 16, C2)

    # ---- stage 3 ---------------------------------------------------------------------
    z3 = conv9(pad3, w3_ref, b3_ref, S3, C2)                         # (S3*S3, C3)
    m3 = pool_rows(z3, S4, S3, C3).astype(bf16)
    feat = pool_cols(m3, s4e_ref, s4o_ref)                           # (S4*S4, C3) = (16, 128)
    feat_ref[0] = feat.astype(feat_ref.dtype)                        # one lane-dense store


# ----------------------------------------------------------------------------
# Kernel 2: batched MLP head
# ----------------------------------------------------------------------------
def mlp_kernel(x_ref, fc1w_ref, fc1b_ref, fc2w_ref, fc2b_ref, o_ref):
    f32 = jnp.float32
    h = jnp.dot(x_ref[...], fc1w_ref[...], preferred_element_type=f32) + fc1b_ref[...]
    h = jnp.maximum(h, 0.0).astype(jnp.bfloat16)
    # TODO(synk): Dropout(0.3) is the identity in eval/inference mode; training-mode
    #             stochastic masking is intentionally not implemented.
    o_ref[...] = jnp.dot(h, fc2w_ref[...], preferred_element_type=f32) + fc2b_ref[...]


# ----------------------------------------------------------------------------
# One-time weight massaging (layouts + bf16 + pooling selectors)
# ----------------------------------------------------------------------------
def prepare_params(params):
    bf16 = jnp.bfloat16
    d = S4
    w1 = params["w1"].reshape(9 * 3, C1)                              # (dh, dw, ci) row order
    w1p = jnp.zeros((K1, C1), jnp.float32).at[:27, :].set(w1)         # K padded 27 -> 32
    # permute fc1 rows from torch's (C, H, W) flatten order to the kernel's (H, W, C) order
    fc1 = (params["fc1_w"].reshape(C3, d, d, HID)
           .transpose(1, 2, 0, 3).reshape(C3 * d * d, HID))
    fc2w = jnp.zeros((HID, PAD_CLASSES), jnp.float32).at[:, :NUM_CLASSES].set(params["fc2_w"])
    fc2b = jnp.zeros((PAD_CLASSES,), jnp.float32).at[:NUM_CLASSES].set(params["fc2_b"])
    return {
        "w1": w1p.astype(bf16), "b1": params["b1"].reshape(1, C1),
        "w2": params["w2"].reshape(9 * C1, C2).astype(bf16), "b2": params["b2"].reshape(1, C2),
        "w3": params["w3"].reshape(9 * C2, C3).astype(bf16), "b3": params["b3"].reshape(1, C3),
        "fc1_w": fc1.astype(bf16), "fc1_b": params["fc1_b"].reshape(1, HID),
        "fc2_w": fc2w.astype(bf16), "fc2_b": fc2b.reshape(1, PAD_CLASSES),
        # pooling selectors: (interior at row 1 / col 8 of the halo slab; stage 3 has no halo)
        "s2e": _pool_select(S2, S2, S1, S2 + 2, S2 + 16, 1, 8, 0),
        "s2o": _pool_select(S2, S2, S1, S2 + 2, S2 + 16, 1, 8, 1),
        "s3e": _pool_select(S3, S3, S2, S3 + 2, S3 + 16, 1, 8, 0),
        "s3o": _pool_select(S3, S3, S2, S3 + 2, S3 + 16, 1, 8, 1),
        "s4e": _pool_select(S4, S4, S3, S4, S4, 0, 0, 0),
        "s4o": _pool_select(S4, S4, S3, S4, S4, 0, 0, 1),
    }


# ----------------------------------------------------------------------------
# Forward: XLA-side stage-1 im2col + two pallas_calls
# ----------------------------------------------------------------------------
@jax.jit
def simple_cnn_forward(x_nchw, prep):
    N = x_nchw.shape[0]

    # Hoisted stage-1 im2col: lane-dense (N, S1*S1, 32) bf16, matching zero-padded w1.
    x = jnp.transpose(x_nchw, (0, 2, 3, 1)).astype(jnp.float32)       # NCHW -> NHWC
    xp = jnp.pad(x, ((0, 0), (1, 1), (1, 1), (0, 0)))
    col1 = jnp.concatenate(
        [xp[:, dh:dh + S1, dw:dw + S1, :] for dh in range(3) for dw in range(3)], axis=-1)
    col1 = jnp.pad(col1, ((0, 0), (0, 0), (0, 0), (0, K1 - 27)))
    col1 = col1.reshape(N, S1 * S1, K1).astype(jnp.bfloat16)

    feats = pl.pallas_call(
        feature_kernel,
        out_shape=jax.ShapeDtypeStruct((N, S4 * S4, C3), jnp.bfloat16),
        grid=(N,),
        in_specs=[
            pl.BlockSpec((1, S1 * S1, K1), lambda n: (n, 0, 0)),
            pl.BlockSpec((K1, C1), lambda n: (0, 0)),
            pl.BlockSpec((1, C1), lambda n: (0, 0)),
            pl.BlockSpec((9 * C1, C2), lambda n: (0, 0)),
            pl.BlockSpec((1, C2), lambda n: (0, 0)),
            pl.BlockSpec((9 * C2, C3), lambda n: (0, 0)),
            pl.BlockSpec((1, C3), lambda n: (0, 0)),
            pl.BlockSpec(((S2 + 2) * (S2 + 16), S2 * S1), lambda n: (0, 0)),
            pl.BlockSpec(((S2 + 2) * (S2 + 16), S2 * S1), lambda n: (0, 0)),
            pl.BlockSpec(((S3 + 2) * (S3 + 16), S3 * S2), lambda n: (0, 0)),
            pl.BlockSpec(((S3 + 2) * (S3 + 16), S3 * S2), lambda n: (0, 0)),
            pl.BlockSpec((S4 * S4, S4 * S3), lambda n: (0, 0)),
            pl.BlockSpec((S4 * S4, S4 * S3), lambda n: (0, 0)),
        ],
        out_specs=pl.BlockSpec((1, S4 * S4, C3), lambda n: (n, 0, 0)),
        scratch_shapes=[
            pltpu.VMEM((S2 + 2, S2 + 16, C1), jnp.float32),    # pad2: stage-2 halo slab
            pltpu.VMEM((S3 + 2, S3 + 16, C2), jnp.float32),    # pad3: stage-3 halo slab
        ],
        compiler_params=pltpu.CompilerParams(
            dimension_semantics=("parallel",),                 # one image per TC on v7x
            vmem_limit_bytes=32 * 1024 * 1024),
    )(col1, prep["w1"], prep["b1"], prep["w2"], prep["b2"], prep["w3"], prep["b3"],
      prep["s2e"], prep["s2o"], prep["s3e"], prep["s3o"], prep["s4e"], prep["s4o"])

    # Batched MLP head: M=N rows through the MXU, fc1_w DMA'd once for the whole batch.
    flat = feats.reshape(N, FEAT)                              # NHWC flatten (matches fc1 perm)
    logits_pad = pl.pallas_call(
        mlp_kernel,
        out_shape=jax.ShapeDtypeStruct((N, PAD_CLASSES), jnp.float32),
        grid=(1,),
        in_specs=[
            pl.BlockSpec((N, FEAT), lambda i: (0, 0)),
            pl.BlockSpec((FEAT, HID), lambda i: (0, 0)),
            pl.BlockSpec((1, HID), lambda i: (0, 0)),
            pl.BlockSpec((HID, PAD_CLASSES), lambda i: (0, 0)),
            pl.BlockSpec((1, PAD_CLASSES), lambda i: (0, 0)),
        ],
        out_specs=pl.BlockSpec((N, PAD_CLASSES), lambda i: (0, 0)),
        compiler_params=pltpu.CompilerParams(
            dimension_semantics=("arbitrary",),
            vmem_limit_bytes=32 * 1024 * 1024),
    )(flat, prep["fc1_w"], prep["fc1_b"], prep["fc2_w"], prep["fc2_b"])
    return logits_pad[:, :NUM_CLASSES]


# ----------------------------------------------------------------------------
# Pure-JAX f32 reference (uses the original torch-layout params)
# ----------------------------------------------------------------------------
def reference_forward(x_nchw, params):
    x = jnp.transpose(x_nchw, (0, 2, 3, 1)).astype(jnp.float32)
    for w, b in ((params["w1"], params["b1"]),
                 (params["w2"], params["b2"]),
                 (params["w3"], params["b3"])):
        x = jax.lax.conv_general_dilated(
            x, w, window_strides=(1, 1), padding="SAME",
            dimension_numbers=("NHWC", "HWIO", "NHWC"))
        x = jax.nn.relu(x + b)
        x = jax.lax.reduce_window(x, -jnp.inf, jax.lax.max,
                                  (1, 2, 2, 1), (1, 2, 2, 1), "VALID")
    N = x.shape[0]
    x = jnp.transpose(x, (0, 3, 1, 2)).reshape(N, -1)          # torch.nn.Flatten on NCHW
    h = jax.nn.relu(x @ params["fc1_w"] + params["fc1_b"])
    return h @ params["fc2_w"] + params["fc2_b"]


# ----------------------------------------------------------------------------
# Deterministic parameter init + driver
# ----------------------------------------------------------------------------
def make_params(key):
    ks = jax.random.split(key, 10)
    s = 0.05
    d = S4
    return {
        "w1": s * jax.random.normal(ks[0], (3, 3, 3, C1), jnp.float32),
        "b1": s * jax.random.normal(ks[1], (C1,), jnp.float32),
        "w2": s * jax.random.normal(ks[2], (3, 3, C1, C2), jnp.float32),
        "b2": s * jax.random.normal(ks[3], (C2,), jnp.float32),
        "w3": s * jax.random.normal(ks[4], (3, 3, C2, C3), jnp.float32),
        "b3": s * jax.random.normal(ks[5], (C3,), jnp.float32),
        "fc1_w": s * jax.random.normal(ks[6], (C3 * d * d, HID), jnp.float32),
        "fc1_b": s * jax.random.normal(ks[7], (HID,), jnp.float32),
        "fc2_w": s * jax.random.normal(ks[8], (HID, NUM_CLASSES), jnp.float32),
        "fc2_b": s * jax.random.normal(ks[9], (NUM_CLASSES,), jnp.float32),
    }


if __name__ == "__main__":
    root = jax.random.PRNGKey(0)
    k_x, k_p = jax.random.split(root)
    x = jax.random.normal(k_x, (BATCH, 3, INPUT_SIZE, INPUT_SIZE), jnp.float32)  # NCHW like torch
    params = make_params(k_p)
    prep = prepare_params(params)       # one-time layout/bf16 massaging (off the hot path)

    logits = jax.block_until_ready(simple_cnn_forward(x, prep))
    assert logits.shape == (BATCH, NUM_CLASSES)
    assert bool(jnp.all(jnp.isfinite(logits)))

    ref = jax.block_until_ready(reference_forward(x, params))
    max_err = float(jnp.max(jnp.abs(logits - ref)))
    # bf16 matmul operands with f32 accumulation across 3 convs + 2 FCs
    assert max_err < 5e-2, f"mismatch vs reference: {max_err}"

    print("KERNEL_OK")
</pallas_src>

<mosaic_0001>
module attributes {stable_mosaic.version = 11 : i64} {
  func.func @feature_kernel(%arg0: i32, %arg1: memref<1x1024x32xbf16, #tpu.memory_space<vmem>>, %arg2: memref<32x32xbf16, #tpu.memory_space<vmem>>, %arg3: memref<1x32xf32, #tpu.memory_space<vmem>>, %arg4: memref<288x64xbf16, #tpu.memory_space<vmem>>, %arg5: memref<1x64xf32, #tpu.memory_space<vmem>>, %arg6: memref<576x128xbf16, #tpu.memory_space<vmem>>, %arg7: memref<1x128xf32, #tpu.memory_space<vmem>>, %arg8: memref<576x512xbf16, #tpu.memory_space<vmem>>, %arg9: memref<576x512xbf16, #tpu.memory_space<vmem>>, %arg10: memref<240x128xbf16, #tpu.memory_space<vmem>>, %arg11: memref<240x128xbf16, #tpu.memory_space<vmem>>, %arg12: memref<16x32xbf16, #tpu.memory_space<vmem>>, %arg13: memref<16x32xbf16, #tpu.memory_space<vmem>>, %arg14: memref<1x16x128xbf16, #tpu.memory_space<vmem>>, %arg15: memref<18x32x32xf32, #tpu.memory_space<vmem>>, %arg16: memref<10x24x64xf32, #tpu.memory_space<vmem>>) attributes {dimension_semantics = [#tpu.dimension_semantics<parallel>], iteration_bounds = array<i64: 2>, scalar_prefetch = 0 : i64, scratch_operands = 2 : i64, tpu.core_type = #tpu.core_type<tc>, window_params = [{transform_indices = @transform_0, window_bounds = array<i64: 1, 1024, 32>}, {pipeline_mode = #tpu.pipeline_mode<synchronous>, transform_indices = @transform_1, window_bounds = array<i64: 32, 32>}, {pipeline_mode = #tpu.pipeline_mode<synchronous>, transform_indices = @transform_2, window_bounds = array<i64: 1, 32>}, {pipeline_mode = #tpu.pipeline_mode<synchronous>, transform_indices = @transform_3, window_bounds = array<i64: 288, 64>}, {pipeline_mode = #tpu.pipeline_mode<synchronous>, transform_indices = @transform_4, window_bounds = array<i64: 1, 64>}, {pipeline_mode = #tpu.pipeline_mode<synchronous>, transform_indices = @transform_5, window_bounds = array<i64: 576, 128>}, {pipeline_mode = #tpu.pipeline_mode<synchronous>, transform_indices = @transform_6, window_bounds = array<i64: 1, 128>}, {pipeline_mode = #tpu.pipeline_mode<synchronous>, transform_indices = @transform_7, window_bounds = array<i64: 576, 512>}, {pipeline_mode = #tpu.pipeline_mode<synchronous>, transform_indices = @transform_8, window_bounds = array<i64: 576, 512>}, {pipeline_mode = #tpu.pipeline_mode<synchronous>, transform_indices = @transform_9, window_bounds = array<i64: 240, 128>}, {pipeline_mode = #tpu.pipeline_mode<synchronous>, transform_indices = @transform_10, window_bounds = array<i64: 240, 128>}, {pipeline_mode = #tpu.pipeline_mode<synchronous>, transform_indices = @transform_11, window_bounds = array<i64: 16, 32>}, {pipeline_mode = #tpu.pipeline_mode<synchronous>, transform_indices = @transform_12, window_bounds = array<i64: 16, 32>}, {transform_indices = @transform_13, window_bounds = array<i64: 1, 16, 128>}]} {
    %c0 = arith.constant 0 : index
    %c0_0 = arith.constant 0 : index
    %c0_1 = arith.constant 0 : index
    %0 = vector.load %arg1[%c0, %c0_0, %c0_1] : memref<1x1024x32xbf16, #tpu.memory_space<vmem>>, vector<1x1024x32xbf16>
    %1 = vector.shape_cast %0 : vector<1x1024x32xbf16> to vector<1024x32xbf16>
    %c0_2 = arith.constant 0 : index
    %c0_3 = arith.constant 0 : index
    %2 = vector.load %arg2[%c0_2, %c0_3] : memref<32x32xbf16, #tpu.memory_space<vmem>>, vector<32x32xbf16>
    %cst = arith.constant dense<0.000000e+00> : vector<1024x32xf32>
    %3 = tpu.matmul %1, %2, %cst {dimension_numbers = #tpu.dot_dimension_numbers<[1], [0], [0], [1], [0, 0, 1, 1], [], []>} : vector<1024x32xbf16>, vector<32x32xbf16>, vector<1024x32xf32> -> vector<1024x32xf32>
    %c0_4 = arith.constant 0 : index
    %c0_5 = arith.constant 0 : index
    %4 = vector.load %arg3[%c0_4, %c0_5] : memref<1x32xf32, #tpu.memory_space<vmem>>, vector<1x32xf32>
    %5 = vector.broadcast %4 : vector<1x32xf32> to vector<1024x32xf32>
    %6 = arith.addf %3, %5 : vector<1024x32xf32>
    %cst_6 = arith.constant 0.000000e+00 : f32
    %7 = vector.broadcast %cst_6 : f32 to vector<1024x32xf32>
    %8 = arith.maximumf %6, %7 : vector<1024x32xf32>
    %9 = vector.shape_cast %8 : vector<1024x32xf32> to vector<16x2x32x32xf32>
    %10 = vector.extract_strided_slice %9 {offsets = [0, 0, 0, 0], sizes = [16, 1, 32, 32], strides = [1, 1, 1, 1]} : vector<16x2x32x32xf32> to vector<16x1x32x32xf32>
    %11 = vector.shape_cast %10 : vector<16x1x32x32xf32> to vector<16x32x32xf32>
    %12 = vector.extract_strided_slice %9 {offsets = [0, 1, 0, 0], sizes = [16, 1, 32, 32], strides = [1, 1, 1, 1]} : vector<16x2x32x32xf32> to vector<16x1x32x32xf32>
    %13 = vector.shape_cast %12 : vector<16x1x32x32xf32> to vector<16x32x32xf32>
    %14 = arith.maximumf %11, %13 : vector<16x32x32xf32>
    %15 = vector.shape_cast %14 : vector<16x32x32xf32> to vector<512x32xf32>
    %16 = arith.truncf %15 : vector<512x32xf32> to vector<512x32xbf16>
    %c0_7 = arith.constant 0 : index
    %c0_8 = arith.constant 0 : index
    %17 = vector.load %arg8[%c0_7, %c0_8] : memref<576x512xbf16, #tpu.memory_space<vmem>>, vector<576x512xbf16>
    %cst_9 = arith.constant dense<0.000000e+00> : vector<576x32xf32>
    %18 = tpu.matmul %17, %16, %cst_9 {dimension_numbers = #tpu.dot_dimension_numbers<[1], [0], [0], [1], [0, 0, 1, 1], [], []>} : vector<576x512xbf16>, vector<512x32xbf16>, vector<576x32xf32> -> vector<576x32xf32>
    %c0_10 = arith.constant 0 : index
    %c0_11 = arith.constant 0 : index
    %19 = vector.load %arg9[%c0_10, %c0_11] : memref<576x512xbf16, #tpu.memory_space<vmem>>, vector<576x512xbf16>
    %cst_12 = arith.constant dense<0.000000e+00> : vector<576x32xf32>
    %20 = tpu.matmul %19, %16, %cst_12 {dimension_numbers = #tpu.dot_dimension_numbers<[1], [0], [0], [1], [0, 0, 1, 1], [], []>} : vector<576x512xbf16>, vector<512x32xbf16>, vector<576x32xf32> -> vector<576x32xf32>
    %21 = arith.maximumf %18, %20 : vector<576x32xf32>
    %22 = vector.shape_cast %21 : vector<576x32xf32> to vector<18x32x32xf32>
    %c0_13 = arith.constant 0 : index
    %c0_14 = arith.constant 0 : index
    %c0_15 = arith.constant 0 : index
    %23 = vector.load %arg15[%c0_13, %c0_14, %c0_15] : memref<18x32x32xf32, #tpu.memory_space<vmem>>, vector<18x32x32xf32>
    tpu.vector_store %arg15[%c0_13, %c0_14, %c0_15], %22 {strides = array<i32>} : memref<18x32x32xf32, #tpu.memory_space<vmem>>, vector<18x32x32xf32>,
    %c0_16 = arith.constant 0 : index
    %c7 = arith.constant 7 : index
    %c0_17 = arith.constant 0 : index
    %24 = vector.load %arg15[%c0_16, %c7, %c0_17] : memref<18x32x32xf32, #tpu.memory_space<vmem>>, vector<16x16x32xf32>
    %25 = vector.shape_cast %24 : vector<16x16x32xf32> to vector<256x32xf32>
    %26 = arith.truncf %25 : vector<256x32xf32> to vector<256x32xbf16>
    %c0_18 = arith.constant 0 : index
    %c0_19 = arith.constant 0 : index
    %27 = vector.load %arg4[%c0_18, %c0_19] : memref<288x64xbf16, #tpu.memory_space<vmem>>, vector<32x64xbf16>
    %cst_20 = arith.constant dense<0.000000e+00> : vector<256x64xf32>
    %28 = tpu.matmul %26, %27, %cst_20 {dimension_numbers = #tpu.dot_dimension_numbers<[1], [0], [0], [1], [0, 0, 1, 1], [], []>} : vector<256x32xbf16>, vector<32x64xbf16>, vector<256x64xf32> -> vector<256x64xf32>
    %c0_21 = arith.constant 0 : index
    %c8 = arith.constant 8 : index
    %c0_22 = arith.constant 0 : index
    %29 = vector.load %arg15[%c0_21, %c8, %c0_22] : memref<18x32x32xf32, #tpu.memory_space<vmem>>, vector<16x16x32xf32>
    %30 = vector.shape_cast %29 : vector<16x16x32xf32> to vector<256x32xf32>
    %31 = arith.truncf %30 : vector<256x32xf32> to vector<256x32xbf16>
    %c32 = arith.constant 32 : index
    %c0_23 = arith.constant 0 : index
    %32 = vector.load %arg4[%c32, %c0_23] : memref<288x64xbf16, #tpu.memory_space<vmem>>, vector<32x64xbf16>
    %cst_24 = arith.constant dense<0.000000e+00> : vector<256x64xf32>
    %33 = tpu.matmul %31, %32, %cst_24 {dimension_numbers = #tpu.dot_dimension_numbers<[1], [0], [0], [1], [0, 0, 1, 1], [], []>} : vector<256x32xbf16>, vector<32x64xbf16>, vector<256x64xf32> -> vector<256x64xf32>
    %34 = arith.addf %28, %33 : vector<256x64xf32>
    %c0_25 = arith.constant 0 : index
    %c9 = arith.constant 9 : index
    %c0_26 = arith.constant 0 : index
    %35 = vector.load %arg15[%c0_25, %c9, %c0_26] : memref<18x32x32xf32, #tpu.memory_space<vmem>>, vector<16x16x32xf32>
    %36 = vector.shape_cast %35 : vector<16x16x32xf32> to vector<256x32xf32>
    %37 = arith.truncf %36 : vector<256x32xf32> to vector<256x32xbf16>
    %c64 = arith.constant 64 : index
    %c0_27 = arith.constant 0 : index
    %38 = vector.load %arg4[%c64, %c0_27] : memref<288x64xbf16, #tpu.memory_space<vmem>>, vector<32x64xbf16>
    %cst_28 = arith.constant dense<0.000000e+00> : vector<256x64xf32>
    %39 = tpu.matmul %37, %38, %cst_28 {dimension_numbers = #tpu.dot_dimension_numbers<[1], [0], [0], [1], [0, 0, 1, 1], [], []>} : vector<256x32xbf16>, vector<32x64xbf16>, vector<256x64xf32> -> vector<256x64xf32>
    %40 = arith.addf %34, %39 : vector<256x64xf32>
    %c1 = arith.constant 1 : index
    %c7_29 = arith.constant 7 : index
    %c0_30 = arith.constant 0 : index
    %41 = vector.load %arg15[%c1, %c7_29, %c0_30] : memref<18x32x32xf32, #tpu.memory_space<vmem>>, vector<16x16x32xf32>
    %42 = vector.shape_cast %41 : vector<16x16x32xf32> to vector<256x32xf32>
    %43 = arith.truncf %42 : vector<256x32xf32> to vector<256x32xbf16>
    %c96 = arith.constant 96 : index
    %c0_31 = arith.constant 0 : index
    %44 = vector.load %arg4[%c96, %c0_31] : memref<288x64xbf16, #tpu.memory_space<vmem>>, vector<32x64xbf16>
    %cst_32 = arith.constant dense<0.000000e+00> : vector<256x64xf32>
    %45 = tpu.matmul %43, %44, %cst_32 {dimension_numbers = #tpu.dot_dimension_numbers<[1], [0], [0], [1], [0, 0, 1, 1], [], []>} : vector<256x32xbf16>, vector<32x64xbf16>, vector<256x64xf32> -> vector<256x64xf32>
    %46 = arith.addf %40, %45 : vector<256x64xf32>
    %c1_33 = arith.constant 1 : index
    %c8_34 = arith.constant 8 : index
    %c0_35 = arith.constant 0 : index
    %47 = vector.load %arg15[%c1_33, %c8_34, %c0_35] : memref<18x32x32xf32, #tpu.memory_space<vmem>>, vector<16x16x32xf32>
    %48 = vector.shape_cast %47 : vector<16x16x32xf32> to vector<256x32xf32>
    %49 = arith.truncf %48 : vector<256x32xf32> to vector<256x32xbf16>
    %c128 = arith.constant 128 : index
    %c0_36 = arith.constant 0 : index
    %50 = vector.load %arg4[%c128, %c0_36] : memref<288x64xbf16, #tpu.memory_space<vmem>>, vector<32x64xbf16>
    %cst_37 = arith.constant dense<0.000000e+00> : vector<256x64xf32>
    %51 = tpu.matmul %49, %50, %cst_37 {dimension_numbers = #tpu.dot_dimension_numbers<[1], [0], [0], [1], [0, 0, 1, 1], [], []>} : vector<256x32xbf16>, vector<32x64xbf16>, vector<256x64xf32> -> vector<256x64xf32>
    %52 = arith.addf %46, %51 : vector<256x64xf32>
    %c1_38 = arith.constant 1 : index
    %c9_39 = arith.constant 9 : index
    %c0_40 = arith.constant 0 : index
    %53 = vector.load %arg15[%c1_38, %c9_39, %c0_40] : memref<18x32x32xf32, #tpu.memory_space<vmem>>, vector<16x16x32xf32>
    %54 = vector.shape_cast %53 : vector<16x16x32xf32> to vector<256x32xf32>
    %55 = arith.truncf %54 : vector<256x32xf32> to vector<256x32xbf16>
    %c160 = arith.constant 160 : index
    %c0_41 = arith.constant 0 : index
    %56 = vector.load %arg4[%c160, %c0_41] : memref<288x64xbf16, #tpu.memory_space<vmem>>, vector<32x64xbf16>
    %cst_42 = arith.constant dense<0.000000e+00> : vector<256x64xf32>
    %57 = tpu.matmul %55, %56, %cst_42 {dimension_numbers = #tpu.dot_dimension_numbers<[1], [0], [0], [1], [0, 0, 1, 1], [], []>} : vector<256x32xbf16>, vector<32x64xbf16>, vector<256x64xf32> -> vector<256x64xf32>
    %58 = arith.addf %52, %57 : vector<256x64xf32>
    %c2 = arith.constant 2 : index
    %c7_43 = arith.constant 7 : index
    %c0_44 = arith.constant 0 : index
    %59 = vector.load %arg15[%c2, %c7_43, %c0_44] : memref<18x32x32xf32, #tpu.memory_space<vmem>>, vector<16x16x32xf32>
    %60 = vector.shape_cast %59 : vector<16x16x32xf32> to vector<256x32xf32>
    %61 = arith.truncf %60 : vector<256x32xf32> to vector<256x32xbf16>
    %c192 = arith.constant 192 : index
    %c0_45 = arith.constant 0 : index
    %62 = vector.load %arg4[%c192, %c0_45] : memref<288x64xbf16, #tpu.memory_space<vmem>>, vector<32x64xbf16>
    %cst_46 = arith.constant dense<0.000000e+00> : vector<256x64xf32>
    %63 = tpu.matmul %61, %62, %cst_46 {dimension_numbers = #tpu.dot_dimension_numbers<[1], [0], [0], [1], [0, 0, 1, 1], [], []>} : vector<256x32xbf16>, vector<32x64xbf16>, vector<256x64xf32> -> vector<256x64xf32>
    %64 = arith.addf %58, %63 : vector<256x64xf32>
    %c2_47 = arith.constant 2 : index
    %c8_48 = arith.constant 8 : index
    %c0_49 = arith.constant 0 : index
    %65 = vector.load %arg15[%c2_47, %c8_48, %c0_49] : memref<18x32x32xf32, #tpu.memory_space<vmem>>, vector<16x16x32xf32>
    %66 = vector.shape_cast %65 : vector<16x16x32xf32> to vector<256x32xf32>
    %67 = arith.truncf %66 : vector<256x32xf32> to vector<256x32xbf16>
    %c224 = arith.constant 224 : index
    %c0_50 = arith.constant 0 : index
    %68 = vector.load %arg4[%c224, %c0_50] : memref<288x64xbf16, #tpu.memory_space<vmem>>, vector<32x64xbf16>
    %cst_51 = arith.constant dense<0.000000e+00> : vector<256x64xf32>
    %69 = tpu.matmul %67, %68, %cst_51 {dimension_numbers = #tpu.dot_dimension_numbers<[1], [0], [0], [1], [0, 0, 1, 1], [], []>} : vector<256x32xbf16>, vector<32x64xbf16>, vector<256x64xf32> -> vector<256x64xf32>
    %70 = arith.addf %64, %69 : vector<256x64xf32>
    %c2_52 = arith.constant 2 : index
    %c9_53 = arith.constant 9 : index
    %c0_54 = arith.constant 0 : index
    %71 = vector.load %arg15[%c2_52, %c9_53, %c0_54] : memref<18x32x32xf32, #tpu.memory_space<vmem>>, vector<16x16x32xf32>
    %72 = vector.shape_cast %71 : vector<16x16x32xf32> to vector<256x32xf32>
    %73 = arith.truncf %72 : vector<256x32xf32> to vector<256x32xbf16>
    %c256 = arith.constant 256 : index
    %c0_55 = arith.constant 0 : index
    %74 = vector.load %arg4[%c256, %c0_55] : memref<288x64xbf16, #tpu.memory_space<vmem>>, vector<32x64xbf16>
    %cst_56 = arith.constant dense<0.000000e+00> : vector<256x64xf32>
    %75 = tpu.matmul %73, %74, %cst_56 {dimension_numbers = #tpu.dot_dimension_numbers<[1], [0], [0], [1], [0, 0, 1, 1], [], []>} : vector<256x32xbf16>, vector<32x64xbf16>, vector<256x64xf32> -> vector<256x64xf32>
    %76 = arith.addf %70, %75 : vector<256x64xf32>
    %c0_57 = arith.constant 0 : index
    %c0_58 = arith.constant 0 : index
    %77 = vector.load %arg5[%c0_57, %c0_58] : memref<1x64xf32, #tpu.memory_space<vmem>>, vector<1x64xf32>
    %78 = vector.broadcast %77 : vector<1x64xf32> to vector<256x64xf32>
    %79 = arith.addf %76, %78 : vector<256x64xf32>
    %cst_59 = arith.constant 0.000000e+00 : f32
    %80 = vector.broadcast %cst_59 : f32 to vector<256x64xf32>
    %81 = arith.maximumf %79, %80 : vector<256x64xf32>
    %82 = vector.shape_cast %81 : vector<256x64xf32> to vector<8x2x16x64xf32>
    %83 = vector.extract_strided_slice %82 {offsets = [0, 0, 0, 0], sizes = [8, 1, 16, 64], strides = [1, 1, 1, 1]} : vector<8x2x16x64xf32> to vector<8x1x16x64xf32>
    %84 = vector.shape_cast %83 : vector<8x1x16x64xf32> to vector<8x16x64xf32>
    %85 = vector.extract_strided_slice %82 {offsets = [0, 1, 0, 0], sizes = [8, 1, 16, 64], strides = [1, 1, 1, 1]} : vector<8x2x16x64xf32> to vector<8x1x16x64xf32>
    %86 = vector.shape_cast %85 : vector<8x1x16x64xf32> to vector<8x16x64xf32>
    %87 = arith.maximumf %84, %86 : vector<8x16x64xf32>
    %88 = vector.shape_cast %87 : vector<8x16x64xf32> to vector<128x64xf32>
    %89 = arith.truncf %88 : vector<128x64xf32> to vector<128x64xbf16>
    %c0_60 = arith.constant 0 : index
    %c0_61 = arith.constant 0 : index
    %90 = vector.load %arg10[%c0_60, %c0_61] : memref<240x128xbf16, #tpu.memory_space<vmem>>, vector<240x128xbf16>
    %cst_62 = arith.constant dense<0.000000e+00> : vector<240x64xf32>
    %91 = tpu.matmul %90, %89, %cst_62 {dimension_numbers = #tpu.dot_dimension_numbers<[1], [0], [0], [1], [0, 0, 1, 1], [], []>} : vector<240x128xbf16>, vector<128x64xbf16>, vector<240x64xf32> -> vector<240x64xf32>
    %c0_63 = arith.constant 0 : index
    %c0_64 = arith.constant 0 : index
    %92 = vector.load %arg11[%c0_63, %c0_64] : memref<240x128xbf16, #tpu.memory_space<vmem>>, vector<240x128xbf16>
    %cst_65 = arith.constant dense<0.000000e+00> : vector<240x64xf32>
    %93 = tpu.matmul %92, %89, %cst_65 {dimension_numbers = #tpu.dot_dimension_numbers<[1], [0], [0], [1], [0, 0, 1, 1], [], []>} : vector<240x128xbf16>, vector<128x64xbf16>, vector<240x64xf32> -> vector<240x64xf32>
    %94 = arith.maximumf %91, %93 : vector<240x64xf32>
    %95 = vector.shape_cast %94 : vector<240x64xf32> to vector<10x24x64xf32>
    %c0_66 = arith.constant 0 : index
    %c0_67 = arith.constant 0 : index
    %c0_68 = arith.constant 0 : index
    %96 = vector.load %arg16[%c0_66, %c0_67, %c0_68] : memref<10x24x64xf32, #tpu.memory_space<vmem>>, vector<10x24x64xf32>
    tpu.vector_store %arg16[%c0_66, %c0_67, %c0_68], %95 {strides = array<i32>} : memref<10x24x64xf32, #tpu.memory_space<vmem>>, vector<10x24x64xf32>,
    %c0_69 = arith.constant 0 : index
    %c7_70 = arith.constant 7 : index
    %c0_71 = arith.constant 0 : index
    %97 = vector.load %arg16[%c0_69, %c7_70, %c0_71] : memref<10x24x64xf32, #tpu.memory_space<vmem>>, vector<8x8x64xf32>
    %98 = vector.shape_cast %97 : vector<8x8x64xf32> to vector<64x64xf32>
    %99 = arith.truncf %98 : vector<64x64xf32> to vector<64x64xbf16>
    %c0_72 = arith.constant 0 : index
    %c0_73 = arith.constant 0 : index
    %100 = vector.load %arg6[%c0_72, %c0_73] : memref<576x128xbf16, #tpu.memory_space<vmem>>, vector<64x128xbf16>
    %cst_74 = arith.constant dense<0.000000e+00> : vector<64x128xf32>
    %101 = tpu.matmul %99, %100, %cst_74 {dimension_numbers = #tpu.dot_dimension_numbers<[1], [0], [0], [1], [0, 0, 1, 1], [], []>} : vector<64x64xbf16>, vector<64x128xbf16>, vector<64x128xf32> -> vector<64x128xf32>
    %c0_75 = arith.constant 0 : index
    %c8_76 = arith.constant 8 : index
    %c0_77 = arith.constant 0 : index
    %102 = vector.load %arg16[%c0_75, %c8_76, %c0_77] : memref<10x24x64xf32, #tpu.memory_space<vmem>>, vector<8x8x64xf32>
    %103 = vector.shape_cast %102 : vector<8x8x64xf32> to vector<64x64xf32>
    %104 = arith.truncf %103 : vector<64x64xf32> to vector<64x64xbf16>
    %c64_78 = arith.constant 64 : index
    %c0_79 = arith.constant 0 : index
    %105 = vector.load %arg6[%c64_78, %c0_79] : memref<576x128xbf16, #tpu.memory_space<vmem>>, vector<64x128xbf16>
    %cst_80 = arith.constant dense<0.000000e+00> : vector<64x128xf32>
    %106 = tpu.matmul %104, %105, %cst_80 {dimension_numbers = #tpu.dot_dimension_numbers<[1], [0], [0], [1], [0, 0, 1, 1], [], []>} : vector<64x64xbf16>, vector<64x128xbf16>, vector<64x128xf32> -> vector<64x128xf32>
    %107 = arith.addf %101, %106 : vector<64x128xf32>
    %c0_81 = arith.constant 0 : index
    %c9_82 = arith.constant 9 : index
    %c0_83 = arith.constant 0 : index
    %108 = vector.load %arg16[%c0_81, %c9_82, %c0_83] : memref<10x24x64xf32, #tpu.memory_space<vmem>>, vector<8x8x64xf32>
    %109 = vector.shape_cast %108 : vector<8x8x64xf32> to vector<64x64xf32>
    %110 = arith.truncf %109 : vector<64x64xf32> to vector<64x64xbf16>
    %c128_84 = arith.constant 128 : index
    %c0_85 = arith.constant 0 : index
    %111 = vector.load %arg6[%c128_84, %c0_85] : memref<576x128xbf16, #tpu.memory_space<vmem>>, vector<64x128xbf16>
    %cst_86 = arith.constant dense<0.000000e+00> : vector<64x128xf32>
    %112 = tpu.matmul %110, %111, %cst_86 {dimension_numbers = #tpu.dot_dimension_numbers<[1], [0], [0], [1], [0, 0, 1, 1], [], []>} : vector<64x64xbf16>, vector<64x128xbf16>, vector<64x128xf32> -> vector<64x128xf32>
    %113 = arith.addf %107, %112 : vector<64x128xf32>
    %c1_87 = arith.constant 1 : index
    %c7_88 = arith.constant 7 : index
    %c0_89 = arith.constant 0 : index
    %114 = vector.load %arg16[%c1_87, %c7_88, %c0_89] : memref<10x24x64xf32, #tpu.memory_space<vmem>>, vector<8x8x64xf32>
    %115 = vector.shape_cast %114 : vector<8x8x64xf32> to vector<64x64xf32>
    %116 = arith.truncf %115 : vector<64x64xf32> to vector<64x64xbf16>
    %c192_90 = arith.constant 192 : index
    %c0_91 = arith.constant 0 : index
    %117 = vector.load %arg6[%c192_90, %c0_91] : memref<576x128xbf16, #tpu.memory_space<vmem>>, vector<64x128xbf16>
    %cst_92 = arith.constant dense<0.000000e+00> : vector<64x128xf32>
    %118 = tpu.matmul %116, %117, %cst_92 {dimension_numbers = #tpu.dot_dimension_numbers<[1], [0], [0], [1], [0, 0, 1, 1], [], []>} : vector<64x64xbf16>, vector<64x128xbf16>, vector<64x128xf32> -> vector<64x128xf32>
    %119 = arith.addf %113, %118 : vector<64x128xf32>
    %c1_93 = arith.constant 1 : index
    %c8_94 = arith.constant 8 : index
    %c0_95 = arith.constant 0 : index
    %120 = vector.load %arg16[%c1_93, %c8_94, %c0_95] : memref<10x24x64xf32, #tpu.memory_space<vmem>>, vector<8x8x64xf32>
    %121 = vector.shape_cast %120 : vector<8x8x64xf32> to vector<64x64xf32>
    %122 = arith.truncf %121 : vector<64x64xf32> to vector<64x64xbf16>
    %c256_96 = arith.constant 256 : index
    %c0_97 = arith.constant 0 : index
    %123 = vector.load %arg6[%c256_96, %c0_97] : memref<576x128xbf16, #tpu.memory_space<vmem>>, vector<64x128xbf16>
    %cst_98 = arith.constant dense<0.000000e+00> : vector<64x128xf32>
    %124 = tpu.matmul %122, %123, %cst_98 {dimension_numbers = #tpu.dot_dimension_numbers<[1], [0], [0], [1], [0, 0, 1, 1], [], []>} : vector<64x64xbf16>, vector<64x128xbf16>, vector<64x128xf32> -> vector<64x128xf32>
    %125 = arith.addf %119, %124 : vector<64x128xf32>
    %c1_99 = arith.constant 1 : index
    %c9_100 = arith.constant 9 : index
    %c0_101 = arith.constant 0 : index
    %126 = vector.load %arg16[%c1_99, %c9_100, %c0_101] : memref<10x24x64xf32, #tpu.memory_space<vmem>>, vector<8x8x64xf32>
    %127 = vector.shape_cast %126 : vector<8x8x64xf32> to vector<64x64xf32>
    %128 = arith.truncf %127 : vector<64x64xf32> to vector<64x64xbf16>
    %c320 = arith.constant 320 : index
    %c0_102 = arith.constant 0 : index
    %129 = vector.load %arg6[%c320, %c0_102] : memref<576x128xbf16, #tpu.memory_space<vmem>>, vector<64x128xbf16>
    %cst_103 = arith.constant dense<0.000000e+00> : vector<64x128xf32>
    %130 = tpu.matmul %128, %129, %cst_103 {dimension_numbers = #tpu.dot_dimension_numbers<[1], [0], [0], [1], [0, 0, 1, 1], [], []>} : vector<64x64xbf16>, vector<64x128xbf16>, vector<64x128xf32> -> vector<64x128xf32>
    %131 = arith.addf %125, %130 : vector<64x128xf32>
    %c2_104 = arith.constant 2 : index
    %c7_105 = arith.constant 7 : index
    %c0_106 = arith.constant 0 : index
    %132 = vector.load %arg16[%c2_104, %c7_105, %c0_106] : memref<10x24x64xf32, #tpu.memory_space<vmem>>, vector<8x8x64xf32>
    %133 = vector.shape_cast %132 : vector<8x8x64xf32> to vector<64x64xf32>
    %134 = arith.truncf %133 : vector<64x64xf32> to vector<64x64xbf16>
    %c384 = arith.constant 384 : index
    %c0_107 = arith.constant 0 : index
    %135 = vector.load %arg6[%c384, %c0_107] : memref<576x128xbf16, #tpu.memory_space<vmem>>, vector<64x128xbf16>
    %cst_108 = arith.constant dense<0.000000e+00> : vector<64x128xf32>
    %136 = tpu.matmul %134, %135, %cst_108 {dimension_numbers = #tpu.dot_dimension_numbers<[1], [0], [0], [1], [0, 0, 1, 1], [], []>} : vector<64x64xbf16>, vector<64x128xbf16>, vector<64x128xf32> -> vector<64x128xf32>
    %137 = arith.addf %131, %136 : vector<64x128xf32>
    %c2_109 = arith.constant 2 : index
    %c8_110 = arith.constant 8 : index
    %c0_111 = arith.constant 0 : index
    %138 = vector.load %arg16[%c2_109, %c8_110, %c0_111] : memref<10x24x64xf32, #tpu.memory_space<vmem>>, vector<8x8x64xf32>
    %139 = vector.shape_cast %138 : vector<8x8x64xf32> to vector<64x64xf32>
    %140 = arith.truncf %139 : vector<64x64xf32> to vector<64x64xbf16>
    %c448 = arith.constant 448 : index
    %c0_112 = arith.constant 0 : index
    %141 = vector.load %arg6[%c448, %c0_112] : memref<576x128xbf16, #tpu.memory_space<vmem>>, vector<64x128xbf16>
    %cst_113 = arith.constant dense<0.000000e+00> : vector<64x128xf32>
    %142 = tpu.matmul %140, %141, %cst_113 {dimension_numbers = #tpu.dot_dimension_numbers<[1], [0], [0], [1], [0, 0, 1, 1], [], []>} : vector<64x64xbf16>, vector<64x128xbf16>, vector<64x128xf32> -> vector<64x128xf32>
    %143 = arith.addf %137, %142 : vector<64x128xf32>
    %c2_114 = arith.constant 2 : index
    %c9_115 = arith.constant 9 : index
    %c0_116 = arith.constant 0 : index
    %144 = vector.load %arg16[%c2_114, %c9_115, %c0_116] : memref<10x24x64xf32, #tpu.memory_space<vmem>>, vector<8x8x64xf32>
    %145 = vector.shape_cast %144 : vector<8x8x64xf32> to vector<64x64xf32>
    %146 = arith.truncf %145 : vector<64x64xf32> to vector<64x64xbf16>
    %c512 = arith.constant 512 : index
    %c0_117 = arith.constant 0 : index
    %147 = vector.load %arg6[%c512, %c0_117] : memref<576x128xbf16, #tpu.memory_space<vmem>>, vector<64x128xbf16>
    %cst_118 = arith.constant dense<0.000000e+00> : vector<64x128xf32>
    %148 = tpu.matmul %146, %147, %cst_118 {dimension_numbers = #tpu.dot_dimension_numbers<[1], [0], [0], [1], [0, 0, 1, 1], [], []>} : vector<64x64xbf16>, vector<64x128xbf16>, vector<64x128xf32> -> vector<64x128xf32>
    %149 = arith.addf %143, %148 : vector<64x128xf32>
    %c0_119 = arith.constant 0 : index
    %c0_120 = arith.constant 0 : index
    %150 = vector.load %arg7[%c0_119, %c0_120] : memref<1x128xf32, #tpu.memory_space<vmem>>, vector<1x128xf32>
    %151 = vector.broadcast %150 : vector<1x128xf32> to vector<64x128xf32>
    %152 = arith.addf %149, %151 : vector<64x128xf32>
    %cst_121 = arith.constant 0.000000e+00 : f32
    %153 = vector.broadcast %cst_121 : f32 to vector<64x128xf32>
    %154 = arith.maximumf %152, %153 : vector<64x128xf32>
    %155 = vector.shape_cast %154 : vector<64x128xf32> to vector<4x2x8x128xf32>
    %156 = vector.extract_strided_slice %155 {offsets = [0, 0, 0, 0], sizes = [4, 1, 8, 128], strides = [1, 1, 1, 1]} : vector<4x2x8x128xf32> to vector<4x1x8x128xf32>
    %157 = vector.shape_cast %156 : vector<4x1x8x128xf32> to vector<4x8x128xf32>
    %158 = vector.extract_strided_slice %155 {offsets = [0, 1, 0, 0], sizes = [4, 1, 8, 128], strides = [1, 1, 1, 1]} : vector<4x2x8x128xf32> to vector<4x1x8x128xf32>
    %159 = vector.shape_cast %158 : vector<4x1x8x128xf32> to vector<4x8x128xf32>
    %160 = arith.maximumf %157, %159 : vector<4x8x128xf32>
    %161 = vector.shape_cast %160 : vector<4x8x128xf32> to vector<32x128xf32>
    %162 = arith.truncf %161 : vector<32x128xf32> to vector<32x128xbf16>
    %c0_122 = arith.constant 0 : index
    %c0_123 = arith.constant 0 : index
    %163 = vector.load %arg12[%c0_122, %c0_123] : memref<16x32xbf16, #tpu.memory_space<vmem>>, vector<16x32xbf16>
    %cst_124 = arith.constant dense<0.000000e+00> : vector<16x128xf32>
    %164 = tpu.matmul %163, %162, %cst_124 {dimension_numbers = #tpu.dot_dimension_numbers<[1], [0], [0], [1], [0, 0, 1, 1], [], []>} : vector<16x32xbf16>, vector<32x128xbf16>, vector<16x128xf32> -> vector<16x128xf32>
    %c0_125 = arith.constant 0 : index
    %c0_126 = arith.constant 0 : index
    %165 = vector.load %arg13[%c0_125, %c0_126] : memref<16x32xbf16, #tpu.memory_space<vmem>>, vector<16x32xbf16>
    %cst_127 = arith.constant dense<0.000000e+00> : vector<16x128xf32>
    %166 = tpu.matmul %165, %162, %cst_127 {dimension_numbers = #tpu.dot_dimension_numbers<[1], [0], [0], [1], [0, 0, 1, 1], [], []>} : vector<16x32xbf16>, vector<32x128xbf16>, vector<16x128xf32> -> vector<16x128xf32>
    %167 = arith.maximumf %164, %166 : vector<16x128xf32>
    %168 = arith.truncf %167 : vector<16x128xf32> to vector<16x128xbf16>
    %c0_128 = arith.constant 0 : index
    %c0_129 = arith.constant 0 : index
    %c0_130 = arith.constant 0 : index
    %169 = vector.load %arg14[%c0_128, %c0_129, %c0_130] : memref<1x16x128xbf16, #tpu.memory_space<vmem>>, vector<1x16x128xbf16>
    %170 = vector.shape_cast %169 : vector<1x16x128xbf16> to vector<16x128xbf16>
    %171 = vector.shape_cast %168 : vector<16x128xbf16> to vector<1x16x128xbf16>
    tpu.vector_store %arg14[%c0_128, %c0_129, %c0_130], %171 {strides = array<i32>} : memref<1x16x128xbf16, #tpu.memory_space<vmem>>, vector<1x16x128xbf16>,
    return
  }
  func.func @transform_0(%arg0: i32) -> (i32, i32, i32) {
    %c0_i32 = arith.constant 0 : i32
    %c0_i32_0 = arith.constant 0 : i32
    %c0_i32_1 = arith.constant 0 : i32
    return %arg0, %c0_i32, %c0_i32_0 : i32, i32, i32
  }
  func.func @transform_1(%arg0: i32) -> (i32, i32) {
    %c0_i32 = arith.constant 0 : i32
    %c0_i32_0 = arith.constant 0 : i32
    %c0_i32_1 = arith.constant 0 : i32
    return %c0_i32, %c0_i32_0 : i32, i32
  }
  func.func @transform_2(%arg0: i32) -> (i32, i32) {
    %c0_i32 = arith.constant 0 : i32
    %c0_i32_0 = arith.constant 0 : i32
    %c0_i32_1 = arith.constant 0 : i32
    return %c0_i32, %c0_i32_0 : i32, i32
  }
  func.func @transform_3(%arg0: i32) -> (i32, i32) {
    %c0_i32 = arith.constant 0 : i32
    %c0_i32_0 = arith.constant 0 : i32
    %c0_i32_1 = arith.constant 0 : i32
    return %c0_i32, %c0_i32_0 : i32, i32
  }
  func.func @transform_4(%arg0: i32) -> (i32, i32) {
    %c0_i32 = arith.constant 0 : i32
    %c0_i32_0 = arith.constant 0 : i32
    %c0_i32_1 = arith.constant 0 : i32
    return %c0_i32, %c0_i32_0 : i32, i32
  }
  func.func @transform_5(%arg0: i32) -> (i32, i32) {
    %c0_i32 = arith.constant 0 : i32
    %c0_i32_0 = arith.constant 0 : i32
    %c0_i32_1 = arith.constant 0 : i32
    return %c0_i32, %c0_i32_0 : i32, i32
  }
  func.func @transform_6(%arg0: i32) -> (i32, i32) {
    %c0_i32 = arith.constant 0 : i32
    %c0_i32_0 = arith.constant 0 : i32
    %c0_i32_1 = arith.constant 0 : i32
    return %c0_i32, %c0_i32_0 : i32, i32
  }
  func.func @transform_7(%arg0: i32) -> (i32, i32) {
    %c0_i32 = arith.constant 0 : i32
    %c0_i32_0 = arith.constant 0 : i32
    %c0_i32_1 = arith.constant 0 : i32
    return %c0_i32, %c0_i32_0 : i32, i32
  }
  func.func @transform_8(%arg0: i32) -> (i32, i32) {
    %c0_i32 = arith.constant 0 : i32
    %c0_i32_0 = arith.constant 0 : i32
    %c0_i32_1 = arith.constant 0 : i32
    return %c0_i32, %c0_i32_0 : i32, i32
  }
  func.func @transform_9(%arg0: i32) -> (i32, i32) {
    %c0_i32 = arith.constant 0 : i32
    %c0_i32_0 = arith.constant 0 : i32
    %c0_i32_1 = arith.constant 0 : i32
    return %c0_i32, %c0_i32_0 : i32, i32
  }
  func.func @transform_10(%arg0: i32) -> (i32, i32) {
    %c0_i32 = arith.constant 0 : i32
    %c0_i32_0 = arith.constant 0 : i32
    %c0_i32_1 = arith.constant 0 : i32
    return %c0_i32, %c0_i32_0 : i32, i32
  }
  func.func @transform_11(%arg0: i32) -> (i32, i32) {
    %c0_i32 = arith.constant 0 : i32
    %c0_i32_0 = arith.constant 0 : i32
    %c0_i32_1 = arith.constant 0 : i32
    return %c0_i32, %c0_i32_0 : i32, i32
  }
  func.func @transform_12(%arg0: i32) -> (i32, i32) {
    %c0_i32 = arith.constant 0 : i32
    %c0_i32_0 = arith.constant 0 : i32
    %c0_i32_1 = arith.constant 0 : i32
    return %c0_i32, %c0_i32_0 : i32, i32
  }
  func.func @transform_13(%arg0: i32) -> (i32, i32, i32) {
    %c0_i32 = arith.constant 0 : i32
    %c0_i32_0 = arith.constant 0 : i32
    %c0_i32_1 = arith.constant 0 : i32
    return %arg0, %c0_i32, %c0_i32_0 : i32, i32, i32
  }
}

module attributes {stable_mosaic.version = 11 : i64} {
  func.func @mlp_kernel(%arg0: i32, %arg1: memref<2x2048xbf16, #tpu.memory_space<vmem>>, %arg2: memref<2048x256xbf16, #tpu.memory_space<vmem>>, %arg3: memref<1x256xf32, #tpu.memory_space<vmem>>, %arg4: memref<256x128xbf16, #tpu.memory_space<vmem>>, %arg5: memref<1x128xf32, #tpu.memory_space<vmem>>, %arg6: memref<2x128xf32, #tpu.memory_space<vmem>>) attributes {dimension_semantics = [#tpu.dimension_semantics<arbitrary>], iteration_bounds = array<i64: 1>, scalar_prefetch = 0 : i64, scratch_operands = 0 : i64, tpu.core_type = #tpu.core_type<tc>, window_params = [{pipeline_mode = #tpu.pipeline_mode<synchronous>, transform_indices = @transform_0, window_bounds = array<i64: 2, 2048>}, {pipeline_mode = #tpu.pipeline_mode<synchronous>, transform_indices = @transform_1, window_bounds = array<i64: 2048, 256>}, {pipeline_mode = #tpu.pipeline_mode<synchronous>, transform_indices = @transform_2, window_bounds = array<i64: 1, 256>}, {pipeline_mode = #tpu.pipeline_mode<synchronous>, transform_indices = @transform_3, window_bounds = array<i64: 256, 128>}, {pipeline_mode = #tpu.pipeline_mode<synchronous>, transform_indices = @transform_4, window_bounds = array<i64: 1, 128>}, {pipeline_mode = #tpu.pipeline_mode<synchronous>, transform_indices = @transform_5, window_bounds = array<i64: 2, 128>}]} {
    %c0 = arith.constant 0 : index
    %c0_0 = arith.constant 0 : index
    %0 = vector.load %arg1[%c0, %c0_0] : memref<2x2048xbf16, #tpu.memory_space<vmem>>, vector<2x2048xbf16>
    %c0_1 = arith.constant 0 : index
    %c0_2 = arith.constant 0 : index
    %1 = vector.load %arg2[%c0_1, %c0_2] : memref<2048x256xbf16, #tpu.memory_space<vmem>>, vector<2048x256xbf16>
    %cst = arith.constant dense<0.000000e+00> : vector<2x256xf32>
    %2 = tpu.matmul %0, %1, %cst {dimension_numbers = #tpu.dot_dimension_numbers<[1], [0], [0], [1], [0, 0, 1, 1], [], []>} : vector<2x2048xbf16>, vector<2048x256xbf16>, vector<2x256xf32> -> vector<2x256xf32>
    %c0_3 = arith.constant 0 : index
    %c0_4 = arith.constant 0 : index
    %3 = vector.load %arg3[%c0_3, %c0_4] : memref<1x256xf32, #tpu.memory_space<vmem>>, vector<1x256xf32>
    %4 = vector.broadcast %3 : vector<1x256xf32> to vector<2x256xf32>
    %5 = arith.addf %2, %4 : vector<2x256xf32>
    %cst_5 = arith.constant 0.000000e+00 : f32
    %6 = vector.broadcast %cst_5 : f32 to vector<2x256xf32>
    %7 = arith.maximumf %5, %6 : vector<2x256xf32>
    %8 = arith.truncf %7 : vector<2x256xf32> to vector<2x256xbf16>
    %c0_6 = arith.constant 0 : index
    %c0_7 = arith.constant 0 : index
    %9 = vector.load %arg4[%c0_6, %c0_7] : memref<256x128xbf16, #tpu.memory_space<vmem>>, vector<256x128xbf16>
    %cst_8 = arith.constant dense<0.000000e+00> : vector<2x128xf32>
    %10 = tpu.matmul %8, %9, %cst_8 {dimension_numbers = #tpu.dot_dimension_numbers<[1], [0], [0], [1], [0, 0, 1, 1], [], []>} : vector<2x256xbf16>, vector<256x128xbf16>, vector<2x128xf32> -> vector<2x128xf32>
    %c0_9 = arith.constant 0 : index
    %c0_10 = arith.constant 0 : index
    %11 = vector.load %arg5[%c0_9, %c0_10] : memref<1x128xf32, #tpu.memory_space<vmem>>, vector<1x128xf32>
    %12 = vector.broadcast %11 : vector<1x128xf32> to vector<2x128xf32>
    %13 = arith.addf %10, %12 : vector<2x128xf32>
    %c0_11 = arith.constant 0 : index
    %c0_12 = arith.constant 0 : index
    %14 = vector.load %arg6[%c0_11, %c0_12] : memref<2x128xf32, #tpu.memory_space<vmem>>, vector<2x128xf32>
    tpu.vector_store %arg6[%c0_11, %c0_12], %13 {strides = array<i32>} : memref<2x128xf32, #tpu.memory_space<vmem>>, vector<2x128xf32>,
    return
  }
  func.func @transform_0(%arg0: i32) -> (i32, i32) {
    %c0_i32 = arith.constant 0 : i32
    %c0_i32_0 = arith.constant 0 : i32
    %c0_i32_1 = arith.constant 0 : i32
    return %c0_i32, %c0_i32_0 : i32, i32
  }
  func.func @transform_1(%arg0: i32) -> (i32, i32) {
    %c0_i32 = arith.constant 0 : i32
    %c0_i32_0 = arith.constant 0 : i32
    %c0_i32_1 = arith.constant 0 : i32
    return %c0_i32, %c0_i32_0 : i32, i32
  }
  func.func @transform_2(%arg0: i32) -> (i32, i32) {
    %c0_i32 = arith.constant 0 : i32
    %c0_i32_0 = arith.constant 0 : i32
    %c0_i32_1 = arith.constant 0 : i32
    return %c0_i32, %c0_i32_0 : i32, i32
  }
  func.func @transform_3(%arg0: i32) -> (i32, i32) {
    %c0_i32 = arith.constant 0 : i32
    %c0_i32_0 = arith.constant 0 : i32
    %c0_i32_1 = arith.constant 0 : i32
    return %c0_i32, %c0_i32_0 : i32, i32
  }
  func.func @transform_4(%arg0: i32) -> (i32, i32) {
    %c0_i32 = arith.constant 0 : i32
    %c0_i32_0 = arith.constant 0 : i32
    %c0_i32_1 = arith.constant 0 : i32
    return %c0_i32, %c0_i32_0 : i32, i32
  }
  func.func @transform_5(%arg0: i32) -> (i32, i32) {
    %c0_i32 = arith.constant 0 : i32
    %c0_i32_0 = arith.constant 0 : i32
    %c0_i32_1 = arith.constant 0 : i32
    return %c0_i32, %c0_i32_0 : i32, i32
  }
}

</mosaic_0001>

<llo_original>
// kernel: simple_cnn_forward.3
$region0: #{simple_cnn_forward.3}
  #allocation0 [shape = 'u32[]', space=smem, size = 0x4, offset = 0x4, fixed_abs, tag = 'smem constant byte address 0x4 - core index']
  #allocation1 [shape = 'u32[72,128]{1,0:T(1,128)}', space=vmem, size = 0x9000, scoped, tag = 'internal scratch']
  %s0 = inlined_call_operand.vmem [shape: bf16[2,2048], index: 0, kind: input, shape index: {}]
  %s1 = inlined_call_operand.vmem [shape: bf16[2048,256], index: 1, kind: input, shape index: {}]
  %s2 = inlined_call_operand.vmem [shape: f32[1,256], index: 2, kind: input, shape index: {}]
  %s3 = inlined_call_operand.vmem [shape: bf16[256,128], index: 3, kind: input, shape index: {}]
  %s4 = inlined_call_operand.vmem [shape: f32[1,128], index: 4, kind: input, shape index: {}]
  %s5 = inlined_call_operand.hbm [shape: f32[2,128], index: 5, kind: output, shape index: {}]
  %s6 = sld [smem:[#allocation0]]
  $region30: #{simple_cnn_forward.3} parent=0
    _
  %s8 = ssub.s32 1, %s6
  %s9 = scalar_select 0, %s8, %s6
  $region1: #{simple_cnn_forward.3} parent=0
    #allocation2 [shape = 'u8[1024]{0}', space=vmem, size = 0x400, scoped, tag = 'output window, operand 0, single buffered']
    #allocation3 [shape = 's32[1]{0}', space=sflag, size = 0x4, scoped, tag = 'scoped memory for simple_cnn_forward.3']
    %10 = vsyncpa [#allocation3], 0
    // Predicated region
    $region2: #{simple_cnn_forward.3} parent=1 // pred_check
      _
    $region3: #{simple_cnn_forward.3} parent=1 // pred_check_branch
      %12 = sbr.rel (0) target = $region5
    $region4: #{simple_cnn_forward.3} parent=1 // pred_region
      _
    $region5: #{simple_cnn_forward.3} parent=1 // pred_fallthru
      _
    // Predicated region
    $region6: #{simple_cnn_forward.3} parent=1 // pred_check
      _
    $region7: #{simple_cnn_forward.3} parent=1 // pred_check_branch
      %14 = sbr.rel (0) target = $region9
    $region8: #{simple_cnn_forward.3} parent=1 // pred_region
      _
    $region9: #{simple_cnn_forward.3} parent=1 // pred_fallthru
      _
    // Predicated region
    $region10: #{simple_cnn_forward.3} parent=1 // pred_check
      _
    $region11: #{simple_cnn_forward.3} parent=1 // pred_check_branch
      %16 = sbr.rel (0) target = $region13
    $region12: #{simple_cnn_forward.3} parent=1 // pred_region
      _
    $region13: #{simple_cnn_forward.3} parent=1 // pred_fallthru
      _
    // Predicated region
    $region14: #{simple_cnn_forward.3} parent=1 // pred_check
      _
    $region15: #{simple_cnn_forward.3} parent=1 // pred_check_branch
      %18 = sbr.rel (0) target = $region17
    $region16: #{simple_cnn_forward.3} parent=1 // pred_region
      _
    $region17: #{simple_cnn_forward.3} parent=1 // pred_fallthru
      _
    // Predicated region
    $region18: #{simple_cnn_forward.3} parent=1 // pred_check
      _
    $region19: #{simple_cnn_forward.3} parent=1 // pred_check_branch
      %20 = sbr.rel (0) target = $region21
    $region20: #{simple_cnn_forward.3} parent=1 // pred_region
      _
    $region21: #{simple_cnn_forward.3} parent=1 // pred_fallthru
      _
    %v21 = vld [vmem:[%s0] sm:$0xff]
    %v22 = vld [vmem:[%s0 + $0x8] sm:$0xff]
    %v23 = vld [vmem:[%s1] sm:$0xff]
    %v24 = vld [vmem:[%s1 + $0x8] sm:$0xff]
    %v25 = vld [vmem:[%s1 + $0x10] sm:$0xff]
    %v26 = vld [vmem:[%s1 + $0x18] sm:$0xff]
    %v27 = vld [vmem:[%s1 + $0x20] sm:$0xff]
    %v28 = vld [vmem:[%s1 + $0x28] sm:$0xff]
    %v29 = vld [vmem:[%s1 + $0x30] sm:$0xff]
    %v30 = vld [vmem:[%s1 + $0x38] sm:$0xff]
    %v31 = vld [vmem:[%s1 + $0x40] sm:$0xff]
    %v32 = vld [vmem:[%s1 + $0x48] sm:$0xff]
    %v33 = vld [vmem:[%s1 + $0x50] sm:$0xff]
    %v34 = vld [vmem:[%s1 + $0x58] sm:$0xff]
    %v35 = vld [vmem:[%s1 + $0x60] sm:$0xff]
    %v36 = vld [vmem:[%s1 + $0x68] sm:$0xff]
    %v37 = vld [vmem:[%s1 + $0x70] sm:$0xff]
    %v38 = vld [vmem:[%s1 + $0x78] sm:$0xff]
    %v39 = vld [vmem:[%s1 + $0x80] sm:$0xff]
    %v40 = vld [vmem:[%s1 + $0x88] sm:$0xff]
    %v41 = vld [vmem:[%s1 + $0x90] sm:$0xff]
    %v42 = vld [vmem:[%s1 + $0x98] sm:$0xff]
    %v43 = vld [vmem:[%s1 + $0xa0] sm:$0xff]
    %v44 = vld [vmem:[%s1 + $0xa8] sm:$0xff]
    %v45 = vld [vmem:[%s1 + $0xb0] sm:$0xff]
    %v46 = vld [vmem:[%s1 + $0xb8] sm:$0xff]
    %v47 = vld [vmem:[%s1 + $0xc0] sm:$0xff]
    %v48 = vld [vmem:[%s1 + $0xc8] sm:$0xff]
    %v49 = vld [vmem:[%s1 + $0xd0] sm:$0xff]
    %v50 = vld [vmem:[%s1 + $0xd8] sm:$0xff]
    %v51 = vld [vmem:[%s1 + $0xe0] sm:$0xff]
    %v52 = vld [vmem:[%s1 + $0xe8] sm:$0xff]
    %v53 = vld [vmem:[%s1 + $0xf0] sm:$0xff]
    %v54 = vld [vmem:[%s1 + $0xf8] sm:$0xff]
    %v55 = vld [vmem:[%s1 + $0x100] sm:$0xff]
    %v56 = vld [vmem:[%s1 + $0x108] sm:$0xff]
    %v57 = vld [vmem:[%s1 + $0x110] sm:$0xff]
    %v58 = vld [vmem:[%s1 + $0x118] sm:$0xff]
    %v59 = vld [vmem:[%s1 + $0x120] sm:$0xff]
    %v60 = vld [vmem:[%s1 + $0x128] sm:$0xff]
    %v61 = vld [vmem:[%s1 + $0x130] sm:$0xff]
    %v62 = vld [vmem:[%s1 + $0x138] sm:$0xff]
    %v63 = vld [vmem:[%s1 + $0x140] sm:$0xff]
    %v64 = vld [vmem:[%s1 + $0x148] sm:$0xff]
    %v65 = vld [vmem:[%s1 + $0x150] sm:$0xff]
    %v66 = vld [vmem:[%s1 + $0x158] sm:$0xff]
    %v67 = vld [vmem:[%s1 + $0x160] sm:$0xff]
    %v68 = vld [vmem:[%s1 + $0x168] sm:$0xff]
    %v69 = vld [vmem:[%s1 + $0x170] sm:$0xff]
    %v70 = vld [vmem:[%s1 + $0x178] sm:$0xff]
    %v71 = vld [vmem:[%s1 + $0x180] sm:$0xff]
    %v72 = vld [vmem:[%s1 + $0x188] sm:$0xff]
    %v73 = vld [vmem:[%s1 + $0x190] sm:$0xff]
    %v74 = vld [vmem:[%s1 + $0x198] sm:$0xff]
    %v75 = vld [vmem:[%s1 + $0x1a0] sm:$0xff]
    %v76 = vld [vmem:[%s1 + $0x1a8] sm:$0xff]
    %v77 = vld [vmem:[%s1 + $0x1b0] sm:$0xff]
    %v78 = vld [vmem:[%s1 + $0x1b8] sm:$0xff]
    %v79 = vld [vmem:[%s1 + $0x1c0] sm:$0xff]
    %v80 = vld [vmem:[%s1 + $0x1c8] sm:$0xff]
    %v81 = vld [vmem:[%s1 + $0x1d0] sm:$0xff]
    %v82 = vld [vmem:[%s1 + $0x1d8] sm:$0xff]
    %v83 = vld [vmem:[%s1 + $0x1e0] sm:$0xff]
    %v84 = vld [vmem:[%s1 + $0x1e8] sm:$0xff]
    %v85 = vld [vmem:[%s1 + $0x1f0] sm:$0xff]
    %v86 = vld [vmem:[%s1 + $0x1f8] sm:$0xff]
    %v87 = vld [vmem:[%s1 + $0x200] sm:$0xff]
    %v88 = vld [vmem:[%s1 + $0x208] sm:$0xff]
    %v89 = vld [vmem:[%s1 + $0x210] sm:$0xff]
    %v90 = vld [vmem:[%s1 + $0x218] sm:$0xff]
    %v91 = vld [vmem:[%s1 + $0x220] sm:$0xff]
    %v92 = vld [vmem:[%s1 + $0x228] sm:$0xff]
    %v93 = vld [vmem:[%s1 + $0x230] sm:$0xff]
    %v94 = vld [vmem:[%s1 + $0x238] sm:$0xff]
    %v95 = vld [vmem:[%s1 + $0x240] sm:$0xff]
    %v96 = vld [vmem:[%s1 + $0x248] sm:$0xff]
    %v97 = vld [vmem:[%s1 + $0x250] sm:$0xff]
    %v98 = vld [vmem:[%s1 + $0x258] sm:$0xff]
    %v99 = vld [vmem:[%s1 + $0x260] sm:$0xff]
    %v100 = vld [vmem:[%s1 + $0x268] sm:$0xff]
    %v101 = vld [vmem:[%s1 + $0x270] sm:$0xff]
    %v102 = vld [vmem:[%s1 + $0x278] sm:$0xff]
    %v103 = vld [vmem:[%s1 + $0x280] sm:$0xff]
    %v104 = vld [vmem:[%s1 + $0x288] sm:$0xff]
    %v105 = vld [vmem:[%s1 + $0x290] sm:$0xff]
    %v106 = vld [vmem:[%s1 + $0x298] sm:$0xff]
    %v107 = vld [vmem:[%s1 + $0x2a0] sm:$0xff]
    %v108 = vld [vmem:[%s1 + $0x2a8] sm:$0xff]
    %v109 = vld [vmem:[%s1 + $0x2b0] sm:$0xff]
    %v110 = vld [vmem:[%s1 + $0x2b8] sm:$0xff]
    %v111 = vld [vmem:[%s1 + $0x2c0] sm:$0xff]
    %v112 = vld [vmem:[%s1 + $0x2c8] sm:$0xff]
    %v113 = vld [vmem:[%s1 + $0x2d0] sm:$0xff]
    %v114 = vld [vmem:[%s1 + $0x2d8] sm:$0xff]
    %v115 = vld [vmem:[%s1 + $0x2e0] sm:$0xff]
    %v116 = vld [vmem:[%s1 + $0x2e8] sm:$0xff]
    %v117 = vld [vmem:[%s1 + $0x2f0] sm:$0xff]
    %v118 = vld [vmem:[%s1 + $0x2f8] sm:$0xff]
    %v119 = vld [vmem:[%s1 + $0x300] sm:$0xff]
    %v120 = vld [vmem:[%s1 + $0x308] sm:$0xff]
    %v121 = vld [vmem:[%s1 + $0x310] sm:$0xff]
    %v122 = vld [vmem:[%s1 + $0x318] sm:$0xff]
    %v123 = vld [vmem:[%s1 + $0x320] sm:$0xff]
    %v124 = vld [vmem:[%s1 + $0x328] sm:$0xff]
    %v125 = vld [vmem:[%s1 + $0x330] sm:$0xff]
    %v126 = vld [vmem:[%s1 + $0x338] sm:$0xff]
    %v127 = vld [vmem:[%s1 + $0x340] sm:$0xff]
    %v128 = vld [vmem:[%s1 + $0x348] sm:$0xff]
    %v129 = vld [vmem:[%s1 + $0x350] sm:$0xff]
    %v130 = vld [vmem:[%s1 + $0x358] sm:$0xff]
    %v131 = vld [vmem:[%s1 + $0x360] sm:$0xff]
    %v132 = vld [vmem:[%s1 + $0x368] sm:$0xff]
    %v133 = vld [vmem:[%s1 + $0x370] sm:$0xff]
    %v134 = vld [vmem:[%s1 + $0x378] sm:$0xff]
    %v135 = vld [vmem:[%s1 + $0x380] sm:$0xff]
    %v136 = vld [vmem:[%s1 + $0x388] sm:$0xff]
    %v137 = vld [vmem:[%s1 + $0x390] sm:$0xff]
    %v138 = vld [vmem:[%s1 + $0x398] sm:$0xff]
    %v139 = vld [vmem:[%s1 + $0x3a0] sm:$0xff]
    %v140 = vld [vmem:[%s1 + $0x3a8] sm:$0xff]
    %v141 = vld [vmem:[%s1 + $0x3b0] sm:$0xff]
    %v142 = vld [vmem:[%s1 + $0x3b8] sm:$0xff]
    %v143 = vld [vmem:[%s1 + $0x3c0] sm:$0xff]
    %v144 = vld [vmem:[%s1 + $0x3c8] sm:$0xff]
    %v145 = vld [vmem:[%s1 + $0x3d0] sm:$0xff]
    %v146 = vld [vmem:[%s1 + $0x3d8] sm:$0xff]
    %v147 = vld [vmem:[%s1 + $0x3e0] sm:$0xff]
    %v148 = vld [vmem:[%s1 + $0x3e8] sm:$0xff]
    %v149 = vld [vmem:[%s1 + $0x3f0] sm:$0xff]
    %v150 = vld [vmem:[%s1 + $0x3f8] sm:$0xff]
    %v151 = vld [vmem:[%s1 + $0x400] sm:$0xff]
    %v152 = vld [vmem:[%s1 + $0x408] sm:$0xff]
    %v153 = vld [vmem:[%s1 + $0x410] sm:$0xff]
    %v154 = vld [vmem:[%s1 + $0x418] sm:$0xff]
    %v155 = vld [vmem:[%s1 + $0x420] sm:$0xff]
    %v156 = vld [vmem:[%s1 + $0x428] sm:$0xff]
    %v157 = vld [vmem:[%s1 + $0x430] sm:$0xff]
    %v158 = vld [vmem:[%s1 + $0x438] sm:$0xff]
    %v159 = vld [vmem:[%s1 + $0x440] sm:$0xff]
    %v160 = vld [vmem:[%s1 + $0x448] sm:$0xff]
    %v161 = vld [vmem:[%s1 + $0x450] sm:$0xff]
    %v162 = vld [vmem:[%s1 + $0x458] sm:$0xff]
    %v163 = vld [vmem:[%s1 + $0x460] sm:$0xff]
    %v164 = vld [vmem:[%s1 + $0x468] sm:$0xff]
    %v165 = vld [vmem:[%s1 + $0x470] sm:$0xff]
    %v166 = vld [vmem:[%s1 + $0x478] sm:$0xff]
    %v167 = vld [vmem:[%s1 + $0x480] sm:$0xff]
    %v168 = vld [vmem:[%s1 + $0x488] sm:$0xff]
    %v169 = vld [vmem:[%s1 + $0x490] sm:$0xff]
    %v170 = vld [vmem:[%s1 + $0x498] sm:$0xff]
    %v171 = vld [vmem:[%s1 + $0x4a0] sm:$0xff]
    %v172 = vld [vmem:[%s1 + $0x4a8] sm:$0xff]
    %v173 = vld [vmem:[%s1 + $0x4b0] sm:$0xff]
    %v174 = vld [vmem:[%s1 + $0x4b8] sm:$0xff]
    %v175 = vld [vmem:[%s1 + $0x4c0] sm:$0xff]
    %v176 = vld [vmem:[%s1 + $0x4c8] sm:$0xff]
    %v177 = vld [vmem:[%s1 + $0x4d0] sm:$0xff]
    %v178 = vld [vmem:[%s1 + $0x4d8] sm:$0xff]
    %v179 = vld [vmem:[%s1 + $0x4e0] sm:$0xff]
    %v180 = vld [vmem:[%s1 + $0x4e8] sm:$0xff]
    %v181 = vld [vmem:[%s1 + $0x4f0] sm:$0xff]
    %v182 = vld [vmem:[%s1 + $0x4f8] sm:$0xff]
    %v183 = vld [vmem:[%s1 + $0x500] sm:$0xff]
    %v184 = vld [vmem:[%s1 + $0x508] sm:$0xff]
    %v185 = vld [vmem:[%s1 + $0x510] sm:$0xff]
    %v186 = vld [vmem:[%s1 + $0x518] sm:$0xff]
    %v187 = vld [vmem:[%s1 + $0x520] sm:$0xff]
    %v188 = vld [vmem:[%s1 + $0x528] sm:$0xff]
    %v189 = vld [vmem:[%s1 + $0x530] sm:$0xff]
    %v190 = vld [vmem:[%s1 + $0x538] sm:$0xff]
    %v191 = vld [vmem:[%s1 + $0x540] sm:$0xff]
    %v192 = vld [vmem:[%s1 + $0x548] sm:$0xff]
    %v193 = vld [vmem:[%s1 + $0x550] sm:$0xff]
    %v194 = vld [vmem:[%s1 + $0x558] sm:$0xff]
    %v195 = vld [vmem:[%s1 + $0x560] sm:$0xff]
    %v196 = vld [vmem:[%s1 + $0x568] sm:$0xff]
    %v197 = vld [vmem:[%s1 + $0x570] sm:$0xff]
    %v198 = vld [vmem:[%s1 + $0x578] sm:$0xff]
    %v199 = vld [vmem:[%s1 + $0x580] sm:$0xff]
    %v200 = vld [vmem:[%s1 + $0x588] sm:$0xff]
    %v201 = vld [vmem:[%s1 + $0x590] sm:$0xff]
    %v202 = vld [vmem:[%s1 + $0x598] sm:$0xff]
    %v203 = vld [vmem:[%s1 + $0x5a0] sm:$0xff]
    %v204 = vld [vmem:[%s1 + $0x5a8] sm:$0xff]
    %v205 = vld [vmem:[%s1 + $0x5b0] sm:$0xff]
    %v206 = vld [vmem:[%s1 + $0x5b8] sm:$0xff]
    %v207 = vld [vmem:[%s1 + $0x5c0] sm:$0xff]
    %v208 = vld [vmem:[%s1 + $0x5c8] sm:$0xff]
    %v209 = vld [vmem:[%s1 + $0x5d0] sm:$0xff]
    %v210 = vld [vmem:[%s1 + $0x5d8] sm:$0xff]
    %v211 = vld [vmem:[%s1 + $0x5e0] sm:$0xff]
    %v212 = vld [vmem:[%s1 + $0x5e8] sm:$0xff]
    %v213 = vld [vmem:[%s1 + $0x5f0] sm:$0xff]
    %v214 = vld [vmem:[%s1 + $0x5f8] sm:$0xff]
    %v215 = vld [vmem:[%s1 + $0x600] sm:$0xff]
    %v216 = vld [vmem:[%s1 + $0x608] sm:$0xff]
    %v217 = vld [vmem:[%s1 + $0x610] sm:$0xff]
    %v218 = vld [vmem:[%s1 + $0x618] sm:$0xff]
    %v219 = vld [vmem:[%s1 + $0x620] sm:$0xff]
    %v220 = vld [vmem:[%s1 + $0x628] sm:$0xff]
    %v221 = vld [vmem:[%s1 + $0x630] sm:$0xff]
    %v222 = vld [vmem:[%s1 + $0x638] sm:$0xff]
    %v223 = vld [vmem:[%s1 + $0x640] sm:$0xff]
    %v224 = vld [vmem:[%s1 + $0x648] sm:$0xff]
    %v225 = vld [vmem:[%s1 + $0x650] sm:$0xff]
    %v226 = vld [vmem:[%s1 + $0x658] sm:$0xff]
    %v227 = vld [vmem:[%s1 + $0x660] sm:$0xff]
    %v228 = vld [vmem:[%s1 + $0x668] sm:$0xff]
    %v229 = vld [vmem:[%s1 + $0x670] sm:$0xff]
    %v230 = vld [vmem:[%s1 + $0x678] sm:$0xff]
    %v231 = vld [vmem:[%s1 + $0x680] sm:$0xff]
    %v232 = vld [vmem:[%s1 + $0x688] sm:$0xff]
    %v233 = vld [vmem:[%s1 + $0x690] sm:$0xff]
    %v234 = vld [vmem:[%s1 + $0x698] sm:$0xff]
    %v235 = vld [vmem:[%s1 + $0x6a0] sm:$0xff]
    %v236 = vld [vmem:[%s1 + $0x6a8] sm:$0xff]
    %v237 = vld [vmem:[%s1 + $0x6b0] sm:$0xff]
    %v238 = vld [vmem:[%s1 + $0x6b8] sm:$0xff]
    %v239 = vld [vmem:[%s1 + $0x6c0] sm:$0xff]
    %v240 = vld [vmem:[%s1 + $0x6c8] sm:$0xff]
    %v241 = vld [vmem:[%s1 + $0x6d0] sm:$0xff]
    %v242 = vld [vmem:[%s1 + $0x6d8] sm:$0xff]
    %v243 = vld [vmem:[%s1 + $0x6e0] sm:$0xff]
    %v244 = vld [vmem:[%s1 + $0x6e8] sm:$0xff]
    %v245 = vld [vmem:[%s1 + $0x6f0] sm:$0xff]
    %v246 = vld [vmem:[%s1 + $0x6f8] sm:$0xff]
    %v247 = vld [vmem:[%s1 + $0x700] sm:$0xff]
    %v248 = vld [vmem:[%s1 + $0x708] sm:$0xff]
    %v249 = vld [vmem:[%s1 + $0x710] sm:$0xff]
    %v250 = vld [vmem:[%s1 + $0x718] sm:$0xff]
    %v251 = vld [vmem:[%s1 + $0x720] sm:$0xff]
    %v252 = vld [vmem:[%s1 + $0x728] sm:$0xff]
    %v253 = vld [vmem:[%s1 + $0x730] sm:$0xff]
    %v254 = vld [vmem:[%s1 + $0x738] sm:$0xff]
    %v255 = vld [vmem:[%s1 + $0x740] sm:$0xff]
    %v256 = vld [vmem:[%s1 + $0x748] sm:$0xff]
    %v257 = vld [vmem:[%s1 + $0x750] sm:$0xff]
    %v258 = vld [vmem:[%s1 + $0x758] sm:$0xff]
    %v259 = vld [vmem:[%s1 + $0x760] sm:$0xff]
    %v260 = vld [vmem:[%s1 + $0x768] sm:$0xff]
    %v261 = vld [vmem:[%s1 + $0x770] sm:$0xff]
    %v262 = vld [vmem:[%s1 + $0x778] sm:$0xff]
    %v263 = vld [vmem:[%s1 + $0x780] sm:$0xff]
    %v264 = vld [vmem:[%s1 + $0x788] sm:$0xff]
    %v265 = vld [vmem:[%s1 + $0x790] sm:$0xff]
    %v266 = vld [vmem:[%s1 + $0x798] sm:$0xff]
    %v267 = vld [vmem:[%s1 + $0x7a0] sm:$0xff]
    %v268 = vld [vmem:[%s1 + $0x7a8] sm:$0xff]
    %v269 = vld [vmem:[%s1 + $0x7b0] sm:$0xff]
    %v270 = vld [vmem:[%s1 + $0x7b8] sm:$0xff]
    %v271 = vld [vmem:[%s1 + $0x7c0] sm:$0xff]
    %v272 = vld [vmem:[%s1 + $0x7c8] sm:$0xff]
    %v273 = vld [vmem:[%s1 + $0x7d0] sm:$0xff]
    %v274 = vld [vmem:[%s1 + $0x7d8] sm:$0xff]
    %v275 = vld [vmem:[%s1 + $0x7e0] sm:$0xff]
    %v276 = vld [vmem:[%s1 + $0x7e8] sm:$0xff]
    %v277 = vld [vmem:[%s1 + $0x7f0] sm:$0xff]
    %v278 = vld [vmem:[%s1 + $0x7f8] sm:$0xff]
    %v279 = vld [vmem:[%s2] sm:$0x3]
    %v281 = vperm.slane %v279, 0
    %v282 = vperm.slane %v279, 1
    %286 = vst [vmem:[#allocation1] ss:$9 sm:$0xff] %v21
    %v287 = vld [vmem:[#allocation1] sm:$0xff]
    %v288 = vld [vmem:[#allocation1 + $0x9] sm:$0xff]
    %v289 = vld [vmem:[#allocation1 + $0x12] sm:$0xff]
    %v290 = vld [vmem:[#allocation1 + $0x1b] sm:$0xff]
    %v291 = vld [vmem:[#allocation1 + $0x24] sm:$0xff]
    %v292 = vld [vmem:[#allocation1 + $0x2d] sm:$0xff]
    %v293 = vld [vmem:[#allocation1 + $0x36] sm:$0xff]
    %v294 = vld [vmem:[#allocation1 + $0x3f] sm:$0xff]
    %296 = vst [vmem:[#allocation1] ss:$9 sm:$0xff] %v22
    %v297 = vld [vmem:[#allocation1] sm:$0xff]
    %v298 = vld [vmem:[#allocation1 + $0x9] sm:$0xff]
    %v299 = vld [vmem:[#allocation1 + $0x12] sm:$0xff]
    %v300 = vld [vmem:[#allocation1 + $0x1b] sm:$0xff]
    %v301 = vld [vmem:[#allocation1 + $0x24] sm:$0xff]
    %v302 = vld [vmem:[#allocation1 + $0x2d] sm:$0xff]
    %v303 = vld [vmem:[#allocation1 + $0x36] sm:$0xff]
    %v304 = vld [vmem:[#allocation1 + $0x3f] sm:$0xff]
    %v577 = vunpack.c.l.b16 %v23
    %v578 = vunpack.c.h.b16 %v23
    %v579 = vunpack.c.l.b16 %v24
    %v580 = vunpack.c.h.b16 %v24
    %v581 = vunpack.c.l.b16 %v25
    %v582 = vunpack.c.h.b16 %v25
    %v583 = vunpack.c.l.b16 %v26
    %v584 = vunpack.c.h.b16 %v26
    %v585 = vunpack.c.l.b16 %v27
    %v586 = vunpack.c.h.b16 %v27
    %v587 = vunpack.c.l.b16 %v28
    %v588 = vunpack.c.h.b16 %v28
    %v589 = vunpack.c.l.b16 %v29
    %v590 = vunpack.c.h.b16 %v29
    %v591 = vunpack.c.l.b16 %v30
    %v592 = vunpack.c.h.b16 %v30
    %v593 = vunpack.c.l.b16 %v31
    %v594 = vunpack.c.h.b16 %v31
    %v595 = vunpack.c.l.b16 %v32
    %v596 = vunpack.c.h.b16 %v32
    %v597 = vunpack.c.l.b16 %v33
    %v598 = vunpack.c.h.b16 %v33
    %v599 = vunpack.c.l.b16 %v34
    %v600 = vunpack.c.h.b16 %v34
    %v601 = vunpack.c.l.b16 %v35
    %v602 = vunpack.c.h.b16 %v35
    %v603 = vunpack.c.l.b16 %v36
    %v604 = vunpack.c.h.b16 %v36
    %v605 = vunpack.c.l.b16 %v37
    %v606 = vunpack.c.h.b16 %v37
    %v607 = vunpack.c.l.b16 %v38
    %v608 = vunpack.c.h.b16 %v38
    %v609 = vunpack.c.l.b16 %v39
    %v610 = vunpack.c.h.b16 %v39
    %v611 = vunpack.c.l.b16 %v40
    %v612 = vunpack.c.h.b16 %v40
    %v613 = vunpack.c.l.b16 %v41
    %v614 = vunpack.c.h.b16 %v41
    %v615 = vunpack.c.l.b16 %v42
    %v616 = vunpack.c.h.b16 %v42
    %v617 = vunpack.c.l.b16 %v43
    %v618 = vunpack.c.h.b16 %v43
    %v619 = vunpack.c.l.b16 %v44
    %v620 = vunpack.c.h.b16 %v44
    %v621 = vunpack.c.l.b16 %v45
    %v622 = vunpack.c.h.b16 %v45
    %v623 = vunpack.c.l.b16 %v46
    %v624 = vunpack.c.h.b16 %v46
    %v625 = vunpack.c.l.b16 %v47
    %v626 = vunpack.c.h.b16 %v47
    %v627 = vunpack.c.l.b16 %v48
    %v628 = vunpack.c.h.b16 %v48
    %v629 = vunpack.c.l.b16 %v49
    %v630 = vunpack.c.h.b16 %v49
    %v631 = vunpack.c.l.b16 %v50
    %v632 = vunpack.c.h.b16 %v50
    %v633 = vunpack.c.l.b16 %v51
    %v634 = vunpack.c.h.b16 %v51
    %v635 = vunpack.c.l.b16 %v52
    %v636 = vunpack.c.h.b16 %v52
    %v637 = vunpack.c.l.b16 %v53
    %v638 = vunpack.c.h.b16 %v53
    %v639 = vunpack.c.l.b16 %v54
    %v640 = vunpack.c.h.b16 %v54
    %v641 = vunpack.c.l.b16 %v55
    %v642 = vunpack.c.h.b16 %v55
    %v643 = vunpack.c.l.b16 %v56
    %v644 = vunpack.c.h.b16 %v56
    %v645 = vunpack.c.l.b16 %v57
    %v646 = vunpack.c.h.b16 %v57
    %v647 = vunpack.c.l.b16 %v58
    %v648 = vunpack.c.h.b16 %v58
    %v649 = vunpack.c.l.b16 %v59
    %v650 = vunpack.c.h.b16 %v59
    %v651 = vunpack.c.l.b16 %v60
    %v652 = vunpack.c.h.b16 %v60
    %v653 = vunpack.c.l.b16 %v61
    %v654 = vunpack.c.h.b16 %v61
    %v655 = vunpack.c.l.b16 %v62
    %v656 = vunpack.c.h.b16 %v62
    %v657 = vunpack.c.l.b16 %v63
    %v658 = vunpack.c.h.b16 %v63
    %v659 = vunpack.c.l.b16 %v64
    %v660 = vunpack.c.h.b16 %v64
    %v661 = vunpack.c.l.b16 %v65
    %v662 = vunpack.c.h.b16 %v65
    %v663 = vunpack.c.l.b16 %v66
    %v664 = vunpack.c.h.b16 %v66
    %v665 = vunpack.c.l.b16 %v67
    %v666 = vunpack.c.h.b16 %v67
    %v667 = vunpack.c.l.b16 %v68
    %v668 = vunpack.c.h.b16 %v68
    %v669 = vunpack.c.l.b16 %v69
    %v670 = vunpack.c.h.b16 %v69
    %v671 = vunpack.c.l.b16 %v70
    %v672 = vunpack.c.h.b16 %v70
    %v673 = vunpack.c.l.b16 %v71
    %v674 = vunpack.c.h.b16 %v71
    %v675 = vunpack.c.l.b16 %v72
    %v676 = vunpack.c.h.b16 %v72
    %v677 = vunpack.c.l.b16 %v73
    %v678 = vunpack.c.h.b16 %v73
    %v679 = vunpack.c.l.b16 %v74
    %v680 = vunpack.c.h.b16 %v74
    %v681 = vunpack.c.l.b16 %v75
    %v682 = vunpack.c.h.b16 %v75
    %v683 = vunpack.c.l.b16 %v76
    %v684 = vunpack.c.h.b16 %v76
    %v685 = vunpack.c.l.b16 %v77
    %v686 = vunpack.c.h.b16 %v77
    %v687 = vunpack.c.l.b16 %v78
    %v688 = vunpack.c.h.b16 %v78
    %v689 = vunpack.c.l.b16 %v79
    %v690 = vunpack.c.h.b16 %v79
    %v691 = vunpack.c.l.b16 %v80
    %v692 = vunpack.c.h.b16 %v80
    %v693 = vunpack.c.l.b16 %v81
    %v694 = vunpack.c.h.b16 %v81
    %v695 = vunpack.c.l.b16 %v82
    %v696 = vunpack.c.h.b16 %v82
    %v697 = vunpack.c.l.b16 %v83
    %v698 = vunpack.c.h.b16 %v83
    %v699 = vunpack.c.l.b16 %v84
    %v700 = vunpack.c.h.b16 %v84
    %v701 = vunpack.c.l.b16 %v85
    %v702 = vunpack.c.h.b16 %v85
    %v703 = vunpack.c.l.b16 %v86
    %v704 = vunpack.c.h.b16 %v86
    %v705 = vunpack.c.l.b16 %v87
    %v706 = vunpack.c.h.b16 %v87
    %v707 = vunpack.c.l.b16 %v88
    %v708 = vunpack.c.h.b16 %v88
    %v709 = vunpack.c.l.b16 %v89
    %v710 = vunpack.c.h.b16 %v89
    %v711 = vunpack.c.l.b16 %v90
    %v712 = vunpack.c.h.b16 %v90
    %v713 = vunpack.c.l.b16 %v91
    %v714 = vunpack.c.h.b16 %v91
    %v715 = vunpack.c.l.b16 %v92
    %v716 = vunpack.c.h.b16 %v92
    %v717 = vunpack.c.l.b16 %v93
    %v718 = vunpack.c.h.b16 %v93
    %v719 = vunpack.c.l.b16 %v94
    %v720 = vunpack.c.h.b16 %v94
    %v721 = vunpack.c.l.b16 %v95
    %v722 = vunpack.c.h.b16 %v95
    %v723 = vunpack.c.l.b16 %v96
    %v724 = vunpack.c.h.b16 %v96
    %v725 = vunpack.c.l.b16 %v97
    %v726 = vunpack.c.h.b16 %v97
    %v727 = vunpack.c.l.b16 %v98
    %v728 = vunpack.c.h.b16 %v98
    %v729 = vunpack.c.l.b16 %v99
    %v730 = vunpack.c.h.b16 %v99
    %v731 = vunpack.c.l.b16 %v100
    %v732 = vunpack.c.h.b16 %v100
    %v733 = vunpack.c.l.b16 %v101
    %v734 = vunpack.c.h.b16 %v101
    %v735 = vunpack.c.l.b16 %v102
    %v736 = vunpack.c.h.b16 %v102
    %v737 = vunpack.c.l.b16 %v103
    %v738 = vunpack.c.h.b16 %v103
    %v739 = vunpack.c.l.b16 %v104
    %v740 = vunpack.c.h.b16 %v104
    %v741 = vunpack.c.l.b16 %v105
    %v742 = vunpack.c.h.b16 %v105
    %v743 = vunpack.c.l.b16 %v106
    %v744 = vunpack.c.h.b16 %v106
    %v745 = vunpack.c.l.b16 %v107
    %v746 = vunpack.c.h.b16 %v107
    %v747 = vunpack.c.l.b16 %v108
    %v748 = vunpack.c.h.b16 %v108
    %v749 = vunpack.c.l.b16 %v109
    %v750 = vunpack.c.h.b16 %v109
    %v751 = vunpack.c.l.b16 %v110
    %v752 = vunpack.c.h.b16 %v110
    %v753 = vunpack.c.l.b16 %v111
    %v754 = vunpack.c.h.b16 %v111
    %v755 = vunpack.c.l.b16 %v112
    %v756 = vunpack.c.h.b16 %v112
    %v757 = vunpack.c.l.b16 %v113
    %v758 = vunpack.c.h.b16 %v113
    %v759 = vunpack.c.l.b16 %v114
    %v760 = vunpack.c.h.b16 %v114
    %v761 = vunpack.c.l.b16 %v115
    %v762 = vunpack.c.h.b16 %v115
    %v763 = vunpack.c.l.b16 %v116
    %v764 = vunpack.c.h.b16 %v116
    %v765 = vunpack.c.l.b16 %v117
    %v766 = vunpack.c.h.b16 %v117
    %v767 = vunpack.c.l.b16 %v118
    %v768 = vunpack.c.h.b16 %v118
    %v769 = vunpack.c.l.b16 %v119
    %v770 = vunpack.c.h.b16 %v119
    %v771 = vunpack.c.l.b16 %v120
    %v772 = vunpack.c.h.b16 %v120
    %v773 = vunpack.c.l.b16 %v121
    %v774 = vunpack.c.h.b16 %v121
    %v775 = vunpack.c.l.b16 %v122
    %v776 = vunpack.c.h.b16 %v122
    %v777 = vunpack.c.l.b16 %v123
    %v778 = vunpack.c.h.b16 %v123
    %v779 = vunpack.c.l.b16 %v124
    %v780 = vunpack.c.h.b16 %v124
    %v781 = vunpack.c.l.b16 %v125
    %v782 = vunpack.c.h.b16 %v125
    %v783 = vunpack.c.l.b16 %v126
    %v784 = vunpack.c.h.b16 %v126
    %v785 = vunpack.c.l.b16 %v127
    %v786 = vunpack.c.h.b16 %v127
    %v787 = vunpack.c.l.b16 %v128
    %v788 = vunpack.c.h.b16 %v128
    %v789 = vunpack.c.l.b16 %v129
    %v790 = vunpack.c.h.b16 %v129
    %v791 = vunpack.c.l.b16 %v130
    %v792 = vunpack.c.h.b16 %v130
    %v793 = vunpack.c.l.b16 %v131
    %v794 = vunpack.c.h.b16 %v131
    %v795 = vunpack.c.l.b16 %v132
    %v796 = vunpack.c.h.b16 %v132
    %v797 = vunpack.c.l.b16 %v133
    %v798 = vunpack.c.h.b16 %v133
    %v799 = vunpack.c.l.b16 %v134
    %v800 = vunpack.c.h.b16 %v134
    %v801 = vunpack.c.l.b16 %v135
    %v802 = vunpack.c.h.b16 %v135
    %v803 = vunpack.c.l.b16 %v136
    %v804 = vunpack.c.h.b16 %v136
    %v805 = vunpack.c.l.b16 %v137
    %v806 = vunpack.c.h.b16 %v137
    %v807 = vunpack.c.l.b16 %v138
    %v808 = vunpack.c.h.b16 %v138
    %v809 = vunpack.c.l.b16 %v139
    %v810 = vunpack.c.h.b16 %v139
    %v811 = vunpack.c.l.b16 %v140
    %v812 = vunpack.c.h.b16 %v140
    %v813 = vunpack.c.l.b16 %v141
    %v814 = vunpack.c.h.b16 %v141
    %v815 = vunpack.c.l.b16 %v142
    %v816 = vunpack.c.h.b16 %v142
    %v817 = vunpack.c.l.b16 %v143
    %v818 = vunpack.c.h.b16 %v143
    %v819 = vunpack.c.l.b16 %v144
    %v820 = vunpack.c.h.b16 %v144
    %v821 = vunpack.c.l.b16 %v145
    %v822 = vunpack.c.h.b16 %v145
    %v823 = vunpack.c.l.b16 %v146
    %v824 = vunpack.c.h.b16 %v146
    %v825 = vunpack.c.l.b16 %v147
    %v826 = vunpack.c.h.b16 %v147
    %v827 = vunpack.c.l.b16 %v148
    %v828 = vunpack.c.h.b16 %v148
    %v829 = vunpack.c.l.b16 %v149
    %v830 = vunpack.c.h.b16 %v149
    %v831 = vunpack.c.l.b16 %v150
    %v832 = vunpack.c.h.b16 %v150
    %v833 = vunpack.c.l.b16 %v151
    %v834 = vunpack.c.h.b16 %v151
    %v835 = vunpack.c.l.b16 %v152
    %v836 = vunpack.c.h.b16 %v152
    %v837 = vunpack.c.l.b16 %v153
    %v838 = vunpack.c.h.b16 %v153
    %v839 = vunpack.c.l.b16 %v154
    %v840 = vunpack.c.h.b16 %v154
    %v841 = vunpack.c.l.b16 %v155
    %v842 = vunpack.c.h.b16 %v155
    %v843 = vunpack.c.l.b16 %v156
    %v844 = vunpack.c.h.b16 %v156
    %v845 = vunpack.c.l.b16 %v157
    %v846 = vunpack.c.h.b16 %v157
    %v847 = vunpack.c.l.b16 %v158
    %v848 = vunpack.c.h.b16 %v158
    %v849 = vunpack.c.l.b16 %v159
    %v850 = vunpack.c.h.b16 %v159
    %v851 = vunpack.c.l.b16 %v160
    %v852 = vunpack.c.h.b16 %v160
    %v853 = vunpack.c.l.b16 %v161
    %v854 = vunpack.c.h.b16 %v161
    %v855 = vunpack.c.l.b16 %v162
    %v856 = vunpack.c.h.b16 %v162
    %v857 = vunpack.c.l.b16 %v163
    %v858 = vunpack.c.h.b16 %v163
    %v859 = vunpack.c.l.b16 %v164
    %v860 = vunpack.c.h.b16 %v164
    %v861 = vunpack.c.l.b16 %v165
    %v862 = vunpack.c.h.b16 %v165
    %v863 = vunpack.c.l.b16 %v166
    %v864 = vunpack.c.h.b16 %v166
    %v865 = vunpack.c.l.b16 %v167
    %v866 = vunpack.c.h.b16 %v167
    %v867 = vunpack.c.l.b16 %v168
    %v868 = vunpack.c.h.b16 %v168
    %v869 = vunpack.c.l.b16 %v169
    %v870 = vunpack.c.h.b16 %v169
    %v871 = vunpack.c.l.b16 %v170
    %v872 = vunpack.c.h.b16 %v170
    %v873 = vunpack.c.l.b16 %v171
    %v874 = vunpack.c.h.b16 %v171
    %v875 = vunpack.c.l.b16 %v172
    %v876 = vunpack.c.h.b16 %v172
    %v877 = vunpack.c.l.b16 %v173
    %v878 = vunpack.c.h.b16 %v173
    %v879 = vunpack.c.l.b16 %v174
    %v880 = vunpack.c.h.b16 %v174
    %v881 = vunpack.c.l.b16 %v175
    %v882 = vunpack.c.h.b16 %v175
    %v883 = vunpack.c.l.b16 %v176
    %v884 = vunpack.c.h.b16 %v176
    %v885 = vunpack.c.l.b16 %v177
    %v886 = vunpack.c.h.b16 %v177
    %v887 = vunpack.c.l.b16 %v178
    %v888 = vunpack.c.h.b16 %v178
    %v889 = vunpack.c.l.b16 %v179
    %v890 = vunpack.c.h.b16 %v179
    %v891 = vunpack.c.l.b16 %v180
    %v892 = vunpack.c.h.b16 %v180
    %v893 = vunpack.c.l.b16 %v181
    %v894 = vunpack.c.h.b16 %v181
    %v895 = vunpack.c.l.b16 %v182
    %v896 = vunpack.c.h.b16 %v182
    %v897 = vunpack.c.l.b16 %v183
    %v898 = vunpack.c.h.b16 %v183
    %v899 = vunpack.c.l.b16 %v184
    %v900 = vunpack.c.h.b16 %v184
    %v901 = vunpack.c.l.b16 %v185
    %v902 = vunpack.c.h.b16 %v185
    %v903 = vunpack.c.l.b16 %v186
    %v904 = vunpack.c.h.b16 %v186
    %v905 = vunpack.c.l.b16 %v187
    %v906 = vunpack.c.h.b16 %v187
    %v907 = vunpack.c.l.b16 %v188
    %v908 = vunpack.c.h.b16 %v188
    %v909 = vunpack.c.l.b16 %v189
    %v910 = vunpack.c.h.b16 %v189
    %v911 = vunpack.c.l.b16 %v190
    %v912 = vunpack.c.h.b16 %v190
    %v913 = vunpack.c.l.b16 %v191
    %v914 = vunpack.c.h.b16 %v191
    %v915 = vunpack.c.l.b16 %v192
    %v916 = vunpack.c.h.b16 %v192
    %v917 = vunpack.c.l.b16 %v193
    %v918 = vunpack.c.h.b16 %v193
    %v919 = vunpack.c.l.b16 %v194
    %v920 = vunpack.c.h.b16 %v194
    %v921 = vunpack.c.l.b16 %v195
    %v922 = vunpack.c.h.b16 %v195
    %v923 = vunpack.c.l.b16 %v196
    %v924 = vunpack.c.h.b16 %v196
    %v925 = vunpack.c.l.b16 %v197
    %v926 = vunpack.c.h.b16 %v197
    %v927 = vunpack.c.l.b16 %v198
    %v928 = vunpack.c.h.b16 %v198
    %v929 = vunpack.c.l.b16 %v199
    %v930 = vunpack.c.h.b16 %v199
    %v931 = vunpack.c.l.b16 %v200
    %v932 = vunpack.c.h.b16 %v200
    %v933 = vunpack.c.l.b16 %v201
    %v934 = vunpack.c.h.b16 %v201
    %v935 = vunpack.c.l.b16 %v202
    %v936 = vunpack.c.h.b16 %v202
    %v937 = vunpack.c.l.b16 %v203
    %v938 = vunpack.c.h.b16 %v203
    %v939 = vunpack.c.l.b16 %v204
    %v940 = vunpack.c.h.b16 %v204
    %v941 = vunpack.c.l.b16 %v205
    %v942 = vunpack.c.h.b16 %v205
    %v943 = vunpack.c.l.b16 %v206
    %v944 = vunpack.c.h.b16 %v206
    %v945 = vunpack.c.l.b16 %v207
    %v946 = vunpack.c.h.b16 %v207
    %v947 = vunpack.c.l.b16 %v208
    %v948 = vunpack.c.h.b16 %v208
    %v949 = vunpack.c.l.b16 %v209
    %v950 = vunpack.c.h.b16 %v209
    %v951 = vunpack.c.l.b16 %v210
    %v952 = vunpack.c.h.b16 %v210
    %v953 = vunpack.c.l.b16 %v211
    %v954 = vunpack.c.h.b16 %v211
    %v955 = vunpack.c.l.b16 %v212
    %v956 = vunpack.c.h.b16 %v212
    %v957 = vunpack.c.l.b16 %v213
    %v958 = vunpack.c.h.b16 %v213
    %v959 = vunpack.c.l.b16 %v214
    %v960 = vunpack.c.h.b16 %v214
    %v961 = vunpack.c.l.b16 %v215
    %v962 = vunpack.c.h.b16 %v215
    %v963 = vunpack.c.l.b16 %v216
    %v964 = vunpack.c.h.b16 %v216
    %v965 = vunpack.c.l.b16 %v217
    %v966 = vunpack.c.h.b16 %v217
    %v967 = vunpack.c.l.b16 %v218
    %v968 = vunpack.c.h.b16 %v218
    %v969 = vunpack.c.l.b16 %v219
    %v970 = vunpack.c.h.b16 %v219
    %v971 = vunpack.c.l.b16 %v220
    %v972 = vunpack.c.h.b16 %v220
    %v973 = vunpack.c.l.b16 %v221
    %v974 = vunpack.c.h.b16 %v221
    %v975 = vunpack.c.l.b16 %v222
    %v976 = vunpack.c.h.b16 %v222
    %v977 = vunpack.c.l.b16 %v223
    %v978 = vunpack.c.h.b16 %v223
    %v979 = vunpack.c.l.b16 %v224
    %v980 = vunpack.c.h.b16 %v224
    %v981 = vunpack.c.l.b16 %v225
    %v982 = vunpack.c.h.b16 %v225
    %v983 = vunpack.c.l.b16 %v226
    %v984 = vunpack.c.h.b16 %v226
    %v985 = vunpack.c.l.b16 %v227
    %v986 = vunpack.c.h.b16 %v227
    %v987 = vunpack.c.l.b16 %v228
    %v988 = vunpack.c.h.b16 %v228
    %v989 = vunpack.c.l.b16 %v229
    %v990 = vunpack.c.h.b16 %v229
    %v991 = vunpack.c.l.b16 %v230
    %v992 = vunpack.c.h.b16 %v230
    %v993 = vunpack.c.l.b16 %v231
    %v994 = vunpack.c.h.b16 %v231
    %v995 = vunpack.c.l.b16 %v232
    %v996 = vunpack.c.h.b16 %v232
    %v997 = vunpack.c.l.b16 %v233
    %v998 = vunpack.c.h.b16 %v233
    %v999 = vunpack.c.l.b16 %v234
    %v1000 = vunpack.c.h.b16 %v234
    %v1001 = vunpack.c.l.b16 %v235
    %v1002 = vunpack.c.h.b16 %v235
    %v1003 = vunpack.c.l.b16 %v236
    %v1004 = vunpack.c.h.b16 %v236
    %v1005 = vunpack.c.l.b16 %v237
    %v1006 = vunpack.c.h.b16 %v237
    %v1007 = vunpack.c.l.b16 %v238
    %v1008 = vunpack.c.h.b16 %v238
    %v1009 = vunpack.c.l.b16 %v239
    %v1010 = vunpack.c.h.b16 %v239
    %v1011 = vunpack.c.l.b16 %v240
    %v1012 = vunpack.c.h.b16 %v240
    %v1013 = vunpack.c.l.b16 %v241
    %v1014 = vunpack.c.h.b16 %v241
    %v1015 = vunpack.c.l.b16 %v242
    %v1016 = vunpack.c.h.b16 %v242
    %v1017 = vunpack.c.l.b16 %v243
    %v1018 = vunpack.c.h.b16 %v243
    %v1019 = vunpack.c.l.b16 %v244
    %v1020 = vunpack.c.h.b16 %v244
    %v1021 = vunpack.c.l.b16 %v245
    %v1022 = vunpack.c.h.b16 %v245
    %v1023 = vunpack.c.l.b16 %v246
    %v1024 = vunpack.c.h.b16 %v246
    %v1025 = vunpack.c.l.b16 %v247
    %v1026 = vunpack.c.h.b16 %v247
    %v1027 = vunpack.c.l.b16 %v248
    %v1028 = vunpack.c.h.b16 %v248
    %v1029 = vunpack.c.l.b16 %v249
    %v1030 = vunpack.c.h.b16 %v249
    %v1031 = vunpack.c.l.b16 %v250
    %v1032 = vunpack.c.h.b16 %v250
    %v1033 = vunpack.c.l.b16 %v251
    %v1034 = vunpack.c.h.b16 %v251
    %v1035 = vunpack.c.l.b16 %v252
    %v1036 = vunpack.c.h.b16 %v252
    %v1037 = vunpack.c.l.b16 %v253
    %v1038 = vunpack.c.h.b16 %v253
    %v1039 = vunpack.c.l.b16 %v254
    %v1040 = vunpack.c.h.b16 %v254
    %v1041 = vunpack.c.l.b16 %v255
    %v1042 = vunpack.c.h.b16 %v255
    %v1043 = vunpack.c.l.b16 %v256
    %v1044 = vunpack.c.h.b16 %v256
    %v1045 = vunpack.c.l.b16 %v257
    %v1046 = vunpack.c.h.b16 %v257
    %v1047 = vunpack.c.l.b16 %v258
    %v1048 = vunpack.c.h.b16 %v258
    %v1049 = vunpack.c.l.b16 %v259
    %v1050 = vunpack.c.h.b16 %v259
    %v1051 = vunpack.c.l.b16 %v260
    %v1052 = vunpack.c.h.b16 %v260
    %v1053 = vunpack.c.l.b16 %v261
    %v1054 = vunpack.c.h.b16 %v261
    %v1055 = vunpack.c.l.b16 %v262
    %v1056 = vunpack.c.h.b16 %v262
    %v1057 = vunpack.c.l.b16 %v263
    %v1058 = vunpack.c.h.b16 %v263
    %v1059 = vunpack.c.l.b16 %v264
    %v1060 = vunpack.c.h.b16 %v264
    %v1061 = vunpack.c.l.b16 %v265
    %v1062 = vunpack.c.h.b16 %v265
    %v1063 = vunpack.c.l.b16 %v266
    %v1064 = vunpack.c.h.b16 %v266
    %v1065 = vunpack.c.l.b16 %v267
    %v1066 = vunpack.c.h.b16 %v267
    %v1067 = vunpack.c.l.b16 %v268
    %v1068 = vunpack.c.h.b16 %v268
    %v1069 = vunpack.c.l.b16 %v269
    %v1070 = vunpack.c.h.b16 %v269
    %v1071 = vunpack.c.l.b16 %v270
    %v1072 = vunpack.c.h.b16 %v270
    %v1073 = vunpack.c.l.b16 %v271
    %v1074 = vunpack.c.h.b16 %v271
    %v1075 = vunpack.c.l.b16 %v272
    %v1076 = vunpack.c.h.b16 %v272
    %v1077 = vunpack.c.l.b16 %v273
    %v1078 = vunpack.c.h.b16 %v273
    %v1079 = vunpack.c.l.b16 %v274
    %v1080 = vunpack.c.h.b16 %v274
    %v1081 = vunpack.c.l.b16 %v275
    %v1082 = vunpack.c.h.b16 %v275
    %v1083 = vunpack.c.l.b16 %v276
    %v1084 = vunpack.c.h.b16 %v276
    %v1085 = vunpack.c.l.b16 %v277
    %v1086 = vunpack.c.h.b16 %v277
    %v1087 = vunpack.c.l.b16 %v278
    %v1088 = vunpack.c.h.b16 %v278
    %v1089 = vpack.c.b16 %v579, %v577
    %v1090 = vpack.c.b16 %v580, %v578
    %v1091 = vpack.c.b16 %v583, %v581
    %v1092 = vpack.c.b16 %v584, %v582
    %v1093 = vpack.c.b16 %v587, %v585
    %v1094 = vpack.c.b16 %v588, %v586
    %v1095 = vpack.c.b16 %v591, %v589
    %v1096 = vpack.c.b16 %v592, %v590
    %v1097 = vpack.c.b16 %v595, %v593
    %v1098 = vpack.c.b16 %v596, %v594
    %v1099 = vpack.c.b16 %v599, %v597
    %v1100 = vpack.c.b16 %v600, %v598
    %v1101 = vpack.c.b16 %v603, %v601
    %v1102 = vpack.c.b16 %v604, %v602
    %v1103 = vpack.c.b16 %v607, %v605
    %v1104 = vpack.c.b16 %v608, %v606
    %v1105 = vpack.c.b16 %v611, %v609
    %v1106 = vpack.c.b16 %v612, %v610
    %v1107 = vpack.c.b16 %v615, %v613
    %v1108 = vpack.c.b16 %v616, %v614
    %v1109 = vpack.c.b16 %v619, %v617
    %v1110 = vpack.c.b16 %v620, %v618
    %v1111 = vpack.c.b16 %v623, %v621
    %v1112 = vpack.c.b16 %v624, %v622
    %v1113 = vpack.c.b16 %v627, %v625
    %v1114 = vpack.c.b16 %v628, %v626
    %v1115 = vpack.c.b16 %v631, %v629
    %v1116 = vpack.c.b16 %v632, %v630
    %v1117 = vpack.c.b16 %v635, %v633
    %v1118 = vpack.c.b16 %v636, %v634
    %v1119 = vpack.c.b16 %v639, %v637
    %v1120 = vpack.c.b16 %v640, %v638
    %v1121 = vpack.c.b16 %v643, %v641
    %v1122 = vpack.c.b16 %v644, %v642
    %v1123 = vpack.c.b16 %v647, %v645
    %v1124 = vpack.c.b16 %v648, %v646
    %v1125 = vpack.c.b16 %v651, %v649
    %v1126 = vpack.c.b16 %v652, %v650
    %v1127 = vpack.c.b16 %v655, %v653
    %v1128 = vpack.c.b16 %v656, %v654
    %v1129 = vpack.c.b16 %v659, %v657
    %v1130 = vpack.c.b16 %v660, %v658
    %v1131 = vpack.c.b16 %v663, %v661
    %v1132 = vpack.c.b16 %v664, %v662
    %v1133 = vpack.c.b16 %v667, %v665
    %v1134 = vpack.c.b16 %v668, %v666
    %v1135 = vpack.c.b16 %v671, %v669
    %v1136 = vpack.c.b16 %v672, %v670
    %v1137 = vpack.c.b16 %v675, %v673
    %v1138 = vpack.c.b16 %v676, %v674
    %v1139 = vpack.c.b16 %v679, %v677
    %v1140 = vpack.c.b16 %v680, %v678
    %v1141 = vpack.c.b16 %v683, %v681
    %v1142 = vpack.c.b16 %v684, %v682
    %v1143 = vpack.c.b16 %v687, %v685
    %v1144 = vpack.c.b16 %v688, %v686
    %v1145 = vpack.c.b16 %v691, %v689
    %v1146 = vpack.c.b16 %v692, %v690
    %v1147 = vpack.c.b16 %v695, %v693
    %v1148 = vpack.c.b16 %v696, %v694
    %v1149 = vpack.c.b16 %v699, %v697
    %v1150 = vpack.c.b16 %v700, %v698
    %v1151 = vpack.c.b16 %v703, %v701
    %v1152 = vpack.c.b16 %v704, %v702
    %v1153 = vpack.c.b16 %v707, %v705
    %v1154 = vpack.c.b16 %v708, %v706
    %v1155 = vpack.c.b16 %v711, %v709
    %v1156 = vpack.c.b16 %v712, %v710
    %v1157 = vpack.c.b16 %v715, %v713
    %v1158 = vpack.c.b16 %v716, %v714
    %v1159 = vpack.c.b16 %v719, %v717
    %v1160 = vpack.c.b16 %v720, %v718
    %v1161 = vpack.c.b16 %v723, %v721
    %v1162 = vpack.c.b16 %v724, %v722
    %v1163 = vpack.c.b16 %v727, %v725
    %v1164 = vpack.c.b16 %v728, %v726
    %v1165 = vpack.c.b16 %v731, %v729
    %v1166 = vpack.c.b16 %v732, %v730
    %v1167 = vpack.c.b16 %v735, %v733
    %v1168 = vpack.c.b16 %v736, %v734
    %v1169 = vpack.c.b16 %v739, %v737
    %v1170 = vpack.c.b16 %v740, %v738
    %v1171 = vpack.c.b16 %v743, %v741
    %v1172 = vpack.c.b16 %v744, %v742
    %v1173 = vpack.c.b16 %v747, %v745
    %v1174 = vpack.c.b16 %v748, %v746
    %v1175 = vpack.c.b16 %v751, %v749
    %v1176 = vpack.c.b16 %v752, %v750
    %v1177 = vpack.c.b16 %v755, %v753
    %v1178 = vpack.c.b16 %v756, %v754
    %v1179 = vpack.c.b16 %v759, %v757
    %v1180 = vpack.c.b16 %v760, %v758
    %v1181 = vpack.c.b16 %v763, %v761
    %v1182 = vpack.c.b16 %v764, %v762
    %v1183 = vpack.c.b16 %v767, %v765
    %v1184 = vpack.c.b16 %v768, %v766
    %v1185 = vpack.c.b16 %v771, %v769
    %v1186 = vpack.c.b16 %v772, %v770
    %v1187 = vpack.c.b16 %v775, %v773
    %v1188 = vpack.c.b16 %v776, %v774
    %v1189 = vpack.c.b16 %v779, %v777
    %v1190 = vpack.c.b16 %v780, %v778
    %v1191 = vpack.c.b16 %v783, %v781
    %v1192 = vpack.c.b16 %v784, %v782
    %v1193 = vpack.c.b16 %v787, %v785
    %v1194 = vpack.c.b16 %v788, %v786
    %v1195 = vpack.c.b16 %v791, %v789
    %v1196 = vpack.c.b16 %v792, %v790
    %v1197 = vpack.c.b16 %v795, %v793
    %v1198 = vpack.c.b16 %v796, %v794
    %v1199 = vpack.c.b16 %v799, %v797
    %v1200 = vpack.c.b16 %v800, %v798
    %v1201 = vpack.c.b16 %v803, %v801
    %v1202 = vpack.c.b16 %v804, %v802
    %v1203 = vpack.c.b16 %v807, %v805
    %v1204 = vpack.c.b16 %v808, %v806
    %v1205 = vpack.c.b16 %v811, %v809
    %v1206 = vpack.c.b16 %v812, %v810
    %v1207 = vpack.c.b16 %v815, %v813
    %v1208 = vpack.c.b16 %v816, %v814
    %v1209 = vpack.c.b16 %v819, %v817
    %v1210 = vpack.c.b16 %v820, %v818
    %v1211 = vpack.c.b16 %v823, %v821
    %v1212 = vpack.c.b16 %v824, %v822
    %v1213 = vpack.c.b16 %v827, %v825
    %v1214 = vpack.c.b16 %v828, %v826
    %v1215 = vpack.c.b16 %v831, %v829
    %v1216 = vpack.c.b16 %v832, %v830
    %v1217 = vpack.c.b16 %v835, %v833
    %v1218 = vpack.c.b16 %v836, %v834
    %v1219 = vpack.c.b16 %v839, %v837
    %v1220 = vpack.c.b16 %v840, %v838
    %v1221 = vpack.c.b16 %v843, %v841
    %v1222 = vpack.c.b16 %v844, %v842
    %v1223 = vpack.c.b16 %v847, %v845
    %v1224 = vpack.c.b16 %v848, %v846
    %v1225 = vpack.c.b16 %v851, %v849
    %v1226 = vpack.c.b16 %v852, %v850
    %v1227 = vpack.c.b16 %v855, %v853
    %v1228 = vpack.c.b16 %v856, %v854
    %v1229 = vpack.c.b16 %v859, %v857
    %v1230 = vpack.c.b16 %v860, %v858
    %v1231 = vpack.c.b16 %v863, %v861
    %v1232 = vpack.c.b16 %v864, %v862
    %v1233 = vpack.c.b16 %v867, %v865
    %v1234 = vpack.c.b16 %v868, %v866
    %v1235 = vpack.c.b16 %v871, %v869
    %v1236 = vpack.c.b16 %v872, %v870
    %v1237 = vpack.c.b16 %v875, %v873
    %v1238 = vpack.c.b16 %v876, %v874
    %v1239 = vpack.c.b16 %v879, %v877
    %v1240 = vpack.c.b16 %v880, %v878
    %v1241 = vpack.c.b16 %v883, %v881
    %v1242 = vpack.c.b16 %v884, %v882
    %v1243 = vpack.c.b16 %v887, %v885
    %v1244 = vpack.c.b16 %v888, %v886
    %v1245 = vpack.c.b16 %v891, %v889
    %v1246 = vpack.c.b16 %v892, %v890
    %v1247 = vpack.c.b16 %v895, %v893
    %v1248 = vpack.c.b16 %v896, %v894
    %v1249 = vpack.c.b16 %v899, %v897
    %v1250 = vpack.c.b16 %v900, %v898
    %v1251 = vpack.c.b16 %v903, %v901
    %v1252 = vpack.c.b16 %v904, %v902
    %v1253 = vpack.c.b16 %v907, %v905
    %v1254 = vpack.c.b16 %v908, %v906
    %v1255 = vpack.c.b16 %v911, %v909
    %v1256 = vpack.c.b16 %v912, %v910
    %v1257 = vpack.c.b16 %v915, %v913
    %v1258 = vpack.c.b16 %v916, %v914
    %v1259 = vpack.c.b16 %v919, %v917
    %v1260 = vpack.c.b16 %v920, %v918
    %v1261 = vpack.c.b16 %v923, %v921
    %v1262 = vpack.c.b16 %v924, %v922
    %v1263 = vpack.c.b16 %v927, %v925
    %v1264 = vpack.c.b16 %v928, %v926
    %v1265 = vpack.c.b16 %v931, %v929
    %v1266 = vpack.c.b16 %v932, %v930
    %v1267 = vpack.c.b16 %v935, %v933
    %v1268 = vpack.c.b16 %v936, %v934
    %v1269 = vpack.c.b16 %v939, %v937
    %v1270 = vpack.c.b16 %v940, %v938
    %v1271 = vpack.c.b16 %v943, %v941
    %v1272 = vpack.c.b16 %v944, %v942
    %v1273 = vpack.c.b16 %v947, %v945
    %v1274 = vpack.c.b16 %v948, %v946
    %v1275 = vpack.c.b16 %v951, %v949
    %v1276 = vpack.c.b16 %v952, %v950
    %v1277 = vpack.c.b16 %v955, %v953
    %v1278 = vpack.c.b16 %v956, %v954
    %v1279 = vpack.c.b16 %v959, %v957
    %v1280 = vpack.c.b16 %v960, %v958
    %v1281 = vpack.c.b16 %v963, %v961
    %v1282 = vpack.c.b16 %v964, %v962
    %v1283 = vpack.c.b16 %v967, %v965
    %v1284 = vpack.c.b16 %v968, %v966
    %v1285 = vpack.c.b16 %v971, %v969
    %v1286 = vpack.c.b16 %v972, %v970
    %v1287 = vpack.c.b16 %v975, %v973
    %v1288 = vpack.c.b16 %v976, %v974
    %v1289 = vpack.c.b16 %v979, %v977
    %v1290 = vpack.c.b16 %v980, %v978
    %v1291 = vpack.c.b16 %v983, %v981
    %v1292 = vpack.c.b16 %v984, %v982
    %v1293 = vpack.c.b16 %v987, %v985
    %v1294 = vpack.c.b16 %v988, %v986
    %v1295 = vpack.c.b16 %v991, %v989
    %v1296 = vpack.c.b16 %v992, %v990
    %v1297 = vpack.c.b16 %v995, %v993
    %v1298 = vpack.c.b16 %v996, %v994
    %v1299 = vpack.c.b16 %v999, %v997
    %v1300 = vpack.c.b16 %v1000, %v998
    %v1301 = vpack.c.b16 %v1003, %v1001
    %v1302 = vpack.c.b16 %v1004, %v1002
    %v1303 = vpack.c.b16 %v1007, %v1005
    %v1304 = vpack.c.b16 %v1008, %v1006
    %v1305 = vpack.c.b16 %v1011, %v1009
    %v1306 = vpack.c.b16 %v1012, %v1010
    %v1307 = vpack.c.b16 %v1015, %v1013
    %v1308 = vpack.c.b16 %v1016, %v1014
    %v1309 = vpack.c.b16 %v1019, %v1017
    %v1310 = vpack.c.b16 %v1020, %v1018
    %v1311 = vpack.c.b16 %v1023, %v1021
    %v1312 = vpack.c.b16 %v1024, %v1022
    %v1313 = vpack.c.b16 %v1027, %v1025
    %v1314 = vpack.c.b16 %v1028, %v1026
    %v1315 = vpack.c.b16 %v1031, %v1029
    %v1316 = vpack.c.b16 %v1032, %v1030
    %v1317 = vpack.c.b16 %v1035, %v1033
    %v1318 = vpack.c.b16 %v1036, %v1034
    %v1319 = vpack.c.b16 %v1039, %v1037
    %v1320 = vpack.c.b16 %v1040, %v1038
    %v1321 = vpack.c.b16 %v1043, %v1041
    %v1322 = vpack.c.b16 %v1044, %v1042
    %v1323 = vpack.c.b16 %v1047, %v1045
    %v1324 = vpack.c.b16 %v1048, %v1046
    %v1325 = vpack.c.b16 %v1051, %v1049
    %v1326 = vpack.c.b16 %v1052, %v1050
    %v1327 = vpack.c.b16 %v1055, %v1053
    %v1328 = vpack.c.b16 %v1056, %v1054
    %v1329 = vpack.c.b16 %v1059, %v1057
    %v1330 = vpack.c.b16 %v1060, %v1058
    %v1331 = vpack.c.b16 %v1063, %v1061
    %v1332 = vpack.c.b16 %v1064, %v1062
    %v1333 = vpack.c.b16 %v1067, %v1065
    %v1334 = vpack.c.b16 %v1068, %v1066
    %v1335 = vpack.c.b16 %v1071, %v1069
    %v1336 = vpack.c.b16 %v1072, %v1070
    %v1337 = vpack.c.b16 %v1075, %v1073
    %v1338 = vpack.c.b16 %v1076, %v1074
    %v1339 = vpack.c.b16 %v1079, %v1077
    %v1340 = vpack.c.b16 %v1080, %v1078
    %v1341 = vpack.c.b16 %v1083, %v1081
    %v1342 = vpack.c.b16 %v1084, %v1082
    %v1343 = vpack.c.b16 %v1087, %v1085
    %v1344 = vpack.c.b16 %v1088, %v1086
    %1601 = vmatpush.bf16.msra.mxu0 %v1103
    %1602 = vmatpush.bf16.msra.mxu0 %v1101
    %1603 = vmatpush.bf16.msra.mxu0 %v1099
    %1604 = vmatpush.bf16.msra.mxu0 %v1097
    %1605 = vmatpush.bf16.msra.mxu0 %v1095
    %1606 = vmatpush.bf16.msra.mxu0 %v1093
    %1607 = vmatpush.bf16.msra.mxu0 %v1091
    %1608 = vmatpush.bf16.msra.mxu0 %v1089
    %1609 = vmatmul.bf16.gmra.mxu0 %v287
    %v1610 = vpop.f32.mrf.mxu0
    %v1611 = vadd.f32 %v281, %v1610
    %v1612 = vpop.f32.mrf.mxu0
    %1613 = vdwg.mxu0
    %1614 = vmatpush.bf16.msra.mxu0 %v1119
    %1615 = vmatpush.bf16.msra.mxu0 %v1117
    %1616 = vmatpush.bf16.msra.mxu0 %v1115
    %1617 = vmatpush.bf16.msra.mxu0 %v1113
    %1618 = vmatpush.bf16.msra.mxu0 %v1111
    %1619 = vmatpush.bf16.msra.mxu0 %v1109
    %1620 = vmatpush.bf16.msra.mxu0 %v1107
    %1621 = vmatpush.bf16.msra.mxu0 %v1105
    %1622 = vmatmul.bf16.gmra.mxu0 %v288
    %v1623 = vpop.f32.mrf.mxu0
    %v1624 = vadd.f32 %v1611, %v1623
    %v1625 = vpop.f32.mrf.mxu0
    %1626 = vdwg.mxu0
    %1627 = vmatpush.bf16.msra.mxu0 %v1135
    %1628 = vmatpush.bf16.msra.mxu0 %v1133
    %1629 = vmatpush.bf16.msra.mxu0 %v1131
    %1630 = vmatpush.bf16.msra.mxu0 %v1129
    %1631 = vmatpush.bf16.msra.mxu0 %v1127
    %1632 = vmatpush.bf16.msra.mxu0 %v1125
    %1633 = vmatpush.bf16.msra.mxu0 %v1123
    %1634 = vmatpush.bf16.msra.mxu0 %v1121
    %1635 = vmatmul.bf16.gmra.mxu0 %v289
    %v1636 = vpop.f32.mrf.mxu0
    %v1637 = vadd.f32 %v1624, %v1636
    %v1638 = vpop.f32.mrf.mxu0
    %1639 = vdwg.mxu0
    %1640 = vmatpush.bf16.msra.mxu0 %v1151
    %1641 = vmatpush.bf16.msra.mxu0 %v1149
    %1642 = vmatpush.bf16.msra.mxu0 %v1147
    %1643 = vmatpush.bf16.msra.mxu0 %v1145
    %1644 = vmatpush.bf16.msra.mxu0 %v1143
    %1645 = vmatpush.bf16.msra.mxu0 %v1141
    %1646 = vmatpush.bf16.msra.mxu0 %v1139
    %1647 = vmatpush.bf16.msra.mxu0 %v1137
    %1648 = vmatmul.bf16.gmra.mxu0 %v290
    %v1649 = vpop.f32.mrf.mxu0
    %v1650 = vadd.f32 %v1637, %v1649
    %v1651 = vpop.f32.mrf.mxu0
    %1652 = vdwg.mxu0
    %1653 = vmatpush.bf16.msra.mxu0 %v1167
    %1654 = vmatpush.bf16.msra.mxu0 %v1165
    %1655 = vmatpush.bf16.msra.mxu0 %v1163
    %1656 = vmatpush.bf16.msra.mxu0 %v1161
    %1657 = vmatpush.bf16.msra.mxu0 %v1159
    %1658 = vmatpush.bf16.msra.mxu0 %v1157
    %1659 = vmatpush.bf16.msra.mxu0 %v1155
    %1660 = vmatpush.bf16.msra.mxu0 %v1153
    %1661 = vmatmul.bf16.gmra.mxu0 %v291
    %v1662 = vpop.f32.mrf.mxu0
    %v1663 = vadd.f32 %v1650, %v1662
    %v1664 = vpop.f32.mrf.mxu0
    %1665 = vdwg.mxu0
    %1666 = vmatpush.bf16.msra.mxu0 %v1183
    %1667 = vmatpush.bf16.msra.mxu0 %v1181
    %1668 = vmatpush.bf16.msra.mxu0 %v1179
    %1669 = vmatpush.bf16.msra.mxu0 %v1177
    %1670 = vmatpush.bf16.msra.mxu0 %v1175
    %1671 = vmatpush.bf16.msra.mxu0 %v1173
    %1672 = vmatpush.bf16.msra.mxu0 %v1171
    %1673 = vmatpush.bf16.msra.mxu0 %v1169
    %1674 = vmatmul.bf16.gmra.mxu0 %v292
    %v1675 = vpop.f32.mrf.mxu0
    %v1676 = vadd.f32 %v1663, %v1675
    %v1677 = vpop.f32.mrf.mxu0
    %1678 = vdwg.mxu0
    %1679 = vmatpush.bf16.msra.mxu0 %v1199
    %1680 = vmatpush.bf16.msra.mxu0 %v1197
    %1681 = vmatpush.bf16.msra.mxu0 %v1195
    %1682 = vmatpush.bf16.msra.mxu0 %v1193
    %1683 = vmatpush.bf16.msra.mxu0 %v1191
    %1684 = vmatpush.bf16.msra.mxu0 %v1189
    %1685 = vmatpush.bf16.msra.mxu0 %v1187
    %1686 = vmatpush.bf16.msra.mxu0 %v1185
    %1687 = vmatmul.bf16.gmra.mxu0 %v293
    %v1688 = vpop.f32.mrf.mxu0
    %v1689 = vadd.f32 %v1676, %v1688
    %v1690 = vpop.f32.mrf.mxu0
    %1691 = vdwg.mxu0
    %1692 = vmatpush.bf16.msra.mxu0 %v1215
    %1693 = vmatpush.bf16.msra.mxu0 %v1213
    %1694 = vmatpush.bf16.msra.mxu0 %v1211
    %1695 = vmatpush.bf16.msra.mxu0 %v1209
    %1696 = vmatpush.bf16.msra.mxu0 %v1207
    %1697 = vmatpush.bf16.msra.mxu0 %v1205
    %1698 = vmatpush.bf16.msra.mxu0 %v1203
    %1699 = vmatpush.bf16.msra.mxu0 %v1201
    %1700 = vmatmul.bf16.gmra.mxu0 %v294
    %v1701 = vpop.f32.mrf.mxu0
    %v1702 = vadd.f32 %v1689, %v1701
    %v1703 = vpop.f32.mrf.mxu0
    %1704 = vdwg.mxu0
    %1705 = vmatpush.bf16.msra.mxu0 %v1231
    %1706 = vmatpush.bf16.msra.mxu0 %v1229
    %1707 = vmatpush.bf16.msra.mxu0 %v1227
    %1708 = vmatpush.bf16.msra.mxu0 %v1225
    %1709 = vmatpush.bf16.msra.mxu0 %v1223
    %1710 = vmatpush.bf16.msra.mxu0 %v1221
    %1711 = vmatpush.bf16.msra.mxu0 %v1219
    %1712 = vmatpush.bf16.msra.mxu0 %v1217
    %1713 = vmatmul.bf16.gmra.mxu0 %v297
    %v1714 = vpop.f32.mrf.mxu0
    %v1715 = vadd.f32 %v1702, %v1714
    %v1716 = vpop.f32.mrf.mxu0
    %1717 = vdwg.mxu0
    %1718 = vmatpush.bf16.msra.mxu0 %v1247
    %1719 = vmatpush.bf16.msra.mxu0 %v1245
    %1720 = vmatpush.bf16.msra.mxu0 %v1243
    %1721 = vmatpush.bf16.msra.mxu0 %v1241
    %1722 = vmatpush.bf16.msra.mxu0 %v1239
    %1723 = vmatpush.bf16.msra.mxu0 %v1237
    %1724 = vmatpush.bf16.msra.mxu0 %v1235
    %1725 = vmatpush.bf16.msra.mxu0 %v1233
    %1726 = vmatmul.bf16.gmra.mxu0 %v298
    %v1727 = vpop.f32.mrf.mxu0
    %v1728 = vadd.f32 %v1715, %v1727
    %v1729 = vpop.f32.mrf.mxu0
    %1730 = vdwg.mxu0
    %1731 = vmatpush.bf16.msra.mxu0 %v1263
    %1732 = vmatpush.bf16.msra.mxu0 %v1261
    %1733 = vmatpush.bf16.msra.mxu0 %v1259
    %1734 = vmatpush.bf16.msra.mxu0 %v1257
    %1735 = vmatpush.bf16.msra.mxu0 %v1255
    %1736 = vmatpush.bf16.msra.mxu0 %v1253
    %1737 = vmatpush.bf16.msra.mxu0 %v1251
    %1738 = vmatpush.bf16.msra.mxu0 %v1249
    %1739 = vmatmul.bf16.gmra.mxu0 %v299
    %v1740 = vpop.f32.mrf.mxu0
    %v1741 = vadd.f32 %v1728, %v1740
    %v1742 = vpop.f32.mrf.mxu0
    %1743 = vdwg.mxu0
    %1744 = vmatpush.bf16.msra.mxu0 %v1279
    %1745 = vmatpush.bf16.msra.mxu0 %v1277
    %1746 = vmatpush.bf16.msra.mxu0 %v1275
    %1747 = vmatpush.bf16.msra.mxu0 %v1273
    %1748 = vmatpush.bf16.msra.mxu0 %v1271
    %1749 = vmatpush.bf16.msra.mxu0 %v1269
    %1750 = vmatpush.bf16.msra.mxu0 %v1267
    %1751 = vmatpush.bf16.msra.mxu0 %v1265
    %1752 = vmatmul.bf16.gmra.mxu0 %v300
    %v1753 = vpop.f32.mrf.mxu0
    %v1754 = vadd.f32 %v1741, %v1753
    %v1755 = vpop.f32.mrf.mxu0
    %1756 = vdwg.mxu0
    %1757 = vmatpush.bf16.msra.mxu0 %v1295
    %1758 = vmatpush.bf16.msra.mxu0 %v1293
    %1759 = vmatpush.bf16.msra.mxu0 %v1291
    %1760 = vmatpush.bf16.msra.mxu0 %v1289
    %1761 = vmatpush.bf16.msra.mxu0 %v1287
    %1762 = vmatpush.bf16.msra.mxu0 %v1285
    %1763 = vmatpush.bf16.msra.mxu0 %v1283
    %1764 = vmatpush.bf16.msra.mxu0 %v1281
    %1765 = vmatmul.bf16.gmra.mxu0 %v301
    %v1766 = vpop.f32.mrf.mxu0
    %v1767 = vadd.f32 %v1754, %v1766
    %v1768 = vpop.f32.mrf.mxu0
    %1769 = vdwg.mxu0
    %1770 = vmatpush.bf16.msra.mxu0 %v1311
    %1771 = vmatpush.bf16.msra.mxu0 %v1309
    %1772 = vmatpush.bf16.msra.mxu0 %v1307
    %1773 = vmatpush.bf16.msra.mxu0 %v1305
    %1774 = vmatpush.bf16.msra.mxu0 %v1303
    %1775 = vmatpush.bf16.msra.mxu0 %v1301
    %1776 = vmatpush.bf16.msra.mxu0 %v1299
    %1777 = vmatpush.bf16.msra.mxu0 %v1297
    %1778 = vmatmul.bf16.gmra.mxu0 %v302
    %v1779 = vpop.f32.mrf.mxu0
    %v1780 = vadd.f32 %v1767, %v1779
    %v1781 = vpop.f32.mrf.mxu0
    %1782 = vdwg.mxu0
    %1783 = vmatpush.bf16.msra.mxu0 %v1327
    %1784 = vmatpush.bf16.msra.mxu0 %v1325
    %1785 = vmatpush.bf16.msra.mxu0 %v1323
    %1786 = vmatpush.bf16.msra.mxu0 %v1321
    %1787 = vmatpush.bf16.msra.mxu0 %v1319
    %1788 = vmatpush.bf16.msra.mxu0 %v1317
    %1789 = vmatpush.bf16.msra.mxu0 %v1315
    %1790 = vmatpush.bf16.msra.mxu0 %v1313
    %1791 = vmatmul.bf16.gmra.mxu0 %v303
    %v1792 = vpop.f32.mrf.mxu0
    %v1793 = vadd.f32 %v1780, %v1792
    %v1794 = vpop.f32.mrf.mxu0
    %1795 = vdwg.mxu0
    %1796 = vmatpush.bf16.msra.mxu0 %v1343
    %1797 = vmatpush.bf16.msra.mxu0 %v1341
    %1798 = vmatpush.bf16.msra.mxu0 %v1339
    %1799 = vmatpush.bf16.msra.mxu0 %v1337
    %1800 = vmatpush.bf16.msra.mxu0 %v1335
    %1801 = vmatpush.bf16.msra.mxu0 %v1333
    %1802 = vmatpush.bf16.msra.mxu0 %v1331
    %1803 = vmatpush.bf16.msra.mxu0 %v1329
    %1804 = vmatmul.bf16.gmra.mxu0 %v304
    %v1805 = vpop.f32.mrf.mxu0
    %v1806 = vadd.f32 %v1793, %v1805
    %v1807 = vpop.f32.mrf.mxu0
    %1808 = vdwg.mxu0
    %1809 = vmatpush.bf16.msra.mxu0 %v1104
    %1810 = vmatpush.bf16.msra.mxu0 %v1102
    %1811 = vmatpush.bf16.msra.mxu0 %v1100
    %1812 = vmatpush.bf16.msra.mxu0 %v1098
    %1813 = vmatpush.bf16.msra.mxu0 %v1096
    %1814 = vmatpush.bf16.msra.mxu0 %v1094
    %1815 = vmatpush.bf16.msra.mxu0 %v1092
    %1816 = vmatpush.bf16.msra.mxu0 %v1090
    %1817 = vmatmul.bf16.gmra.mxu0 %v287
    %v1818 = vpop.f32.mrf.mxu0
    %v1819 = vadd.f32 %v282, %v1818
    %v1820 = vpop.f32.mrf.mxu0
    %1821 = vdwg.mxu0
    %1822 = vmatpush.bf16.msra.mxu0 %v1120
    %1823 = vmatpush.bf16.msra.mxu0 %v1118
    %1824 = vmatpush.bf16.msra.mxu0 %v1116
    %1825 = vmatpush.bf16.msra.mxu0 %v1114
    %1826 = vmatpush.bf16.msra.mxu0 %v1112
    %1827 = vmatpush.bf16.msra.mxu0 %v1110
    %1828 = vmatpush.bf16.msra.mxu0 %v1108
    %1829 = vmatpush.bf16.msra.mxu0 %v1106
    %1830 = vmatmul.bf16.gmra.mxu0 %v288
    %v1831 = vpop.f32.mrf.mxu0
    %v1832 = vadd.f32 %v1819, %v1831
    %v1833 = vpop.f32.mrf.mxu0
    %1834 = vdwg.mxu0
    %1835 = vmatpush.bf16.msra.mxu0 %v1136
    %1836 = vmatpush.bf16.msra.mxu0 %v1134
    %1837 = vmatpush.bf16.msra.mxu0 %v1132
    %1838 = vmatpush.bf16.msra.mxu0 %v1130
    %1839 = vmatpush.bf16.msra.mxu0 %v1128
    %1840 = vmatpush.bf16.msra.mxu0 %v1126
    %1841 = vmatpush.bf16.msra.mxu0 %v1124
    %1842 = vmatpush.bf16.msra.mxu0 %v1122
    %1843 = vmatmul.bf16.gmra.mxu0 %v289
    %v1844 = vpop.f32.mrf.mxu0
    %v1845 = vadd.f32 %v1832, %v1844
    %v1846 = vpop.f32.mrf.mxu0
    %1847 = vdwg.mxu0
    %1848 = vmatpush.bf16.msra.mxu0 %v1152
    %1849 = vmatpush.bf16.msra.mxu0 %v1150
    %1850 = vmatpush.bf16.msra.mxu0 %v1148
    %1851 = vmatpush.bf16.msra.mxu0 %v1146
    %1852 = vmatpush.bf16.msra.mxu0 %v1144
    %1853 = vmatpush.bf16.msra.mxu0 %v1142
    %1854 = vmatpush.bf16.msra.mxu0 %v1140
    %1855 = vmatpush.bf16.msra.mxu0 %v1138
    %1856 = vmatmul.bf16.gmra.mxu0 %v290
    %v1857 = vpop.f32.mrf.mxu0
    %v1858 = vadd.f32 %v1845, %v1857
    %v1859 = vpop.f32.mrf.mxu0
    %1860 = vdwg.mxu0
    %1861 = vmatpush.bf16.msra.mxu0 %v1168
    %1862 = vmatpush.bf16.msra.mxu0 %v1166
    %1863 = vmatpush.bf16.msra.mxu0 %v1164
    %1864 = vmatpush.bf16.msra.mxu0 %v1162
    %1865 = vmatpush.bf16.msra.mxu0 %v1160
    %1866 = vmatpush.bf16.msra.mxu0 %v1158
    %1867 = vmatpush.bf16.msra.mxu0 %v1156
    %1868 = vmatpush.bf16.msra.mxu0 %v1154
    %1869 = vmatmul.bf16.gmra.mxu0 %v291
    %v1870 = vpop.f32.mrf.mxu0
    %v1871 = vadd.f32 %v1858, %v1870
    %v1872 = vpop.f32.mrf.mxu0
    %1873 = vdwg.mxu0
    %1874 = vmatpush.bf16.msra.mxu0 %v1184
    %1875 = vmatpush.bf16.msra.mxu0 %v1182
    %1876 = vmatpush.bf16.msra.mxu0 %v1180
    %1877 = vmatpush.bf16.msra.mxu0 %v1178
    %1878 = vmatpush.bf16.msra.mxu0 %v1176
    %1879 = vmatpush.bf16.msra.mxu0 %v1174
    %1880 = vmatpush.bf16.msra.mxu0 %v1172
    %1881 = vmatpush.bf16.msra.mxu0 %v1170
    %1882 = vmatmul.bf16.gmra.mxu0 %v292
    %v1883 = vpop.f32.mrf.mxu0
    %v1884 = vadd.f32 %v1871, %v1883
    %v1885 = vpop.f32.mrf.mxu0
    %1886 = vdwg.mxu0
    %1887 = vmatpush.bf16.msra.mxu0 %v1200
    %1888 = vmatpush.bf16.msra.mxu0 %v1198
    %1889 = vmatpush.bf16.msra.mxu0 %v1196
    %1890 = vmatpush.bf16.msra.mxu0 %v1194
    %1891 = vmatpush.bf16.msra.mxu0 %v1192
    %1892 = vmatpush.bf16.msra.mxu0 %v1190
    %1893 = vmatpush.bf16.msra.mxu0 %v1188
    %1894 = vmatpush.bf16.msra.mxu0 %v1186
    %1895 = vmatmul.bf16.gmra.mxu0 %v293
    %v1896 = vpop.f32.mrf.mxu0
    %v1897 = vadd.f32 %v1884, %v1896
    %v1898 = vpop.f32.mrf.mxu0
    %1899 = vdwg.mxu0
    %1900 = vmatpush.bf16.msra.mxu0 %v1216
    %1901 = vmatpush.bf16.msra.mxu0 %v1214
    %1902 = vmatpush.bf16.msra.mxu0 %v1212
    %1903 = vmatpush.bf16.msra.mxu0 %v1210
    %1904 = vmatpush.bf16.msra.mxu0 %v1208
    %1905 = vmatpush.bf16.msra.mxu0 %v1206
    %1906 = vmatpush.bf16.msra.mxu0 %v1204
    %1907 = vmatpush.bf16.msra.mxu0 %v1202
    %1908 = vmatmul.bf16.gmra.mxu0 %v294
    %v1909 = vpop.f32.mrf.mxu0
    %v1910 = vadd.f32 %v1897, %v1909
    %v1911 = vpop.f32.mrf.mxu0
    %1912 = vdwg.mxu0
    %1913 = vmatpush.bf16.msra.mxu0 %v1232
    %1914 = vmatpush.bf16.msra.mxu0 %v1230
    %1915 = vmatpush.bf16.msra.mxu0 %v1228
    %1916 = vmatpush.bf16.msra.mxu0 %v1226
    %1917 = vmatpush.bf16.msra.mxu0 %v1224
    %1918 = vmatpush.bf16.msra.mxu0 %v1222
    %1919 = vmatpush.bf16.msra.mxu0 %v1220
    %1920 = vmatpush.bf16.msra.mxu0 %v1218
    %1921 = vmatmul.bf16.gmra.mxu0 %v297
    %v1922 = vpop.f32.mrf.mxu0
    %v1923 = vadd.f32 %v1910, %v1922
    %v1924 = vpop.f32.mrf.mxu0
    %1925 = vdwg.mxu0
    %1926 = vmatpush.bf16.msra.mxu0 %v1248
    %1927 = vmatpush.bf16.msra.mxu0 %v1246
    %1928 = vmatpush.bf16.msra.mxu0 %v1244
    %1929 = vmatpush.bf16.msra.mxu0 %v1242
    %1930 = vmatpush.bf16.msra.mxu0 %v1240
    %1931 = vmatpush.bf16.msra.mxu0 %v1238
    %1932 = vmatpush.bf16.msra.mxu0 %v1236
    %1933 = vmatpush.bf16.msra.mxu0 %v1234
    %1934 = vmatmul.bf16.gmra.mxu0 %v298
    %v1935 = vpop.f32.mrf.mxu0
    %v1936 = vadd.f32 %v1923, %v1935
    %v1937 = vpop.f32.mrf.mxu0
    %1938 = vdwg.mxu0
    %1939 = vmatpush.bf16.msra.mxu0 %v1264
    %1940 = vmatpush.bf16.msra.mxu0 %v1262
    %1941 = vmatpush.bf16.msra.mxu0 %v1260
    %1942 = vmatpush.bf16.msra.mxu0 %v1258
    %1943 = vmatpush.bf16.msra.mxu0 %v1256
    %1944 = vmatpush.bf16.msra.mxu0 %v1254
    %1945 = vmatpush.bf16.msra.mxu0 %v1252
    %1946 = vmatpush.bf16.msra.mxu0 %v1250
    %1947 = vmatmul.bf16.gmra.mxu0 %v299
    %v1948 = vpop.f32.mrf.mxu0
    %v1949 = vadd.f32 %v1936, %v1948
    %v1950 = vpop.f32.mrf.mxu0
    %1951 = vdwg.mxu0
    %1952 = vmatpush.bf16.msra.mxu0 %v1280
    %1953 = vmatpush.bf16.msra.mxu0 %v1278
    %1954 = vmatpush.bf16.msra.mxu0 %v1276
    %1955 = vmatpush.bf16.msra.mxu0 %v1274
    %1956 = vmatpush.bf16.msra.mxu0 %v1272
    %1957 = vmatpush.bf16.msra.mxu0 %v1270
    %1958 = vmatpush.bf16.msra.mxu0 %v1268
    %1959 = vmatpush.bf16.msra.mxu0 %v1266
    %1960 = vmatmul.bf16.gmra.mxu0 %v300
    %v1961 = vpop.f32.mrf.mxu0
    %v1962 = vadd.f32 %v1949, %v1961
    %v1963 = vpop.f32.mrf.mxu0
    %1964 = vdwg.mxu0
    %1965 = vmatpush.bf16.msra.mxu0 %v1296
    %1966 = vmatpush.bf16.msra.mxu0 %v1294
    %1967 = vmatpush.bf16.msra.mxu0 %v1292
    %1968 = vmatpush.bf16.msra.mxu0 %v1290
    %1969 = vmatpush.bf16.msra.mxu0 %v1288
    %1970 = vmatpush.bf16.msra.mxu0 %v1286
    %1971 = vmatpush.bf16.msra.mxu0 %v1284
    %1972 = vmatpush.bf16.msra.mxu0 %v1282
    %1973 = vmatmul.bf16.gmra.mxu0 %v301
    %v1974 = vpop.f32.mrf.mxu0
    %v1975 = vadd.f32 %v1962, %v1974
    %v1976 = vpop.f32.mrf.mxu0
    %1977 = vdwg.mxu0
    %1978 = vmatpush.bf16.msra.mxu0 %v1312
    %1979 = vmatpush.bf16.msra.mxu0 %v1310
    %1980 = vmatpush.bf16.msra.mxu0 %v1308
    %1981 = vmatpush.bf16.msra.mxu0 %v1306
    %1982 = vmatpush.bf16.msra.mxu0 %v1304
    %1983 = vmatpush.bf16.msra.mxu0 %v1302
    %1984 = vmatpush.bf16.msra.mxu0 %v1300
    %1985 = vmatpush.bf16.msra.mxu0 %v1298
    %1986 = vmatmul.bf16.gmra.mxu0 %v302
    %v1987 = vpop.f32.mrf.mxu0
    %v1988 = vadd.f32 %v1975, %v1987
    %v1989 = vpop.f32.mrf.mxu0
    %1990 = vdwg.mxu0
    %1991 = vmatpush.bf16.msra.mxu0 %v1328
    %1992 = vmatpush.bf16.msra.mxu0 %v1326
    %1993 = vmatpush.bf16.msra.mxu0 %v1324
    %1994 = vmatpush.bf16.msra.mxu0 %v1322
    %1995 = vmatpush.bf16.msra.mxu0 %v1320
    %1996 = vmatpush.bf16.msra.mxu0 %v1318
    %1997 = vmatpush.bf16.msra.mxu0 %v1316
    %1998 = vmatpush.bf16.msra.mxu0 %v1314
    %1999 = vmatmul.bf16.gmra.mxu0 %v303
    %v2000 = vpop.f32.mrf.mxu0
    %v2001 = vadd.f32 %v1988, %v2000
    %v2002 = vpop.f32.mrf.mxu0
    %2003 = vdwg.mxu0
    %2004 = vmatpush.bf16.msra.mxu0 %v1344
    %2005 = vmatpush.bf16.msra.mxu0 %v1342
    %2006 = vmatpush.bf16.msra.mxu0 %v1340
    %2007 = vmatpush.bf16.msra.mxu0 %v1338
    %2008 = vmatpush.bf16.msra.mxu0 %v1336
    %2009 = vmatpush.bf16.msra.mxu0 %v1334
    %2010 = vmatpush.bf16.msra.mxu0 %v1332
    %2011 = vmatpush.bf16.msra.mxu0 %v1330
    %2012 = vmatmul.bf16.gmra.mxu0 %v304
    %v2013 = vpop.f32.mrf.mxu0
    %v2014 = vadd.f32 %v2001, %v2013
    %v2015 = vpop.f32.mrf.mxu0
    %2016 = vdwg.mxu0
    %v2017 = vmax.f32 %v1806, 0.0
    %v2018 = vmax.f32 %v2014, 0.0
    %v2019 = vpack.c.bf16 %v2017, %v2017
    %v2020 = vpack.c.bf16 %v2018, %v2018
    %v2021 = vld [vmem:[%s3] sm:$0xf]
    %v2022 = vld [vmem:[%s3 + $0x4] sm:$0xf]
    %v2023 = vld [vmem:[%s3 + $0x8] sm:$0xf]
    %v2024 = vld [vmem:[%s3 + $0xc] sm:$0xf]
    %v2025 = vld [vmem:[%s3 + $0x10] sm:$0xf]
    %v2026 = vld [vmem:[%s3 + $0x14] sm:$0xf]
    %v2027 = vld [vmem:[%s3 + $0x18] sm:$0xf]
    %v2028 = vld [vmem:[%s3 + $0x1c] sm:$0xf]
    %v2029 = vld [vmem:[%s3 + $0x20] sm:$0xf]
    %v2030 = vld [vmem:[%s3 + $0x24] sm:$0xf]
    %v2031 = vld [vmem:[%s3 + $0x28] sm:$0xf]
    %v2032 = vld [vmem:[%s3 + $0x2c] sm:$0xf]
    %v2033 = vld [vmem:[%s3 + $0x30] sm:$0xf]
    %v2034 = vld [vmem:[%s3 + $0x34] sm:$0xf]
    %v2035 = vld [vmem:[%s3 + $0x38] sm:$0xf]
    %v2036 = vld [vmem:[%s3 + $0x3c] sm:$0xf]
    %v2037 = vld [vmem:[%s3 + $0x40] sm:$0xf]
    %v2038 = vld [vmem:[%s3 + $0x44] sm:$0xf]
    %v2039 = vld [vmem:[%s3 + $0x48] sm:$0xf]
    %v2040 = vld [vmem:[%s3 + $0x4c] sm:$0xf]
    %v2041 = vld [vmem:[%s3 + $0x50] sm:$0xf]
    %v2042 = vld [vmem:[%s3 + $0x54] sm:$0xf]
    %v2043 = vld [vmem:[%s3 + $0x58] sm:$0xf]
    %v2044 = vld [vmem:[%s3 + $0x5c] sm:$0xf]
    %v2045 = vld [vmem:[%s3 + $0x60] sm:$0xf]
    %v2046 = vld [vmem:[%s3 + $0x64] sm:$0xf]
    %v2047 = vld [vmem:[%s3 + $0x68] sm:$0xf]
    %v2048 = vld [vmem:[%s3 + $0x6c] sm:$0xf]
    %v2049 = vld [vmem:[%s3 + $0x70] sm:$0xf]
    %v2050 = vld [vmem:[%s3 + $0x74] sm:$0xf]
    %v2051 = vld [vmem:[%s3 + $0x78] sm:$0xf]
    %v2052 = vld [vmem:[%s3 + $0x7c] sm:$0xf]
    %v2053 = vld [vmem:[%s4] sm:$0x1]
    %v2055 = vperm.slane %v2053, 0
    %v2089 = vunpack.c.l.b16 %v2021
    %v2090 = vunpack.c.l.b16 %v2022
    %v2091 = vunpack.c.l.b16 %v2023
    %v2092 = vunpack.c.l.b16 %v2024
    %v2093 = vunpack.c.l.b16 %v2025
    %v2094 = vunpack.c.l.b16 %v2026
    %v2095 = vunpack.c.l.b16 %v2027
    %v2096 = vunpack.c.l.b16 %v2028
    %v2097 = vunpack.c.l.b16 %v2029
    %v2098 = vunpack.c.l.b16 %v2030
    %v2099 = vunpack.c.l.b16 %v2031
    %v2100 = vunpack.c.l.b16 %v2032
    %v2101 = vunpack.c.l.b16 %v2033
    %v2102 = vunpack.c.l.b16 %v2034
    %v2103 = vunpack.c.l.b16 %v2035
    %v2104 = vunpack.c.l.b16 %v2036
    %v2105 = vunpack.c.l.b16 %v2037
    %v2106 = vunpack.c.l.b16 %v2038
    %v2107 = vunpack.c.l.b16 %v2039
    %v2108 = vunpack.c.l.b16 %v2040
    %v2109 = vunpack.c.l.b16 %v2041
    %v2110 = vunpack.c.l.b16 %v2042
    %v2111 = vunpack.c.l.b16 %v2043
    %v2112 = vunpack.c.l.b16 %v2044
    %v2113 = vunpack.c.l.b16 %v2045
    %v2114 = vunpack.c.l.b16 %v2046
    %v2115 = vunpack.c.l.b16 %v2047
    %v2116 = vunpack.c.l.b16 %v2048
    %v2117 = vunpack.c.l.b16 %v2049
    %v2118 = vunpack.c.l.b16 %v2050
    %v2119 = vunpack.c.l.b16 %v2051
    %v2120 = vunpack.c.l.b16 %v2052
    %v2121 = vpack.c.b16 %v2090, %v2089
    %v2122 = vpack.c.b16 %v2092, %v2091
    %v2123 = vpack.c.b16 %v2094, %v2093
    %v2124 = vpack.c.b16 %v2096, %v2095
    %v2125 = vpack.c.b16 %v2098, %v2097
    %v2126 = vpack.c.b16 %v2100, %v2099
    %v2127 = vpack.c.b16 %v2102, %v2101
    %v2128 = vpack.c.b16 %v2104, %v2103
    %v2129 = vpack.c.b16 %v2106, %v2105
    %v2130 = vpack.c.b16 %v2108, %v2107
    %v2131 = vpack.c.b16 %v2110, %v2109
    %v2132 = vpack.c.b16 %v2112, %v2111
    %v2133 = vpack.c.b16 %v2114, %v2113
    %v2134 = vpack.c.b16 %v2116, %v2115
    %v2135 = vpack.c.b16 %v2118, %v2117
    %v2136 = vpack.c.b16 %v2120, %v2119
    %2153 = vmatpush.bf16.msra.mxu0 %v2128
    %2154 = vmatpush.bf16.msra.mxu0 %v2127
    %2155 = vmatpush.bf16.msra.mxu0 %v2126
    %2156 = vmatpush.bf16.msra.mxu0 %v2125
    %2157 = vmatpush.bf16.msra.mxu0 %v2124
    %2158 = vmatpush.bf16.msra.mxu0 %v2123
    %2159 = vmatpush.bf16.msra.mxu0 %v2122
    %2160 = vmatpush.bf16.msra.mxu0 %v2121
    %2161 = vmatmul.bf16.gmra.mxu0 %v2019
    %v2162 = vpop.f32.mrf.mxu0
    %v2163 = vadd.f32 %v2055, %v2162
    %v2164 = vpop.f32.mrf.mxu0
    %2165 = vdwg.mxu0
    %2166 = vmatpush.bf16.msra.mxu0 %v2136
    %2167 = vmatpush.bf16.msra.mxu0 %v2135
    %2168 = vmatpush.bf16.msra.mxu0 %v2134
    %2169 = vmatpush.bf16.msra.mxu0 %v2133
    %2170 = vmatpush.bf16.msra.mxu0 %v2132
    %2171 = vmatpush.bf16.msra.mxu0 %v2131
    %2172 = vmatpush.bf16.msra.mxu0 %v2130
    %2173 = vmatpush.bf16.msra.mxu0 %v2129
    %2174 = vmatmul.bf16.gmra.mxu0 %v2020
    %v2175 = vpop.f32.mrf.mxu0
    %v2176 = vadd.f32 %v2163, %v2175
    %v2177 = vpop.f32.mrf.mxu0
    %2178 = vdwg.mxu0
    %2179 = vst [vmem:[#allocation2] sm:$0x3] %v2176
    // Predicated region
    $region22: #{simple_cnn_forward.3} parent=1 // pred_check
      _
    $region23: #{simple_cnn_forward.3} parent=1 // pred_check_branch
      %2181 = sbr.rel (0) target = $region25
    $region24: #{simple_cnn_forward.3} parent=1 // pred_region
      %2183 = vsyncadd [#allocation3], 0
      %s2185 = sshll.u32 [#allocation2], 4
      %s2186 = int_to_ptr.vmem [resolvable:$true] %s2185
      %s2187 = sshll.u32 %s5, 4
      %s2188 = int_to_ptr.hbm [resolvable:$true] %s2187
      %2190 = dma.vmem_to_hbm [thread:$0]  %s2186, 32, %s2188, [#allocation3]
    $region25: #{simple_cnn_forward.3} parent=1 // pred_fallthru
      _
    // Predicated region
    $region26: #{simple_cnn_forward.3} parent=1 // pred_check
      _
    $region27: #{simple_cnn_forward.3} parent=1 // pred_check_branch
      %2192 = sbr.rel (0) target = $region29
    $region28: #{simple_cnn_forward.3} parent=1 // pred_region
      %2194 = dma.done [#allocation3], 32
    $region29: #{simple_cnn_forward.3} parent=1 // pred_fallthru
      _
    %2195 = vsyncpa [#allocation3], 1

// kernel: simple_cnn_forward.2
$region0: #{simple_cnn_forward.2}
  #allocation0 [shape = 'u32[]', space=smem, size = 0x4, offset = 0x4, fixed_abs, tag = 'smem constant byte address 0x4 - core index']
  #allocation1 [shape = 'u32[72,128]{1,0:T(1,128)}', space=vmem, size = 0x9000, scoped, tag = 'internal scratch']
  #allocation2 [shape = 'f32[18,32,32]{2,1,0:T(8,128)}', space=vmem, size = 0x48000, scoped, tag = 'scratch operand']
  #allocation3 [shape = 'f32[10,24,64]{2,1,0:T(8,128)}', space=vmem, size = 0x1e000, scoped, tag = 'scratch operand']
  %s0 = inlined_call_operand.vmem [shape: bf16[2,1024,32], index: 0, kind: input, shape index: {}]
  %s1 = inlined_call_operand.vmem [shape: bf16[32,32], index: 1, kind: input, shape index: {}]
  %s2 = inlined_call_operand.vmem [shape: f32[1,32], index: 2, kind: input, shape index: {}]
  %s3 = inlined_call_operand.vmem [shape: bf16[288,64], index: 3, kind: input, shape index: {}]
  %s4 = inlined_call_operand.vmem [shape: f32[1,64], index: 4, kind: input, shape index: {}]
  %s5 = inlined_call_operand.vmem [shape: bf16[576,128], index: 5, kind: input, shape index: {}]
  %s6 = inlined_call_operand.vmem [shape: f32[1,128], index: 6, kind: input, shape index: {}]
  %s7 = inlined_call_operand.vmem [shape: bf16[576,512], index: 7, kind: input, shape index: {}]
  %s8 = inlined_call_operand.vmem [shape: bf16[576,512], index: 8, kind: input, shape index: {}]
  %s9 = inlined_call_operand.vmem [shape: bf16[240,128], index: 9, kind: input, shape index: {}]
  %s10 = inlined_call_operand.vmem [shape: bf16[240,128], index: 10, kind: input, shape index: {}]
  %s11 = inlined_call_operand.vmem [shape: bf16[16,32], index: 11, kind: input, shape index: {}]
  %s12 = inlined_call_operand.vmem [shape: bf16[16,32], index: 12, kind: input, shape index: {}]
  %s13 = inlined_call_operand.vmem [shape: bf16[2,16,128], index: 13, kind: output, shape index: {}]
  %s14 = sld [smem:[#allocation0]]
  $region85: #{simple_cnn_forward.2} parent=0
    _
  %s16 = ssub.s32 1, %s14
  %s17 = scalar_select 0, %s16, %s14
  loop: start=0, step=1, limit=4
  $region2: #{simple_cnn_forward.2} parent=0 // loop_pre_header
    _
  $region3: #{simple_cnn_forward.2} parent=0 // loop_header
    %s19 = sphi 0, %s23
    %p20 = scmp.ge.s32.totalorder %s19, 4
    %s29 = sphi 0, %s31
    %s32 = sphi 0, %s29
    %s33 = sphi 0, %s32
    %s49 = sphi 0, %s33
    %s53 = sphi 0, %s53
    %s55 = sphi 0, %s53
    %s56 = sphi 0, %s55
    %s70 = sphi 0, %s56
    %s74 = sphi 0, %s74
    %s76 = sphi 0, %s74
    %s77 = sphi 0, %s76
    %s91 = sphi 0, %s77
    %s95 = sphi 0, %s95
    %s97 = sphi 0, %s95
    %s98 = sphi 0, %s97
    %s112 = sphi 0, %s98
    %s116 = sphi 0, %s116
    %s118 = sphi 0, %s116
    %s119 = sphi 0, %s118
    %s133 = sphi 0, %s119
    %s137 = sphi 0, %s137
    %s139 = sphi 0, %s137
    %s140 = sphi 0, %s139
    %s154 = sphi 0, %s140
    %s158 = sphi 0, %s158
    %s160 = sphi 0, %s158
    %s161 = sphi 0, %s160
    %s175 = sphi 0, %s161
    %s179 = sphi 0, %s179
    %s181 = sphi 0, %s179
    %s182 = sphi 0, %s181
    %s196 = sphi 0, %s182
    %s200 = sphi 0, %s200
    %s202 = sphi 0, %s200
    %s203 = sphi 0, %s202
    %s217 = sphi 0, %s203
    %s221 = sphi 0, %s221
    %s223 = sphi 0, %s221
    %s224 = sphi 0, %s223
    %s238 = sphi 0, %s224
    %s242 = sphi 0, %s242
    %s244 = sphi 0, %s242
    %s245 = sphi 0, %s244
    %s259 = sphi 0, %s245
    %s263 = sphi 0, %s263
    %s265 = sphi 0, %s263
    %s266 = sphi 0, %s265
    %s280 = sphi 0, %s266
    %s284 = sphi 0, %s284
    %s286 = sphi 0, %s284
    %s287 = sphi 0, %s286
    %s301 = sphi 0, %s287
    %s307 = sphi 0, %s309
    %s310 = sphi 0, %s307
    %s311 = sphi 0, %s310
    %s327 = sphi 0, %s311
  $region4: #{simple_cnn_forward.2} parent=0 // loop_header_branch
    %22 = sbr.rel (%p20) target = $region8
  $region5: #{simple_cnn_forward.2} parent=0 // loop_body
    %s24 = ssub.s32 %s19, 1
    %s25 = ssub.s32 %s19, 2
    %s26 = sadd.s32 %s19, 1
    %s27 = ssub.s32 %s19, %s26
    %p28 = scmp.eq.s32.totalorder %s27, 0
    %s30 = sadd.s32 %s29, 1
    %s31 = scalar_select %p28, %s29, %s30
    %p34 = pneg %p28
    %p35 = scmp.eq.s32.totalorder %s19, 1
    %p36 = por %p34, %p35
    %p37 = scmp.ne.s32.totalorder %s29, %s32
    %p38 = scmp.eq.s32.totalorder %s19, 0
    %p39 = por %p37, %p38
    %p40 = scmp.ne.s32.totalorder %s29, %s32
    %p41 = scmp.eq.s32.totalorder %s24, 1
    %p42 = por %p40, %p41
    %p43 = scmp.ne.s32.totalorder %s32, %s33
    %p44 = scmp.eq.s32.totalorder %s24, 0
    %p45 = por %p43, %p44
    %p46 = scmp.ne.s32.totalorder %s32, %s33
    %p47 = scmp.eq.s32.totalorder %s25, 1
    %p48 = por %p46, %p47
    %p50 = scmp.ne.s32.totalorder %s33, %s49
    %p51 = scmp.eq.s32.totalorder %s25, 0
    %p52 = por %p50, %p51
    %s54 = sadd.s32 %s53, 1
    %p57 = scmp.eq.s32.totalorder %s19, 1
    %p58 = scmp.ne.s32.totalorder %s53, %s55
    %p59 = scmp.eq.s32.totalorder %s19, 0
    %p60 = por %p58, %p59
    %p61 = scmp.ne.s32.totalorder %s53, %s55
    %p62 = scmp.eq.s32.totalorder %s24, 1
    %p63 = por %p61, %p62
    %p64 = scmp.ne.s32.totalorder %s55, %s56
    %p65 = scmp.eq.s32.totalorder %s24, 0
    %p66 = por %p64, %p65
    %p67 = scmp.ne.s32.totalorder %s55, %s56
    %p68 = scmp.eq.s32.totalorder %s25, 1
    %p69 = por %p67, %p68
    %p71 = scmp.ne.s32.totalorder %s56, %s70
    %p72 = scmp.eq.s32.totalorder %s25, 0
    %p73 = por %p71, %p72
    %s75 = sadd.s32 %s74, 1
    %p78 = scmp.eq.s32.totalorder %s19, 1
    %p79 = scmp.ne.s32.totalorder %s74, %s76
    %p80 = scmp.eq.s32.totalorder %s19, 0
    %p81 = por %p79, %p80
    %p82 = scmp.ne.s32.totalorder %s74, %s76
    %p83 = scmp.eq.s32.totalorder %s24, 1
    %p84 = por %p82, %p83
    %p85 = scmp.ne.s32.totalorder %s76, %s77
    %p86 = scmp.eq.s32.totalorder %s24, 0
    %p87 = por %p85, %p86
    %p88 = scmp.ne.s32.totalorder %s76, %s77
    %p89 = scmp.eq.s32.totalorder %s25, 1
    %p90 = por %p88, %p89
    %p92 = scmp.ne.s32.totalorder %s77, %s91
    %p93 = scmp.eq.s32.totalorder %s25, 0
    %p94 = por %p92, %p93
    %s96 = sadd.s32 %s95, 1
    %p99 = scmp.eq.s32.totalorder %s19, 1
    %p100 = scmp.ne.s32.totalorder %s95, %s97
    %p101 = scmp.eq.s32.totalorder %s19, 0
    %p102 = por %p100, %p101
    %p103 = scmp.ne.s32.totalorder %s95, %s97
    %p104 = scmp.eq.s32.totalorder %s24, 1
    %p105 = por %p103, %p104
    %p106 = scmp.ne.s32.totalorder %s97, %s98
    %p107 = scmp.eq.s32.totalorder %s24, 0
    %p108 = por %p106, %p107
    %p109 = scmp.ne.s32.totalorder %s97, %s98
    %p110 = scmp.eq.s32.totalorder %s25, 1
    %p111 = por %p109, %p110
    %p113 = scmp.ne.s32.totalorder %s98, %s112
    %p114 = scmp.eq.s32.totalorder %s25, 0
    %p115 = por %p113, %p114
    %s117 = sadd.s32 %s116, 1
    %p120 = scmp.eq.s32.totalorder %s19, 1
    %p121 = scmp.ne.s32.totalorder %s116, %s118
    %p122 = scmp.eq.s32.totalorder %s19, 0
    %p123 = por %p121, %p122
    %p124 = scmp.ne.s32.totalorder %s116, %s118
    %p125 = scmp.eq.s32.totalorder %s24, 1
    %p126 = por %p124, %p125
    %p127 = scmp.ne.s32.totalorder %s118, %s119
    %p128 = scmp.eq.s32.totalorder %s24, 0
    %p129 = por %p127, %p128
    %p130 = scmp.ne.s32.totalorder %s118, %s119
    %p131 = scmp.eq.s32.totalorder %s25, 1
    %p132 = por %p130, %p131
    %p134 = scmp.ne.s32.totalorder %s119, %s133
    %p135 = scmp.eq.s32.totalorder %s25, 0
    %p136 = por %p134, %p135
    %s138 = sadd.s32 %s137, 1
    %p141 = scmp.eq.s32.totalorder %s19, 1
    %p142 = scmp.ne.s32.totalorder %s137, %s139
    %p143 = scmp.eq.s32.totalorder %s19, 0
    %p144 = por %p142, %p143
    %p145 = scmp.ne.s32.totalorder %s137, %s139
    %p146 = scmp.eq.s32.totalorder %s24, 1
    %p147 = por %p145, %p146
    %p148 = scmp.ne.s32.totalorder %s139, %s140
    %p149 = scmp.eq.s32.totalorder %s24, 0
    %p150 = por %p148, %p149
    %p151 = scmp.ne.s32.totalorder %s139, %s140
    %p152 = scmp.eq.s32.totalorder %s25, 1
    %p153 = por %p151, %p152
    %p155 = scmp.ne.s32.totalorder %s140, %s154
    %p156 = scmp.eq.s32.totalorder %s25, 0
    %p157 = por %p155, %p156
    %s159 = sadd.s32 %s158, 1
    %p162 = scmp.eq.s32.totalorder %s19, 1
    %p163 = scmp.ne.s32.totalorder %s158, %s160
    %p164 = scmp.eq.s32.totalorder %s19, 0
    %p165 = por %p163, %p164
    %p166 = scmp.ne.s32.totalorder %s158, %s160
    %p167 = scmp.eq.s32.totalorder %s24, 1
    %p168 = por %p166, %p167
    %p169 = scmp.ne.s32.totalorder %s160, %s161
    %p170 = scmp.eq.s32.totalorder %s24, 0
    %p171 = por %p169, %p170
    %p172 = scmp.ne.s32.totalorder %s160, %s161
    %p173 = scmp.eq.s32.totalorder %s25, 1
    %p174 = por %p172, %p173
    %p176 = scmp.ne.s32.totalorder %s161, %s175
    %p177 = scmp.eq.s32.totalorder %s25, 0
    %p178 = por %p176, %p177
    %s180 = sadd.s32 %s179, 1
    %p183 = scmp.eq.s32.totalorder %s19, 1
    %p184 = scmp.ne.s32.totalorder %s179, %s181
    %p185 = scmp.eq.s32.totalorder %s19, 0
    %p186 = por %p184, %p185
    %p187 = scmp.ne.s32.totalorder %s179, %s181
    %p188 = scmp.eq.s32.totalorder %s24, 1
    %p189 = por %p187, %p188
    %p190 = scmp.ne.s32.totalorder %s181, %s182
    %p191 = scmp.eq.s32.totalorder %s24, 0
    %p192 = por %p190, %p191
    %p193 = scmp.ne.s32.totalorder %s181, %s182
    %p194 = scmp.eq.s32.totalorder %s25, 1
    %p195 = por %p193, %p194
    %p197 = scmp.ne.s32.totalorder %s182, %s196
    %p198 = scmp.eq.s32.totalorder %s25, 0
    %p199 = por %p197, %p198
    %s201 = sadd.s32 %s200, 1
    %p204 = scmp.eq.s32.totalorder %s19, 1
    %p205 = scmp.ne.s32.totalorder %s200, %s202
    %p206 = scmp.eq.s32.totalorder %s19, 0
    %p207 = por %p205, %p206
    %p208 = scmp.ne.s32.totalorder %s200, %s202
    %p209 = scmp.eq.s32.totalorder %s24, 1
    %p210 = por %p208, %p209
    %p211 = scmp.ne.s32.totalorder %s202, %s203
    %p212 = scmp.eq.s32.totalorder %s24, 0
    %p213 = por %p211, %p212
    %p214 = scmp.ne.s32.totalorder %s202, %s203
    %p215 = scmp.eq.s32.totalorder %s25, 1
    %p216 = por %p214, %p215
    %p218 = scmp.ne.s32.totalorder %s203, %s217
    %p219 = scmp.eq.s32.totalorder %s25, 0
    %p220 = por %p218, %p219
    %s222 = sadd.s32 %s221, 1
    %p225 = scmp.eq.s32.totalorder %s19, 1
    %p226 = scmp.ne.s32.totalorder %s221, %s223
    %p227 = scmp.eq.s32.totalorder %s19, 0
    %p228 = por %p226, %p227
    %p229 = scmp.ne.s32.totalorder %s221, %s223
    %p230 = scmp.eq.s32.totalorder %s24, 1
    %p231 = por %p229, %p230
    %p232 = scmp.ne.s32.totalorder %s223, %s224
    %p233 = scmp.eq.s32.totalorder %s24, 0
    %p234 = por %p232, %p233
    %p235 = scmp.ne.s32.totalorder %s223, %s224
    %p236 = scmp.eq.s32.totalorder %s25, 1
    %p237 = por %p235, %p236
    %p239 = scmp.ne.s32.totalorder %s224, %s238
    %p240 = scmp.eq.s32.totalorder %s25, 0
    %p241 = por %p239, %p240
    %s243 = sadd.s32 %s242, 1
    %p246 = scmp.eq.s32.totalorder %s19, 1
    %p247 = scmp.ne.s32.totalorder %s242, %s244
    %p248 = scmp.eq.s32.totalorder %s19, 0
    %p249 = por %p247, %p248
    %p250 = scmp.ne.s32.totalorder %s242, %s244
    %p251 = scmp.eq.s32.totalorder %s24, 1
    %p252 = por %p250, %p251
    %p253 = scmp.ne.s32.totalorder %s244, %s245
    %p254 = scmp.eq.s32.totalorder %s24, 0
    %p255 = por %p253, %p254
    %p256 = scmp.ne.s32.totalorder %s244, %s245
    %p257 = scmp.eq.s32.totalorder %s25, 1
    %p258 = por %p256, %p257
    %p260 = scmp.ne.s32.totalorder %s245, %s259
    %p261 = scmp.eq.s32.totalorder %s25, 0
    %p262 = por %p260, %p261
    %s264 = sadd.s32 %s263, 1
    %p267 = scmp.eq.s32.totalorder %s19, 1
    %p268 = scmp.ne.s32.totalorder %s263, %s265
    %p269 = scmp.eq.s32.totalorder %s19, 0
    %p270 = por %p268, %p269
    %p271 = scmp.ne.s32.totalorder %s263, %s265
    %p272 = scmp.eq.s32.totalorder %s24, 1
    %p273 = por %p271, %p272
    %p274 = scmp.ne.s32.totalorder %s265, %s266
    %p275 = scmp.eq.s32.totalorder %s24, 0
    %p276 = por %p274, %p275
    %p277 = scmp.ne.s32.totalorder %s265, %s266
    %p278 = scmp.eq.s32.totalorder %s25, 1
    %p279 = por %p277, %p278
    %p281 = scmp.ne.s32.totalorder %s266, %s280
    %p282 = scmp.eq.s32.totalorder %s25, 0
    %p283 = por %p281, %p282
    %s285 = sadd.s32 %s284, 1
    %p288 = scmp.eq.s32.totalorder %s19, 1
    %p289 = scmp.ne.s32.totalorder %s284, %s286
    %p290 = scmp.eq.s32.totalorder %s19, 0
    %p291 = por %p289, %p290
    %p292 = scmp.ne.s32.totalorder %s284, %s286
    %p293 = scmp.eq.s32.totalorder %s24, 1
    %p294 = por %p292, %p293
    %p295 = scmp.ne.s32.totalorder %s286, %s287
    %p296 = scmp.eq.s32.totalorder %s24, 0
    %p297 = por %p295, %p296
    %p298 = scmp.ne.s32.totalorder %s286, %s287
    %p299 = scmp.eq.s32.totalorder %s25, 1
    %p300 = por %p298, %p299
    %p302 = scmp.ne.s32.totalorder %s287, %s301
    %p303 = scmp.eq.s32.totalorder %s25, 0
    %p304 = por %p302, %p303
    %s305 = ssub.s32 %s19, %s26
    %p306 = scmp.eq.s32.totalorder %s305, 0
    %s308 = sadd.s32 %s307, 1
    %s309 = scalar_select %p306, %s307, %s308
    %p312 = pneg %p306
    %p313 = scmp.eq.s32.totalorder %s19, 1
    %p314 = por %p312, %p313
    %p315 = scmp.ne.s32.totalorder %s307, %s310
    %p316 = scmp.eq.s32.totalorder %s19, 0
    %p317 = por %p315, %p316
    %p318 = scmp.ne.s32.totalorder %s307, %s310
    %p319 = scmp.eq.s32.totalorder %s24, 1
    %p320 = por %p318, %p319
    %p321 = scmp.ne.s32.totalorder %s310, %s311
    %p322 = scmp.eq.s32.totalorder %s24, 0
    %p323 = por %p321, %p322
    %p324 = scmp.ne.s32.totalorder %s310, %s311
    %p325 = scmp.eq.s32.totalorder %s25, 1
    %p326 = por %p324, %p325
    %p328 = scmp.ne.s32.totalorder %s311, %s327
    %p329 = scmp.eq.s32.totalorder %s25, 0
    %p330 = por %p328, %p329
    %p331 = scmp.le.s32.totalorder 1, %s19
    %p332 = scmp.lt.s32.totalorder %s19, 3
    %p333 = pnand %p331, %p332
    %p334 = pneg %p333
    // Predicated region
    $region9: #{simple_cnn_forward.2} parent=5 // pred_check
      _
    $region10: #{simple_cnn_forward.2} parent=5 // pred_check_branch
      %336 = sbr.rel (%p333) target = $region12
    $region11: #{simple_cnn_forward.2} parent=5 // pred_region
      %s337 = ssub.s32 %s19, 1
      // Predicated region
      $region13: #{simple_cnn_forward.2} parent=11 // pred_check
        %p338 = pneg %p66
      $region14: #{simple_cnn_forward.2} parent=11 // pred_check_branch
        %340 = sbr.rel (%p338) target = $region16
      $region15: #{simple_cnn_forward.2} parent=11 // pred_region
        _
      $region16: #{simple_cnn_forward.2} parent=11 // pred_fallthru
        _
      // Predicated region
      $region17: #{simple_cnn_forward.2} parent=11 // pred_check
        %p341 = pneg %p87
      $region18: #{simple_cnn_forward.2} parent=11 // pred_check_branch
        %343 = sbr.rel (%p341) target = $region20
      $region19: #{simple_cnn_forward.2} parent=11 // pred_region
        _
      $region20: #{simple_cnn_forward.2} parent=11 // pred_fallthru
        _
      // Predicated region
      $region21: #{simple_cnn_forward.2} parent=11 // pred_check
        %p344 = pneg %p108
      $region22: #{simple_cnn_forward.2} parent=11 // pred_check_branch
        %346 = sbr.rel (%p344) target = $region24
      $region23: #{simple_cnn_forward.2} parent=11 // pred_region
        _
      $region24: #{simple_cnn_forward.2} parent=11 // pred_fallthru
        _
      // Predicated region
      $region25: #{simple_cnn_forward.2} parent=11 // pred_check
        %p347 = pneg %p129
      $region26: #{simple_cnn_forward.2} parent=11 // pred_check_branch
        %349 = sbr.rel (%p347) target = $region28
      $region27: #{simple_cnn_forward.2} parent=11 // pred_region
        _
      $region28: #{simple_cnn_forward.2} parent=11 // pred_fallthru
        _
      // Predicated region
      $region29: #{simple_cnn_forward.2} parent=11 // pred_check
        %p350 = pneg %p150
      $region30: #{simple_cnn_forward.2} parent=11 // pred_check_branch
        %352 = sbr.rel (%p350) target = $region32
      $region31: #{simple_cnn_forward.2} parent=11 // pred_region
        _
      $region32: #{simple_cnn_forward.2} parent=11 // pred_fallthru
        _
      // Predicated region
      $region33: #{simple_cnn_forward.2} parent=11 // pred_check
        %p353 = pneg %p171
      $region34: #{simple_cnn_forward.2} parent=11 // pred_check_branch
        %355 = sbr.rel (%p353) target = $region36
      $region35: #{simple_cnn_forward.2} parent=11 // pred_region
        _
      $region36: #{simple_cnn_forward.2} parent=11 // pred_fallthru
        _
      // Predicated region
      $region37: #{simple_cnn_forward.2} parent=11 // pred_check
        %p356 = pneg %p192
      $region38: #{simple_cnn_forward.2} parent=11 // pred_check_branch
        %358 = sbr.rel (%p356) target = $region40
      $region39: #{simple_cnn_forward.2} parent=11 // pred_region
        _
      $region40: #{simple_cnn_forward.2} parent=11 // pred_fallthru
        _
      // Predicated region
      $region41: #{simple_cnn_forward.2} parent=11 // pred_check
        %p359 = pneg %p213
      $region42: #{simple_cnn_forward.2} parent=11 // pred_check_branch
        %361 = sbr.rel (%p359) target = $region44
      $region43: #{simple_cnn_forward.2} parent=11 // pred_region
        _
      $region44: #{simple_cnn_forward.2} parent=11 // pred_fallthru
        _
      // Predicated region
      $region45: #{simple_cnn_forward.2} parent=11 // pred_check
        %p362 = pneg %p234
      $region46: #{simple_cnn_forward.2} parent=11 // pred_check_branch
        %364 = sbr.rel (%p362) target = $region48
      $region47: #{simple_cnn_forward.2} parent=11 // pred_region
        _
      $region48: #{simple_cnn_forward.2} parent=11 // pred_fallthru
        _
      // Predicated region
      $region49: #{simple_cnn_forward.2} parent=11 // pred_check
        %p365 = pneg %p255
      $region50: #{simple_cnn_forward.2} parent=11 // pred_check_branch
        %367 = sbr.rel (%p365) target = $region52
      $region51: #{simple_cnn_forward.2} parent=11 // pred_region
        _
      $region52: #{simple_cnn_forward.2} parent=11 // pred_fallthru
        _
      // Predicated region
      $region53: #{simple_cnn_forward.2} parent=11 // pred_check
        %p368 = pneg %p276
      $region54: #{simple_cnn_forward.2} parent=11 // pred_check_branch
        %370 = sbr.rel (%p368) target = $region56
      $region55: #{simple_cnn_forward.2} parent=11 // pred_region
        _
      $region56: #{simple_cnn_forward.2} parent=11 // pred_fallthru
        _
      // Predicated region
      $region57: #{simple_cnn_forward.2} parent=11 // pred_check
        %p371 = pneg %p297
      $region58: #{simple_cnn_forward.2} parent=11 // pred_check_branch
        %373 = sbr.rel (%p371) target = $region60
      $region59: #{simple_cnn_forward.2} parent=11 // pred_region
        _
      $region60: #{simple_cnn_forward.2} parent=11 // pred_fallthru
        _
    $region12: #{simple_cnn_forward.2} parent=5 // pred_fallthru
      _
    %p374 = scmp.lt.s32.totalorder %s19, 2
    // Predicated region
    $region61: #{simple_cnn_forward.2} parent=5 // pred_check
      %p375 = pneg %p374
    $region62: #{simple_cnn_forward.2} parent=5 // pred_check_branch
      %377 = sbr.rel (%p375) target = $region64
    $region63: #{simple_cnn_forward.2} parent=5 // pred_region
      // Predicated region
      $region65: #{simple_cnn_forward.2} parent=63 // pred_check
        %p378 = pneg %p39
      $region66: #{simple_cnn_forward.2} parent=63 // pred_check_branch
        %380 = sbr.rel (%p378) target = $region68
      $region67: #{simple_cnn_forward.2} parent=63 // pred_region
        %p381 = scmp.lt.s32.totalorder %s19, 1
        %s382 = scalar_select %p381, %s19, 1
        %s383 = smul.addr %s382, 128
        %s384 = smul.addr %s383, 4
        %s385 = scalar_lea.vmem %s0, %s384
      $region68: #{simple_cnn_forward.2} parent=63 // pred_fallthru
        _
    $region64: #{simple_cnn_forward.2} parent=5 // pred_fallthru
      _
    %p386 = scmp.le.s32.totalorder 1, %s19
    %p387 = scmp.lt.s32.totalorder %s19, 3
    %p388 = pnand %p386, %p387
    %p389 = pneg %p388
    // Predicated region
    $region69: #{simple_cnn_forward.2} parent=5 // pred_check
      _
    $region70: #{simple_cnn_forward.2} parent=5 // pred_check_branch
      %391 = sbr.rel (%p388) target = $region72
    $region71: #{simple_cnn_forward.2} parent=5 // pred_region
      %s392 = ssub.s32 %s19, 1
      %p393 = scmp.lt.s32.totalorder %s24, 1
      %s394 = scalar_select %p393, %s24, 1
      %s395 = smul.addr %s394, 128
      %s396 = smul.addr %s395, 4
      %s397 = scalar_lea.vmem %s0, %s396
      %p398 = pneg %p45
      %p399 = pneg %p42
      %p400 = pneg %p66
      %p401 = pneg %p63
      %p402 = pneg %p87
      %p403 = pneg %p84
      %p404 = pneg %p108
      %p405 = pneg %p105
      %p406 = pneg %p129
      %p407 = pneg %p126
      %p408 = pneg %p150
      %p409 = pneg %p147
      %p410 = pneg %p171
      %p411 = pneg %p168
      %p412 = pneg %p192
      %p413 = pneg %p189
      %p414 = pneg %p213
      %p415 = pneg %p210
      %p416 = pneg %p234
      %p417 = pneg %p231
      %p418 = pneg %p255
      %p419 = pneg %p252
      %p420 = pneg %p276
      %p421 = pneg %p273
      %p422 = pneg %p297
      %p423 = pneg %p294
      %p424 = pneg %p323
      %p425 = pneg %p320
      %p426 = scmp.lt.s32.totalorder %s24, 1
      %s427 = scalar_select %p426, %s24, 1
      %s428 = smul.addr %s427, 2
      %s429 = smul.addr %s428, 4
      %s430 = scalar_lea.vmem %s13, %s429
      %p431 = scmp.lt.s32.totalorder %s24, 1
      %s432 = scalar_select %p431, %s24, 1
      %s433 = smul.addr %s432, 128
      %s434 = smul.addr %s433, 4
      %s435 = scalar_lea.vmem %s0, %s434
      %p436 = scmp.lt.s32.totalorder %s24, 1
      %s437 = scalar_select %p436, %s24, 1
      %s438 = smul.addr %s437, 2
      %s439 = smul.addr %s438, 4
      %s440 = scalar_lea.vmem %s13, %s439
      %v442 = vld [vmem:[%s435] sm:$0xf]
      %v443 = vld [vmem:[%s435 + $0x4] sm:$0xf]
      %v444 = vld [vmem:[%s435 + $0x8] sm:$0xf]
      %v445 = vld [vmem:[%s435 + $0xc] sm:$0xf]
      %v446 = vld [vmem:[%s435 + $0x10] sm:$0xf]
      %v447 = vld [vmem:[%s435 + $0x14] sm:$0xf]
      %v448 = vld [vmem:[%s435 + $0x18] sm:$0xf]
      %v449 = vld [vmem:[%s435 + $0x1c] sm:$0xf]
      %v450 = vld [vmem:[%s435 + $0x20] sm:$0xf]
      %v451 = vld [vmem:[%s435 + $0x24] sm:$0xf]
      %v452 = vld [vmem:[%s435 + $0x28] sm:$0xf]
      %v453 = vld [vmem:[%s435 + $0x2c] sm:$0xf]
      %v454 = vld [vmem:[%s435 + $0x30] sm:$0xf]
      %v455 = vld [vmem:[%s435 + $0x34] sm:$0xf]
      %v456 = vld [vmem:[%s435 + $0x38] sm:$0xf]
      %v457 = vld [vmem:[%s435 + $0x3c] sm:$0xf]
      %v458 = vld [vmem:[%s435 + $0x40] sm:$0xf]
      %v459 = vld [vmem:[%s435 + $0x44] sm:$0xf]
      %v460 = vld [vmem:[%s435 + $0x48] sm:$0xf]
      %v461 = vld [vmem:[%s435 + $0x4c] sm:$0xf]
      %v462 = vld [vmem:[%s435 + $0x50] sm:$0xf]
      %v463 = vld [vmem:[%s435 + $0x54] sm:$0xf]
      %v464 = vld [vmem:[%s435 + $0x58] sm:$0xf]
      %v465 = vld [vmem:[%s435 + $0x5c] sm:$0xf]
      %v466 = vld [vmem:[%s435 + $0x60] sm:$0xf]
      %v467 = vld [vmem:[%s435 + $0x64] sm:$0xf]
      %v468 = vld [vmem:[%s435 + $0x68] sm:$0xf]
      %v469 = vld [vmem:[%s435 + $0x6c] sm:$0xf]
      %v470 = vld [vmem:[%s435 + $0x70] sm:$0xf]
      %v471 = vld [vmem:[%s435 + $0x74] sm:$0xf]
      %v472 = vld [vmem:[%s435 + $0x78] sm:$0xf]
      %v473 = vld [vmem:[%s435 + $0x7c] sm:$0xf]
      %v474 = vld [vmem:[%s435 + $0x80] sm:$0xf]
      %v475 = vld [vmem:[%s435 + $0x84] sm:$0xf]
      %v476 = vld [vmem:[%s435 + $0x88] sm:$0xf]
      %v477 = vld [vmem:[%s435 + $0x8c] sm:$0xf]
      %v478 = vld [vmem:[%s435 + $0x90] sm:$0xf]
      %v479 = vld [vmem:[%s435 + $0x94] sm:$0xf]
      %v480 = vld [vmem:[%s435 + $0x98] sm:$0xf]
      %v481 = vld [vmem:[%s435 + $0x9c] sm:$0xf]
      %v482 = vld [vmem:[%s435 + $0xa0] sm:$0xf]
      %v483 = vld [vmem:[%s435 + $0xa4] sm:$0xf]
      %v484 = vld [vmem:[%s435 + $0xa8] sm:$0xf]
      %v485 = vld [vmem:[%s435 + $0xac] sm:$0xf]
      %v486 = vld [vmem:[%s435 + $0xb0] sm:$0xf]
      %v487 = vld [vmem:[%s435 + $0xb4] sm:$0xf]
      %v488 = vld [vmem:[%s435 + $0xb8] sm:$0xf]
      %v489 = vld [vmem:[%s435 + $0xbc] sm:$0xf]
      %v490 = vld [vmem:[%s435 + $0xc0] sm:$0xf]
      %v491 = vld [vmem:[%s435 + $0xc4] sm:$0xf]
      %v492 = vld [vmem:[%s435 + $0xc8] sm:$0xf]
      %v493 = vld [vmem:[%s435 + $0xcc] sm:$0xf]
      %v494 = vld [vmem:[%s435 + $0xd0] sm:$0xf]
      %v495 = vld [vmem:[%s435 + $0xd4] sm:$0xf]
      %v496 = vld [vmem:[%s435 + $0xd8] sm:$0xf]
      %v497 = vld [vmem:[%s435 + $0xdc] sm:$0xf]
      %v498 = vld [vmem:[%s435 + $0xe0] sm:$0xf]
      %v499 = vld [vmem:[%s435 + $0xe4] sm:$0xf]
      %v500 = vld [vmem:[%s435 + $0xe8] sm:$0xf]
      %v501 = vld [vmem:[%s435 + $0xec] sm:$0xf]
      %v502 = vld [vmem:[%s435 + $0xf0] sm:$0xf]
      %v503 = vld [vmem:[%s435 + $0xf4] sm:$0xf]
      %v504 = vld [vmem:[%s435 + $0xf8] sm:$0xf]
      %v505 = vld [vmem:[%s435 + $0xfc] sm:$0xf]
      %v506 = vld [vmem:[%s435 + $0x100] sm:$0xf]
      %v507 = vld [vmem:[%s435 + $0x104] sm:$0xf]
      %v508 = vld [vmem:[%s435 + $0x108] sm:$0xf]
      %v509 = vld [vmem:[%s435 + $0x10c] sm:$0xf]
      %v510 = vld [vmem:[%s435 + $0x110] sm:$0xf]
      %v511 = vld [vmem:[%s435 + $0x114] sm:$0xf]
      %v512 = vld [vmem:[%s435 + $0x118] sm:$0xf]
      %v513 = vld [vmem:[%s435 + $0x11c] sm:$0xf]
      %v514 = vld [vmem:[%s435 + $0x120] sm:$0xf]
      %v515 = vld [vmem:[%s435 + $0x124] sm:$0xf]
      %v516 = vld [vmem:[%s435 + $0x128] sm:$0xf]
      %v517 = vld [vmem:[%s435 + $0x12c] sm:$0xf]
      %v518 = vld [vmem:[%s435 + $0x130] sm:$0xf]
      %v519 = vld [vmem:[%s435 + $0x134] sm:$0xf]
      %v520 = vld [vmem:[%s435 + $0x138] sm:$0xf]
      %v521 = vld [vmem:[%s435 + $0x13c] sm:$0xf]
      %v522 = vld [vmem:[%s435 + $0x140] sm:$0xf]
      %v523 = vld [vmem:[%s435 + $0x144] sm:$0xf]
      %v524 = vld [vmem:[%s435 + $0x148] sm:$0xf]
      %v525 = vld [vmem:[%s435 + $0x14c] sm:$0xf]
      %v526 = vld [vmem:[%s435 + $0x150] sm:$0xf]
      %v527 = vld [vmem:[%s435 + $0x154] sm:$0xf]
      %v528 = vld [vmem:[%s435 + $0x158] sm:$0xf]
      %v529 = vld [vmem:[%s435 + $0x15c] sm:$0xf]
      %v530 = vld [vmem:[%s435 + $0x160] sm:$0xf]
      %v531 = vld [vmem:[%s435 + $0x164] sm:$0xf]
      %v532 = vld [vmem:[%s435 + $0x168] sm:$0xf]
      %v533 = vld [vmem:[%s435 + $0x16c] sm:$0xf]
      %v534 = vld [vmem:[%s435 + $0x170] sm:$0xf]
      %v535 = vld [vmem:[%s435 + $0x174] sm:$0xf]
      %v536 = vld [vmem:[%s435 + $0x178] sm:$0xf]
      %v537 = vld [vmem:[%s435 + $0x17c] sm:$0xf]
      %v538 = vld [vmem:[%s435 + $0x180] sm:$0xf]
      %v539 = vld [vmem:[%s435 + $0x184] sm:$0xf]
      %v540 = vld [vmem:[%s435 + $0x188] sm:$0xf]
      %v541 = vld [vmem:[%s435 + $0x18c] sm:$0xf]
      %v542 = vld [vmem:[%s435 + $0x190] sm:$0xf]
      %v543 = vld [vmem:[%s435 + $0x194] sm:$0xf]
      %v544 = vld [vmem:[%s435 + $0x198] sm:$0xf]
      %v545 = vld [vmem:[%s435 + $0x19c] sm:$0xf]
      %v546 = vld [vmem:[%s435 + $0x1a0] sm:$0xf]
      %v547 = vld [vmem:[%s435 + $0x1a4] sm:$0xf]
      %v548 = vld [vmem:[%s435 + $0x1a8] sm:$0xf]
      %v549 = vld [vmem:[%s435 + $0x1ac] sm:$0xf]
      %v550 = vld [vmem:[%s435 + $0x1b0] sm:$0xf]
      %v551 = vld [vmem:[%s435 + $0x1b4] sm:$0xf]
      %v552 = vld [vmem:[%s435 + $0x1b8] sm:$0xf]
      %v553 = vld [vmem:[%s435 + $0x1bc] sm:$0xf]
      %v554 = vld [vmem:[%s435 + $0x1c0] sm:$0xf]
      %v555 = vld [vmem:[%s435 + $0x1c4] sm:$0xf]
      %v556 = vld [vmem:[%s435 + $0x1c8] sm:$0xf]
      %v557 = vld [vmem:[%s435 + $0x1cc] sm:$0xf]
      %v558 = vld [vmem:[%s435 + $0x1d0] sm:$0xf]
      %v559 = vld [vmem:[%s435 + $0x1d4] sm:$0xf]
      %v560 = vld [vmem:[%s435 + $0x1d8] sm:$0xf]
      %v561 = vld [vmem:[%s435 + $0x1dc] sm:$0xf]
      %v562 = vld [vmem:[%s435 + $0x1e0] sm:$0xf]
      %v563 = vld [vmem:[%s435 + $0x1e4] sm:$0xf]
      %v564 = vld [vmem:[%s435 + $0x1e8] sm:$0xf]
      %v565 = vld [vmem:[%s435 + $0x1ec] sm:$0xf]
      %v566 = vld [vmem:[%s435 + $0x1f0] sm:$0xf]
      %v567 = vld [vmem:[%s435 + $0x1f4] sm:$0xf]
      %v568 = vld [vmem:[%s435 + $0x1f8] sm:$0xf]
      %v569 = vld [vmem:[%s435 + $0x1fc] sm:$0xf]
      %v570 = vld [vmem:[%s1] sm:$0xf]
      %v571 = vld [vmem:[%s1 + $0x4] sm:$0xf]
      %v572 = vld [vmem:[%s1 + $0x8] sm:$0xf]
      %v573 = vld [vmem:[%s1 + $0xc] sm:$0xf]
      %v574 = vld [vmem:[%s2] sm:$0x1]
      %v576 = vperm.slane %v574, 0
      %v706 = vunpack.c.l.b16 %v442
      %v707 = vunpack.c.l.b16 %v443
      %v708 = vunpack.c.l.b16 %v444
      %v709 = vunpack.c.l.b16 %v445
      %v710 = vunpack.c.l.b16 %v446
      %v711 = vunpack.c.l.b16 %v447
      %v712 = vunpack.c.l.b16 %v448
      %v713 = vunpack.c.l.b16 %v449
      %v714 = vunpack.c.l.b16 %v450
      %v715 = vunpack.c.l.b16 %v451
      %v716 = vunpack.c.l.b16 %v452
      %v717 = vunpack.c.l.b16 %v453
      %v718 = vunpack.c.l.b16 %v454
      %v719 = vunpack.c.l.b16 %v455
      %v720 = vunpack.c.l.b16 %v456
      %v721 = vunpack.c.l.b16 %v457
      %v722 = vunpack.c.l.b16 %v458
      %v723 = vunpack.c.l.b16 %v459
      %v724 = vunpack.c.l.b16 %v460
      %v725 = vunpack.c.l.b16 %v461
      %v726 = vunpack.c.l.b16 %v462
      %v727 = vunpack.c.l.b16 %v463
      %v728 = vunpack.c.l.b16 %v464
      %v729 = vunpack.c.l.b16 %v465
      %v730 = vunpack.c.l.b16 %v466
      %v731 = vunpack.c.l.b16 %v467
      %v732 = vunpack.c.l.b16 %v468
      %v733 = vunpack.c.l.b16 %v469
      %v734 = vunpack.c.l.b16 %v470
      %v735 = vunpack.c.l.b16 %v471
      %v736 = vunpack.c.l.b16 %v472
      %v737 = vunpack.c.l.b16 %v473
      %v738 = vunpack.c.l.b16 %v474
      %v739 = vunpack.c.l.b16 %v475
      %v740 = vunpack.c.l.b16 %v476
      %v741 = vunpack.c.l.b16 %v477
      %v742 = vunpack.c.l.b16 %v478
      %v743 = vunpack.c.l.b16 %v479
      %v744 = vunpack.c.l.b16 %v480
      %v745 = vunpack.c.l.b16 %v481
      %v746 = vunpack.c.l.b16 %v482
      %v747 = vunpack.c.l.b16 %v483
      %v748 = vunpack.c.l.b16 %v484
      %v749 = vunpack.c.l.b16 %v485
      %v750 = vunpack.c.l.b16 %v486
      %v751 = vunpack.c.l.b16 %v487
      %v752 = vunpack.c.l.b16 %v488
      %v753 = vunpack.c.l.b16 %v489
      %v754 = vunpack.c.l.b16 %v490
      %v755 = vunpack.c.l.b16 %v491
      %v756 = vunpack.c.l.b16 %v492
      %v757 = vunpack.c.l.b16 %v493
      %v758 = vunpack.c.l.b16 %v494
      %v759 = vunpack.c.l.b16 %v495
      %v760 = vunpack.c.l.b16 %v496
      %v761 = vunpack.c.l.b16 %v497
      %v762 = vunpack.c.l.b16 %v498
      %v763 = vunpack.c.l.b16 %v499
      %v764 = vunpack.c.l.b16 %v500
      %v765 = vunpack.c.l.b16 %v501
      %v766 = vunpack.c.l.b16 %v502
      %v767 = vunpack.c.l.b16 %v503
      %v768 = vunpack.c.l.b16 %v504
      %v769 = vunpack.c.l.b16 %v505
      %v770 = vunpack.c.l.b16 %v506
      %v771 = vunpack.c.l.b16 %v507
      %v772 = vunpack.c.l.b16 %v508
      %v773 = vunpack.c.l.b16 %v509
      %v774 = vunpack.c.l.b16 %v510
      %v775 = vunpack.c.l.b16 %v511
      %v776 = vunpack.c.l.b16 %v512
      %v777 = vunpack.c.l.b16 %v513
      %v778 = vunpack.c.l.b16 %v514
      %v779 = vunpack.c.l.b16 %v515
      %v780 = vunpack.c.l.b16 %v516
      %v781 = vunpack.c.l.b16 %v517
      %v782 = vunpack.c.l.b16 %v518
      %v783 = vunpack.c.l.b16 %v519
      %v784 = vunpack.c.l.b16 %v520
      %v785 = vunpack.c.l.b16 %v521
      %v786 = vunpack.c.l.b16 %v522
      %v787 = vunpack.c.l.b16 %v523
      %v788 = vunpack.c.l.b16 %v524
      %v789 = vunpack.c.l.b16 %v525
      %v790 = vunpack.c.l.b16 %v526
      %v791 = vunpack.c.l.b16 %v527
      %v792 = vunpack.c.l.b16 %v528
      %v793 = vunpack.c.l.b16 %v529
      %v794 = vunpack.c.l.b16 %v530
      %v795 = vunpack.c.l.b16 %v531
      %v796 = vunpack.c.l.b16 %v532
      %v797 = vunpack.c.l.b16 %v533
      %v798 = vunpack.c.l.b16 %v534
      %v799 = vunpack.c.l.b16 %v535
      %v800 = vunpack.c.l.b16 %v536
      %v801 = vunpack.c.l.b16 %v537
      %v802 = vunpack.c.l.b16 %v538
      %v803 = vunpack.c.l.b16 %v539
      %v804 = vunpack.c.l.b16 %v540
      %v805 = vunpack.c.l.b16 %v541
      %v806 = vunpack.c.l.b16 %v542
      %v807 = vunpack.c.l.b16 %v543
      %v808 = vunpack.c.l.b16 %v544
      %v809 = vunpack.c.l.b16 %v545
      %v810 = vunpack.c.l.b16 %v546
      %v811 = vunpack.c.l.b16 %v547
      %v812 = vunpack.c.l.b16 %v548
      %v813 = vunpack.c.l.b16 %v549
      %v814 = vunpack.c.l.b16 %v550
      %v815 = vunpack.c.l.b16 %v551
      %v816 = vunpack.c.l.b16 %v552
      %v817 = vunpack.c.l.b16 %v553
      %v818 = vunpack.c.l.b16 %v554
      %v819 = vunpack.c.l.b16 %v555
      %v820 = vunpack.c.l.b16 %v556
      %v821 = vunpack.c.l.b16 %v557
      %v822 = vunpack.c.l.b16 %v558
      %v823 = vunpack.c.l.b16 %v559
      %v824 = vunpack.c.l.b16 %v560
      %v825 = vunpack.c.l.b16 %v561
      %v826 = vunpack.c.l.b16 %v562
      %v827 = vunpack.c.l.b16 %v563
      %v828 = vunpack.c.l.b16 %v564
      %v829 = vunpack.c.l.b16 %v565
      %v830 = vunpack.c.l.b16 %v566
      %v831 = vunpack.c.l.b16 %v567
      %v832 = vunpack.c.l.b16 %v568
      %v833 = vunpack.c.l.b16 %v569
      %v834 = vpack.c.b16 %v707, %v706
      %v835 = vpack.c.b16 %v709, %v708
      %v836 = vpack.c.b16 %v711, %v710
      %v837 = vpack.c.b16 %v713, %v712
      %v838 = vpack.c.b16 %v715, %v714
      %v839 = vpack.c.b16 %v717, %v716
      %v840 = vpack.c.b16 %v719, %v718
      %v841 = vpack.c.b16 %v721, %v720
      %v842 = vpack.c.b16 %v723, %v722
      %v843 = vpack.c.b16 %v725, %v724
      %v844 = vpack.c.b16 %v727, %v726
      %v845 = vpack.c.b16 %v729, %v728
      %v846 = vpack.c.b16 %v731, %v730
      %v847 = vpack.c.b16 %v733, %v732
      %v848 = vpack.c.b16 %v735, %v734
      %v849 = vpack.c.b16 %v737, %v736
      %v850 = vpack.c.b16 %v739, %v738
      %v851 = vpack.c.b16 %v741, %v740
      %v852 = vpack.c.b16 %v743, %v742
      %v853 = vpack.c.b16 %v745, %v744
      %v854 = vpack.c.b16 %v747, %v746
      %v855 = vpack.c.b16 %v749, %v748
      %v856 = vpack.c.b16 %v751, %v750
      %v857 = vpack.c.b16 %v753, %v752
      %v858 = vpack.c.b16 %v755, %v754
      %v859 = vpack.c.b16 %v757, %v756
      %v860 = vpack.c.b16 %v759, %v758
      %v861 = vpack.c.b16 %v761, %v760
      %v862 = vpack.c.b16 %v763, %v762
      %v863 = vpack.c.b16 %v765, %v764
      %v864 = vpack.c.b16 %v767, %v766
      %v865 = vpack.c.b16 %v769, %v768
      %v866 = vpack.c.b16 %v771, %v770
      %v867 = vpack.c.b16 %v773, %v772
      %v868 = vpack.c.b16 %v775, %v774
      %v869 = vpack.c.b16 %v777, %v776
      %v870 = vpack.c.b16 %v779, %v778
      %v871 = vpack.c.b16 %v781, %v780
      %v872 = vpack.c.b16 %v783, %v782
      %v873 = vpack.c.b16 %v785, %v784
      %v874 = vpack.c.b16 %v787, %v786
      %v875 = vpack.c.b16 %v789, %v788
      %v876 = vpack.c.b16 %v791, %v790
      %v877 = vpack.c.b16 %v793, %v792
      %v878 = vpack.c.b16 %v795, %v794
      %v879 = vpack.c.b16 %v797, %v796
      %v880 = vpack.c.b16 %v799, %v798
      %v881 = vpack.c.b16 %v801, %v800
      %v882 = vpack.c.b16 %v803, %v802
      %v883 = vpack.c.b16 %v805, %v804
      %v884 = vpack.c.b16 %v807, %v806
      %v885 = vpack.c.b16 %v809, %v808
      %v886 = vpack.c.b16 %v811, %v810
      %v887 = vpack.c.b16 %v813, %v812
      %v888 = vpack.c.b16 %v815, %v814
      %v889 = vpack.c.b16 %v817, %v816
      %v890 = vpack.c.b16 %v819, %v818
      %v891 = vpack.c.b16 %v821, %v820
      %v892 = vpack.c.b16 %v823, %v822
      %v893 = vpack.c.b16 %v825, %v824
      %v894 = vpack.c.b16 %v827, %v826
      %v895 = vpack.c.b16 %v829, %v828
      %v896 = vpack.c.b16 %v831, %v830
      %v897 = vpack.c.b16 %v833, %v832
      %v902 = vunpack.c.l.b16 %v570
      %v903 = vunpack.c.l.b16 %v571
      %v904 = vunpack.c.l.b16 %v572
      %v905 = vunpack.c.l.b16 %v573
      %v906 = vpack.c.b16 %v903, %v902
      %v907 = vpack.c.b16 %v905, %v904
      %vm910 = vcmask 261120
      %v912 = vsel %vm910, %v834, 0
      %v915 = vsel %vm910, %v835, 0
      %v918 = vsel %vm910, %v836, 0
      %v921 = vsel %vm910, %v837, 0
      %v924 = vsel %vm910, %v838, 0
      %v927 = vsel %vm910, %v839, 0
      %v930 = vsel %vm910, %v840, 0
      %v933 = vsel %vm910, %v841, 0
      %v936 = vsel %vm910, %v842, 0
      %v939 = vsel %vm910, %v843, 0
      %v942 = vsel %vm910, %v844, 0
      %v945 = vsel %vm910, %v845, 0
      %v948 = vsel %vm910, %v846, 0
      %v951 = vsel %vm910, %v847, 0
      %v954 = vsel %vm910, %v848, 0
      %v957 = vsel %vm910, %v849, 0
      %v960 = vsel %vm910, %v850, 0
      %v963 = vsel %vm910, %v851, 0
      %v966 = vsel %vm910, %v852, 0
      %v969 = vsel %vm910, %v853, 0
      %v972 = vsel %vm910, %v854, 0
      %v975 = vsel %vm910, %v855, 0
      %v978 = vsel %vm910, %v856, 0
      %v981 = vsel %vm910, %v857, 0
      %v984 = vsel %vm910, %v858, 0
      %v987 = vsel %vm910, %v859, 0
      %v990 = vsel %vm910, %v860, 0
      %v993 = vsel %vm910, %v861, 0
      %v996 = vsel %vm910, %v862, 0
      %v999 = vsel %vm910, %v863, 0
      %v1002 = vsel %vm910, %v864, 0
      %v1005 = vsel %vm910, %v865, 0
      %v1008 = vsel %vm910, %v866, 0
      %v1011 = vsel %vm910, %v867, 0
      %v1014 = vsel %vm910, %v868, 0
      %v1017 = vsel %vm910, %v869, 0
      %v1020 = vsel %vm910, %v870, 0
      %v1023 = vsel %vm910, %v871, 0
      %v1026 = vsel %vm910, %v872, 0
      %v1029 = vsel %vm910, %v873, 0
      %v1032 = vsel %vm910, %v874, 0
      %v1035 = vsel %vm910, %v875, 0
      %v1038 = vsel %vm910, %v876, 0
      %v1041 = vsel %vm910, %v877, 0
      %v1044 = vsel %vm910, %v878, 0
      %v1047 = vsel %vm910, %v879, 0
      %v1050 = vsel %vm910, %v880, 0
      %v1053 = vsel %vm910, %v881, 0
      %v1056 = vsel %vm910, %v882, 0
      %v1059 = vsel %vm910, %v883, 0
      %v1062 = vsel %vm910, %v884, 0
      %v1065 = vsel %vm910, %v885, 0
      %v1068 = vsel %vm910, %v886, 0
      %v1071 = vsel %vm910, %v887, 0
      %v1074 = vsel %vm910, %v888, 0
      %v1077 = vsel %vm910, %v889, 0
      %v1080 = vsel %vm910, %v890, 0
      %v1083 = vsel %vm910, %v891, 0
      %v1086 = vsel %vm910, %v892, 0
      %v1089 = vsel %vm910, %v893, 0
      %v1092 = vsel %vm910, %v894, 0
      %v1095 = vsel %vm910, %v895, 0
      %v1098 = vsel %vm910, %v896, 0
      %v1101 = vsel %vm910, %v897, 0
      %1103 = vmatpush.bf16.msra.mxu0 0
      %1104 = vmatpush.bf16.msra.mxu0 0
      %1105 = vmatpush.bf16.msra.mxu0 0
      %1106 = vmatpush.bf16.msra.mxu0 0
      %1107 = vmatpush.bf16.msra.mxu0 0
      %1108 = vmatpush.bf16.msra.mxu0 0
      %1109 = vmatpush.bf16.msra.mxu0 %v907
      %1110 = vmatpush.bf16.msra.mxu0 %v906
      %1111 = vmatmul.bf16.gmra.mxu0 %v912
      %v1112 = vpop.f32.mrf.mxu0
      %v1113 = vadd.f32 %v576, %v1112
      %v1114 = vpop.f32.mrf.mxu0
      %v1115 = vadd.f32 %v576, %v1114
      %1116 = vmatmul.bf16.gmra.mxu0 %v915
      %v1117 = vpop.f32.mrf.mxu0
      %v1118 = vadd.f32 %v576, %v1117
      %v1119 = vpop.f32.mrf.mxu0
      %v1120 = vadd.f32 %v576, %v1119
      %1121 = vmatmul.bf16.gmra.mxu0 %v918
      %v1122 = vpop.f32.mrf.mxu0
      %v1123 = vadd.f32 %v576, %v1122
      %v1124 = vpop.f32.mrf.mxu0
      %v1125 = vadd.f32 %v576, %v1124
      %1126 = vmatmul.bf16.gmra.mxu0 %v921
      %v1127 = vpop.f32.mrf.mxu0
      %v1128 = vadd.f32 %v576, %v1127
      %v1129 = vpop.f32.mrf.mxu0
      %v1130 = vadd.f32 %v576, %v1129
      %1131 = vmatmul.bf16.gmra.mxu0 %v924
      %v1132 = vpop.f32.mrf.mxu0
      %v1133 = vadd.f32 %v576, %v1132
      %v1134 = vpop.f32.mrf.mxu0
      %v1135 = vadd.f32 %v576, %v1134
      %1136 = vmatmul.bf16.gmra.mxu0 %v927
      %v1137 = vpop.f32.mrf.mxu0
      %v1138 = vadd.f32 %v576, %v1137
      %v1139 = vpop.f32.mrf.mxu0
      %v1140 = vadd.f32 %v576, %v1139
      %1141 = vmatmul.bf16.gmra.mxu0 %v930
      %v1142 = vpop.f32.mrf.mxu0
      %v1143 = vadd.f32 %v576, %v1142
      %v1144 = vpop.f32.mrf.mxu0
      %v1145 = vadd.f32 %v576, %v1144
      %1146 = vmatmul.bf16.gmra.mxu0 %v933
      %v1147 = vpop.f32.mrf.mxu0
      %v1148 = vadd.f32 %v576, %v1147
      %v1149 = vpop.f32.mrf.mxu0
      %v1150 = vadd.f32 %v576, %v1149
      %1151 = vmatmul.bf16.gmra.mxu0 %v936
      %v1152 = vpop.f32.mrf.mxu0
      %v1153 = vadd.f32 %v576, %v1152
      %v1154 = vpop.f32.mrf.mxu0
      %v1155 = vadd.f32 %v576, %v1154
      %1156 = vmatmul.bf16.gmra.mxu0 %v939
      %v1157 = vpop.f32.mrf.mxu0
      %v1158 = vadd.f32 %v576, %v1157
      %v1159 = vpop.f32.mrf.mxu0
      %v1160 = vadd.f32 %v576, %v1159
      %1161 = vmatmul.bf16.gmra.mxu0 %v942
      %v1162 = vpop.f32.mrf.mxu0
      %v1163 = vadd.f32 %v576, %v1162
      %v1164 = vpop.f32.mrf.mxu0
      %v1165 = vadd.f32 %v576, %v1164
      %1166 = vmatmul.bf16.gmra.mxu0 %v945
      %v1167 = vpop.f32.mrf.mxu0
      %v1168 = vadd.f32 %v576, %v1167
      %v1169 = vpop.f32.mrf.mxu0
      %v1170 = vadd.f32 %v576, %v1169
      %1171 = vmatmul.bf16.gmra.mxu0 %v948
      %v1172 = vpop.f32.mrf.mxu0
      %v1173 = vadd.f32 %v576, %v1172
      %v1174 = vpop.f32.mrf.mxu0
      %v1175 = vadd.f32 %v576, %v1174
      %1176 = vmatmul.bf16.gmra.mxu0 %v951
      %v1177 = vpop.f32.mrf.mxu0
      %v1178 = vadd.f32 %v576, %v1177
      %v1179 = vpop.f32.mrf.mxu0
      %v1180 = vadd.f32 %v576, %v1179
      %1181 = vmatmul.bf16.gmra.mxu0 %v954
      %v1182 = vpop.f32.mrf.mxu0
      %v1183 = vadd.f32 %v576, %v1182
      %v1184 = vpop.f32.mrf.mxu0
      %v1185 = vadd.f32 %v576, %v1184
      %1186 = vmatmul.bf16.gmra.mxu0 %v957
      %v1187 = vpop.f32.mrf.mxu0
      %v1188 = vadd.f32 %v576, %v1187
      %v1189 = vpop.f32.mrf.mxu0
      %v1190 = vadd.f32 %v576, %v1189
      %1191 = vmatmul.bf16.gmra.mxu0 %v960
      %v1192 = vpop.f32.mrf.mxu0
      %v1193 = vadd.f32 %v576, %v1192
      %v1194 = vpop.f32.mrf.mxu0
      %v1195 = vadd.f32 %v576, %v1194
      %1196 = vmatmul.bf16.gmra.mxu0 %v963
      %v1197 = vpop.f32.mrf.mxu0
      %v1198 = vadd.f32 %v576, %v1197
      %v1199 = vpop.f32.mrf.mxu0
      %v1200 = vadd.f32 %v576, %v1199
      %1201 = vmatmul.bf16.gmra.mxu0 %v966
      %v1202 = vpop.f32.mrf.mxu0
      %v1203 = vadd.f32 %v576, %v1202
      %v1204 = vpop.f32.mrf.mxu0
      %v1205 = vadd.f32 %v576, %v1204
      %1206 = vmatmul.bf16.gmra.mxu0 %v969
      %v1207 = vpop.f32.mrf.mxu0
      %v1208 = vadd.f32 %v576, %v1207
      %v1209 = vpop.f32.mrf.mxu0
      %v1210 = vadd.f32 %v576, %v1209
      %1211 = vmatmul.bf16.gmra.mxu0 %v972
      %v1212 = vpop.f32.mrf.mxu0
      %v1213 = vadd.f32 %v576, %v1212
      %v1214 = vpop.f32.mrf.mxu0
      %v1215 = vadd.f32 %v576, %v1214
      %1216 = vmatmul.bf16.gmra.mxu0 %v975
      %v1217 = vpop.f32.mrf.mxu0
      %v1218 = vadd.f32 %v576, %v1217
      %v1219 = vpop.f32.mrf.mxu0
      %v1220 = vadd.f32 %v576, %v1219
      %1221 = vmatmul.bf16.gmra.mxu0 %v978
      %v1222 = vpop.f32.mrf.mxu0
      %v1223 = vadd.f32 %v576, %v1222
      %v1224 = vpop.f32.mrf.mxu0
      %v1225 = vadd.f32 %v576, %v1224
      %1226 = vmatmul.bf16.gmra.mxu0 %v981
      %v1227 = vpop.f32.mrf.mxu0
      %v1228 = vadd.f32 %v576, %v1227
      %v1229 = vpop.f32.mrf.mxu0
      %v1230 = vadd.f32 %v576, %v1229
      %1231 = vmatmul.bf16.gmra.mxu0 %v984
      %v1232 = vpop.f32.mrf.mxu0
      %v1233 = vadd.f32 %v576, %v1232
      %v1234 = vpop.f32.mrf.mxu0
      %v1235 = vadd.f32 %v576, %v1234
      %1236 = vmatmul.bf16.gmra.mxu0 %v987
      %v1237 = vpop.f32.mrf.mxu0
      %v1238 = vadd.f32 %v576, %v1237
      %v1239 = vpop.f32.mrf.mxu0
      %v1240 = vadd.f32 %v576, %v1239
      %1241 = vmatmul.bf16.gmra.mxu0 %v990
      %v1242 = vpop.f32.mrf.mxu0
      %v1243 = vadd.f32 %v576, %v1242
      %v1244 = vpop.f32.mrf.mxu0
      %v1245 = vadd.f32 %v576, %v1244
      %1246 = vmatmul.bf16.gmra.mxu0 %v993
      %v1247 = vpop.f32.mrf.mxu0
      %v1248 = vadd.f32 %v576, %v1247
      %v1249 = vpop.f32.mrf.mxu0
      %v1250 = vadd.f32 %v576, %v1249
      %1251 = vmatmul.bf16.gmra.mxu0 %v996
      %v1252 = vpop.f32.mrf.mxu0
      %v1253 = vadd.f32 %v576, %v1252
      %v1254 = vpop.f32.mrf.mxu0
      %v1255 = vadd.f32 %v576, %v1254
      %1256 = vmatmul.bf16.gmra.mxu0 %v999
      %v1257 = vpop.f32.mrf.mxu0
      %v1258 = vadd.f32 %v576, %v1257
      %v1259 = vpop.f32.mrf.mxu0
      %v1260 = vadd.f32 %v576, %v1259
      %1261 = vmatmul.bf16.gmra.mxu0 %v1002
      %v1262 = vpop.f32.mrf.mxu0
      %v1263 = vadd.f32 %v576, %v1262
      %v1264 = vpop.f32.mrf.mxu0
      %v1265 = vadd.f32 %v576, %v1264
      %1266 = vmatmul.bf16.gmra.mxu0 %v1005
      %v1267 = vpop.f32.mrf.mxu0
      %v1268 = vadd.f32 %v576, %v1267
      %v1269 = vpop.f32.mrf.mxu0
      %v1270 = vadd.f32 %v576, %v1269
      %1271 = vmatmul.bf16.gmra.mxu0 %v1008
      %v1272 = vpop.f32.mrf.mxu0
      %v1273 = vadd.f32 %v576, %v1272
      %v1274 = vpop.f32.mrf.mxu0
      %v1275 = vadd.f32 %v576, %v1274
      %1276 = vmatmul.bf16.gmra.mxu0 %v1011
      %v1277 = vpop.f32.mrf.mxu0
      %v1278 = vadd.f32 %v576, %v1277
      %v1279 = vpop.f32.mrf.mxu0
      %v1280 = vadd.f32 %v576, %v1279
      %1281 = vmatmul.bf16.gmra.mxu0 %v1014
      %v1282 = vpop.f32.mrf.mxu0
      %v1283 = vadd.f32 %v576, %v1282
      %v1284 = vpop.f32.mrf.mxu0
      %v1285 = vadd.f32 %v576, %v1284
      %1286 = vmatmul.bf16.gmra.mxu0 %v1017
      %v1287 = vpop.f32.mrf.mxu0
      %v1288 = vadd.f32 %v576, %v1287
      %v1289 = vpop.f32.mrf.mxu0
      %v1290 = vadd.f32 %v576, %v1289
      %1291 = vmatmul.bf16.gmra.mxu0 %v1020
      %v1292 = vpop.f32.mrf.mxu0
      %v1293 = vadd.f32 %v576, %v1292
      %v1294 = vpop.f32.mrf.mxu0
      %v1295 = vadd.f32 %v576, %v1294
      %1296 = vmatmul.bf16.gmra.mxu0 %v1023
      %v1297 = vpop.f32.mrf.mxu0
      %v1298 = vadd.f32 %v576, %v1297
      %v1299 = vpop.f32.mrf.mxu0
      %v1300 = vadd.f32 %v576, %v1299
      %1301 = vmatmul.bf16.gmra.mxu0 %v1026
      %v1302 = vpop.f32.mrf.mxu0
      %v1303 = vadd.f32 %v576, %v1302
      %v1304 = vpop.f32.mrf.mxu0
      %v1305 = vadd.f32 %v576, %v1304
      %1306 = vmatmul.bf16.gmra.mxu0 %v1029
      %v1307 = vpop.f32.mrf.mxu0
      %v1308 = vadd.f32 %v576, %v1307
      %v1309 = vpop.f32.mrf.mxu0
      %v1310 = vadd.f32 %v576, %v1309
      %1311 = vmatmul.bf16.gmra.mxu0 %v1032
      %v1312 = vpop.f32.mrf.mxu0
      %v1313 = vadd.f32 %v576, %v1312
      %v1314 = vpop.f32.mrf.mxu0
      %v1315 = vadd.f32 %v576, %v1314
      %1316 = vmatmul.bf16.gmra.mxu0 %v1035
      %v1317 = vpop.f32.mrf.mxu0
      %v1318 = vadd.f32 %v576, %v1317
      %v1319 = vpop.f32.mrf.mxu0
      %v1320 = vadd.f32 %v576, %v1319
      %1321 = vmatmul.bf16.gmra.mxu0 %v1038
      %v1322 = vpop.f32.mrf.mxu0
      %v1323 = vadd.f32 %v576, %v1322
      %v1324 = vpop.f32.mrf.mxu0
      %v1325 = vadd.f32 %v576, %v1324
      %1326 = vmatmul.bf16.gmra.mxu0 %v1041
      %v1327 = vpop.f32.mrf.mxu0
      %v1328 = vadd.f32 %v576, %v1327
      %v1329 = vpop.f32.mrf.mxu0
      %v1330 = vadd.f32 %v576, %v1329
      %1331 = vmatmul.bf16.gmra.mxu0 %v1044
      %v1332 = vpop.f32.mrf.mxu0
      %v1333 = vadd.f32 %v576, %v1332
      %v1334 = vpop.f32.mrf.mxu0
      %v1335 = vadd.f32 %v576, %v1334
      %1336 = vmatmul.bf16.gmra.mxu0 %v1047
      %v1337 = vpop.f32.mrf.mxu0
      %v1338 = vadd.f32 %v576, %v1337
      %v1339 = vpop.f32.mrf.mxu0
      %v1340 = vadd.f32 %v576, %v1339
      %1341 = vmatmul.bf16.gmra.mxu0 %v1050
      %v1342 = vpop.f32.mrf.mxu0
      %v1343 = vadd.f32 %v576, %v1342
      %v1344 = vpop.f32.mrf.mxu0
      %v1345 = vadd.f32 %v576, %v1344
      %1346 = vmatmul.bf16.gmra.mxu0 %v1053
      %v1347 = vpop.f32.mrf.mxu0
      %v1348 = vadd.f32 %v576, %v1347
      %v1349 = vpop.f32.mrf.mxu0
      %v1350 = vadd.f32 %v576, %v1349
      %1351 = vmatmul.bf16.gmra.mxu0 %v1056
      %v1352 = vpop.f32.mrf.mxu0
      %v1353 = vadd.f32 %v576, %v1352
      %v1354 = vpop.f32.mrf.mxu0
      %v1355 = vadd.f32 %v576, %v1354
      %1356 = vmatmul.bf16.gmra.mxu0 %v1059
      %v1357 = vpop.f32.mrf.mxu0
      %v1358 = vadd.f32 %v576, %v1357
      %v1359 = vpop.f32.mrf.mxu0
      %v1360 = vadd.f32 %v576, %v1359
      %1361 = vmatmul.bf16.gmra.mxu0 %v1062
      %v1362 = vpop.f32.mrf.mxu0
      %v1363 = vadd.f32 %v576, %v1362
      %v1364 = vpop.f32.mrf.mxu0
      %v1365 = vadd.f32 %v576, %v1364
      %1366 = vmatmul.bf16.gmra.mxu0 %v1065
      %v1367 = vpop.f32.mrf.mxu0
      %v1368 = vadd.f32 %v576, %v1367
      %v1369 = vpop.f32.mrf.mxu0
      %v1370 = vadd.f32 %v576, %v1369
      %1371 = vmatmul.bf16.gmra.mxu0 %v1068
      %v1372 = vpop.f32.mrf.mxu0
      %v1373 = vadd.f32 %v576, %v1372
      %v1374 = vpop.f32.mrf.mxu0
      %v1375 = vadd.f32 %v576, %v1374
      %1376 = vmatmul.bf16.gmra.mxu0 %v1071
      %v1377 = vpop.f32.mrf.mxu0
      %v1378 = vadd.f32 %v576, %v1377
      %v1379 = vpop.f32.mrf.mxu0
      %v1380 = vadd.f32 %v576, %v1379
      %1381 = vmatmul.bf16.gmra.mxu0 %v1074
      %v1382 = vpop.f32.mrf.mxu0
      %v1383 = vadd.f32 %v576, %v1382
      %v1384 = vpop.f32.mrf.mxu0
      %v1385 = vadd.f32 %v576, %v1384
      %1386 = vmatmul.bf16.gmra.mxu0 %v1077
      %v1387 = vpop.f32.mrf.mxu0
      %v1388 = vadd.f32 %v576, %v1387
      %v1389 = vpop.f32.mrf.mxu0
      %v1390 = vadd.f32 %v576, %v1389
      %1391 = vmatmul.bf16.gmra.mxu0 %v1080
      %v1392 = vpop.f32.mrf.mxu0
      %v1393 = vadd.f32 %v576, %v1392
      %v1394 = vpop.f32.mrf.mxu0
      %v1395 = vadd.f32 %v576, %v1394
      %1396 = vmatmul.bf16.gmra.mxu0 %v1083
      %v1397 = vpop.f32.mrf.mxu0
      %v1398 = vadd.f32 %v576, %v1397
      %v1399 = vpop.f32.mrf.mxu0
      %v1400 = vadd.f32 %v576, %v1399
      %1401 = vmatmul.bf16.gmra.mxu0 %v1086
      %v1402 = vpop.f32.mrf.mxu0
      %v1403 = vadd.f32 %v576, %v1402
      %v1404 = vpop.f32.mrf.mxu0
      %v1405 = vadd.f32 %v576, %v1404
      %1406 = vmatmul.bf16.gmra.mxu0 %v1089
      %v1407 = vpop.f32.mrf.mxu0
      %v1408 = vadd.f32 %v576, %v1407
      %v1409 = vpop.f32.mrf.mxu0
      %v1410 = vadd.f32 %v576, %v1409
      %1411 = vmatmul.bf16.gmra.mxu0 %v1092
      %v1412 = vpop.f32.mrf.mxu0
      %v1413 = vadd.f32 %v576, %v1412
      %v1414 = vpop.f32.mrf.mxu0
      %v1415 = vadd.f32 %v576, %v1414
      %1416 = vmatmul.bf16.gmra.mxu0 %v1095
      %v1417 = vpop.f32.mrf.mxu0
      %v1418 = vadd.f32 %v576, %v1417
      %v1419 = vpop.f32.mrf.mxu0
      %v1420 = vadd.f32 %v576, %v1419
      %1421 = vmatmul.bf16.gmra.mxu0 %v1098
      %v1422 = vpop.f32.mrf.mxu0
      %v1423 = vadd.f32 %v576, %v1422
      %v1424 = vpop.f32.mrf.mxu0
      %v1425 = vadd.f32 %v576, %v1424
      %1426 = vmatmul.bf16.gmra.mxu0 %v1101
      %v1427 = vpop.f32.mrf.mxu0
      %v1428 = vadd.f32 %v576, %v1427
      %v1429 = vpop.f32.mrf.mxu0
      %v1430 = vadd.f32 %v576, %v1429
      %1431 = vdwg.mxu0
      %v1432 = vmax.f32 %v1113, 0.0
      %v1433 = vmax.f32 %v1115, 0.0
      %v1434 = vmax.f32 %v1118, 0.0
      %v1435 = vmax.f32 %v1120, 0.0
      %v1436 = vmax.f32 %v1123, 0.0
      %v1437 = vmax.f32 %v1125, 0.0
      %v1438 = vmax.f32 %v1128, 0.0
      %v1439 = vmax.f32 %v1130, 0.0
      %v1440 = vmax.f32 %v1133, 0.0
      %v1441 = vmax.f32 %v1135, 0.0
      %v1442 = vmax.f32 %v1138, 0.0
      %v1443 = vmax.f32 %v1140, 0.0
      %v1444 = vmax.f32 %v1143, 0.0
      %v1445 = vmax.f32 %v1145, 0.0
      %v1446 = vmax.f32 %v1148, 0.0
      %v1447 = vmax.f32 %v1150, 0.0
      %v1448 = vmax.f32 %v1153, 0.0
      %v1449 = vmax.f32 %v1155, 0.0
      %v1450 = vmax.f32 %v1158, 0.0
      %v1451 = vmax.f32 %v1160, 0.0
      %v1452 = vmax.f32 %v1163, 0.0
      %v1453 = vmax.f32 %v1165, 0.0
      %v1454 = vmax.f32 %v1168, 0.0
      %v1455 = vmax.f32 %v1170, 0.0
      %v1456 = vmax.f32 %v1173, 0.0
      %v1457 = vmax.f32 %v1175, 0.0
      %v1458 = vmax.f32 %v1178, 0.0
      %v1459 = vmax.f32 %v1180, 0.0
      %v1460 = vmax.f32 %v1183, 0.0
      %v1461 = vmax.f32 %v1185, 0.0
      %v1462 = vmax.f32 %v1188, 0.0
      %v1463 = vmax.f32 %v1190, 0.0
      %v1464 = vmax.f32 %v1193, 0.0
      %v1465 = vmax.f32 %v1195, 0.0
      %v1466 = vmax.f32 %v1198, 0.0
      %v1467 = vmax.f32 %v1200, 0.0
      %v1468 = vmax.f32 %v1203, 0.0
      %v1469 = vmax.f32 %v1205, 0.0
      %v1470 = vmax.f32 %v1208, 0.0
      %v1471 = vmax.f32 %v1210, 0.0
      %v1472 = vmax.f32 %v1213, 0.0
      %v1473 = vmax.f32 %v1215, 0.0
      %v1474 = vmax.f32 %v1218, 0.0
      %v1475 = vmax.f32 %v1220, 0.0
      %v1476 = vmax.f32 %v1223, 0.0
      %v1477 = vmax.f32 %v1225, 0.0
      %v1478 = vmax.f32 %v1228, 0.0
      %v1479 = vmax.f32 %v1230, 0.0
      %v1480 = vmax.f32 %v1233, 0.0
      %v1481 = vmax.f32 %v1235, 0.0
      %v1482 = vmax.f32 %v1238, 0.0
      %v1483 = vmax.f32 %v1240, 0.0
      %v1484 = vmax.f32 %v1243, 0.0
      %v1485 = vmax.f32 %v1245, 0.0
      %v1486 = vmax.f32 %v1248, 0.0
      %v1487 = vmax.f32 %v1250, 0.0
      %v1488 = vmax.f32 %v1253, 0.0
      %v1489 = vmax.f32 %v1255, 0.0
      %v1490 = vmax.f32 %v1258, 0.0
      %v1491 = vmax.f32 %v1260, 0.0
      %v1492 = vmax.f32 %v1263, 0.0
      %v1493 = vmax.f32 %v1265, 0.0
      %v1494 = vmax.f32 %v1268, 0.0
      %v1495 = vmax.f32 %v1270, 0.0
      %v1496 = vmax.f32 %v1273, 0.0
      %v1497 = vmax.f32 %v1275, 0.0
      %v1498 = vmax.f32 %v1278, 0.0
      %v1499 = vmax.f32 %v1280, 0.0
      %v1500 = vmax.f32 %v1283, 0.0
      %v1501 = vmax.f32 %v1285, 0.0
      %v1502 = vmax.f32 %v1288, 0.0
      %v1503 = vmax.f32 %v1290, 0.0
      %v1504 = vmax.f32 %v1293, 0.0
      %v1505 = vmax.f32 %v1295, 0.0
      %v1506 = vmax.f32 %v1298, 0.0
      %v1507 = vmax.f32 %v1300, 0.0
      %v1508 = vmax.f32 %v1303, 0.0
      %v1509 = vmax.f32 %v1305, 0.0
      %v1510 = vmax.f32 %v1308, 0.0
      %v1511 = vmax.f32 %v1310, 0.0
      %v1512 = vmax.f32 %v1313, 0.0
      %v1513 = vmax.f32 %v1315, 0.0
      %v1514 = vmax.f32 %v1318, 0.0
      %v1515 = vmax.f32 %v1320, 0.0
      %v1516 = vmax.f32 %v1323, 0.0
      %v1517 = vmax.f32 %v1325, 0.0
      %v1518 = vmax.f32 %v1328, 0.0
      %v1519 = vmax.f32 %v1330, 0.0
      %v1520 = vmax.f32 %v1333, 0.0
      %v1521 = vmax.f32 %v1335, 0.0
      %v1522 = vmax.f32 %v1338, 0.0
      %v1523 = vmax.f32 %v1340, 0.0
      %v1524 = vmax.f32 %v1343, 0.0
      %v1525 = vmax.f32 %v1345, 0.0
      %v1526 = vmax.f32 %v1348, 0.0
      %v1527 = vmax.f32 %v1350, 0.0
      %v1528 = vmax.f32 %v1353, 0.0
      %v1529 = vmax.f32 %v1355, 0.0
      %v1530 = vmax.f32 %v1358, 0.0
      %v1531 = vmax.f32 %v1360, 0.0
      %v1532 = vmax.f32 %v1363, 0.0
      %v1533 = vmax.f32 %v1365, 0.0
      %v1534 = vmax.f32 %v1368, 0.0
      %v1535 = vmax.f32 %v1370, 0.0
      %v1536 = vmax.f32 %v1373, 0.0
      %v1537 = vmax.f32 %v1375, 0.0
      %v1538 = vmax.f32 %v1378, 0.0
      %v1539 = vmax.f32 %v1380, 0.0
      %v1540 = vmax.f32 %v1383, 0.0
      %v1541 = vmax.f32 %v1385, 0.0
      %v1542 = vmax.f32 %v1388, 0.0
      %v1543 = vmax.f32 %v1390, 0.0
      %v1544 = vmax.f32 %v1393, 0.0
      %v1545 = vmax.f32 %v1395, 0.0
      %v1546 = vmax.f32 %v1398, 0.0
      %v1547 = vmax.f32 %v1400, 0.0
      %v1548 = vmax.f32 %v1403, 0.0
      %v1549 = vmax.f32 %v1405, 0.0
      %v1550 = vmax.f32 %v1408, 0.0
      %v1551 = vmax.f32 %v1410, 0.0
      %v1552 = vmax.f32 %v1413, 0.0
      %v1553 = vmax.f32 %v1415, 0.0
      %v1554 = vmax.f32 %v1418, 0.0
      %v1555 = vmax.f32 %v1420, 0.0
      %v1556 = vmax.f32 %v1423, 0.0
      %v1557 = vmax.f32 %v1425, 0.0
      %v1558 = vmax.f32 %v1428, 0.0
      %v1559 = vmax.f32 %v1430, 0.0
      %v1560 = vmax.f32 %v1432, %v1436
      %v1561 = vmax.f32 %v1433, %v1437
      %v1562 = vmax.f32 %v1434, %v1438
      %v1563 = vmax.f32 %v1435, %v1439
      %v1564 = vmax.f32 %v1440, %v1444
      %v1565 = vmax.f32 %v1441, %v1445
      %v1566 = vmax.f32 %v1442, %v1446
      %v1567 = vmax.f32 %v1443, %v1447
      %v1568 = vmax.f32 %v1448, %v1452
      %v1569 = vmax.f32 %v1449, %v1453
      %v1570 = vmax.f32 %v1450, %v1454
      %v1571 = vmax.f32 %v1451, %v1455
      %v1572 = vmax.f32 %v1456, %v1460
      %v1573 = vmax.f32 %v1457, %v1461
      %v1574 = vmax.f32 %v1458, %v1462
      %v1575 = vmax.f32 %v1459, %v1463
      %v1576 = vmax.f32 %v1464, %v1468
      %v1577 = vmax.f32 %v1465, %v1469
      %v1578 = vmax.f32 %v1466, %v1470
      %v1579 = vmax.f32 %v1467, %v1471
      %v1580 = vmax.f32 %v1472, %v1476
      %v1581 = vmax.f32 %v1473, %v1477
      %v1582 = vmax.f32 %v1474, %v1478
      %v1583 = vmax.f32 %v1475, %v1479
      %v1584 = vmax.f32 %v1480, %v1484
      %v1585 = vmax.f32 %v1481, %v1485
      %v1586 = vmax.f32 %v1482, %v1486
      %v1587 = vmax.f32 %v1483, %v1487
      %v1588 = vmax.f32 %v1488, %v1492
      %v1589 = vmax.f32 %v1489, %v1493
      %v1590 = vmax.f32 %v1490, %v1494
      %v1591 = vmax.f32 %v1491, %v1495
      %v1592 = vmax.f32 %v1496, %v1500
      %v1593 = vmax.f32 %v1497, %v1501
      %v1594 = vmax.f32 %v1498, %v1502
      %v1595 = vmax.f32 %v1499, %v1503
      %v1596 = vmax.f32 %v1504, %v1508
      %v1597 = vmax.f32 %v1505, %v1509
      %v1598 = vmax.f32 %v1506, %v1510
      %v1599 = vmax.f32 %v1507, %v1511
      %v1600 = vmax.f32 %v1512, %v1516
      %v1601 = vmax.f32 %v1513, %v1517
      %v1602 = vmax.f32 %v1514, %v1518
      %v1603 = vmax.f32 %v1515, %v1519
      %v1604 = vmax.f32 %v1520, %v1524
      %v1605 = vmax.f32 %v1521, %v1525
      %v1606 = vmax.f32 %v1522, %v1526
      %v1607 = vmax.f32 %v1523, %v1527
      %v1608 = vmax.f32 %v1528, %v1532
      %v1609 = vmax.f32 %v1529, %v1533
      %v1610 = vmax.f32 %v1530, %v1534
      %v1611 = vmax.f32 %v1531, %v1535
      %v1612 = vmax.f32 %v1536, %v1540
      %v1613 = vmax.f32 %v1537, %v1541
      %v1614 = vmax.f32 %v1538, %v1542
      %v1615 = vmax.f32 %v1539, %v1543
      %v1616 = vmax.f32 %v1544, %v1548
      %v1617 = vmax.f32 %v1545, %v1549
      %v1618 = vmax.f32 %v1546, %v1550
      %v1619 = vmax.f32 %v1547, %v1551
      %v1620 = vmax.f32 %v1552, %v1556
      %v1621 = vmax.f32 %v1553, %v1557
      %v1622 = vmax.f32 %v1554, %v1558
      %v1623 = vmax.f32 %v1555, %v1559
      %v1624 = vpack.c.bf16 %v1561, %v1560
      %v1625 = vpack.c.bf16 %v1563, %v1562
      %v1626 = vpack.c.bf16 %v1565, %v1564
      %v1627 = vpack.c.bf16 %v1567, %v1566
      %v1628 = vpack.c.bf16 %v1569, %v1568
      %v1629 = vpack.c.bf16 %v1571, %v1570
      %v1630 = vpack.c.bf16 %v1573, %v1572
      %v1631 = vpack.c.bf16 %v1575, %v1574
      %v1632 = vpack.c.bf16 %v1577, %v1576
      %v1633 = vpack.c.bf16 %v1579, %v1578
      %v1634 = vpack.c.bf16 %v1581, %v1580
      %v1635 = vpack.c.bf16 %v1583, %v1582
      %v1636 = vpack.c.bf16 %v1585, %v1584
      %v1637 = vpack.c.bf16 %v1587, %v1586
      %v1638 = vpack.c.bf16 %v1589, %v1588
      %v1639 = vpack.c.bf16 %v1591, %v1590
      %v1640 = vpack.c.bf16 %v1593, %v1592
      %v1641 = vpack.c.bf16 %v1595, %v1594
      %v1642 = vpack.c.bf16 %v1597, %v1596
      %v1643 = vpack.c.bf16 %v1599, %v1598
      %v1644 = vpack.c.bf16 %v1601, %v1600
      %v1645 = vpack.c.bf16 %v1603, %v1602
      %v1646 = vpack.c.bf16 %v1605, %v1604
      %v1647 = vpack.c.bf16 %v1607, %v1606
      %v1648 = vpack.c.bf16 %v1609, %v1608
      %v1649 = vpack.c.bf16 %v1611, %v1610
      %v1650 = vpack.c.bf16 %v1613, %v1612
      %v1651 = vpack.c.bf16 %v1615, %v1614
      %v1652 = vpack.c.bf16 %v1617, %v1616
      %v1653 = vpack.c.bf16 %v1619, %v1618
      %v1654 = vpack.c.bf16 %v1621, %v1620
      %v1655 = vpack.c.bf16 %v1623, %v1622
      %v1656 = vld [vmem:[%s7] sm:$0xff]
      %v1657 = vld [vmem:[%s7 + $0x8] sm:$0xff]
      %v1658 = vld [vmem:[%s7 + $0x10] sm:$0xff]
      %v1659 = vld [vmem:[%s7 + $0x18] sm:$0xff]
      %v1660 = vld [vmem:[%s7 + $0x20] sm:$0xff]
      %v1661 = vld [vmem:[%s7 + $0x28] sm:$0xff]
      %v1662 = vld [vmem:[%s7 + $0x30] sm:$0xff]
      %v1663 = vld [vmem:[%s7 + $0x38] sm:$0xff]
      %v1664 = vld [vmem:[%s7 + $0x40] sm:$0xff]
      %v1665 = vld [vmem:[%s7 + $0x48] sm:$0xff]
      %v1666 = vld [vmem:[%s7 + $0x50] sm:$0xff]
      %v1667 = vld [vmem:[%s7 + $0x58] sm:$0xff]
      %v1668 = vld [vmem:[%s7 + $0x60] sm:$0xff]
      %v1669 = vld [vmem:[%s7 + $0x68] sm:$0xff]
      %v1670 = vld [vmem:[%s7 + $0x70] sm:$0xff]
      %v1671 = vld [vmem:[%s7 + $0x78] sm:$0xff]
      %v1672 = vld [vmem:[%s7 + $0x80] sm:$0xff]
      %v1673 = vld [vmem:[%s7 + $0x88] sm:$0xff]
      %v1674 = vld [vmem:[%s7 + $0x90] sm:$0xff]
      %v1675 = vld [vmem:[%s7 + $0x98] sm:$0xff]
      %v1676 = vld [vmem:[%s7 + $0xa0] sm:$0xff]
      %v1677 = vld [vmem:[%s7 + $0xa8] sm:$0xff]
      %v1678 = vld [vmem:[%s7 + $0xb0] sm:$0xff]
      %v1679 = vld [vmem:[%s7 + $0xb8] sm:$0xff]
      %v1680 = vld [vmem:[%s7 + $0xc0] sm:$0xff]
      %v1681 = vld [vmem:[%s7 + $0xc8] sm:$0xff]
      %v1682 = vld [vmem:[%s7 + $0xd0] sm:$0xff]
      %v1683 = vld [vmem:[%s7 + $0xd8] sm:$0xff]
      %v1684 = vld [vmem:[%s7 + $0xe0] sm:$0xff]
      %v1685 = vld [vmem:[%s7 + $0xe8] sm:$0xff]
      %v1686 = vld [vmem:[%s7 + $0xf0] sm:$0xff]
      %v1687 = vld [vmem:[%s7 + $0xf8] sm:$0xff]
      %v1688 = vld [vmem:[%s7 + $0x100] sm:$0xff]
      %v1689 = vld [vmem:[%s7 + $0x108] sm:$0xff]
      %v1690 = vld [vmem:[%s7 + $0x110] sm:$0xff]
      %v1691 = vld [vmem:[%s7 + $0x118] sm:$0xff]
      %v1692 = vld [vmem:[%s7 + $0x120] sm:$0xff]
      %v1693 = vld [vmem:[%s7 + $0x128] sm:$0xff]
      %v1694 = vld [vmem:[%s7 + $0x130] sm:$0xff]
      %v1695 = vld [vmem:[%s7 + $0x138] sm:$0xff]
      %v1696 = vld [vmem:[%s7 + $0x140] sm:$0xff]
      %v1697 = vld [vmem:[%s7 + $0x148] sm:$0xff]
      %v1698 = vld [vmem:[%s7 + $0x150] sm:$0xff]
      %v1699 = vld [vmem:[%s7 + $0x158] sm:$0xff]
      %v1700 = vld [vmem:[%s7 + $0x160] sm:$0xff]
      %v1701 = vld [vmem:[%s7 + $0x168] sm:$0xff]
      %v1702 = vld [vmem:[%s7 + $0x170] sm:$0xff]
      %v1703 = vld [vmem:[%s7 + $0x178] sm:$0xff]
      %v1704 = vld [vmem:[%s7 + $0x180] sm:$0xff]
      %v1705 = vld [vmem:[%s7 + $0x188] sm:$0xff]
      %v1706 = vld [vmem:[%s7 + $0x190] sm:$0xff]
      %v1707 = vld [vmem:[%s7 + $0x198] sm:$0xff]
      %v1708 = vld [vmem:[%s7 + $0x1a0] sm:$0xff]
      %v1709 = vld [vmem:[%s7 + $0x1a8] sm:$0xff]
      %v1710 = vld [vmem:[%s7 + $0x1b0] sm:$0xff]
      %v1711 = vld [vmem:[%s7 + $0x1b8] sm:$0xff]
      %v1712 = vld [vmem:[%s7 + $0x1c0] sm:$0xff]
      %v1713 = vld [vmem:[%s7 + $0x1c8] sm:$0xff]
      %v1714 = vld [vmem:[%s7 + $0x1d0] sm:$0xff]
      %v1715 = vld [vmem:[%s7 + $0x1d8] sm:$0xff]
      %v1716 = vld [vmem:[%s7 + $0x1e0] sm:$0xff]
      %v1717 = vld [vmem:[%s7 + $0x1e8] sm:$0xff]
      %v1718 = vld [vmem:[%s7 + $0x1f0] sm:$0xff]
      %v1719 = vld [vmem:[%s7 + $0x1f8] sm:$0xff]
      %v1720 = vld [vmem:[%s7 + $0x200] sm:$0xff]
      %v1721 = vld [vmem:[%s7 + $0x208] sm:$0xff]
      %v1722 = vld [vmem:[%s7 + $0x210] sm:$0xff]
      %v1723 = vld [vmem:[%s7 + $0x218] sm:$0xff]
      %v1724 = vld [vmem:[%s7 + $0x220] sm:$0xff]
      %v1725 = vld [vmem:[%s7 + $0x228] sm:$0xff]
      %v1726 = vld [vmem:[%s7 + $0x230] sm:$0xff]
      %v1727 = vld [vmem:[%s7 + $0x238] sm:$0xff]
      %v1728 = vld [vmem:[%s7 + $0x240] sm:$0xff]
      %v1729 = vld [vmem:[%s7 + $0x248] sm:$0xff]
      %v1730 = vld [vmem:[%s7 + $0x250] sm:$0xff]
      %v1731 = vld [vmem:[%s7 + $0x258] sm:$0xff]
      %v1732 = vld [vmem:[%s7 + $0x260] sm:$0xff]
      %v1733 = vld [vmem:[%s7 + $0x268] sm:$0xff]
      %v1734 = vld [vmem:[%s7 + $0x270] sm:$0xff]
      %v1735 = vld [vmem:[%s7 + $0x278] sm:$0xff]
      %v1736 = vld [vmem:[%s7 + $0x280] sm:$0xff]
      %v1737 = vld [vmem:[%s7 + $0x288] sm:$0xff]
      %v1738 = vld [vmem:[%s7 + $0x290] sm:$0xff]
      %v1739 = vld [vmem:[%s7 + $0x298] sm:$0xff]
      %v1740 = vld [vmem:[%s7 + $0x2a0] sm:$0xff]
      %v1741 = vld [vmem:[%s7 + $0x2a8] sm:$0xff]
      %v1742 = vld [vmem:[%s7 + $0x2b0] sm:$0xff]
      %v1743 = vld [vmem:[%s7 + $0x2b8] sm:$0xff]
      %v1744 = vld [vmem:[%s7 + $0x2c0] sm:$0xff]
      %v1745 = vld [vmem:[%s7 + $0x2c8] sm:$0xff]
      %v1746 = vld [vmem:[%s7 + $0x2d0] sm:$0xff]
      %v1747 = vld [vmem:[%s7 + $0x2d8] sm:$0xff]
      %v1748 = vld [vmem:[%s7 + $0x2e0] sm:$0xff]
      %v1749 = vld [vmem:[%s7 + $0x2e8] sm:$0xff]
      %v1750 = vld [vmem:[%s7 + $0x2f0] sm:$0xff]
      %v1751 = vld [vmem:[%s7 + $0x2f8] sm:$0xff]
      %v1752 = vld [vmem:[%s7 + $0x300] sm:$0xff]
      %v1753 = vld [vmem:[%s7 + $0x308] sm:$0xff]
      %v1754 = vld [vmem:[%s7 + $0x310] sm:$0xff]
      %v1755 = vld [vmem:[%s7 + $0x318] sm:$0xff]
      %v1756 = vld [vmem:[%s7 + $0x320] sm:$0xff]
      %v1757 = vld [vmem:[%s7 + $0x328] sm:$0xff]
      %v1758 = vld [vmem:[%s7 + $0x330] sm:$0xff]
      %v1759 = vld [vmem:[%s7 + $0x338] sm:$0xff]
      %v1760 = vld [vmem:[%s7 + $0x340] sm:$0xff]
      %v1761 = vld [vmem:[%s7 + $0x348] sm:$0xff]
      %v1762 = vld [vmem:[%s7 + $0x350] sm:$0xff]
      %v1763 = vld [vmem:[%s7 + $0x358] sm:$0xff]
      %v1764 = vld [vmem:[%s7 + $0x360] sm:$0xff]
      %v1765 = vld [vmem:[%s7 + $0x368] sm:$0xff]
      %v1766 = vld [vmem:[%s7 + $0x370] sm:$0xff]
      %v1767 = vld [vmem:[%s7 + $0x378] sm:$0xff]
      %v1768 = vld [vmem:[%s7 + $0x380] sm:$0xff]
      %v1769 = vld [vmem:[%s7 + $0x388] sm:$0xff]
      %v1770 = vld [vmem:[%s7 + $0x390] sm:$0xff]
      %v1771 = vld [vmem:[%s7 + $0x398] sm:$0xff]
      %v1772 = vld [vmem:[%s7 + $0x3a0] sm:$0xff]
      %v1773 = vld [vmem:[%s7 + $0x3a8] sm:$0xff]
      %v1774 = vld [vmem:[%s7 + $0x3b0] sm:$0xff]
      %v1775 = vld [vmem:[%s7 + $0x3b8] sm:$0xff]
      %v1776 = vld [vmem:[%s7 + $0x3c0] sm:$0xff]
      %v1777 = vld [vmem:[%s7 + $0x3c8] sm:$0xff]
      %v1778 = vld [vmem:[%s7 + $0x3d0] sm:$0xff]
      %v1779 = vld [vmem:[%s7 + $0x3d8] sm:$0xff]
      %v1780 = vld [vmem:[%s7 + $0x3e0] sm:$0xff]
      %v1781 = vld [vmem:[%s7 + $0x3e8] sm:$0xff]
      %v1782 = vld [vmem:[%s7 + $0x3f0] sm:$0xff]
      %v1783 = vld [vmem:[%s7 + $0x3f8] sm:$0xff]
      %v1784 = vld [vmem:[%s7 + $0x400] sm:$0xff]
      %v1785 = vld [vmem:[%s7 + $0x408] sm:$0xff]
      %v1786 = vld [vmem:[%s7 + $0x410] sm:$0xff]
      %v1787 = vld [vmem:[%s7 + $0x418] sm:$0xff]
      %v1788 = vld [vmem:[%s7 + $0x420] sm:$0xff]
      %v1789 = vld [vmem:[%s7 + $0x428] sm:$0xff]
      %v1790 = vld [vmem:[%s7 + $0x430] sm:$0xff]
      %v1791 = vld [vmem:[%s7 + $0x438] sm:$0xff]
      %v1792 = vld [vmem:[%s7 + $0x440] sm:$0xff]
      %v1793 = vld [vmem:[%s7 + $0x448] sm:$0xff]
      %v1794 = vld [vmem:[%s7 + $0x450] sm:$0xff]
      %v1795 = vld [vmem:[%s7 + $0x458] sm:$0xff]
      %v1796 = vld [vmem:[%s7 + $0x460] sm:$0xff]
      %v1797 = vld [vmem:[%s7 + $0x468] sm:$0xff]
      %v1798 = vld [vmem:[%s7 + $0x470] sm:$0xff]
      %v1799 = vld [vmem:[%s7 + $0x478] sm:$0xff]
      %v1944 = vunpack.c.l.b16 %v1656
      %v1945 = vunpack.c.h.b16 %v1656
      %v1946 = vunpack.c.l.b16 %v1657
      %v1947 = vunpack.c.h.b16 %v1657
      %v1948 = vunpack.c.l.b16 %v1658
      %v1949 = vunpack.c.h.b16 %v1658
      %v1950 = vunpack.c.l.b16 %v1659
      %v1951 = vunpack.c.h.b16 %v1659
      %v1952 = vunpack.c.l.b16 %v1660
      %v1953 = vunpack.c.h.b16 %v1660
      %v1954 = vunpack.c.l.b16 %v1661
      %v1955 = vunpack.c.h.b16 %v1661
      %v1956 = vunpack.c.l.b16 %v1662
      %v1957 = vunpack.c.h.b16 %v1662
      %v1958 = vunpack.c.l.b16 %v1663
      %v1959 = vunpack.c.h.b16 %v1663
      %v1960 = vunpack.c.l.b16 %v1664
      %v1961 = vunpack.c.h.b16 %v1664
      %v1962 = vunpack.c.l.b16 %v1665
      %v1963 = vunpack.c.h.b16 %v1665
      %v1964 = vunpack.c.l.b16 %v1666
      %v1965 = vunpack.c.h.b16 %v1666
      %v1966 = vunpack.c.l.b16 %v1667
      %v1967 = vunpack.c.h.b16 %v1667
      %v1968 = vunpack.c.l.b16 %v1668
      %v1969 = vunpack.c.h.b16 %v1668
      %v1970 = vunpack.c.l.b16 %v1669
      %v1971 = vunpack.c.h.b16 %v1669
      %v1972 = vunpack.c.l.b16 %v1670
      %v1973 = vunpack.c.h.b16 %v1670
      %v1974 = vunpack.c.l.b16 %v1671
      %v1975 = vunpack.c.h.b16 %v1671
      %v1976 = vunpack.c.l.b16 %v1672
      %v1977 = vunpack.c.h.b16 %v1672
      %v1978 = vunpack.c.l.b16 %v1673
      %v1979 = vunpack.c.h.b16 %v1673
      %v1980 = vunpack.c.l.b16 %v1674
      %v1981 = vunpack.c.h.b16 %v1674
      %v1982 = vunpack.c.l.b16 %v1675
      %v1983 = vunpack.c.h.b16 %v1675
      %v1984 = vunpack.c.l.b16 %v1676
      %v1985 = vunpack.c.h.b16 %v1676
      %v1986 = vunpack.c.l.b16 %v1677
      %v1987 = vunpack.c.h.b16 %v1677
      %v1988 = vunpack.c.l.b16 %v1678
      %v1989 = vunpack.c.h.b16 %v1678
      %v1990 = vunpack.c.l.b16 %v1679
      %v1991 = vunpack.c.h.b16 %v1679
      %v1992 = vunpack.c.l.b16 %v1680
      %v1993 = vunpack.c.h.b16 %v1680
      %v1994 = vunpack.c.l.b16 %v1681
      %v1995 = vunpack.c.h.b16 %v1681
      %v1996 = vunpack.c.l.b16 %v1682
      %v1997 = vunpack.c.h.b16 %v1682
      %v1998 = vunpack.c.l.b16 %v1683
      %v1999 = vunpack.c.h.b16 %v1683
      %v2000 = vunpack.c.l.b16 %v1684
      %v2001 = vunpack.c.h.b16 %v1684
      %v2002 = vunpack.c.l.b16 %v1685
      %v2003 = vunpack.c.h.b16 %v1685
      %v2004 = vunpack.c.l.b16 %v1686
      %v2005 = vunpack.c.h.b16 %v1686
      %v2006 = vunpack.c.l.b16 %v1687
      %v2007 = vunpack.c.h.b16 %v1687
      %v2008 = vunpack.c.l.b16 %v1688
      %v2009 = vunpack.c.h.b16 %v1688
      %v2010 = vunpack.c.l.b16 %v1689
      %v2011 = vunpack.c.h.b16 %v1689
      %v2012 = vunpack.c.l.b16 %v1690
      %v2013 = vunpack.c.h.b16 %v1690
      %v2014 = vunpack.c.l.b16 %v1691
      %v2015 = vunpack.c.h.b16 %v1691
      %v2016 = vunpack.c.l.b16 %v1692
      %v2017 = vunpack.c.h.b16 %v1692
      %v2018 = vunpack.c.l.b16 %v1693
      %v2019 = vunpack.c.h.b16 %v1693
      %v2020 = vunpack.c.l.b16 %v1694
      %v2021 = vunpack.c.h.b16 %v1694
      %v2022 = vunpack.c.l.b16 %v1695
      %v2023 = vunpack.c.h.b16 %v1695
      %v2024 = vunpack.c.l.b16 %v1696
      %v2025 = vunpack.c.h.b16 %v1696
      %v2026 = vunpack.c.l.b16 %v1697
      %v2027 = vunpack.c.h.b16 %v1697
      %v2028 = vunpack.c.l.b16 %v1698
      %v2029 = vunpack.c.h.b16 %v1698
      %v2030 = vunpack.c.l.b16 %v1699
      %v2031 = vunpack.c.h.b16 %v1699
      %v2032 = vunpack.c.l.b16 %v1700
      %v2033 = vunpack.c.h.b16 %v1700
      %v2034 = vunpack.c.l.b16 %v1701
      %v2035 = vunpack.c.h.b16 %v1701
      %v2036 = vunpack.c.l.b16 %v1702
      %v2037 = vunpack.c.h.b16 %v1702
      %v2038 = vunpack.c.l.b16 %v1703
      %v2039 = vunpack.c.h.b16 %v1703
      %v2040 = vunpack.c.l.b16 %v1704
      %v2041 = vunpack.c.h.b16 %v1704
      %v2042 = vunpack.c.l.b16 %v1705
      %v2043 = vunpack.c.h.b16 %v1705
      %v2044 = vunpack.c.l.b16 %v1706
      %v2045 = vunpack.c.h.b16 %v1706
      %v2046 = vunpack.c.l.b16 %v1707
      %v2047 = vunpack.c.h.b16 %v1707
      %v2048 = vunpack.c.l.b16 %v1708
      %v2049 = vunpack.c.h.b16 %v1708
      %v2050 = vunpack.c.l.b16 %v1709
      %v2051 = vunpack.c.h.b16 %v1709
      %v2052 = vunpack.c.l.b16 %v1710
      %v2053 = vunpack.c.h.b16 %v1710
      %v2054 = vunpack.c.l.b16 %v1711
      %v2055 = vunpack.c.h.b16 %v1711
      %v2056 = vunpack.c.l.b16 %v1712
      %v2057 = vunpack.c.h.b16 %v1712
      %v2058 = vunpack.c.l.b16 %v1713
      %v2059 = vunpack.c.h.b16 %v1713
      %v2060 = vunpack.c.l.b16 %v1714
      %v2061 = vunpack.c.h.b16 %v1714
      %v2062 = vunpack.c.l.b16 %v1715
      %v2063 = vunpack.c.h.b16 %v1715
      %v2064 = vunpack.c.l.b16 %v1716
      %v2065 = vunpack.c.h.b16 %v1716
      %v2066 = vunpack.c.l.b16 %v1717
      %v2067 = vunpack.c.h.b16 %v1717
      %v2068 = vunpack.c.l.b16 %v1718
      %v2069 = vunpack.c.h.b16 %v1718
      %v2070 = vunpack.c.l.b16 %v1719
      %v2071 = vunpack.c.h.b16 %v1719
      %v2072 = vunpack.c.l.b16 %v1720
      %v2073 = vunpack.c.h.b16 %v1720
      %v2074 = vunpack.c.l.b16 %v1721
      %v2075 = vunpack.c.h.b16 %v1721
      %v2076 = vunpack.c.l.b16 %v1722
      %v2077 = vunpack.c.h.b16 %v1722
      %v2078 = vunpack.c.l.b16 %v1723
      %v2079 = vunpack.c.h.b16 %v1723
      %v2080 = vunpack.c.l.b16 %v1724
      %v2081 = vunpack.c.h.b16 %v1724
      %v2082 = vunpack.c.l.b16 %v1725
      %v2083 = vunpack.c.h.b16 %v1725
      %v2084 = vunpack.c.l.b16 %v1726
      %v2085 = vunpack.c.h.b16 %v1726
      %v2086 = vunpack.c.l.b16 %v1727
      %v2087 = vunpack.c.h.b16 %v1727
      %v2088 = vunpack.c.l.b16 %v1728
      %v2089 = vunpack.c.h.b16 %v1728
      %v2090 = vunpack.c.l.b16 %v1729
      %v2091 = vunpack.c.h.b16 %v1729
      %v2092 = vunpack.c.l.b16 %v1730
      %v2093 = vunpack.c.h.b16 %v1730
      %v2094 = vunpack.c.l.b16 %v1731
      %v2095 = vunpack.c.h.b16 %v1731
      %v2096 = vunpack.c.l.b16 %v1732
      %v2097 = vunpack.c.h.b16 %v1732
      %v2098 = vunpack.c.l.b16 %v1733
      %v2099 = vunpack.c.h.b16 %v1733
      %v2100 = vunpack.c.l.b16 %v1734
      %v2101 = vunpack.c.h.b16 %v1734
      %v2102 = vunpack.c.l.b16 %v1735
      %v2103 = vunpack.c.h.b16 %v1735
      %v2104 = vunpack.c.l.b16 %v1736
      %v2105 = vunpack.c.h.b16 %v1736
      %v2106 = vunpack.c.l.b16 %v1737
      %v2107 = vunpack.c.h.b16 %v1737
      %v2108 = vunpack.c.l.b16 %v1738
      %v2109 = vunpack.c.h.b16 %v1738
      %v2110 = vunpack.c.l.b16 %v1739
      %v2111 = vunpack.c.h.b16 %v1739
      %v2112 = vunpack.c.l.b16 %v1740
      %v2113 = vunpack.c.h.b16 %v1740
      %v2114 = vunpack.c.l.b16 %v1741
      %v2115 = vunpack.c.h.b16 %v1741
      %v2116 = vunpack.c.l.b16 %v1742
      %v2117 = vunpack.c.h.b16 %v1742
      %v2118 = vunpack.c.l.b16 %v1743
      %v2119 = vunpack.c.h.b16 %v1743
      %v2120 = vunpack.c.l.b16 %v1744
      %v2121 = vunpack.c.h.b16 %v1744
      %v2122 = vunpack.c.l.b16 %v1745
      %v2123 = vunpack.c.h.b16 %v1745
      %v2124 = vunpack.c.l.b16 %v1746
      %v2125 = vunpack.c.h.b16 %v1746
      %v2126 = vunpack.c.l.b16 %v1747
      %v2127 = vunpack.c.h.b16 %v1747
      %v2128 = vunpack.c.l.b16 %v1748
      %v2129 = vunpack.c.h.b16 %v1748
      %v2130 = vunpack.c.l.b16 %v1749
      %v2131 = vunpack.c.h.b16 %v1749
      %v2132 = vunpack.c.l.b16 %v1750
      %v2133 = vunpack.c.h.b16 %v1750
      %v2134 = vunpack.c.l.b16 %v1751
      %v2135 = vunpack.c.h.b16 %v1751
      %v2136 = vunpack.c.l.b16 %v1752
      %v2137 = vunpack.c.h.b16 %v1752
      %v2138 = vunpack.c.l.b16 %v1753
      %v2139 = vunpack.c.h.b16 %v1753
      %v2140 = vunpack.c.l.b16 %v1754
      %v2141 = vunpack.c.h.b16 %v1754
      %v2142 = vunpack.c.l.b16 %v1755
      %v2143 = vunpack.c.h.b16 %v1755
      %v2144 = vunpack.c.l.b16 %v1756
      %v2145 = vunpack.c.h.b16 %v1756
      %v2146 = vunpack.c.l.b16 %v1757
      %v2147 = vunpack.c.h.b16 %v1757
      %v2148 = vunpack.c.l.b16 %v1758
      %v2149 = vunpack.c.h.b16 %v1758
      %v2150 = vunpack.c.l.b16 %v1759
      %v2151 = vunpack.c.h.b16 %v1759
      %v2152 = vunpack.c.l.b16 %v1760
      %v2153 = vunpack.c.h.b16 %v1760
      %v2154 = vunpack.c.l.b16 %v1761
      %v2155 = vunpack.c.h.b16 %v1761
      %v2156 = vunpack.c.l.b16 %v1762
      %v2157 = vunpack.c.h.b16 %v1762
      %v2158 = vunpack.c.l.b16 %v1763
      %v2159 = vunpack.c.h.b16 %v1763
      %v2160 = vunpack.c.l.b16 %v1764
      %v2161 = vunpack.c.h.b16 %v1764
      %v2162 = vunpack.c.l.b16 %v1765
      %v2163 = vunpack.c.h.b16 %v1765
      %v2164 = vunpack.c.l.b16 %v1766
      %v2165 = vunpack.c.h.b16 %v1766
      %v2166 = vunpack.c.l.b16 %v1767
      %v2167 = vunpack.c.h.b16 %v1767
      %v2168 = vunpack.c.l.b16 %v1768
      %v2169 = vunpack.c.h.b16 %v1768
      %v2170 = vunpack.c.l.b16 %v1769
      %v2171 = vunpack.c.h.b16 %v1769
      %v2172 = vunpack.c.l.b16 %v1770
      %v2173 = vunpack.c.h.b16 %v1770
      %v2174 = vunpack.c.l.b16 %v1771
      %v2175 = vunpack.c.h.b16 %v1771
      %v2176 = vunpack.c.l.b16 %v1772
      %v2177 = vunpack.c.h.b16 %v1772
      %v2178 = vunpack.c.l.b16 %v1773
      %v2179 = vunpack.c.h.b16 %v1773
      %v2180 = vunpack.c.l.b16 %v1774
      %v2181 = vunpack.c.h.b16 %v1774
      %v2182 = vunpack.c.l.b16 %v1775
      %v2183 = vunpack.c.h.b16 %v1775
      %v2184 = vunpack.c.l.b16 %v1776
      %v2185 = vunpack.c.h.b16 %v1776
      %v2186 = vunpack.c.l.b16 %v1777
      %v2187 = vunpack.c.h.b16 %v1777
      %v2188 = vunpack.c.l.b16 %v1778
      %v2189 = vunpack.c.h.b16 %v1778
      %v2190 = vunpack.c.l.b16 %v1779
      %v2191 = vunpack.c.h.b16 %v1779
      %v2192 = vunpack.c.l.b16 %v1780
      %v2193 = vunpack.c.h.b16 %v1780
      %v2194 = vunpack.c.l.b16 %v1781
      %v2195 = vunpack.c.h.b16 %v1781
      %v2196 = vunpack.c.l.b16 %v1782
      %v2197 = vunpack.c.h.b16 %v1782
      %v2198 = vunpack.c.l.b16 %v1783
      %v2199 = vunpack.c.h.b16 %v1783
      %v2200 = vunpack.c.l.b16 %v1784
      %v2201 = vunpack.c.h.b16 %v1784
      %v2202 = vunpack.c.l.b16 %v1785
      %v2203 = vunpack.c.h.b16 %v1785
      %v2204 = vunpack.c.l.b16 %v1786
      %v2205 = vunpack.c.h.b16 %v1786
      %v2206 = vunpack.c.l.b16 %v1787
      %v2207 = vunpack.c.h.b16 %v1787
      %v2208 = vunpack.c.l.b16 %v1788
      %v2209 = vunpack.c.h.b16 %v1788
      %v2210 = vunpack.c.l.b16 %v1789
      %v2211 = vunpack.c.h.b16 %v1789
      %v2212 = vunpack.c.l.b16 %v1790
      %v2213 = vunpack.c.h.b16 %v1790
      %v2214 = vunpack.c.l.b16 %v1791
      %v2215 = vunpack.c.h.b16 %v1791
      %v2216 = vunpack.c.l.b16 %v1792
      %v2217 = vunpack.c.h.b16 %v1792
      %v2218 = vunpack.c.l.b16 %v1793
      %v2219 = vunpack.c.h.b16 %v1793
      %v2220 = vunpack.c.l.b16 %v1794
      %v2221 = vunpack.c.h.b16 %v1794
      %v2222 = vunpack.c.l.b16 %v1795
      %v2223 = vunpack.c.h.b16 %v1795
      %v2224 = vunpack.c.l.b16 %v1796
      %v2225 = vunpack.c.h.b16 %v1796
      %v2226 = vunpack.c.l.b16 %v1797
      %v2227 = vunpack.c.h.b16 %v1797
      %v2228 = vunpack.c.l.b16 %v1798
      %v2229 = vunpack.c.h.b16 %v1798
      %v2230 = vunpack.c.l.b16 %v1799
      %v2231 = vunpack.c.h.b16 %v1799
      %v2232 = vpack.c.b16 %v1948, %v1944
      %v2233 = vpack.c.b16 %v1949, %v1945
      %v2234 = vpack.c.b16 %v1950, %v1946
      %v2235 = vpack.c.b16 %v1951, %v1947
      %v2236 = vpack.c.b16 %v1956, %v1952
      %v2237 = vpack.c.b16 %v1957, %v1953
      %v2238 = vpack.c.b16 %v1958, %v1954
      %v2239 = vpack.c.b16 %v1959, %v1955
      %v2240 = vpack.c.b16 %v1964, %v1960
      %v2241 = vpack.c.b16 %v1965, %v1961
      %v2242 = vpack.c.b16 %v1966, %v1962
      %v2243 = vpack.c.b16 %v1967, %v1963
      %v2244 = vpack.c.b16 %v1972, %v1968
      %v2245 = vpack.c.b16 %v1973, %v1969
      %v2246 = vpack.c.b16 %v1974, %v1970
      %v2247 = vpack.c.b16 %v1975, %v1971
      %v2248 = vpack.c.b16 %v1980, %v1976
      %v2249 = vpack.c.b16 %v1981, %v1977
      %v2250 = vpack.c.b16 %v1982, %v1978
      %v2251 = vpack.c.b16 %v1983, %v1979
      %v2252 = vpack.c.b16 %v1988, %v1984
      %v2253 = vpack.c.b16 %v1989, %v1985
      %v2254 = vpack.c.b16 %v1990, %v1986
      %v2255 = vpack.c.b16 %v1991, %v1987
      %v2256 = vpack.c.b16 %v1996, %v1992
      %v2257 = vpack.c.b16 %v1997, %v1993
      %v2258 = vpack.c.b16 %v1998, %v1994
      %v2259 = vpack.c.b16 %v1999, %v1995
      %v2260 = vpack.c.b16 %v2004, %v2000
      %v2261 = vpack.c.b16 %v2005, %v2001
      %v2262 = vpack.c.b16 %v2006, %v2002
      %v2263 = vpack.c.b16 %v2007, %v2003
      %v2264 = vpack.c.b16 %v2012, %v2008
      %v2265 = vpack.c.b16 %v2013, %v2009
      %v2266 = vpack.c.b16 %v2014, %v2010
      %v2267 = vpack.c.b16 %v2015, %v2011
      %v2268 = vpack.c.b16 %v2020, %v2016
      %v2269 = vpack.c.b16 %v2021, %v2017
      %v2270 = vpack.c.b16 %v2022, %v2018
      %v2271 = vpack.c.b16 %v2023, %v2019
      %v2272 = vpack.c.b16 %v2028, %v2024
      %v2273 = vpack.c.b16 %v2029, %v2025
      %v2274 = vpack.c.b16 %v2030, %v2026
      %v2275 = vpack.c.b16 %v2031, %v2027
      %v2276 = vpack.c.b16 %v2036, %v2032
      %v2277 = vpack.c.b16 %v2037, %v2033
      %v2278 = vpack.c.b16 %v2038, %v2034
      %v2279 = vpack.c.b16 %v2039, %v2035
      %v2280 = vpack.c.b16 %v2044, %v2040
      %v2281 = vpack.c.b16 %v2045, %v2041
      %v2282 = vpack.c.b16 %v2046, %v2042
      %v2283 = vpack.c.b16 %v2047, %v2043
      %v2284 = vpack.c.b16 %v2052, %v2048
      %v2285 = vpack.c.b16 %v2053, %v2049
      %v2286 = vpack.c.b16 %v2054, %v2050
      %v2287 = vpack.c.b16 %v2055, %v2051
      %v2288 = vpack.c.b16 %v2060, %v2056
      %v2289 = vpack.c.b16 %v2061, %v2057
      %v2290 = vpack.c.b16 %v2062, %v2058
      %v2291 = vpack.c.b16 %v2063, %v2059
      %v2292 = vpack.c.b16 %v2068, %v2064
      %v2293 = vpack.c.b16 %v2069, %v2065
      %v2294 = vpack.c.b16 %v2070, %v2066
      %v2295 = vpack.c.b16 %v2071, %v2067
      %v2296 = vpack.c.b16 %v2076, %v2072
      %v2297 = vpack.c.b16 %v2077, %v2073
      %v2298 = vpack.c.b16 %v2078, %v2074
      %v2299 = vpack.c.b16 %v2079, %v2075
      %v2300 = vpack.c.b16 %v2084, %v2080
      %v2301 = vpack.c.b16 %v2085, %v2081
      %v2302 = vpack.c.b16 %v2086, %v2082
      %v2303 = vpack.c.b16 %v2087, %v2083
      %v2304 = vpack.c.b16 %v2092, %v2088
      %v2305 = vpack.c.b16 %v2093, %v2089
      %v2306 = vpack.c.b16 %v2094, %v2090
      %v2307 = vpack.c.b16 %v2095, %v2091
      %v2308 = vpack.c.b16 %v2100, %v2096
      %v2309 = vpack.c.b16 %v2101, %v2097
      %v2310 = vpack.c.b16 %v2102, %v2098
      %v2311 = vpack.c.b16 %v2103, %v2099
      %v2312 = vpack.c.b16 %v2108, %v2104
      %v2313 = vpack.c.b16 %v2109, %v2105
      %v2314 = vpack.c.b16 %v2110, %v2106
      %v2315 = vpack.c.b16 %v2111, %v2107
      %v2316 = vpack.c.b16 %v2116, %v2112
      %v2317 = vpack.c.b16 %v2117, %v2113
      %v2318 = vpack.c.b16 %v2118, %v2114
      %v2319 = vpack.c.b16 %v2119, %v2115
      %v2320 = vpack.c.b16 %v2124, %v2120
      %v2321 = vpack.c.b16 %v2125, %v2121
      %v2322 = vpack.c.b16 %v2126, %v2122
      %v2323 = vpack.c.b16 %v2127, %v2123
      %v2324 = vpack.c.b16 %v2132, %v2128
      %v2325 = vpack.c.b16 %v2133, %v2129
      %v2326 = vpack.c.b16 %v2134, %v2130
      %v2327 = vpack.c.b16 %v2135, %v2131
      %v2328 = vpack.c.b16 %v2140, %v2136
      %v2329 = vpack.c.b16 %v2141, %v2137
      %v2330 = vpack.c.b16 %v2142, %v2138
      %v2331 = vpack.c.b16 %v2143, %v2139
      %v2332 = vpack.c.b16 %v2148, %v2144
      %v2333 = vpack.c.b16 %v2149, %v2145
      %v2334 = vpack.c.b16 %v2150, %v2146
      %v2335 = vpack.c.b16 %v2151, %v2147
      %v2336 = vpack.c.b16 %v2156, %v2152
      %v2337 = vpack.c.b16 %v2157, %v2153
      %v2338 = vpack.c.b16 %v2158, %v2154
      %v2339 = vpack.c.b16 %v2159, %v2155
      %v2340 = vpack.c.b16 %v2164, %v2160
      %v2341 = vpack.c.b16 %v2165, %v2161
      %v2342 = vpack.c.b16 %v2166, %v2162
      %v2343 = vpack.c.b16 %v2167, %v2163
      %v2344 = vpack.c.b16 %v2172, %v2168
      %v2345 = vpack.c.b16 %v2173, %v2169
      %v2346 = vpack.c.b16 %v2174, %v2170
      %v2347 = vpack.c.b16 %v2175, %v2171
      %v2348 = vpack.c.b16 %v2180, %v2176
      %v2349 = vpack.c.b16 %v2181, %v2177
      %v2350 = vpack.c.b16 %v2182, %v2178
      %v2351 = vpack.c.b16 %v2183, %v2179
      %v2352 = vpack.c.b16 %v2188, %v2184
      %v2353 = vpack.c.b16 %v2189, %v2185
      %v2354 = vpack.c.b16 %v2190, %v2186
      %v2355 = vpack.c.b16 %v2191, %v2187
      %v2356 = vpack.c.b16 %v2196, %v2192
      %v2357 = vpack.c.b16 %v2197, %v2193
      %v2358 = vpack.c.b16 %v2198, %v2194
      %v2359 = vpack.c.b16 %v2199, %v2195
      %v2360 = vpack.c.b16 %v2204, %v2200
      %v2361 = vpack.c.b16 %v2205, %v2201
      %v2362 = vpack.c.b16 %v2206, %v2202
      %v2363 = vpack.c.b16 %v2207, %v2203
      %v2364 = vpack.c.b16 %v2212, %v2208
      %v2365 = vpack.c.b16 %v2213, %v2209
      %v2366 = vpack.c.b16 %v2214, %v2210
      %v2367 = vpack.c.b16 %v2215, %v2211
      %v2368 = vpack.c.b16 %v2220, %v2216
      %v2369 = vpack.c.b16 %v2221, %v2217
      %v2370 = vpack.c.b16 %v2222, %v2218
      %v2371 = vpack.c.b16 %v2223, %v2219
      %v2372 = vpack.c.b16 %v2228, %v2224
      %v2373 = vpack.c.b16 %v2229, %v2225
      %v2374 = vpack.c.b16 %v2230, %v2226
      %v2375 = vpack.c.b16 %v2231, %v2227
      %2520 = vmatpush.bf16.msra.mxu0 %v1631
      %2521 = vmatpush.bf16.msra.mxu0 %v1630
      %2522 = vmatpush.bf16.msra.mxu0 %v1629
      %2523 = vmatpush.bf16.msra.mxu0 %v1628
      %2524 = vmatpush.bf16.msra.mxu0 %v1627
      %2525 = vmatpush.bf16.msra.mxu0 %v1626
      %2526 = vmatpush.bf16.msra.mxu0 %v1625
      %2527 = vmatpush.bf16.msra.mxu0 %v1624
      %2528 = vmatmul.bf16.gmra.mxu0 %v2232
      %v2529 = vpop.f32.mrf.mxu0
      %v2530 = vadd.f32 0.0, %v2529
      %v2531 = vpop.f32.mrf.mxu0
      %v2532 = vadd.f32 0.0, %v2531
      %2533 = vmatmul.bf16.gmra.mxu0 %v2236
      %v2534 = vpop.f32.mrf.mxu0
      %v2535 = vadd.f32 0.0, %v2534
      %v2536 = vpop.f32.mrf.mxu0
      %v2537 = vadd.f32 0.0, %v2536
      %2538 = vmatmul.bf16.gmra.mxu0 %v2240
      %v2539 = vpop.f32.mrf.mxu0
      %v2540 = vadd.f32 0.0, %v2539
      %v2541 = vpop.f32.mrf.mxu0
      %v2542 = vadd.f32 0.0, %v2541
      %2543 = vmatmul.bf16.gmra.mxu0 %v2244
      %v2544 = vpop.f32.mrf.mxu0
      %v2545 = vadd.f32 0.0, %v2544
      %v2546 = vpop.f32.mrf.mxu0
      %v2547 = vadd.f32 0.0, %v2546
      %2548 = vmatmul.bf16.gmra.mxu0 %v2248
      %v2549 = vpop.f32.mrf.mxu0
      %v2550 = vadd.f32 0.0, %v2549
      %v2551 = vpop.f32.mrf.mxu0
      %v2552 = vadd.f32 0.0, %v2551
      %2553 = vmatmul.bf16.gmra.mxu0 %v2252
      %v2554 = vpop.f32.mrf.mxu0
      %v2555 = vadd.f32 0.0, %v2554
      %v2556 = vpop.f32.mrf.mxu0
      %v2557 = vadd.f32 0.0, %v2556
      %2558 = vmatmul.bf16.gmra.mxu0 %v2256
      %v2559 = vpop.f32.mrf.mxu0
      %v2560 = vadd.f32 0.0, %v2559
      %v2561 = vpop.f32.mrf.mxu0
      %v2562 = vadd.f32 0.0, %v2561
      %2563 = vmatmul.bf16.gmra.mxu0 %v2260
      %v2564 = vpop.f32.mrf.mxu0
      %v2565 = vadd.f32 0.0, %v2564
      %v2566 = vpop.f32.mrf.mxu0
      %v2567 = vadd.f32 0.0, %v2566
      %2568 = vmatmul.bf16.gmra.mxu0 %v2264
      %v2569 = vpop.f32.mrf.mxu0
      %v2570 = vadd.f32 0.0, %v2569
      %v2571 = vpop.f32.mrf.mxu0
      %v2572 = vadd.f32 0.0, %v2571
      %2573 = vmatmul.bf16.gmra.mxu0 %v2268
      %v2574 = vpop.f32.mrf.mxu0
      %v2575 = vadd.f32 0.0, %v2574
      %v2576 = vpop.f32.mrf.mxu0
      %v2577 = vadd.f32 0.0, %v2576
      %2578 = vmatmul.bf16.gmra.mxu0 %v2272
      %v2579 = vpop.f32.mrf.mxu0
      %v2580 = vadd.f32 0.0, %v2579
      %v2581 = vpop.f32.mrf.mxu0
      %v2582 = vadd.f32 0.0, %v2581
      %2583 = vmatmul.bf16.gmra.mxu0 %v2276
      %v2584 = vpop.f32.mrf.mxu0
      %v2585 = vadd.f32 0.0, %v2584
      %v2586 = vpop.f32.mrf.mxu0
      %v2587 = vadd.f32 0.0, %v2586
      %2588 = vmatmul.bf16.gmra.mxu0 %v2280
      %v2589 = vpop.f32.mrf.mxu0
      %v2590 = vadd.f32 0.0, %v2589
      %v2591 = vpop.f32.mrf.mxu0
      %v2592 = vadd.f32 0.0, %v2591
      %2593 = vmatmul.bf16.gmra.mxu0 %v2284
      %v2594 = vpop.f32.mrf.mxu0
      %v2595 = vadd.f32 0.0, %v2594
      %v2596 = vpop.f32.mrf.mxu0
      %v2597 = vadd.f32 0.0, %v2596
      %2598 = vmatmul.bf16.gmra.mxu0 %v2288
      %v2599 = vpop.f32.mrf.mxu0
      %v2600 = vadd.f32 0.0, %v2599
      %v2601 = vpop.f32.mrf.mxu0
      %v2602 = vadd.f32 0.0, %v2601
      %2603 = vmatmul.bf16.gmra.mxu0 %v2292
      %v2604 = vpop.f32.mrf.mxu0
      %v2605 = vadd.f32 0.0, %v2604
      %v2606 = vpop.f32.mrf.mxu0
      %v2607 = vadd.f32 0.0, %v2606
      %2608 = vmatmul.bf16.gmra.mxu0 %v2296
      %v2609 = vpop.f32.mrf.mxu0
      %v2610 = vadd.f32 0.0, %v2609
      %v2611 = vpop.f32.mrf.mxu0
      %v2612 = vadd.f32 0.0, %v2611
      %2613 = vmatmul.bf16.gmra.mxu0 %v2300
      %v2614 = vpop.f32.mrf.mxu0
      %v2615 = vadd.f32 0.0, %v2614
      %v2616 = vpop.f32.mrf.mxu0
      %v2617 = vadd.f32 0.0, %v2616
      %2618 = vmatmul.bf16.gmra.mxu0 %v2304
      %v2619 = vpop.f32.mrf.mxu0
      %v2620 = vadd.f32 0.0, %v2619
      %v2621 = vpop.f32.mrf.mxu0
      %v2622 = vadd.f32 0.0, %v2621
      %2623 = vmatmul.bf16.gmra.mxu0 %v2308
      %v2624 = vpop.f32.mrf.mxu0
      %v2625 = vadd.f32 0.0, %v2624
      %v2626 = vpop.f32.mrf.mxu0
      %v2627 = vadd.f32 0.0, %v2626
      %2628 = vmatmul.bf16.gmra.mxu0 %v2312
      %v2629 = vpop.f32.mrf.mxu0
      %v2630 = vadd.f32 0.0, %v2629
      %v2631 = vpop.f32.mrf.mxu0
      %v2632 = vadd.f32 0.0, %v2631
      %2633 = vmatmul.bf16.gmra.mxu0 %v2316
      %v2634 = vpop.f32.mrf.mxu0
      %v2635 = vadd.f32 0.0, %v2634
      %v2636 = vpop.f32.mrf.mxu0
      %v2637 = vadd.f32 0.0, %v2636
      %2638 = vmatmul.bf16.gmra.mxu0 %v2320
      %v2639 = vpop.f32.mrf.mxu0
      %v2640 = vadd.f32 0.0, %v2639
      %v2641 = vpop.f32.mrf.mxu0
      %v2642 = vadd.f32 0.0, %v2641
      %2643 = vmatmul.bf16.gmra.mxu0 %v2324
      %v2644 = vpop.f32.mrf.mxu0
      %v2645 = vadd.f32 0.0, %v2644
      %v2646 = vpop.f32.mrf.mxu0
      %v2647 = vadd.f32 0.0, %v2646
      %2648 = vmatmul.bf16.gmra.mxu0 %v2328
      %v2649 = vpop.f32.mrf.mxu0
      %v2650 = vadd.f32 0.0, %v2649
      %v2651 = vpop.f32.mrf.mxu0
      %v2652 = vadd.f32 0.0, %v2651
      %2653 = vmatmul.bf16.gmra.mxu0 %v2332
      %v2654 = vpop.f32.mrf.mxu0
      %v2655 = vadd.f32 0.0, %v2654
      %v2656 = vpop.f32.mrf.mxu0
      %v2657 = vadd.f32 0.0, %v2656
      %2658 = vmatmul.bf16.gmra.mxu0 %v2336
      %v2659 = vpop.f32.mrf.mxu0
      %v2660 = vadd.f32 0.0, %v2659
      %v2661 = vpop.f32.mrf.mxu0
      %v2662 = vadd.f32 0.0, %v2661
      %2663 = vmatmul.bf16.gmra.mxu0 %v2340
      %v2664 = vpop.f32.mrf.mxu0
      %v2665 = vadd.f32 0.0, %v2664
      %v2666 = vpop.f32.mrf.mxu0
      %v2667 = vadd.f32 0.0, %v2666
      %2668 = vmatmul.bf16.gmra.mxu0 %v2344
      %v2669 = vpop.f32.mrf.mxu0
      %v2670 = vadd.f32 0.0, %v2669
      %v2671 = vpop.f32.mrf.mxu0
      %v2672 = vadd.f32 0.0, %v2671
      %2673 = vmatmul.bf16.gmra.mxu0 %v2348
      %v2674 = vpop.f32.mrf.mxu0
      %v2675 = vadd.f32 0.0, %v2674
      %v2676 = vpop.f32.mrf.mxu0
      %v2677 = vadd.f32 0.0, %v2676
      %2678 = vmatmul.bf16.gmra.mxu0 %v2352
      %v2679 = vpop.f32.mrf.mxu0
      %v2680 = vadd.f32 0.0, %v2679
      %v2681 = vpop.f32.mrf.mxu0
      %v2682 = vadd.f32 0.0, %v2681
      %2683 = vmatmul.bf16.gmra.mxu0 %v2356
      %v2684 = vpop.f32.mrf.mxu0
      %v2685 = vadd.f32 0.0, %v2684
      %v2686 = vpop.f32.mrf.mxu0
      %v2687 = vadd.f32 0.0, %v2686
      %2688 = vmatmul.bf16.gmra.mxu0 %v2360
      %v2689 = vpop.f32.mrf.mxu0
      %v2690 = vadd.f32 0.0, %v2689
      %v2691 = vpop.f32.mrf.mxu0
      %v2692 = vadd.f32 0.0, %v2691
      %2693 = vmatmul.bf16.gmra.mxu0 %v2364
      %v2694 = vpop.f32.mrf.mxu0
      %v2695 = vadd.f32 0.0, %v2694
      %v2696 = vpop.f32.mrf.mxu0
      %v2697 = vadd.f32 0.0, %v2696
      %2698 = vmatmul.bf16.gmra.mxu0 %v2368
      %v2699 = vpop.f32.mrf.mxu0
      %v2700 = vadd.f32 0.0, %v2699
      %v2701 = vpop.f32.mrf.mxu0
      %v2702 = vadd.f32 0.0, %v2701
      %2703 = vmatmul.bf16.gmra.mxu0 %v2372
      %v2704 = vpop.f32.mrf.mxu0
      %v2705 = vadd.f32 0.0, %v2704
      %v2706 = vpop.f32.mrf.mxu0
      %v2707 = vadd.f32 0.0, %v2706
      %2708 = vdwg.mxu0
      %2709 = vmatpush.bf16.msra.mxu0 %v1639
      %2710 = vmatpush.bf16.msra.mxu0 %v1638
      %2711 = vmatpush.bf16.msra.mxu0 %v1637
      %2712 = vmatpush.bf16.msra.mxu0 %v1636
      %2713 = vmatpush.bf16.msra.mxu0 %v1635
      %2714 = vmatpush.bf16.msra.mxu0 %v1634
      %2715 = vmatpush.bf16.msra.mxu0 %v1633
      %2716 = vmatpush.bf16.msra.mxu0 %v1632
      %2717 = vmatmul.bf16.gmra.mxu0 %v2233
      %v2718 = vpop.f32.mrf.mxu0
      %v2719 = vadd.f32 %v2530, %v2718
      %v2720 = vpop.f32.mrf.mxu0
      %v2721 = vadd.f32 %v2532, %v2720
      %2722 = vmatmul.bf16.gmra.mxu0 %v2237
      %v2723 = vpop.f32.mrf.mxu0
      %v2724 = vadd.f32 %v2535, %v2723
      %v2725 = vpop.f32.mrf.mxu0
      %v2726 = vadd.f32 %v2537, %v2725
      %2727 = vmatmul.bf16.gmra.mxu0 %v2241
      %v2728 = vpop.f32.mrf.mxu0
      %v2729 = vadd.f32 %v2540, %v2728
      %v2730 = vpop.f32.mrf.mxu0
      %v2731 = vadd.f32 %v2542, %v2730
      %2732 = vmatmul.bf16.gmra.mxu0 %v2245
      %v2733 = vpop.f32.mrf.mxu0
      %v2734 = vadd.f32 %v2545, %v2733
      %v2735 = vpop.f32.mrf.mxu0
      %v2736 = vadd.f32 %v2547, %v2735
      %2737 = vmatmul.bf16.gmra.mxu0 %v2249
      %v2738 = vpop.f32.mrf.mxu0
      %v2739 = vadd.f32 %v2550, %v2738
      %v2740 = vpop.f32.mrf.mxu0
      %v2741 = vadd.f32 %v2552, %v2740
      %2742 = vmatmul.bf16.gmra.mxu0 %v2253
      %v2743 = vpop.f32.mrf.mxu0
      %v2744 = vadd.f32 %v2555, %v2743
      %v2745 = vpop.f32.mrf.mxu0
      %v2746 = vadd.f32 %v2557, %v2745
      %2747 = vmatmul.bf16.gmra.mxu0 %v2257
      %v2748 = vpop.f32.mrf.mxu0
      %v2749 = vadd.f32 %v2560, %v2748
      %v2750 = vpop.f32.mrf.mxu0
      %v2751 = vadd.f32 %v2562, %v2750
      %2752 = vmatmul.bf16.gmra.mxu0 %v2261
      %v2753 = vpop.f32.mrf.mxu0
      %v2754 = vadd.f32 %v2565, %v2753
      %v2755 = vpop.f32.mrf.mxu0
      %v2756 = vadd.f32 %v2567, %v2755
      %2757 = vmatmul.bf16.gmra.mxu0 %v2265
      %v2758 = vpop.f32.mrf.mxu0
      %v2759 = vadd.f32 %v2570, %v2758
      %v2760 = vpop.f32.mrf.mxu0
      %v2761 = vadd.f32 %v2572, %v2760
      %2762 = vmatmul.bf16.gmra.mxu0 %v2269
      %v2763 = vpop.f32.mrf.mxu0
      %v2764 = vadd.f32 %v2575, %v2763
      %v2765 = vpop.f32.mrf.mxu0
      %v2766 = vadd.f32 %v2577, %v2765
      %2767 = vmatmul.bf16.gmra.mxu0 %v2273
      %v2768 = vpop.f32.mrf.mxu0
      %v2769 = vadd.f32 %v2580, %v2768
      %v2770 = vpop.f32.mrf.mxu0
      %v2771 = vadd.f32 %v2582, %v2770
      %2772 = vmatmul.bf16.gmra.mxu0 %v2277
      %v2773 = vpop.f32.mrf.mxu0
      %v2774 = vadd.f32 %v2585, %v2773
      %v2775 = vpop.f32.mrf.mxu0
      %v2776 = vadd.f32 %v2587, %v2775
      %2777 = vmatmul.bf16.gmra.mxu0 %v2281
      %v2778 = vpop.f32.mrf.mxu0
      %v2779 = vadd.f32 %v2590, %v2778
      %v2780 = vpop.f32.mrf.mxu0
      %v2781 = vadd.f32 %v2592, %v2780
      %2782 = vmatmul.bf16.gmra.mxu0 %v2285
      %v2783 = vpop.f32.mrf.mxu0
      %v2784 = vadd.f32 %v2595, %v2783
      %v2785 = vpop.f32.mrf.mxu0
      %v2786 = vadd.f32 %v2597, %v2785
      %2787 = vmatmul.bf16.gmra.mxu0 %v2289
      %v2788 = vpop.f32.mrf.mxu0
      %v2789 = vadd.f32 %v2600, %v2788
      %v2790 = vpop.f32.mrf.mxu0
      %v2791 = vadd.f32 %v2602, %v2790
      %2792 = vmatmul.bf16.gmra.mxu0 %v2293
      %v2793 = vpop.f32.mrf.mxu0
      %v2794 = vadd.f32 %v2605, %v2793
      %v2795 = vpop.f32.mrf.mxu0
      %v2796 = vadd.f32 %v2607, %v2795
      %2797 = vmatmul.bf16.gmra.mxu0 %v2297
      %v2798 = vpop.f32.mrf.mxu0
      %v2799 = vadd.f32 %v2610, %v2798
      %v2800 = vpop.f32.mrf.mxu0
      %v2801 = vadd.f32 %v2612, %v2800
      %2802 = vmatmul.bf16.gmra.mxu0 %v2301
      %v2803 = vpop.f32.mrf.mxu0
      %v2804 = vadd.f32 %v2615, %v2803
      %v2805 = vpop.f32.mrf.mxu0
      %v2806 = vadd.f32 %v2617, %v2805
      %2807 = vmatmul.bf16.gmra.mxu0 %v2305
      %v2808 = vpop.f32.mrf.mxu0
      %v2809 = vadd.f32 %v2620, %v2808
      %v2810 = vpop.f32.mrf.mxu0
      %v2811 = vadd.f32 %v2622, %v2810
      %2812 = vmatmul.bf16.gmra.mxu0 %v2309
      %v2813 = vpop.f32.mrf.mxu0
      %v2814 = vadd.f32 %v2625, %v2813
      %v2815 = vpop.f32.mrf.mxu0
      %v2816 = vadd.f32 %v2627, %v2815
      %2817 = vmatmul.bf16.gmra.mxu0 %v2313
      %v2818 = vpop.f32.mrf.mxu0
      %v2819 = vadd.f32 %v2630, %v2818
      %v2820 = vpop.f32.mrf.mxu0
      %v2821 = vadd.f32 %v2632, %v2820
      %2822 = vmatmul.bf16.gmra.mxu0 %v2317
      %v2823 = vpop.f32.mrf.mxu0
      %v2824 = vadd.f32 %v2635, %v2823
      %v2825 = vpop.f32.mrf.mxu0
      %v2826 = vadd.f32 %v2637, %v2825
      %2827 = vmatmul.bf16.gmra.mxu0 %v2321
      %v2828 = vpop.f32.mrf.mxu0
      %v2829 = vadd.f32 %v2640, %v2828
      %v2830 = vpop.f32.mrf.mxu0
      %v2831 = vadd.f32 %v2642, %v2830
      %2832 = vmatmul.bf16.gmra.mxu0 %v2325
      %v2833 = vpop.f32.mrf.mxu0
      %v2834 = vadd.f32 %v2645, %v2833
      %v2835 = vpop.f32.mrf.mxu0
      %v2836 = vadd.f32 %v2647, %v2835
      %2837 = vmatmul.bf16.gmra.mxu0 %v2329
      %v2838 = vpop.f32.mrf.mxu0
      %v2839 = vadd.f32 %v2650, %v2838
      %v2840 = vpop.f32.mrf.mxu0
      %v2841 = vadd.f32 %v2652, %v2840
      %2842 = vmatmul.bf16.gmra.mxu0 %v2333
      %v2843 = vpop.f32.mrf.mxu0
      %v2844 = vadd.f32 %v2655, %v2843
      %v2845 = vpop.f32.mrf.mxu0
      %v2846 = vadd.f32 %v2657, %v2845
      %2847 = vmatmul.bf16.gmra.mxu0 %v2337
      %v2848 = vpop.f32.mrf.mxu0
      %v2849 = vadd.f32 %v2660, %v2848
      %v2850 = vpop.f32.mrf.mxu0
      %v2851 = vadd.f32 %v2662, %v2850
      %2852 = vmatmul.bf16.gmra.mxu0 %v2341
      %v2853 = vpop.f32.mrf.mxu0
      %v2854 = vadd.f32 %v2665, %v2853
      %v2855 = vpop.f32.mrf.mxu0
      %v2856 = vadd.f32 %v2667, %v2855
      %2857 = vmatmul.bf16.gmra.mxu0 %v2345
      %v2858 = vpop.f32.mrf.mxu0
      %v2859 = vadd.f32 %v2670, %v2858
      %v2860 = vpop.f32.mrf.mxu0
      %v2861 = vadd.f32 %v2672, %v2860
      %2862 = vmatmul.bf16.gmra.mxu0 %v2349
      %v2863 = vpop.f32.mrf.mxu0
      %v2864 = vadd.f32 %v2675, %v2863
      %v2865 = vpop.f32.mrf.mxu0
      %v2866 = vadd.f32 %v2677, %v2865
      %2867 = vmatmul.bf16.gmra.mxu0 %v2353
      %v2868 = vpop.f32.mrf.mxu0
      %v2869 = vadd.f32 %v2680, %v2868
      %v2870 = vpop.f32.mrf.mxu0
      %v2871 = vadd.f32 %v2682, %v2870
      %2872 = vmatmul.bf16.gmra.mxu0 %v2357
      %v2873 = vpop.f32.mrf.mxu0
      %v2874 = vadd.f32 %v2685, %v2873
      %v2875 = vpop.f32.mrf.mxu0
      %v2876 = vadd.f32 %v2687, %v2875
      %2877 = vmatmul.bf16.gmra.mxu0 %v2361
      %v2878 = vpop.f32.mrf.mxu0
      %v2879 = vadd.f32 %v2690, %v2878
      %v2880 = vpop.f32.mrf.mxu0
      %v2881 = vadd.f32 %v2692, %v2880
      %2882 = vmatmul.bf16.gmra.mxu0 %v2365
      %v2883 = vpop.f32.mrf.mxu0
      %v2884 = vadd.f32 %v2695, %v2883
      %v2885 = vpop.f32.mrf.mxu0
      %v2886 = vadd.f32 %v2697, %v2885
      %2887 = vmatmul.bf16.gmra.mxu0 %v2369
      %v2888 = vpop.f32.mrf.mxu0
      %v2889 = vadd.f32 %v2700, %v2888
      %v2890 = vpop.f32.mrf.mxu0
      %v2891 = vadd.f32 %v2702, %v2890
      %2892 = vmatmul.bf16.gmra.mxu0 %v2373
      %v2893 = vpop.f32.mrf.mxu0
      %v2894 = vadd.f32 %v2705, %v2893
      %v2895 = vpop.f32.mrf.mxu0
      %v2896 = vadd.f32 %v2707, %v2895
      %2897 = vdwg.mxu0
      %2898 = vmatpush.bf16.msra.mxu0 %v1647
      %2899 = vmatpush.bf16.msra.mxu0 %v1646
      %2900 = vmatpush.bf16.msra.mxu0 %v1645
      %2901 = vmatpush.bf16.msra.mxu0 %v1644
      %2902 = vmatpush.bf16.msra.mxu0 %v1643
      %2903 = vmatpush.bf16.msra.mxu0 %v1642
      %2904 = vmatpush.bf16.msra.mxu0 %v1641
      %2905 = vmatpush.bf16.msra.mxu0 %v1640
      %2906 = vmatmul.bf16.gmra.mxu0 %v2234
      %v2907 = vpop.f32.mrf.mxu0
      %v2908 = vadd.f32 %v2719, %v2907
      %v2909 = vpop.f32.mrf.mxu0
      %v2910 = vadd.f32 %v2721, %v2909
      %2911 = vmatmul.bf16.gmra.mxu0 %v2238
      %v2912 = vpop.f32.mrf.mxu0
      %v2913 = vadd.f32 %v2724, %v2912
      %v2914 = vpop.f32.mrf.mxu0
      %v2915 = vadd.f32 %v2726, %v2914
      %2916 = vmatmul.bf16.gmra.mxu0 %v2242
      %v2917 = vpop.f32.mrf.mxu0
      %v2918 = vadd.f32 %v2729, %v2917
      %v2919 = vpop.f32.mrf.mxu0
      %v2920 = vadd.f32 %v2731, %v2919
      %2921 = vmatmul.bf16.gmra.mxu0 %v2246
      %v2922 = vpop.f32.mrf.mxu0
      %v2923 = vadd.f32 %v2734, %v2922
      %v2924 = vpop.f32.mrf.mxu0
      %v2925 = vadd.f32 %v2736, %v2924
      %2926 = vmatmul.bf16.gmra.mxu0 %v2250
      %v2927 = vpop.f32.mrf.mxu0
      %v2928 = vadd.f32 %v2739, %v2927
      %v2929 = vpop.f32.mrf.mxu0
      %v2930 = vadd.f32 %v2741, %v2929
      %2931 = vmatmul.bf16.gmra.mxu0 %v2254
      %v2932 = vpop.f32.mrf.mxu0
      %v2933 = vadd.f32 %v2744, %v2932
      %v2934 = vpop.f32.mrf.mxu0
      %v2935 = vadd.f32 %v2746, %v2934
      %2936 = vmatmul.bf16.gmra.mxu0 %v2258
      %v2937 = vpop.f32.mrf.mxu0
      %v2938 = vadd.f32 %v2749, %v2937
      %v2939 = vpop.f32.mrf.mxu0
      %v2940 = vadd.f32 %v2751, %v2939
      %2941 = vmatmul.bf16.gmra.mxu0 %v2262
      %v2942 = vpop.f32.mrf.mxu0
      %v2943 = vadd.f32 %v2754, %v2942
      %v2944 = vpop.f32.mrf.mxu0
      %v2945 = vadd.f32 %v2756, %v2944
      %2946 = vmatmul.bf16.gmra.mxu0 %v2266
      %v2947 = vpop.f32.mrf.mxu0
      %v2948 = vadd.f32 %v2759, %v2947
      %v2949 = vpop.f32.mrf.mxu0
      %v2950 = vadd.f32 %v2761, %v2949
      %2951 = vmatmul.bf16.gmra.mxu0 %v2270
      %v2952 = vpop.f32.mrf.mxu0
      %v2953 = vadd.f32 %v2764, %v2952
      %v2954 = vpop.f32.mrf.mxu0
      %v2955 = vadd.f32 %v2766, %v2954
      %2956 = vmatmul.bf16.gmra.mxu0 %v2274
      %v2957 = vpop.f32.mrf.mxu0
      %v2958 = vadd.f32 %v2769, %v2957
      %v2959 = vpop.f32.mrf.mxu0
      %v2960 = vadd.f32 %v2771, %v2959
      %2961 = vmatmul.bf16.gmra.mxu0 %v2278
      %v2962 = vpop.f32.mrf.mxu0
      %v2963 = vadd.f32 %v2774, %v2962
      %v2964 = vpop.f32.mrf.mxu0
      %v2965 = vadd.f32 %v2776, %v2964
      %2966 = vmatmul.bf16.gmra.mxu0 %v2282
      %v2967 = vpop.f32.mrf.mxu0
      %v2968 = vadd.f32 %v2779, %v2967
      %v2969 = vpop.f32.mrf.mxu0
      %v2970 = vadd.f32 %v2781, %v2969
      %2971 = vmatmul.bf16.gmra.mxu0 %v2286
      %v2972 = vpop.f32.mrf.mxu0
      %v2973 = vadd.f32 %v2784, %v2972
      %v2974 = vpop.f32.mrf.mxu0
      %v2975 = vadd.f32 %v2786, %v2974
      %2976 = vmatmul.bf16.gmra.mxu0 %v2290
      %v2977 = vpop.f32.mrf.mxu0
      %v2978 = vadd.f32 %v2789, %v2977
      %v2979 = vpop.f32.mrf.mxu0
      %v2980 = vadd.f32 %v2791, %v2979
      %2981 = vmatmul.bf16.gmra.mxu0 %v2294
      %v2982 = vpop.f32.mrf.mxu0
      %v2983 = vadd.f32 %v2794, %v2982
      %v2984 = vpop.f32.mrf.mxu0
      %v2985 = vadd.f32 %v2796, %v2984
      %2986 = vmatmul.bf16.gmra.mxu0 %v2298
      %v2987 = vpop.f32.mrf.mxu0
      %v2988 = vadd.f32 %v2799, %v2987
      %v2989 = vpop.f32.mrf.mxu0
      %v2990 = vadd.f32 %v2801, %v2989
      %2991 = vmatmul.bf16.gmra.mxu0 %v2302
      %v2992 = vpop.f32.mrf.mxu0
      %v2993 = vadd.f32 %v2804, %v2992
      %v2994 = vpop.f32.mrf.mxu0
      %v2995 = vadd.f32 %v2806, %v2994
      %2996 = vmatmul.bf16.gmra.mxu0 %v2306
      %v2997 = vpop.f32.mrf.mxu0
      %v2998 = vadd.f32 %v2809, %v2997
      %v2999 = vpop.f32.mrf.mxu0
      %v3000 = vadd.f32 %v2811, %v2999
      %3001 = vmatmul.bf16.gmra.mxu0 %v2310
      %v3002 = vpop.f32.mrf.mxu0
      %v3003 = vadd.f32 %v2814, %v3002
      %v3004 = vpop.f32.mrf.mxu0
      %v3005 = vadd.f32 %v2816, %v3004
      %3006 = vmatmul.bf16.gmra.mxu0 %v2314
      %v3007 = vpop.f32.mrf.mxu0
      %v3008 = vadd.f32 %v2819, %v3007
      %v3009 = vpop.f32.mrf.mxu0
      %v3010 = vadd.f32 %v2821, %v3009
      %3011 = vmatmul.bf16.gmra.mxu0 %v2318
      %v3012 = vpop.f32.mrf.mxu0
      %v3013 = vadd.f32 %v2824, %v3012
      %v3014 = vpop.f32.mrf.mxu0
      %v3015 = vadd.f32 %v2826, %v3014
      %3016 = vmatmul.bf16.gmra.mxu0 %v2322
      %v3017 = vpop.f32.mrf.mxu0
      %v3018 = vadd.f32 %v2829, %v3017
      %v3019 = vpop.f32.mrf.mxu0
      %v3020 = vadd.f32 %v2831, %v3019
      %3021 = vmatmul.bf16.gmra.mxu0 %v2326
      %v3022 = vpop.f32.mrf.mxu0
      %v3023 = vadd.f32 %v2834, %v3022
      %v3024 = vpop.f32.mrf.mxu0
      %v3025 = vadd.f32 %v2836, %v3024
      %3026 = vmatmul.bf16.gmra.mxu0 %v2330
      %v3027 = vpop.f32.mrf.mxu0
      %v3028 = vadd.f32 %v2839, %v3027
      %v3029 = vpop.f32.mrf.mxu0
      %v3030 = vadd.f32 %v2841, %v3029
      %3031 = vmatmul.bf16.gmra.mxu0 %v2334
      %v3032 = vpop.f32.mrf.mxu0
      %v3033 = vadd.f32 %v2844, %v3032
      %v3034 = vpop.f32.mrf.mxu0
      %v3035 = vadd.f32 %v2846, %v3034
      %3036 = vmatmul.bf16.gmra.mxu0 %v2338
      %v3037 = vpop.f32.mrf.mxu0
      %v3038 = vadd.f32 %v2849, %v3037
      %v3039 = vpop.f32.mrf.mxu0
      %v3040 = vadd.f32 %v2851, %v3039
      %3041 = vmatmul.bf16.gmra.mxu0 %v2342
      %v3042 = vpop.f32.mrf.mxu0
      %v3043 = vadd.f32 %v2854, %v3042
      %v3044 = vpop.f32.mrf.mxu0
      %v3045 = vadd.f32 %v2856, %v3044
      %3046 = vmatmul.bf16.gmra.mxu0 %v2346
      %v3047 = vpop.f32.mrf.mxu0
      %v3048 = vadd.f32 %v2859, %v3047
      %v3049 = vpop.f32.mrf.mxu0
      %v3050 = vadd.f32 %v2861, %v3049
      %3051 = vmatmul.bf16.gmra.mxu0 %v2350
      %v3052 = vpop.f32.mrf.mxu0
      %v3053 = vadd.f32 %v2864, %v3052
      %v3054 = vpop.f32.mrf.mxu0
      %v3055 = vadd.f32 %v2866, %v3054
      %3056 = vmatmul.bf16.gmra.mxu0 %v2354
      %v3057 = vpop.f32.mrf.mxu0
      %v3058 = vadd.f32 %v2869, %v3057
      %v3059 = vpop.f32.mrf.mxu0
      %v3060 = vadd.f32 %v2871, %v3059
      %3061 = vmatmul.bf16.gmra.mxu0 %v2358
      %v3062 = vpop.f32.mrf.mxu0
      %v3063 = vadd.f32 %v2874, %v3062
      %v3064 = vpop.f32.mrf.mxu0
      %v3065 = vadd.f32 %v2876, %v3064
      %3066 = vmatmul.bf16.gmra.mxu0 %v2362
      %v3067 = vpop.f32.mrf.mxu0
      %v3068 = vadd.f32 %v2879, %v3067
      %v3069 = vpop.f32.mrf.mxu0
      %v3070 = vadd.f32 %v2881, %v3069
      %3071 = vmatmul.bf16.gmra.mxu0 %v2366
      %v3072 = vpop.f32.mrf.mxu0
      %v3073 = vadd.f32 %v2884, %v3072
      %v3074 = vpop.f32.mrf.mxu0
      %v3075 = vadd.f32 %v2886, %v3074
      %3076 = vmatmul.bf16.gmra.mxu0 %v2370
      %v3077 = vpop.f32.mrf.mxu0
      %v3078 = vadd.f32 %v2889, %v3077
      %v3079 = vpop.f32.mrf.mxu0
      %v3080 = vadd.f32 %v2891, %v3079
      %3081 = vmatmul.bf16.gmra.mxu0 %v2374
      %v3082 = vpop.f32.mrf.mxu0
      %v3083 = vadd.f32 %v2894, %v3082
      %v3084 = vpop.f32.mrf.mxu0
      %v3085 = vadd.f32 %v2896, %v3084
      %3086 = vdwg.mxu0
      %3087 = vmatpush.bf16.msra.mxu0 %v1655
      %3088 = vmatpush.bf16.msra.mxu0 %v1654
      %3089 = vmatpush.bf16.msra.mxu0 %v1653
      %3090 = vmatpush.bf16.msra.mxu0 %v1652
      %3091 = vmatpush.bf16.msra.mxu0 %v1651
      %3092 = vmatpush.bf16.msra.mxu0 %v1650
      %3093 = vmatpush.bf16.msra.mxu0 %v1649
      %3094 = vmatpush.bf16.msra.mxu0 %v1648
      %3095 = vmatmul.bf16.gmra.mxu0 %v2235
      %v3096 = vpop.f32.mrf.mxu0
      %v3097 = vadd.f32 %v2908, %v3096
      %v3098 = vpop.f32.mrf.mxu0
      %v3099 = vadd.f32 %v2910, %v3098
      %3100 = vmatmul.bf16.gmra.mxu0 %v2239
      %v3101 = vpop.f32.mrf.mxu0
      %v3102 = vadd.f32 %v2913, %v3101
      %v3103 = vpop.f32.mrf.mxu0
      %v3104 = vadd.f32 %v2915, %v3103
      %3105 = vmatmul.bf16.gmra.mxu0 %v2243
      %v3106 = vpop.f32.mrf.mxu0
      %v3107 = vadd.f32 %v2918, %v3106
      %v3108 = vpop.f32.mrf.mxu0
      %v3109 = vadd.f32 %v2920, %v3108
      %3110 = vmatmul.bf16.gmra.mxu0 %v2247
      %v3111 = vpop.f32.mrf.mxu0
      %v3112 = vadd.f32 %v2923, %v3111
      %v3113 = vpop.f32.mrf.mxu0
      %v3114 = vadd.f32 %v2925, %v3113
      %3115 = vmatmul.bf16.gmra.mxu0 %v2251
      %v3116 = vpop.f32.mrf.mxu0
      %v3117 = vadd.f32 %v2928, %v3116
      %v3118 = vpop.f32.mrf.mxu0
      %v3119 = vadd.f32 %v2930, %v3118
      %3120 = vmatmul.bf16.gmra.mxu0 %v2255
      %v3121 = vpop.f32.mrf.mxu0
      %v3122 = vadd.f32 %v2933, %v3121
      %v3123 = vpop.f32.mrf.mxu0
      %v3124 = vadd.f32 %v2935, %v3123
      %3125 = vmatmul.bf16.gmra.mxu0 %v2259
      %v3126 = vpop.f32.mrf.mxu0
      %v3127 = vadd.f32 %v2938, %v3126
      %v3128 = vpop.f32.mrf.mxu0
      %v3129 = vadd.f32 %v2940, %v3128
      %3130 = vmatmul.bf16.gmra.mxu0 %v2263
      %v3131 = vpop.f32.mrf.mxu0
      %v3132 = vadd.f32 %v2943, %v3131
      %v3133 = vpop.f32.mrf.mxu0
      %v3134 = vadd.f32 %v2945, %v3133
      %3135 = vmatmul.bf16.gmra.mxu0 %v2267
      %v3136 = vpop.f32.mrf.mxu0
      %v3137 = vadd.f32 %v2948, %v3136
      %v3138 = vpop.f32.mrf.mxu0
      %v3139 = vadd.f32 %v2950, %v3138
      %3140 = vmatmul.bf16.gmra.mxu0 %v2271
      %v3141 = vpop.f32.mrf.mxu0
      %v3142 = vadd.f32 %v2953, %v3141
      %v3143 = vpop.f32.mrf.mxu0
      %v3144 = vadd.f32 %v2955, %v3143
      %3145 = vmatmul.bf16.gmra.mxu0 %v2275
      %v3146 = vpop.f32.mrf.mxu0
      %v3147 = vadd.f32 %v2958, %v3146
      %v3148 = vpop.f32.mrf.mxu0
      %v3149 = vadd.f32 %v2960, %v3148
      %3150 = vmatmul.bf16.gmra.mxu0 %v2279
      %v3151 = vpop.f32.mrf.mxu0
      %v3152 = vadd.f32 %v2963, %v3151
      %v3153 = vpop.f32.mrf.mxu0
      %v3154 = vadd.f32 %v2965, %v3153
      %3155 = vmatmul.bf16.gmra.mxu0 %v2283
      %v3156 = vpop.f32.mrf.mxu0
      %v3157 = vadd.f32 %v2968, %v3156
      %v3158 = vpop.f32.mrf.mxu0
      %v3159 = vadd.f32 %v2970, %v3158
      %3160 = vmatmul.bf16.gmra.mxu0 %v2287
      %v3161 = vpop.f32.mrf.mxu0
      %v3162 = vadd.f32 %v2973, %v3161
      %v3163 = vpop.f32.mrf.mxu0
      %v3164 = vadd.f32 %v2975, %v3163
      %3165 = vmatmul.bf16.gmra.mxu0 %v2291
      %v3166 = vpop.f32.mrf.mxu0
      %v3167 = vadd.f32 %v2978, %v3166
      %v3168 = vpop.f32.mrf.mxu0
      %v3169 = vadd.f32 %v2980, %v3168
      %3170 = vmatmul.bf16.gmra.mxu0 %v2295
      %v3171 = vpop.f32.mrf.mxu0
      %v3172 = vadd.f32 %v2983, %v3171
      %v3173 = vpop.f32.mrf.mxu0
      %v3174 = vadd.f32 %v2985, %v3173
      %3175 = vmatmul.bf16.gmra.mxu0 %v2299
      %v3176 = vpop.f32.mrf.mxu0
      %v3177 = vadd.f32 %v2988, %v3176
      %v3178 = vpop.f32.mrf.mxu0
      %v3179 = vadd.f32 %v2990, %v3178
      %3180 = vmatmul.bf16.gmra.mxu0 %v2303
      %v3181 = vpop.f32.mrf.mxu0
      %v3182 = vadd.f32 %v2993, %v3181
      %v3183 = vpop.f32.mrf.mxu0
      %v3184 = vadd.f32 %v2995, %v3183
      %3185 = vmatmul.bf16.gmra.mxu0 %v2307
      %v3186 = vpop.f32.mrf.mxu0
      %v3187 = vadd.f32 %v2998, %v3186
      %v3188 = vpop.f32.mrf.mxu0
      %v3189 = vadd.f32 %v3000, %v3188
      %3190 = vmatmul.bf16.gmra.mxu0 %v2311
      %v3191 = vpop.f32.mrf.mxu0
      %v3192 = vadd.f32 %v3003, %v3191
      %v3193 = vpop.f32.mrf.mxu0
      %v3194 = vadd.f32 %v3005, %v3193
      %3195 = vmatmul.bf16.gmra.mxu0 %v2315
      %v3196 = vpop.f32.mrf.mxu0
      %v3197 = vadd.f32 %v3008, %v3196
      %v3198 = vpop.f32.mrf.mxu0
      %v3199 = vadd.f32 %v3010, %v3198
      %3200 = vmatmul.bf16.gmra.mxu0 %v2319
      %v3201 = vpop.f32.mrf.mxu0
      %v3202 = vadd.f32 %v3013, %v3201
      %v3203 = vpop.f32.mrf.mxu0
      %v3204 = vadd.f32 %v3015, %v3203
      %3205 = vmatmul.bf16.gmra.mxu0 %v2323
      %v3206 = vpop.f32.mrf.mxu0
      %v3207 = vadd.f32 %v3018, %v3206
      %v3208 = vpop.f32.mrf.mxu0
      %v3209 = vadd.f32 %v3020, %v3208
      %3210 = vmatmul.bf16.gmra.mxu0 %v2327
      %v3211 = vpop.f32.mrf.mxu0
      %v3212 = vadd.f32 %v3023, %v3211
      %v3213 = vpop.f32.mrf.mxu0
      %v3214 = vadd.f32 %v3025, %v3213
      %3215 = vmatmul.bf16.gmra.mxu0 %v2331
      %v3216 = vpop.f32.mrf.mxu0
      %v3217 = vadd.f32 %v3028, %v3216
      %v3218 = vpop.f32.mrf.mxu0
      %v3219 = vadd.f32 %v3030, %v3218
      %3220 = vmatmul.bf16.gmra.mxu0 %v2335
      %v3221 = vpop.f32.mrf.mxu0
      %v3222 = vadd.f32 %v3033, %v3221
      %v3223 = vpop.f32.mrf.mxu0
      %v3224 = vadd.f32 %v3035, %v3223
      %3225 = vmatmul.bf16.gmra.mxu0 %v2339
      %v3226 = vpop.f32.mrf.mxu0
      %v3227 = vadd.f32 %v3038, %v3226
      %v3228 = vpop.f32.mrf.mxu0
      %v3229 = vadd.f32 %v3040, %v3228
      %3230 = vmatmul.bf16.gmra.mxu0 %v2343
      %v3231 = vpop.f32.mrf.mxu0
      %v3232 = vadd.f32 %v3043, %v3231
      %v3233 = vpop.f32.mrf.mxu0
      %v3234 = vadd.f32 %v3045, %v3233
      %3235 = vmatmul.bf16.gmra.mxu0 %v2347
      %v3236 = vpop.f32.mrf.mxu0
      %v3237 = vadd.f32 %v3048, %v3236
      %v3238 = vpop.f32.mrf.mxu0
      %v3239 = vadd.f32 %v3050, %v3238
      %3240 = vmatmul.bf16.gmra.mxu0 %v2351
      %v3241 = vpop.f32.mrf.mxu0
      %v3242 = vadd.f32 %v3053, %v3241
      %v3243 = vpop.f32.mrf.mxu0
      %v3244 = vadd.f32 %v3055, %v3243
      %3245 = vmatmul.bf16.gmra.mxu0 %v2355
      %v3246 = vpop.f32.mrf.mxu0
      %v3247 = vadd.f32 %v3058, %v3246
      %v3248 = vpop.f32.mrf.mxu0
      %v3249 = vadd.f32 %v3060, %v3248
      %3250 = vmatmul.bf16.gmra.mxu0 %v2359
      %v3251 = vpop.f32.mrf.mxu0
      %v3252 = vadd.f32 %v3063, %v3251
      %v3253 = vpop.f32.mrf.mxu0
      %v3254 = vadd.f32 %v3065, %v3253
      %3255 = vmatmul.bf16.gmra.mxu0 %v2363
      %v3256 = vpop.f32.mrf.mxu0
      %v3257 = vadd.f32 %v3068, %v3256
      %v3258 = vpop.f32.mrf.mxu0
      %v3259 = vadd.f32 %v3070, %v3258
      %3260 = vmatmul.bf16.gmra.mxu0 %v2367
      %v3261 = vpop.f32.mrf.mxu0
      %v3262 = vadd.f32 %v3073, %v3261
      %v3263 = vpop.f32.mrf.mxu0
      %v3264 = vadd.f32 %v3075, %v3263
      %3265 = vmatmul.bf16.gmra.mxu0 %v2371
      %v3266 = vpop.f32.mrf.mxu0
      %v3267 = vadd.f32 %v3078, %v3266
      %v3268 = vpop.f32.mrf.mxu0
      %v3269 = vadd.f32 %v3080, %v3268
      %3270 = vmatmul.bf16.gmra.mxu0 %v2375
      %v3271 = vpop.f32.mrf.mxu0
      %v3272 = vadd.f32 %v3083, %v3271
      %v3273 = vpop.f32.mrf.mxu0
      %v3274 = vadd.f32 %v3085, %v3273
      %3275 = vdwg.mxu0
      %v3276 = vld [vmem:[%s8] sm:$0xff]
      %v3277 = vld [vmem:[%s8 + $0x8] sm:$0xff]
      %v3278 = vld [vmem:[%s8 + $0x10] sm:$0xff]
      %v3279 = vld [vmem:[%s8 + $0x18] sm:$0xff]
      %v3280 = vld [vmem:[%s8 + $0x20] sm:$0xff]
      %v3281 = vld [vmem:[%s8 + $0x28] sm:$0xff]
      %v3282 = vld [vmem:[%s8 + $0x30] sm:$0xff]
      %v3283 = vld [vmem:[%s8 + $0x38] sm:$0xff]
      %v3284 = vld [vmem:[%s8 + $0x40] sm:$0xff]
      %v3285 = vld [vmem:[%s8 + $0x48] sm:$0xff]
      %v3286 = vld [vmem:[%s8 + $0x50] sm:$0xff]
      %v3287 = vld [vmem:[%s8 + $0x58] sm:$0xff]
      %v3288 = vld [vmem:[%s8 + $0x60] sm:$0xff]
      %v3289 = vld [vmem:[%s8 + $0x68] sm:$0xff]
      %v3290 = vld [vmem:[%s8 + $0x70] sm:$0xff]
      %v3291 = vld [vmem:[%s8 + $0x78] sm:$0xff]
      %v3292 = vld [vmem:[%s8 + $0x80] sm:$0xff]
      %v3293 = vld [vmem:[%s8 + $0x88] sm:$0xff]
      %v3294 = vld [vmem:[%s8 + $0x90] sm:$0xff]
      %v3295 = vld [vmem:[%s8 + $0x98] sm:$0xff]
      %v3296 = vld [vmem:[%s8 + $0xa0] sm:$0xff]
      %v3297 = vld [vmem:[%s8 + $0xa8] sm:$0xff]
      %v3298 = vld [vmem:[%s8 + $0xb0] sm:$0xff]
      %v3299 = vld [vmem:[%s8 + $0xb8] sm:$0xff]
      %v3300 = vld [vmem:[%s8 + $0xc0] sm:$0xff]
      %v3301 = vld [vmem:[%s8 + $0xc8] sm:$0xff]
      %v3302 = vld [vmem:[%s8 + $0xd0] sm:$0xff]
      %v3303 = vld [vmem:[%s8 + $0xd8] sm:$0xff]
      %v3304 = vld [vmem:[%s8 + $0xe0] sm:$0xff]
      %v3305 = vld [vmem:[%s8 + $0xe8] sm:$0xff]
      %v3306 = vld [vmem:[%s8 + $0xf0] sm:$0xff]
      %v3307 = vld [vmem:[%s8 + $0xf8] sm:$0xff]
      %v3308 = vld [vmem:[%s8 + $0x100] sm:$0xff]
      %v3309 = vld [vmem:[%s8 + $0x108] sm:$0xff]
      %v3310 = vld [vmem:[%s8 + $0x110] sm:$0xff]
      %v3311 = vld [vmem:[%s8 + $0x118] sm:$0xff]
      %v3312 = vld [vmem:[%s8 + $0x120] sm:$0xff]
      %v3313 = vld [vmem:[%s8 + $0x128] sm:$0xff]
      %v3314 = vld [vmem:[%s8 + $0x130] sm:$0xff]
      %v3315 = vld [vmem:[%s8 + $0x138] sm:$0xff]
      %v3316 = vld [vmem:[%s8 + $0x140] sm:$0xff]
      %v3317 = vld [vmem:[%s8 + $0x148] sm:$0xff]
      %v3318 = vld [vmem:[%s8 + $0x150] sm:$0xff]
      %v3319 = vld [vmem:[%s8 + $0x158] sm:$0xff]
      %v3320 = vld [vmem:[%s8 + $0x160] sm:$0xff]
      %v3321 = vld [vmem:[%s8 + $0x168] sm:$0xff]
      %v3322 = vld [vmem:[%s8 + $0x170] sm:$0xff]
      %v3323 = vld [vmem:[%s8 + $0x178] sm:$0xff]
      %v3324 = vld [vmem:[%s8 + $0x180] sm:$0xff]
      %v3325 = vld [vmem:[%s8 + $0x188] sm:$0xff]
      %v3326 = vld [vmem:[%s8 + $0x190] sm:$0xff]
      %v3327 = vld [vmem:[%s8 + $0x198] sm:$0xff]
      %v3328 = vld [vmem:[%s8 + $0x1a0] sm:$0xff]
      %v3329 = vld [vmem:[%s8 + $0x1a8] sm:$0xff]
      %v3330 = vld [vmem:[%s8 + $0x1b0] sm:$0xff]
      %v3331 = vld [vmem:[%s8 + $0x1b8] sm:$0xff]
      %v3332 = vld [vmem:[%s8 + $0x1c0] sm:$0xff]
      %v3333 = vld [vmem:[%s8 + $0x1c8] sm:$0xff]
      %v3334 = vld [vmem:[%s8 + $0x1d0] sm:$0xff]
      %v3335 = vld [vmem:[%s8 + $0x1d8] sm:$0xff]
      %v3336 = vld [vmem:[%s8 + $0x1e0] sm:$0xff]
      %v3337 = vld [vmem:[%s8 + $0x1e8] sm:$0xff]
      %v3338 = vld [vmem:[%s8 + $0x1f0] sm:$0xff]
      %v3339 = vld [vmem:[%s8 + $0x1f8] sm:$0xff]
      %v3340 = vld [vmem:[%s8 + $0x200] sm:$0xff]
      %v3341 = vld [vmem:[%s8 + $0x208] sm:$0xff]
      %v3342 = vld [vmem:[%s8 + $0x210] sm:$0xff]
      %v3343 = vld [vmem:[%s8 + $0x218] sm:$0xff]
      %v3344 = vld [vmem:[%s8 + $0x220] sm:$0xff]
      %v3345 = vld [vmem:[%s8 + $0x228] sm:$0xff]
      %v3346 = vld [vmem:[%s8 + $0x230] sm:$0xff]
      %v3347 = vld [vmem:[%s8 + $0x238] sm:$0xff]
      %v3348 = vld [vmem:[%s8 + $0x240] sm:$0xff]
      %v3349 = vld [vmem:[%s8 + $0x248] sm:$0xff]
      %v3350 = vld [vmem:[%s8 + $0x250] sm:$0xff]
      %v3351 = vld [vmem:[%s8 + $0x258] sm:$0xff]
      %v3352 = vld [vmem:[%s8 + $0x260] sm:$0xff]
      %v3353 = vld [vmem:[%s8 + $0x268] sm:$0xff]
      %v3354 = vld [vmem:[%s8 + $0x270] sm:$0xff]
      %v3355 = vld [vmem:[%s8 + $0x278] sm:$0xff]
      %v3356 = vld [vmem:[%s8 + $0x280] sm:$0xff]
      %v3357 = vld [vmem:[%s8 + $0x288] sm:$0xff]
      %v3358 = vld [vmem:[%s8 + $0x290] sm:$0xff]
      %v3359 = vld [vmem:[%s8 + $0x298] sm:$0xff]
      %v3360 = vld [vmem:[%s8 + $0x2a0] sm:$0xff]
      %v3361 = vld [vmem:[%s8 + $0x2a8] sm:$0xff]
      %v3362 = vld [vmem:[%s8 + $0x2b0] sm:$0xff]
      %v3363 = vld [vmem:[%s8 + $0x2b8] sm:$0xff]
      %v3364 = vld [vmem:[%s8 + $0x2c0] sm:$0xff]
      %v3365 = vld [vmem:[%s8 + $0x2c8] sm:$0xff]
      %v3366 = vld [vmem:[%s8 + $0x2d0] sm:$0xff]
      %v3367 = vld [vmem:[%s8 + $0x2d8] sm:$0xff]
      %v3368 = vld [vmem:[%s8 + $0x2e0] sm:$0xff]
      %v3369 = vld [vmem:[%s8 + $0x2e8] sm:$0xff]
      %v3370 = vld [vmem:[%s8 + $0x2f0] sm:$0xff]
      %v3371 = vld [vmem:[%s8 + $0x2f8] sm:$0xff]
      %v3372 = vld [vmem:[%s8 + $0x300] sm:$0xff]
      %v3373 = vld [vmem:[%s8 + $0x308] sm:$0xff]
      %v3374 = vld [vmem:[%s8 + $0x310] sm:$0xff]
      %v3375 = vld [vmem:[%s8 + $0x318] sm:$0xff]
      %v3376 = vld [vmem:[%s8 + $0x320] sm:$0xff]
      %v3377 = vld [vmem:[%s8 + $0x328] sm:$0xff]
      %v3378 = vld [vmem:[%s8 + $0x330] sm:$0xff]
      %v3379 = vld [vmem:[%s8 + $0x338] sm:$0xff]
      %v3380 = vld [vmem:[%s8 + $0x340] sm:$0xff]
      %v3381 = vld [vmem:[%s8 + $0x348] sm:$0xff]
      %v3382 = vld [vmem:[%s8 + $0x350] sm:$0xff]
      %v3383 = vld [vmem:[%s8 + $0x358] sm:$0xff]
      %v3384 = vld [vmem:[%s8 + $0x360] sm:$0xff]
      %v3385 = vld [vmem:[%s8 + $0x368] sm:$0xff]
      %v3386 = vld [vmem:[%s8 + $0x370] sm:$0xff]
      %v3387 = vld [vmem:[%s8 + $0x378] sm:$0xff]
      %v3388 = vld [vmem:[%s8 + $0x380] sm:$0xff]
      %v3389 = vld [vmem:[%s8 + $0x388] sm:$0xff]
      %v3390 = vld [vmem:[%s8 + $0x390] sm:$0xff]
      %v3391 = vld [vmem:[%s8 + $0x398] sm:$0xff]
      %v3392 = vld [vmem:[%s8 + $0x3a0] sm:$0xff]
      %v3393 = vld [vmem:[%s8 + $0x3a8] sm:$0xff]
      %v3394 = vld [vmem:[%s8 + $0x3b0] sm:$0xff]
      %v3395 = vld [vmem:[%s8 + $0x3b8] sm:$0xff]
      %v3396 = vld [vmem:[%s8 + $0x3c0] sm:$0xff]
      %v3397 = vld [vmem:[%s8 + $0x3c8] sm:$0xff]
      %v3398 = vld [vmem:[%s8 + $0x3d0] sm:$0xff]
      %v3399 = vld [vmem:[%s8 + $0x3d8] sm:$0xff]
      %v3400 = vld [vmem:[%s8 + $0x3e0] sm:$0xff]
      %v3401 = vld [vmem:[%s8 + $0x3e8] sm:$0xff]
      %v3402 = vld [vmem:[%s8 + $0x3f0] sm:$0xff]
      %v3403 = vld [vmem:[%s8 + $0x3f8] sm:$0xff]
      %v3404 = vld [vmem:[%s8 + $0x400] sm:$0xff]
      %v3405 = vld [vmem:[%s8 + $0x408] sm:$0xff]
      %v3406 = vld [vmem:[%s8 + $0x410] sm:$0xff]
      %v3407 = vld [vmem:[%s8 + $0x418] sm:$0xff]
      %v3408 = vld [vmem:[%s8 + $0x420] sm:$0xff]
      %v3409 = vld [vmem:[%s8 + $0x428] sm:$0xff]
      %v3410 = vld [vmem:[%s8 + $0x430] sm:$0xff]
      %v3411 = vld [vmem:[%s8 + $0x438] sm:$0xff]
      %v3412 = vld [vmem:[%s8 + $0x440] sm:$0xff]
      %v3413 = vld [vmem:[%s8 + $0x448] sm:$0xff]
      %v3414 = vld [vmem:[%s8 + $0x450] sm:$0xff]
      %v3415 = vld [vmem:[%s8 + $0x458] sm:$0xff]
      %v3416 = vld [vmem:[%s8 + $0x460] sm:$0xff]
      %v3417 = vld [vmem:[%s8 + $0x468] sm:$0xff]
      %v3418 = vld [vmem:[%s8 + $0x470] sm:$0xff]
      %v3419 = vld [vmem:[%s8 + $0x478] sm:$0xff]
      %v3564 = vunpack.c.l.b16 %v3276
      %v3565 = vunpack.c.h.b16 %v3276
      %v3566 = vunpack.c.l.b16 %v3277
      %v3567 = vunpack.c.h.b16 %v3277
      %v3568 = vunpack.c.l.b16 %v3278
      %v3569 = vunpack.c.h.b16 %v3278
      %v3570 = vunpack.c.l.b16 %v3279
      %v3571 = vunpack.c.h.b16 %v3279
      %v3572 = vunpack.c.l.b16 %v3280
      %v3573 = vunpack.c.h.b16 %v3280
      %v3574 = vunpack.c.l.b16 %v3281
      %v3575 = vunpack.c.h.b16 %v3281
      %v3576 = vunpack.c.l.b16 %v3282
      %v3577 = vunpack.c.h.b16 %v3282
      %v3578 = vunpack.c.l.b16 %v3283
      %v3579 = vunpack.c.h.b16 %v3283
      %v3580 = vunpack.c.l.b16 %v3284
      %v3581 = vunpack.c.h.b16 %v3284
      %v3582 = vunpack.c.l.b16 %v3285
      %v3583 = vunpack.c.h.b16 %v3285
      %v3584 = vunpack.c.l.b16 %v3286
      %v3585 = vunpack.c.h.b16 %v3286
      %v3586 = vunpack.c.l.b16 %v3287
      %v3587 = vunpack.c.h.b16 %v3287
      %v3588 = vunpack.c.l.b16 %v3288
      %v3589 = vunpack.c.h.b16 %v3288
      %v3590 = vunpack.c.l.b16 %v3289
      %v3591 = vunpack.c.h.b16 %v3289
      %v3592 = vunpack.c.l.b16 %v3290
      %v3593 = vunpack.c.h.b16 %v3290
      %v3594 = vunpack.c.l.b16 %v3291
      %v3595 = vunpack.c.h.b16 %v3291
      %v3596 = vunpack.c.l.b16 %v3292
      %v3597 = vunpack.c.h.b16 %v3292
      %v3598 = vunpack.c.l.b16 %v3293
      %v3599 = vunpack.c.h.b16 %v3293
      %v3600 = vunpack.c.l.b16 %v3294
      %v3601 = vunpack.c.h.b16 %v3294
      %v3602 = vunpack.c.l.b16 %v3295
      %v3603 = vunpack.c.h.b16 %v3295
      %v3604 = vunpack.c.l.b16 %v3296
      %v3605 = vunpack.c.h.b16 %v3296
      %v3606 = vunpack.c.l.b16 %v3297
      %v3607 = vunpack.c.h.b16 %v3297
      %v3608 = vunpack.c.l.b16 %v3298
      %v3609 = vunpack.c.h.b16 %v3298
      %v3610 = vunpack.c.l.b16 %v3299
      %v3611 = vunpack.c.h.b16 %v3299
      %v3612 = vunpack.c.l.b16 %v3300
      %v3613 = vunpack.c.h.b16 %v3300
      %v3614 = vunpack.c.l.b16 %v3301
      %v3615 = vunpack.c.h.b16 %v3301
      %v3616 = vunpack.c.l.b16 %v3302
      %v3617 = vunpack.c.h.b16 %v3302
      %v3618 = vunpack.c.l.b16 %v3303
      %v3619 = vunpack.c.h.b16 %v3303
      %v3620 = vunpack.c.l.b16 %v3304
      %v3621 = vunpack.c.h.b16 %v3304
      %v3622 = vunpack.c.l.b16 %v3305
      %v3623 = vunpack.c.h.b16 %v3305
      %v3624 = vunpack.c.l.b16 %v3306
      %v3625 = vunpack.c.h.b16 %v3306
      %v3626 = vunpack.c.l.b16 %v3307
      %v3627 = vunpack.c.h.b16 %v3307
      %v3628 = vunpack.c.l.b16 %v3308
      %v3629 = vunpack.c.h.b16 %v3308
      %v3630 = vunpack.c.l.b16 %v3309
      %v3631 = vunpack.c.h.b16 %v3309
      %v3632 = vunpack.c.l.b16 %v3310
      %v3633 = vunpack.c.h.b16 %v3310
      %v3634 = vunpack.c.l.b16 %v3311
      %v3635 = vunpack.c.h.b16 %v3311
      %v3636 = vunpack.c.l.b16 %v3312
      %v3637 = vunpack.c.h.b16 %v3312
      %v3638 = vunpack.c.l.b16 %v3313
      %v3639 = vunpack.c.h.b16 %v3313
      %v3640 = vunpack.c.l.b16 %v3314
      %v3641 = vunpack.c.h.b16 %v3314
      %v3642 = vunpack.c.l.b16 %v3315
      %v3643 = vunpack.c.h.b16 %v3315
      %v3644 = vunpack.c.l.b16 %v3316
      %v3645 = vunpack.c.h.b16 %v3316
      %v3646 = vunpack.c.l.b16 %v3317
      %v3647 = vunpack.c.h.b16 %v3317
      %v3648 = vunpack.c.l.b16 %v3318
      %v3649 = vunpack.c.h.b16 %v3318
      %v3650 = vunpack.c.l.b16 %v3319
      %v3651 = vunpack.c.h.b16 %v3319
      %v3652 = vunpack.c.l.b16 %v3320
      %v3653 = vunpack.c.h.b16 %v3320
      %v3654 = vunpack.c.l.b16 %v3321
      %v3655 = vunpack.c.h.b16 %v3321
      %v3656 = vunpack.c.l.b16 %v3322
      %v3657 = vunpack.c.h.b16 %v3322
      %v3658 = vunpack.c.l.b16 %v3323
      %v3659 = vunpack.c.h.b16 %v3323
      %v3660 = vunpack.c.l.b16 %v3324
      %v3661 = vunpack.c.h.b16 %v3324
      %v3662 = vunpack.c.l.b16 %v3325
      %v3663 = vunpack.c.h.b16 %v3325
      %v3664 = vunpack.c.l.b16 %v3326
      %v3665 = vunpack.c.h.b16 %v3326
      %v3666 = vunpack.c.l.b16 %v3327
      %v3667 = vunpack.c.h.b16 %v3327
      %v3668 = vunpack.c.l.b16 %v3328
      %v3669 = vunpack.c.h.b16 %v3328
      %v3670 = vunpack.c.l.b16 %v3329
      %v3671 = vunpack.c.h.b16 %v3329
      %v3672 = vunpack.c.l.b16 %v3330
      %v3673 = vunpack.c.h.b16 %v3330
      %v3674 = vunpack.c.l.b16 %v3331
      %v3675 = vunpack.c.h.b16 %v3331
      %v3676 = vunpack.c.l.b16 %v3332
      %v3677 = vunpack.c.h.b16 %v3332
      %v3678 = vunpack.c.l.b16 %v3333
      %v3679 = vunpack.c.h.b16 %v3333
      %v3680 = vunpack.c.l.b16 %v3334
      %v3681 = vunpack.c.h.b16 %v3334
      %v3682 = vunpack.c.l.b16 %v3335
      %v3683 = vunpack.c.h.b16 %v3335
      %v3684 = vunpack.c.l.b16 %v3336
      %v3685 = vunpack.c.h.b16 %v3336
      %v3686 = vunpack.c.l.b16 %v3337
      %v3687 = vunpack.c.h.b16 %v3337
      %v3688 = vunpack.c.l.b16 %v3338
      %v3689 = vunpack.c.h.b16 %v3338
      %v3690 = vunpack.c.l.b16 %v3339
      %v3691 = vunpack.c.h.b16 %v3339
      %v3692 = vunpack.c.l.b16 %v3340
      %v3693 = vunpack.c.h.b16 %v3340
      %v3694 = vunpack.c.l.b16 %v3341
      %v3695 = vunpack.c.h.b16 %v3341
      %v3696 = vunpack.c.l.b16 %v3342
      %v3697 = vunpack.c.h.b16 %v3342
      %v3698 = vunpack.c.l.b16 %v3343
      %v3699 = vunpack.c.h.b16 %v3343
      %v3700 = vunpack.c.l.b16 %v3344
      %v3701 = vunpack.c.h.b16 %v3344
      %v3702 = vunpack.c.l.b16 %v3345
      %v3703 = vunpack.c.h.b16 %v3345
      %v3704 = vunpack.c.l.b16 %v3346
      %v3705 = vunpack.c.h.b16 %v3346
      %v3706 = vunpack.c.l.b16 %v3347
      %v3707 = vunpack.c.h.b16 %v3347
      %v3708 = vunpack.c.l.b16 %v3348
      %v3709 = vunpack.c.h.b16 %v3348
      %v3710 = vunpack.c.l.b16 %v3349
      %v3711 = vunpack.c.h.b16 %v3349
      %v3712 = vunpack.c.l.b16 %v3350
      %v3713 = vunpack.c.h.b16 %v3350
      %v3714 = vunpack.c.l.b16 %v3351
      %v3715 = vunpack.c.h.b16 %v3351
      %v3716 = vunpack.c.l.b16 %v3352
      %v3717 = vunpack.c.h.b16 %v3352
      %v3718 = vunpack.c.l.b16 %v3353
      %v3719 = vunpack.c.h.b16 %v3353
      %v3720 = vunpack.c.l.b16 %v3354
      %v3721 = vunpack.c.h.b16 %v3354
      %v3722 = vunpack.c.l.b16 %v3355
      %v3723 = vunpack.c.h.b16 %v3355
      %v3724 = vunpack.c.l.b16 %v3356
      %v3725 = vunpack.c.h.b16 %v3356
      %v3726 = vunpack.c.l.b16 %v3357
      %v3727 = vunpack.c.h.b16 %v3357
      %v3728 = vunpack.c.l.b16 %v3358
      %v3729 = vunpack.c.h.b16 %v3358
      %v3730 = vunpack.c.l.b16 %v3359
      %v3731 = vunpack.c.h.b16 %v3359
      %v3732 = vunpack.c.l.b16 %v3360
      %v3733 = vunpack.c.h.b16 %v3360
      %v3734 = vunpack.c.l.b16 %v3361
      %v3735 = vunpack.c.h.b16 %v3361
      %v3736 = vunpack.c.l.b16 %v3362
      %v3737 = vunpack.c.h.b16 %v3362
      %v3738 = vunpack.c.l.b16 %v3363
      %v3739 = vunpack.c.h.b16 %v3363
      %v3740 = vunpack.c.l.b16 %v3364
      %v3741 = vunpack.c.h.b16 %v3364
      %v3742 = vunpack.c.l.b16 %v3365
      %v3743 = vunpack.c.h.b16 %v3365
      %v3744 = vunpack.c.l.b16 %v3366
      %v3745 = vunpack.c.h.b16 %v3366
      %v3746 = vunpack.c.l.b16 %v3367
      %v3747 = vunpack.c.h.b16 %v3367
      %v3748 = vunpack.c.l.b16 %v3368
      %v3749 = vunpack.c.h.b16 %v3368
      %v3750 = vunpack.c.l.b16 %v3369
      %v3751 = vunpack.c.h.b16 %v3369
      %v3752 = vunpack.c.l.b16 %v3370
      %v3753 = vunpack.c.h.b16 %v3370
      %v3754 = vunpack.c.l.b16 %v3371
      %v3755 = vunpack.c.h.b16 %v3371
      %v3756 = vunpack.c.l.b16 %v3372
      %v3757 = vunpack.c.h.b16 %v3372
      %v3758 = vunpack.c.l.b16 %v3373
      %v3759 = vunpack.c.h.b16 %v3373
      %v3760 = vunpack.c.l.b16 %v3374
      %v3761 = vunpack.c.h.b16 %v3374
      %v3762 = vunpack.c.l.b16 %v3375
      %v3763 = vunpack.c.h.b16 %v3375
      %v3764 = vunpack.c.l.b16 %v3376
      %v3765 = vunpack.c.h.b16 %v3376
      %v3766 = vunpack.c.l.b16 %v3377
      %v3767 = vunpack.c.h.b16 %v3377
      %v3768 = vunpack.c.l.b16 %v3378
      %v3769 = vunpack.c.h.b16 %v3378
      %v3770 = vunpack.c.l.b16 %v3379
      %v3771 = vunpack.c.h.b16 %v3379
      %v3772 = vunpack.c.l.b16 %v3380
      %v3773 = vunpack.c.h.b16 %v3380
      %v3774 = vunpack.c.l.b16 %v3381
      %v3775 = vunpack.c.h.b16 %v3381
      %v3776 = vunpack.c.l.b16 %v3382
      %v3777 = vunpack.c.h.b16 %v3382
      %v3778 = vunpack.c.l.b16 %v3383
      %v3779 = vunpack.c.h.b16 %v3383
      %v3780 = vunpack.c.l.b16 %v3384
      %v3781 = vunpack.c.h.b16 %v3384
      %v3782 = vunpack.c.l.b16 %v3385
      %v3783 = vunpack.c.h.b16 %v3385
      %v3784 = vunpack.c.l.b16 %v3386
      %v3785 = vunpack.c.h.b16 %v3386
      %v3786 = vunpack.c.l.b16 %v3387
      %v3787 = vunpack.c.h.b16 %v3387
      %v3788 = vunpack.c.l.b16 %v3388
      %v3789 = vunpack.c.h.b16 %v3388
      %v3790 = vunpack.c.l.b16 %v3389
      %v3791 = vunpack.c.h.b16 %v3389
      %v3792 = vunpack.c.l.b16 %v3390
      %v3793 = vunpack.c.h.b16 %v3390
      %v3794 = vunpack.c.l.b16 %v3391
      %v3795 = vunpack.c.h.b16 %v3391
      %v3796 = vunpack.c.l.b16 %v3392
      %v3797 = vunpack.c.h.b16 %v3392
      %v3798 = vunpack.c.l.b16 %v3393
      %v3799 = vunpack.c.h.b16 %v3393
      %v3800 = vunpack.c.l.b16 %v3394
      %v3801 = vunpack.c.h.b16 %v3394
      %v3802 = vunpack.c.l.b16 %v3395
      %v3803 = vunpack.c.h.b16 %v3395
      %v3804 = vunpack.c.l.b16 %v3396
      %v3805 = vunpack.c.h.b16 %v3396
      %v3806 = vunpack.c.l.b16 %v3397
      %v3807 = vunpack.c.h.b16 %v3397
      %v3808 = vunpack.c.l.b16 %v3398
      %v3809 = vunpack.c.h.b16 %v3398
      %v3810 = vunpack.c.l.b16 %v3399
      %v3811 = vunpack.c.h.b16 %v3399
      %v3812 = vunpack.c.l.b16 %v3400
      %v3813 = vunpack.c.h.b16 %v3400
      %v3814 = vunpack.c.l.b16 %v3401
      %v3815 = vunpack.c.h.b16 %v3401
      %v3816 = vunpack.c.l.b16 %v3402
      %v3817 = vunpack.c.h.b16 %v3402
      %v3818 = vunpack.c.l.b16 %v3403
      %v3819 = vunpack.c.h.b16 %v3403
      %v3820 = vunpack.c.l.b16 %v3404
      %v3821 = vunpack.c.h.b16 %v3404
      %v3822 = vunpack.c.l.b16 %v3405
      %v3823 = vunpack.c.h.b16 %v3405
      %v3824 = vunpack.c.l.b16 %v3406
      %v3825 = vunpack.c.h.b16 %v3406
      %v3826 = vunpack.c.l.b16 %v3407
      %v3827 = vunpack.c.h.b16 %v3407
      %v3828 = vunpack.c.l.b16 %v3408
      %v3829 = vunpack.c.h.b16 %v3408
      %v3830 = vunpack.c.l.b16 %v3409
      %v3831 = vunpack.c.h.b16 %v3409
      %v3832 = vunpack.c.l.b16 %v3410
      %v3833 = vunpack.c.h.b16 %v3410
      %v3834 = vunpack.c.l.b16 %v3411
      %v3835 = vunpack.c.h.b16 %v3411
      %v3836 = vunpack.c.l.b16 %v3412
      %v3837 = vunpack.c.h.b16 %v3412
      %v3838 = vunpack.c.l.b16 %v3413
      %v3839 = vunpack.c.h.b16 %v3413
      %v3840 = vunpack.c.l.b16 %v3414
      %v3841 = vunpack.c.h.b16 %v3414
      %v3842 = vunpack.c.l.b16 %v3415
      %v3843 = vunpack.c.h.b16 %v3415
      %v3844 = vunpack.c.l.b16 %v3416
      %v3845 = vunpack.c.h.b16 %v3416
      %v3846 = vunpack.c.l.b16 %v3417
      %v3847 = vunpack.c.h.b16 %v3417
      %v3848 = vunpack.c.l.b16 %v3418
      %v3849 = vunpack.c.h.b16 %v3418
      %v3850 = vunpack.c.l.b16 %v3419
      %v3851 = vunpack.c.h.b16 %v3419
      %v3852 = vpack.c.b16 %v3568, %v3564
      %v3853 = vpack.c.b16 %v3569, %v3565
      %v3854 = vpack.c.b16 %v3570, %v3566
      %v3855 = vpack.c.b16 %v3571, %v3567
      %v3856 = vpack.c.b16 %v3576, %v3572
      %v3857 = vpack.c.b16 %v3577, %v3573
      %v3858 = vpack.c.b16 %v3578, %v3574
      %v3859 = vpack.c.b16 %v3579, %v3575
      %v3860 = vpack.c.b16 %v3584, %v3580
      %v3861 = vpack.c.b16 %v3585, %v3581
      %v3862 = vpack.c.b16 %v3586, %v3582
      %v3863 = vpack.c.b16 %v3587, %v3583
      %v3864 = vpack.c.b16 %v3592, %v3588
      %v3865 = vpack.c.b16 %v3593, %v3589
      %v3866 = vpack.c.b16 %v3594, %v3590
      %v3867 = vpack.c.b16 %v3595, %v3591
      %v3868 = vpack.c.b16 %v3600, %v3596
      %v3869 = vpack.c.b16 %v3601, %v3597
      %v3870 = vpack.c.b16 %v3602, %v3598
      %v3871 = vpack.c.b16 %v3603, %v3599
      %v3872 = vpack.c.b16 %v3608, %v3604
      %v3873 = vpack.c.b16 %v3609, %v3605
      %v3874 = vpack.c.b16 %v3610, %v3606
      %v3875 = vpack.c.b16 %v3611, %v3607
      %v3876 = vpack.c.b16 %v3616, %v3612
      %v3877 = vpack.c.b16 %v3617, %v3613
      %v3878 = vpack.c.b16 %v3618, %v3614
      %v3879 = vpack.c.b16 %v3619, %v3615
      %v3880 = vpack.c.b16 %v3624, %v3620
      %v3881 = vpack.c.b16 %v3625, %v3621
      %v3882 = vpack.c.b16 %v3626, %v3622
      %v3883 = vpack.c.b16 %v3627, %v3623
      %v3884 = vpack.c.b16 %v3632, %v3628
      %v3885 = vpack.c.b16 %v3633, %v3629
      %v3886 = vpack.c.b16 %v3634, %v3630
      %v3887 = vpack.c.b16 %v3635, %v3631
      %v3888 = vpack.c.b16 %v3640, %v3636
      %v3889 = vpack.c.b16 %v3641, %v3637
      %v3890 = vpack.c.b16 %v3642, %v3638
      %v3891 = vpack.c.b16 %v3643, %v3639
      %v3892 = vpack.c.b16 %v3648, %v3644
      %v3893 = vpack.c.b16 %v3649, %v3645
      %v3894 = vpack.c.b16 %v3650, %v3646
      %v3895 = vpack.c.b16 %v3651, %v3647
      %v3896 = vpack.c.b16 %v3656, %v3652
      %v3897 = vpack.c.b16 %v3657, %v3653
      %v3898 = vpack.c.b16 %v3658, %v3654
      %v3899 = vpack.c.b16 %v3659, %v3655
      %v3900 = vpack.c.b16 %v3664, %v3660
      %v3901 = vpack.c.b16 %v3665, %v3661
      %v3902 = vpack.c.b16 %v3666, %v3662
      %v3903 = vpack.c.b16 %v3667, %v3663
      %v3904 = vpack.c.b16 %v3672, %v3668
      %v3905 = vpack.c.b16 %v3673, %v3669
      %v3906 = vpack.c.b16 %v3674, %v3670
      %v3907 = vpack.c.b16 %v3675, %v3671
      %v3908 = vpack.c.b16 %v3680, %v3676
      %v3909 = vpack.c.b16 %v3681, %v3677
      %v3910 = vpack.c.b16 %v3682, %v3678
      %v3911 = vpack.c.b16 %v3683, %v3679
      %v3912 = vpack.c.b16 %v3688, %v3684
      %v3913 = vpack.c.b16 %v3689, %v3685
      %v3914 = vpack.c.b16 %v3690, %v3686
      %v3915 = vpack.c.b16 %v3691, %v3687
      %v3916 = vpack.c.b16 %v3696, %v3692
      %v3917 = vpack.c.b16 %v3697, %v3693
      %v3918 = vpack.c.b16 %v3698, %v3694
      %v3919 = vpack.c.b16 %v3699, %v3695
      %v3920 = vpack.c.b16 %v3704, %v3700
      %v3921 = vpack.c.b16 %v3705, %v3701
      %v3922 = vpack.c.b16 %v3706, %v3702
      %v3923 = vpack.c.b16 %v3707, %v3703
      %v3924 = vpack.c.b16 %v3712, %v3708
      %v3925 = vpack.c.b16 %v3713, %v3709
      %v3926 = vpack.c.b16 %v3714, %v3710
      %v3927 = vpack.c.b16 %v3715, %v3711
      %v3928 = vpack.c.b16 %v3720, %v3716
      %v3929 = vpack.c.b16 %v3721, %v3717
      %v3930 = vpack.c.b16 %v3722, %v3718
      %v3931 = vpack.c.b16 %v3723, %v3719
      %v3932 = vpack.c.b16 %v3728, %v3724
      %v3933 = vpack.c.b16 %v3729, %v3725
      %v3934 = vpack.c.b16 %v3730, %v3726
      %v3935 = vpack.c.b16 %v3731, %v3727
      %v3936 = vpack.c.b16 %v3736, %v3732
      %v3937 = vpack.c.b16 %v3737, %v3733
      %v3938 = vpack.c.b16 %v3738, %v3734
      %v3939 = vpack.c.b16 %v3739, %v3735
      %v3940 = vpack.c.b16 %v3744, %v3740
      %v3941 = vpack.c.b16 %v3745, %v3741
      %v3942 = vpack.c.b16 %v3746, %v3742
      %v3943 = vpack.c.b16 %v3747, %v3743
      %v3944 = vpack.c.b16 %v3752, %v3748
      %v3945 = vpack.c.b16 %v3753, %v3749
      %v3946 = vpack.c.b16 %v3754, %v3750
      %v3947 = vpack.c.b16 %v3755, %v3751
      %v3948 = vpack.c.b16 %v3760, %v3756
      %v3949 = vpack.c.b16 %v3761, %v3757
      %v3950 = vpack.c.b16 %v3762, %v3758
      %v3951 = vpack.c.b16 %v3763, %v3759
      %v3952 = vpack.c.b16 %v3768, %v3764
      %v3953 = vpack.c.b16 %v3769, %v3765
      %v3954 = vpack.c.b16 %v3770, %v3766
      %v3955 = vpack.c.b16 %v3771, %v3767
      %v3956 = vpack.c.b16 %v3776, %v3772
      %v3957 = vpack.c.b16 %v3777, %v3773
      %v3958 = vpack.c.b16 %v3778, %v3774
      %v3959 = vpack.c.b16 %v3779, %v3775
      %v3960 = vpack.c.b16 %v3784, %v3780
      %v3961 = vpack.c.b16 %v3785, %v3781
      %v3962 = vpack.c.b16 %v3786, %v3782
      %v3963 = vpack.c.b16 %v3787, %v3783
      %v3964 = vpack.c.b16 %v3792, %v3788
      %v3965 = vpack.c.b16 %v3793, %v3789
      %v3966 = vpack.c.b16 %v3794, %v3790
      %v3967 = vpack.c.b16 %v3795, %v3791
      %v3968 = vpack.c.b16 %v3800, %v3796
      %v3969 = vpack.c.b16 %v3801, %v3797
      %v3970 = vpack.c.b16 %v3802, %v3798
      %v3971 = vpack.c.b16 %v3803, %v3799
      %v3972 = vpack.c.b16 %v3808, %v3804
      %v3973 = vpack.c.b16 %v3809, %v3805
      %v3974 = vpack.c.b16 %v3810, %v3806
      %v3975 = vpack.c.b16 %v3811, %v3807
      %v3976 = vpack.c.b16 %v3816, %v3812
      %v3977 = vpack.c.b16 %v3817, %v3813
      %v3978 = vpack.c.b16 %v3818, %v3814
      %v3979 = vpack.c.b16 %v3819, %v3815
      %v3980 = vpack.c.b16 %v3824, %v3820
      %v3981 = vpack.c.b16 %v3825, %v3821
      %v3982 = vpack.c.b16 %v3826, %v3822
      %v3983 = vpack.c.b16 %v3827, %v3823
      %v3984 = vpack.c.b16 %v3832, %v3828
      %v3985 = vpack.c.b16 %v3833, %v3829
      %v3986 = vpack.c.b16 %v3834, %v3830
      %v3987 = vpack.c.b16 %v3835, %v3831
      %v3988 = vpack.c.b16 %v3840, %v3836
      %v3989 = vpack.c.b16 %v3841, %v3837
      %v3990 = vpack.c.b16 %v3842, %v3838
      %v3991 = vpack.c.b16 %v3843, %v3839
      %v3992 = vpack.c.b16 %v3848, %v3844
      %v3993 = vpack.c.b16 %v3849, %v3845
      %v3994 = vpack.c.b16 %v3850, %v3846
      %v3995 = vpack.c.b16 %v3851, %v3847
      %4140 = vmatpush.bf16.msra.mxu0 %v1631
      %4141 = vmatpush.bf16.msra.mxu0 %v1630
      %4142 = vmatpush.bf16.msra.mxu0 %v1629
      %4143 = vmatpush.bf16.msra.mxu0 %v1628
      %4144 = vmatpush.bf16.msra.mxu0 %v1627
      %4145 = vmatpush.bf16.msra.mxu0 %v1626
      %4146 = vmatpush.bf16.msra.mxu0 %v1625
      %4147 = vmatpush.bf16.msra.mxu0 %v1624
      %4148 = vmatmul.bf16.gmra.mxu0 %v3852
      %v4149 = vpop.f32.mrf.mxu0
      %v4150 = vadd.f32 0.0, %v4149
      %v4151 = vpop.f32.mrf.mxu0
      %v4152 = vadd.f32 0.0, %v4151
      %4153 = vmatmul.bf16.gmra.mxu0 %v3856
      %v4154 = vpop.f32.mrf.mxu0
      %v4155 = vadd.f32 0.0, %v4154
      %v4156 = vpop.f32.mrf.mxu0
      %v4157 = vadd.f32 0.0, %v4156
      %4158 = vmatmul.bf16.gmra.mxu0 %v3860
      %v4159 = vpop.f32.mrf.mxu0
      %v4160 = vadd.f32 0.0, %v4159
      %v4161 = vpop.f32.mrf.mxu0
      %v4162 = vadd.f32 0.0, %v4161
      %4163 = vmatmul.bf16.gmra.mxu0 %v3864
      %v4164 = vpop.f32.mrf.mxu0
      %v4165 = vadd.f32 0.0, %v4164
      %v4166 = vpop.f32.mrf.mxu0
      %v4167 = vadd.f32 0.0, %v4166
      %4168 = vmatmul.bf16.gmra.mxu0 %v3868
      %v4169 = vpop.f32.mrf.mxu0
      %v4170 = vadd.f32 0.0, %v4169
      %v4171 = vpop.f32.mrf.mxu0
      %v4172 = vadd.f32 0.0, %v4171
      %4173 = vmatmul.bf16.gmra.mxu0 %v3872
      %v4174 = vpop.f32.mrf.mxu0
      %v4175 = vadd.f32 0.0, %v4174
      %v4176 = vpop.f32.mrf.mxu0
      %v4177 = vadd.f32 0.0, %v4176
      %4178 = vmatmul.bf16.gmra.mxu0 %v3876
      %v4179 = vpop.f32.mrf.mxu0
      %v4180 = vadd.f32 0.0, %v4179
      %v4181 = vpop.f32.mrf.mxu0
      %v4182 = vadd.f32 0.0, %v4181
      %4183 = vmatmul.bf16.gmra.mxu0 %v3880
      %v4184 = vpop.f32.mrf.mxu0
      %v4185 = vadd.f32 0.0, %v4184
      %v4186 = vpop.f32.mrf.mxu0
      %v4187 = vadd.f32 0.0, %v4186
      %4188 = vmatmul.bf16.gmra.mxu0 %v3884
      %v4189 = vpop.f32.mrf.mxu0
      %v4190 = vadd.f32 0.0, %v4189
      %v4191 = vpop.f32.mrf.mxu0
      %v4192 = vadd.f32 0.0, %v4191
      %4193 = vmatmul.bf16.gmra.mxu0 %v3888
      %v4194 = vpop.f32.mrf.mxu0
      %v4195 = vadd.f32 0.0, %v4194
      %v4196 = vpop.f32.mrf.mxu0
      %v4197 = vadd.f32 0.0, %v4196
      %4198 = vmatmul.bf16.gmra.mxu0 %v3892
      %v4199 = vpop.f32.mrf.mxu0
      %v4200 = vadd.f32 0.0, %v4199
      %v4201 = vpop.f32.mrf.mxu0
      %v4202 = vadd.f32 0.0, %v4201
      %4203 = vmatmul.bf16.gmra.mxu0 %v3896
      %v4204 = vpop.f32.mrf.mxu0
      %v4205 = vadd.f32 0.0, %v4204
      %v4206 = vpop.f32.mrf.mxu0
      %v4207 = vadd.f32 0.0, %v4206
      %4208 = vmatmul.bf16.gmra.mxu0 %v3900
      %v4209 = vpop.f32.mrf.mxu0
      %v4210 = vadd.f32 0.0, %v4209
      %v4211 = vpop.f32.mrf.mxu0
      %v4212 = vadd.f32 0.0, %v4211
      %4213 = vmatmul.bf16.gmra.mxu0 %v3904
      %v4214 = vpop.f32.mrf.mxu0
      %v4215 = vadd.f32 0.0, %v4214
      %v4216 = vpop.f32.mrf.mxu0
      %v4217 = vadd.f32 0.0, %v4216
      %4218 = vmatmul.bf16.gmra.mxu0 %v3908
      %v4219 = vpop.f32.mrf.mxu0
      %v4220 = vadd.f32 0.0, %v4219
      %v4221 = vpop.f32.mrf.mxu0
      %v4222 = vadd.f32 0.0, %v4221
      %4223 = vmatmul.bf16.gmra.mxu0 %v3912
      %v4224 = vpop.f32.mrf.mxu0
      %v4225 = vadd.f32 0.0, %v4224
      %v4226 = vpop.f32.mrf.mxu0
      %v4227 = vadd.f32 0.0, %v4226
      %4228 = vmatmul.bf16.gmra.mxu0 %v3916
      %v4229 = vpop.f32.mrf.mxu0
      %v4230 = vadd.f32 0.0, %v4229
      %v4231 = vpop.f32.mrf.mxu0
      %v4232 = vadd.f32 0.0, %v4231
      %4233 = vmatmul.bf16.gmra.mxu0 %v3920
      %v4234 = vpop.f32.mrf.mxu0
      %v4235 = vadd.f32 0.0, %v4234
      %v4236 = vpop.f32.mrf.mxu0
      %v4237 = vadd.f32 0.0, %v4236
      %4238 = vmatmul.bf16.gmra.mxu0 %v3924
      %v4239 = vpop.f32.mrf.mxu0
      %v4240 = vadd.f32 0.0, %v4239
      %v4241 = vpop.f32.mrf.mxu0
      %v4242 = vadd.f32 0.0, %v4241
      %4243 = vmatmul.bf16.gmra.mxu0 %v3928
      %v4244 = vpop.f32.mrf.mxu0
      %v4245 = vadd.f32 0.0, %v4244
      %v4246 = vpop.f32.mrf.mxu0
      %v4247 = vadd.f32 0.0, %v4246
      %4248 = vmatmul.bf16.gmra.mxu0 %v3932
      %v4249 = vpop.f32.mrf.mxu0
      %v4250 = vadd.f32 0.0, %v4249
      %v4251 = vpop.f32.mrf.mxu0
      %v4252 = vadd.f32 0.0, %v4251
      %4253 = vmatmul.bf16.gmra.mxu0 %v3936
      %v4254 = vpop.f32.mrf.mxu0
      %v4255 = vadd.f32 0.0, %v4254
      %v4256 = vpop.f32.mrf.mxu0
      %v4257 = vadd.f32 0.0, %v4256
      %4258 = vmatmul.bf16.gmra.mxu0 %v3940
      %v4259 = vpop.f32.mrf.mxu0
      %v4260 = vadd.f32 0.0, %v4259
      %v4261 = vpop.f32.mrf.mxu0
      %v4262 = vadd.f32 0.0, %v4261
      %4263 = vmatmul.bf16.gmra.mxu0 %v3944
      %v4264 = vpop.f32.mrf.mxu0
      %v4265 = vadd.f32 0.0, %v4264
      %v4266 = vpop.f32.mrf.mxu0
      %v4267 = vadd.f32 0.0, %v4266
      %4268 = vmatmul.bf16.gmra.mxu0 %v3948
      %v4269 = vpop.f32.mrf.mxu0
      %v4270 = vadd.f32 0.0, %v4269
      %v4271 = vpop.f32.mrf.mxu0
      %v4272 = vadd.f32 0.0, %v4271
      %4273 = vmatmul.bf16.gmra.mxu0 %v3952
      %v4274 = vpop.f32.mrf.mxu0
      %v4275 = vadd.f32 0.0, %v4274
      %v4276 = vpop.f32.mrf.mxu0
      %v4277 = vadd.f32 0.0, %v4276
      %4278 = vmatmul.bf16.gmra.mxu0 %v3956
      %v4279 = vpop.f32.mrf.mxu0
      %v4280 = vadd.f32 0.0, %v4279
      %v4281 = vpop.f32.mrf.mxu0
      %v4282 = vadd.f32 0.0, %v4281
      %4283 = vmatmul.bf16.gmra.mxu0 %v3960
      %v4284 = vpop.f32.mrf.mxu0
      %v4285 = vadd.f32 0.0, %v4284
      %v4286 = vpop.f32.mrf.mxu0
      %v4287 = vadd.f32 0.0, %v4286
      %4288 = vmatmul.bf16.gmra.mxu0 %v3964
      %v4289 = vpop.f32.mrf.mxu0
      %v4290 = vadd.f32 0.0, %v4289
      %v4291 = vpop.f32.mrf.mxu0
      %v4292 = vadd.f32 0.0, %v4291
      %4293 = vmatmul.bf16.gmra.mxu0 %v3968
      %v4294 = vpop.f32.mrf.mxu0
      %v4295 = vadd.f32 0.0, %v4294
      %v4296 = vpop.f32.mrf.mxu0
      %v4297 = vadd.f32 0.0, %v4296
      %4298 = vmatmul.bf16.gmra.mxu0 %v3972
      %v4299 = vpop.f32.mrf.mxu0
      %v4300 = vadd.f32 0.0, %v4299
      %v4301 = vpop.f32.mrf.mxu0
      %v4302 = vadd.f32 0.0, %v4301
      %4303 = vmatmul.bf16.gmra.mxu0 %v3976
      %v4304 = vpop.f32.mrf.mxu0
      %v4305 = vadd.f32 0.0, %v4304
      %v4306 = vpop.f32.mrf.mxu0
      %v4307 = vadd.f32 0.0, %v4306
      %4308 = vmatmul.bf16.gmra.mxu0 %v3980
      %v4309 = vpop.f32.mrf.mxu0
      %v4310 = vadd.f32 0.0, %v4309
      %v4311 = vpop.f32.mrf.mxu0
      %v4312 = vadd.f32 0.0, %v4311
      %4313 = vmatmul.bf16.gmra.mxu0 %v3984
      %v4314 = vpop.f32.mrf.mxu0
      %v4315 = vadd.f32 0.0, %v4314
      %v4316 = vpop.f32.mrf.mxu0
      %v4317 = vadd.f32 0.0, %v4316
      %4318 = vmatmul.bf16.gmra.mxu0 %v3988
      %v4319 = vpop.f32.mrf.mxu0
      %v4320 = vadd.f32 0.0, %v4319
      %v4321 = vpop.f32.mrf.mxu0
      %v4322 = vadd.f32 0.0, %v4321
      %4323 = vmatmul.bf16.gmra.mxu0 %v3992
      %v4324 = vpop.f32.mrf.mxu0
      %v4325 = vadd.f32 0.0, %v4324
      %v4326 = vpop.f32.mrf.mxu0
      %v4327 = vadd.f32 0.0, %v4326
      %4328 = vdwg.mxu0
      %4329 = vmatpush.bf16.msra.mxu0 %v1639
      %4330 = vmatpush.bf16.msra.mxu0 %v1638
      %4331 = vmatpush.bf16.msra.mxu0 %v1637
      %4332 = vmatpush.bf16.msra.mxu0 %v1636
      %4333 = vmatpush.bf16.msra.mxu0 %v1635
      %4334 = vmatpush.bf16.msra.mxu0 %v1634
      %4335 = vmatpush.bf16.msra.mxu0 %v1633
      %4336 = vmatpush.bf16.msra.mxu0 %v1632
      %4337 = vmatmul.bf16.gmra.mxu0 %v3853
      %v4338 = vpop.f32.mrf.mxu0
      %v4339 = vadd.f32 %v4150, %v4338
      %v4340 = vpop.f32.mrf.mxu0
      %v4341 = vadd.f32 %v4152, %v4340
      %4342 = vmatmul.bf16.gmra.mxu0 %v3857
      %v4343 = vpop.f32.mrf.mxu0
      %v4344 = vadd.f32 %v4155, %v4343
      %v4345 = vpop.f32.mrf.mxu0
      %v4346 = vadd.f32 %v4157, %v4345
      %4347 = vmatmul.bf16.gmra.mxu0 %v3861
      %v4348 = vpop.f32.mrf.mxu0
      %v4349 = vadd.f32 %v4160, %v4348
      %v4350 = vpop.f32.mrf.mxu0
      %v4351 = vadd.f32 %v4162, %v4350
      %4352 = vmatmul.bf16.gmra.mxu0 %v3865
      %v4353 = vpop.f32.mrf.mxu0
      %v4354 = vadd.f32 %v4165, %v4353
      %v4355 = vpop.f32.mrf.mxu0
      %v4356 = vadd.f32 %v4167, %v4355
      %4357 = vmatmul.bf16.gmra.mxu0 %v3869
      %v4358 = vpop.f32.mrf.mxu0
      %v4359 = vadd.f32 %v4170, %v4358
      %v4360 = vpop.f32.mrf.mxu0
      %v4361 = vadd.f32 %v4172, %v4360
      %4362 = vmatmul.bf16.gmra.mxu0 %v3873
      %v4363 = vpop.f32.mrf.mxu0
      %v4364 = vadd.f32 %v4175, %v4363
      %v4365 = vpop.f32.mrf.mxu0
      %v4366 = vadd.f32 %v4177, %v4365
      %4367 = vmatmul.bf16.gmra.mxu0 %v3877
      %v4368 = vpop.f32.mrf.mxu0
      %v4369 = vadd.f32 %v4180, %v4368
      %v4370 = vpop.f32.mrf.mxu0
      %v4371 = vadd.f32 %v4182, %v4370
      %4372 = vmatmul.bf16.gmra.mxu0 %v3881
      %v4373 = vpop.f32.mrf.mxu0
      %v4374 = vadd.f32 %v4185, %v4373
      %v4375 = vpop.f32.mrf.mxu0
      %v4376 = vadd.f32 %v4187, %v4375
      %4377 = vmatmul.bf16.gmra.mxu0 %v3885
      %v4378 = vpop.f32.mrf.mxu0
      %v4379 = vadd.f32 %v4190, %v4378
      %v4380 = vpop.f32.mrf.mxu0
      %v4381 = vadd.f32 %v4192, %v4380
      %4382 = vmatmul.bf16.gmra.mxu0 %v3889
      %v4383 = vpop.f32.mrf.mxu0
      %v4384 = vadd.f32 %v4195, %v4383
      %v4385 = vpop.f32.mrf.mxu0
      %v4386 = vadd.f32 %v4197, %v4385
      %4387 = vmatmul.bf16.gmra.mxu0 %v3893
      %v4388 = vpop.f32.mrf.mxu0
      %v4389 = vadd.f32 %v4200, %v4388
      %v4390 = vpop.f32.mrf.mxu0
      %v4391 = vadd.f32 %v4202, %v4390
      %4392 = vmatmul.bf16.gmra.mxu0 %v3897
      %v4393 = vpop.f32.mrf.mxu0
      %v4394 = vadd.f32 %v4205, %v4393
      %v4395 = vpop.f32.mrf.mxu0
      %v4396 = vadd.f32 %v4207, %v4395
      %4397 = vmatmul.bf16.gmra.mxu0 %v3901
      %v4398 = vpop.f32.mrf.mxu0
      %v4399 = vadd.f32 %v4210, %v4398
      %v4400 = vpop.f32.mrf.mxu0
      %v4401 = vadd.f32 %v4212, %v4400
      %4402 = vmatmul.bf16.gmra.mxu0 %v3905
      %v4403 = vpop.f32.mrf.mxu0
      %v4404 = vadd.f32 %v4215, %v4403
      %v4405 = vpop.f32.mrf.mxu0
      %v4406 = vadd.f32 %v4217, %v4405
      %4407 = vmatmul.bf16.gmra.mxu0 %v3909
      %v4408 = vpop.f32.mrf.mxu0
      %v4409 = vadd.f32 %v4220, %v4408
      %v4410 = vpop.f32.mrf.mxu0
      %v4411 = vadd.f32 %v4222, %v4410
      %4412 = vmatmul.bf16.gmra.mxu0 %v3913
      %v4413 = vpop.f32.mrf.mxu0
      %v4414 = vadd.f32 %v4225, %v4413
      %v4415 = vpop.f32.mrf.mxu0
      %v4416 = vadd.f32 %v4227, %v4415
      %4417 = vmatmul.bf16.gmra.mxu0 %v3917
      %v4418 = vpop.f32.mrf.mxu0
      %v4419 = vadd.f32 %v4230, %v4418
      %v4420 = vpop.f32.mrf.mxu0
      %v4421 = vadd.f32 %v4232, %v4420
      %4422 = vmatmul.bf16.gmra.mxu0 %v3921
      %v4423 = vpop.f32.mrf.mxu0
      %v4424 = vadd.f32 %v4235, %v4423
      %v4425 = vpop.f32.mrf.mxu0
      %v4426 = vadd.f32 %v4237, %v4425
      %4427 = vmatmul.bf16.gmra.mxu0 %v3925
      %v4428 = vpop.f32.mrf.mxu0
      %v4429 = vadd.f32 %v4240, %v4428
      %v4430 = vpop.f32.mrf.mxu0
      %v4431 = vadd.f32 %v4242, %v4430
      %4432 = vmatmul.bf16.gmra.mxu0 %v3929
      %v4433 = vpop.f32.mrf.mxu0
      %v4434 = vadd.f32 %v4245, %v4433
      %v4435 = vpop.f32.mrf.mxu0
      %v4436 = vadd.f32 %v4247, %v4435
      %4437 = vmatmul.bf16.gmra.mxu0 %v3933
      %v4438 = vpop.f32.mrf.mxu0
      %v4439 = vadd.f32 %v4250, %v4438
      %v4440 = vpop.f32.mrf.mxu0
      %v4441 = vadd.f32 %v4252, %v4440
      %4442 = vmatmul.bf16.gmra.mxu0 %v3937
      %v4443 = vpop.f32.mrf.mxu0
      %v4444 = vadd.f32 %v4255, %v4443
      %v4445 = vpop.f32.mrf.mxu0
      %v4446 = vadd.f32 %v4257, %v4445
      %4447 = vmatmul.bf16.gmra.mxu0 %v3941
      %v4448 = vpop.f32.mrf.mxu0
      %v4449 = vadd.f32 %v4260, %v4448
      %v4450 = vpop.f32.mrf.mxu0
      %v4451 = vadd.f32 %v4262, %v4450
      %4452 = vmatmul.bf16.gmra.mxu0 %v3945
      %v4453 = vpop.f32.mrf.mxu0
      %v4454 = vadd.f32 %v4265, %v4453
      %v4455 = vpop.f32.mrf.mxu0
      %v4456 = vadd.f32 %v4267, %v4455
      %4457 = vmatmul.bf16.gmra.mxu0 %v3949
      %v4458 = vpop.f32.mrf.mxu0
      %v4459 = vadd.f32 %v4270, %v4458
      %v4460 = vpop.f32.mrf.mxu0
      %v4461 = vadd.f32 %v4272, %v4460
      %4462 = vmatmul.bf16.gmra.mxu0 %v3953
      %v4463 = vpop.f32.mrf.mxu0
      %v4464 = vadd.f32 %v4275, %v4463
      %v4465 = vpop.f32.mrf.mxu0
      %v4466 = vadd.f32 %v4277, %v4465
      %4467 = vmatmul.bf16.gmra.mxu0 %v3957
      %v4468 = vpop.f32.mrf.mxu0
      %v4469 = vadd.f32 %v4280, %v4468
      %v4470 = vpop.f32.mrf.mxu0
      %v4471 = vadd.f32 %v4282, %v4470
      %4472 = vmatmul.bf16.gmra.mxu0 %v3961
      %v4473 = vpop.f32.mrf.mxu0
      %v4474 = vadd.f32 %v4285, %v4473
      %v4475 = vpop.f32.mrf.mxu0
      %v4476 = vadd.f32 %v4287, %v4475
      %4477 = vmatmul.bf16.gmra.mxu0 %v3965
      %v4478 = vpop.f32.mrf.mxu0
      %v4479 = vadd.f32 %v4290, %v4478
      %v4480 = vpop.f32.mrf.mxu0
      %v4481 = vadd.f32 %v4292, %v4480
      %4482 = vmatmul.bf16.gmra.mxu0 %v3969
      %v4483 = vpop.f32.mrf.mxu0
      %v4484 = vadd.f32 %v4295, %v4483
      %v4485 = vpop.f32.mrf.mxu0
      %v4486 = vadd.f32 %v4297, %v4485
      %4487 = vmatmul.bf16.gmra.mxu0 %v3973
      %v4488 = vpop.f32.mrf.mxu0
      %v4489 = vadd.f32 %v4300, %v4488
      %v4490 = vpop.f32.mrf.mxu0
      %v4491 = vadd.f32 %v4302, %v4490
      %4492 = vmatmul.bf16.gmra.mxu0 %v3977
      %v4493 = vpop.f32.mrf.mxu0
      %v4494 = vadd.f32 %v4305, %v4493
      %v4495 = vpop.f32.mrf.mxu0
      %v4496 = vadd.f32 %v4307, %v4495
      %4497 = vmatmul.bf16.gmra.mxu0 %v3981
      %v4498 = vpop.f32.mrf.mxu0
      %v4499 = vadd.f32 %v4310, %v4498
      %v4500 = vpop.f32.mrf.mxu0
      %v4501 = vadd.f32 %v4312, %v4500
      %4502 = vmatmul.bf16.gmra.mxu0 %v3985
      %v4503 = vpop.f32.mrf.mxu0
      %v4504 = vadd.f32 %v4315, %v4503
      %v4505 = vpop.f32.mrf.mxu0
      %v4506 = vadd.f32 %v4317, %v4505
      %4507 = vmatmul.bf16.gmra.mxu0 %v3989
      %v4508 = vpop.f32.mrf.mxu0
      %v4509 = vadd.f32 %v4320, %v4508
      %v4510 = vpop.f32.mrf.mxu0
      %v4511 = vadd.f32 %v4322, %v4510
      %4512 = vmatmul.bf16.gmra.mxu0 %v3993
      %v4513 = vpop.f32.mrf.mxu0
      %v4514 = vadd.f32 %v4325, %v4513
      %v4515 = vpop.f32.mrf.mxu0
      %v4516 = vadd.f32 %v4327, %v4515
      %4517 = vdwg.mxu0
      %4518 = vmatpush.bf16.msra.mxu0 %v1647
      %4519 = vmatpush.bf16.msra.mxu0 %v1646
      %4520 = vmatpush.bf16.msra.mxu0 %v1645
      %4521 = vmatpush.bf16.msra.mxu0 %v1644
      %4522 = vmatpush.bf16.msra.mxu0 %v1643
      %4523 = vmatpush.bf16.msra.mxu0 %v1642
      %4524 = vmatpush.bf16.msra.mxu0 %v1641
      %4525 = vmatpush.bf16.msra.mxu0 %v1640
      %4526 = vmatmul.bf16.gmra.mxu0 %v3854
      %v4527 = vpop.f32.mrf.mxu0
      %v4528 = vadd.f32 %v4339, %v4527
      %v4529 = vpop.f32.mrf.mxu0
      %v4530 = vadd.f32 %v4341, %v4529
      %4531 = vmatmul.bf16.gmra.mxu0 %v3858
      %v4532 = vpop.f32.mrf.mxu0
      %v4533 = vadd.f32 %v4344, %v4532
      %v4534 = vpop.f32.mrf.mxu0
      %v4535 = vadd.f32 %v4346, %v4534
      %4536 = vmatmul.bf16.gmra.mxu0 %v3862
      %v4537 = vpop.f32.mrf.mxu0
      %v4538 = vadd.f32 %v4349, %v4537
      %v4539 = vpop.f32.mrf.mxu0
      %v4540 = vadd.f32 %v4351, %v4539
      %4541 = vmatmul.bf16.gmra.mxu0 %v3866
      %v4542 = vpop.f32.mrf.mxu0
      %v4543 = vadd.f32 %v4354, %v4542
      %v4544 = vpop.f32.mrf.mxu0
      %v4545 = vadd.f32 %v4356, %v4544
      %4546 = vmatmul.bf16.gmra.mxu0 %v3870
      %v4547 = vpop.f32.mrf.mxu0
      %v4548 = vadd.f32 %v4359, %v4547
      %v4549 = vpop.f32.mrf.mxu0
      %v4550 = vadd.f32 %v4361, %v4549
      %4551 = vmatmul.bf16.gmra.mxu0 %v3874
      %v4552 = vpop.f32.mrf.mxu0
      %v4553 = vadd.f32 %v4364, %v4552
      %v4554 = vpop.f32.mrf.mxu0
      %v4555 = vadd.f32 %v4366, %v4554
      %4556 = vmatmul.bf16.gmra.mxu0 %v3878
      %v4557 = vpop.f32.mrf.mxu0
      %v4558 = vadd.f32 %v4369, %v4557
      %v4559 = vpop.f32.mrf.mxu0
      %v4560 = vadd.f32 %v4371, %v4559
      %4561 = vmatmul.bf16.gmra.mxu0 %v3882
      %v4562 = vpop.f32.mrf.mxu0
      %v4563 = vadd.f32 %v4374, %v4562
      %v4564 = vpop.f32.mrf.mxu0
      %v4565 = vadd.f32 %v4376, %v4564
      %4566 = vmatmul.bf16.gmra.mxu0 %v3886
      %v4567 = vpop.f32.mrf.mxu0
      %v4568 = vadd.f32 %v4379, %v4567
      %v4569 = vpop.f32.mrf.mxu0
      %v4570 = vadd.f32 %v4381, %v4569
      %4571 = vmatmul.bf16.gmra.mxu0 %v3890
      %v4572 = vpop.f32.mrf.mxu0
      %v4573 = vadd.f32 %v4384, %v4572
      %v4574 = vpop.f32.mrf.mxu0
      %v4575 = vadd.f32 %v4386, %v4574
      %4576 = vmatmul.bf16.gmra.mxu0 %v3894
      %v4577 = vpop.f32.mrf.mxu0
      %v4578 = vadd.f32 %v4389, %v4577
      %v4579 = vpop.f32.mrf.mxu0
      %v4580 = vadd.f32 %v4391, %v4579
      %4581 = vmatmul.bf16.gmra.mxu0 %v3898
      %v4582 = vpop.f32.mrf.mxu0
      %v4583 = vadd.f32 %v4394, %v4582
      %v4584 = vpop.f32.mrf.mxu0
      %v4585 = vadd.f32 %v4396, %v4584
      %4586 = vmatmul.bf16.gmra.mxu0 %v3902
      %v4587 = vpop.f32.mrf.mxu0
      %v4588 = vadd.f32 %v4399, %v4587
      %v4589 = vpop.f32.mrf.mxu0
      %v4590 = vadd.f32 %v4401, %v4589
      %4591 = vmatmul.bf16.gmra.mxu0 %v3906
      %v4592 = vpop.f32.mrf.mxu0
      %v4593 = vadd.f32 %v4404, %v4592
      %v4594 = vpop.f32.mrf.mxu0
      %v4595 = vadd.f32 %v4406, %v4594
      %4596 = vmatmul.bf16.gmra.mxu0 %v3910
      %v4597 = vpop.f32.mrf.mxu0
      %v4598 = vadd.f32 %v4409, %v4597
      %v4599 = vpop.f32.mrf.mxu0
      %v4600 = vadd.f32 %v4411, %v4599
      %4601 = vmatmul.bf16.gmra.mxu0 %v3914
      %v4602 = vpop.f32.mrf.mxu0
      %v4603 = vadd.f32 %v4414, %v4602
      %v4604 = vpop.f32.mrf.mxu0
      %v4605 = vadd.f32 %v4416, %v4604
      %4606 = vmatmul.bf16.gmra.mxu0 %v3918
      %v4607 = vpop.f32.mrf.mxu0
      %v4608 = vadd.f32 %v4419, %v4607
      %v4609 = vpop.f32.mrf.mxu0
      %v4610 = vadd.f32 %v4421, %v4609
      %4611 = vmatmul.bf16.gmra.mxu0 %v3922
      %v4612 = vpop.f32.mrf.mxu0
      %v4613 = vadd.f32 %v4424, %v4612
      %v4614 = vpop.f32.mrf.mxu0
      %v4615 = vadd.f32 %v4426, %v4614
      %4616 = vmatmul.bf16.gmra.mxu0 %v3926
      %v4617 = vpop.f32.mrf.mxu0
      %v4618 = vadd.f32 %v4429, %v4617
      %v4619 = vpop.f32.mrf.mxu0
      %v4620 = vadd.f32 %v4431, %v4619
      %4621 = vmatmul.bf16.gmra.mxu0 %v3930
      %v4622 = vpop.f32.mrf.mxu0
      %v4623 = vadd.f32 %v4434, %v4622
      %v4624 = vpop.f32.mrf.mxu0
      %v4625 = vadd.f32 %v4436, %v4624
      %4626 = vmatmul.bf16.gmra.mxu0 %v3934
      %v4627 = vpop.f32.mrf.mxu0
      %v4628 = vadd.f32 %v4439, %v4627
      %v4629 = vpop.f32.mrf.mxu0
      %v4630 = vadd.f32 %v4441, %v4629
      %4631 = vmatmul.bf16.gmra.mxu0 %v3938
      %v4632 = vpop.f32.mrf.mxu0
      %v4633 = vadd.f32 %v4444, %v4632
      %v4634 = vpop.f32.mrf.mxu0
      %v4635 = vadd.f32 %v4446, %v4634
      %4636 = vmatmul.bf16.gmra.mxu0 %v3942
      %v4637 = vpop.f32.mrf.mxu0
      %v4638 = vadd.f32 %v4449, %v4637
      %v4639 = vpop.f32.mrf.mxu0
      %v4640 = vadd.f32 %v4451, %v4639
      %4641 = vmatmul.bf16.gmra.mxu0 %v3946
      %v4642 = vpop.f32.mrf.mxu0
      %v4643 = vadd.f32 %v4454, %v4642
      %v4644 = vpop.f32.mrf.mxu0
      %v4645 = vadd.f32 %v4456, %v4644
      %4646 = vmatmul.bf16.gmra.mxu0 %v3950
      %v4647 = vpop.f32.mrf.mxu0
      %v4648 = vadd.f32 %v4459, %v4647
      %v4649 = vpop.f32.mrf.mxu0
      %v4650 = vadd.f32 %v4461, %v4649
      %4651 = vmatmul.bf16.gmra.mxu0 %v3954
      %v4652 = vpop.f32.mrf.mxu0
      %v4653 = vadd.f32 %v4464, %v4652
      %v4654 = vpop.f32.mrf.mxu0
      %v4655 = vadd.f32 %v4466, %v4654
      %4656 = vmatmul.bf16.gmra.mxu0 %v3958
      %v4657 = vpop.f32.mrf.mxu0
      %v4658 = vadd.f32 %v4469, %v4657
      %v4659 = vpop.f32.mrf.mxu0
      %v4660 = vadd.f32 %v4471, %v4659
      %4661 = vmatmul.bf16.gmra.mxu0 %v3962
      %v4662 = vpop.f32.mrf.mxu0
      %v4663 = vadd.f32 %v4474, %v4662
      %v4664 = vpop.f32.mrf.mxu0
      %v4665 = vadd.f32 %v4476, %v4664
      %4666 = vmatmul.bf16.gmra.mxu0 %v3966
      %v4667 = vpop.f32.mrf.mxu0
      %v4668 = vadd.f32 %v4479, %v4667
      %v4669 = vpop.f32.mrf.mxu0
      %v4670 = vadd.f32 %v4481, %v4669
      %4671 = vmatmul.bf16.gmra.mxu0 %v3970
      %v4672 = vpop.f32.mrf.mxu0
      %v4673 = vadd.f32 %v4484, %v4672
      %v4674 = vpop.f32.mrf.mxu0
      %v4675 = vadd.f32 %v4486, %v4674
      %4676 = vmatmul.bf16.gmra.mxu0 %v3974
      %v4677 = vpop.f32.mrf.mxu0
      %v4678 = vadd.f32 %v4489, %v4677
      %v4679 = vpop.f32.mrf.mxu0
      %v4680 = vadd.f32 %v4491, %v4679
      %4681 = vmatmul.bf16.gmra.mxu0 %v3978
      %v4682 = vpop.f32.mrf.mxu0
      %v4683 = vadd.f32 %v4494, %v4682
      %v4684 = vpop.f32.mrf.mxu0
      %v4685 = vadd.f32 %v4496, %v4684
      %4686 = vmatmul.bf16.gmra.mxu0 %v3982
      %v4687 = vpop.f32.mrf.mxu0
      %v4688 = vadd.f32 %v4499, %v4687
      %v4689 = vpop.f32.mrf.mxu0
      %v4690 = vadd.f32 %v4501, %v4689
      %4691 = vmatmul.bf16.gmra.mxu0 %v3986
      %v4692 = vpop.f32.mrf.mxu0
      %v4693 = vadd.f32 %v4504, %v4692
      %v4694 = vpop.f32.mrf.mxu0
      %v4695 = vadd.f32 %v4506, %v4694
      %4696 = vmatmul.bf16.gmra.mxu0 %v3990
      %v4697 = vpop.f32.mrf.mxu0
      %v4698 = vadd.f32 %v4509, %v4697
      %v4699 = vpop.f32.mrf.mxu0
      %v4700 = vadd.f32 %v4511, %v4699
      %4701 = vmatmul.bf16.gmra.mxu0 %v3994
      %v4702 = vpop.f32.mrf.mxu0
      %v4703 = vadd.f32 %v4514, %v4702
      %v4704 = vpop.f32.mrf.mxu0
      %v4705 = vadd.f32 %v4516, %v4704
      %4706 = vdwg.mxu0
      %4707 = vmatpush.bf16.msra.mxu0 %v1655
      %4708 = vmatpush.bf16.msra.mxu0 %v1654
      %4709 = vmatpush.bf16.msra.mxu0 %v1653
      %4710 = vmatpush.bf16.msra.mxu0 %v1652
      %4711 = vmatpush.bf16.msra.mxu0 %v1651
      %4712 = vmatpush.bf16.msra.mxu0 %v1650
      %4713 = vmatpush.bf16.msra.mxu0 %v1649
      %4714 = vmatpush.bf16.msra.mxu0 %v1648
      %4715 = vmatmul.bf16.gmra.mxu0 %v3855
      %v4716 = vpop.f32.mrf.mxu0
      %v4717 = vadd.f32 %v4528, %v4716
      %v4718 = vpop.f32.mrf.mxu0
      %v4719 = vadd.f32 %v4530, %v4718
      %4720 = vmatmul.bf16.gmra.mxu0 %v3859
      %v4721 = vpop.f32.mrf.mxu0
      %v4722 = vadd.f32 %v4533, %v4721
      %v4723 = vpop.f32.mrf.mxu0
      %v4724 = vadd.f32 %v4535, %v4723
      %4725 = vmatmul.bf16.gmra.mxu0 %v3863
      %v4726 = vpop.f32.mrf.mxu0
      %v4727 = vadd.f32 %v4538, %v4726
      %v4728 = vpop.f32.mrf.mxu0
      %v4729 = vadd.f32 %v4540, %v4728
      %4730 = vmatmul.bf16.gmra.mxu0 %v3867
      %v4731 = vpop.f32.mrf.mxu0
      %v4732 = vadd.f32 %v4543, %v4731
      %v4733 = vpop.f32.mrf.mxu0
      %v4734 = vadd.f32 %v4545, %v4733
      %4735 = vmatmul.bf16.gmra.mxu0 %v3871
      %v4736 = vpop.f32.mrf.mxu0
      %v4737 = vadd.f32 %v4548, %v4736
      %v4738 = vpop.f32.mrf.mxu0
      %v4739 = vadd.f32 %v4550, %v4738
      %4740 = vmatmul.bf16.gmra.mxu0 %v3875
      %v4741 = vpop.f32.mrf.mxu0
      %v4742 = vadd.f32 %v4553, %v4741
      %v4743 = vpop.f32.mrf.mxu0
      %v4744 = vadd.f32 %v4555, %v4743
      %4745 = vmatmul.bf16.gmra.mxu0 %v3879
      %v4746 = vpop.f32.mrf.mxu0
      %v4747 = vadd.f32 %v4558, %v4746
      %v4748 = vpop.f32.mrf.mxu0
      %v4749 = vadd.f32 %v4560, %v4748
      %4750 = vmatmul.bf16.gmra.mxu0 %v3883
      %v4751 = vpop.f32.mrf.mxu0
      %v4752 = vadd.f32 %v4563, %v4751
      %v4753 = vpop.f32.mrf.mxu0
      %v4754 = vadd.f32 %v4565, %v4753
      %4755 = vmatmul.bf16.gmra.mxu0 %v3887
      %v4756 = vpop.f32.mrf.mxu0
      %v4757 = vadd.f32 %v4568, %v4756
      %v4758 = vpop.f32.mrf.mxu0
      %v4759 = vadd.f32 %v4570, %v4758
      %4760 = vmatmul.bf16.gmra.mxu0 %v3891
      %v4761 = vpop.f32.mrf.mxu0
      %v4762 = vadd.f32 %v4573, %v4761
      %v4763 = vpop.f32.mrf.mxu0
      %v4764 = vadd.f32 %v4575, %v4763
      %4765 = vmatmul.bf16.gmra.mxu0 %v3895
      %v4766 = vpop.f32.mrf.mxu0
      %v4767 = vadd.f32 %v4578, %v4766
      %v4768 = vpop.f32.mrf.mxu0
      %v4769 = vadd.f32 %v4580, %v4768
      %4770 = vmatmul.bf16.gmra.mxu0 %v3899
      %v4771 = vpop.f32.mrf.mxu0
      %v4772 = vadd.f32 %v4583, %v4771
      %v4773 = vpop.f32.mrf.mxu0
      %v4774 = vadd.f32 %v4585, %v4773
      %4775 = vmatmul.bf16.gmra.mxu0 %v3903
      %v4776 = vpop.f32.mrf.mxu0
      %v4777 = vadd.f32 %v4588, %v4776
      %v4778 = vpop.f32.mrf.mxu0
      %v4779 = vadd.f32 %v4590, %v4778
      %4780 = vmatmul.bf16.gmra.mxu0 %v3907
      %v4781 = vpop.f32.mrf.mxu0
      %v4782 = vadd.f32 %v4593, %v4781
      %v4783 = vpop.f32.mrf.mxu0
      %v4784 = vadd.f32 %v4595, %v4783
      %4785 = vmatmul.bf16.gmra.mxu0 %v3911
      %v4786 = vpop.f32.mrf.mxu0
      %v4787 = vadd.f32 %v4598, %v4786
      %v4788 = vpop.f32.mrf.mxu0
      %v4789 = vadd.f32 %v4600, %v4788
      %4790 = vmatmul.bf16.gmra.mxu0 %v3915
      %v4791 = vpop.f32.mrf.mxu0
      %v4792 = vadd.f32 %v4603, %v4791
      %v4793 = vpop.f32.mrf.mxu0
      %v4794 = vadd.f32 %v4605, %v4793
      %4795 = vmatmul.bf16.gmra.mxu0 %v3919
      %v4796 = vpop.f32.mrf.mxu0
      %v4797 = vadd.f32 %v4608, %v4796
      %v4798 = vpop.f32.mrf.mxu0
      %v4799 = vadd.f32 %v4610, %v4798
      %4800 = vmatmul.bf16.gmra.mxu0 %v3923
      %v4801 = vpop.f32.mrf.mxu0
      %v4802 = vadd.f32 %v4613, %v4801
      %v4803 = vpop.f32.mrf.mxu0
      %v4804 = vadd.f32 %v4615, %v4803
      %4805 = vmatmul.bf16.gmra.mxu0 %v3927
      %v4806 = vpop.f32.mrf.mxu0
      %v4807 = vadd.f32 %v4618, %v4806
      %v4808 = vpop.f32.mrf.mxu0
      %v4809 = vadd.f32 %v4620, %v4808
      %4810 = vmatmul.bf16.gmra.mxu0 %v3931
      %v4811 = vpop.f32.mrf.mxu0
      %v4812 = vadd.f32 %v4623, %v4811
      %v4813 = vpop.f32.mrf.mxu0
      %v4814 = vadd.f32 %v4625, %v4813
      %4815 = vmatmul.bf16.gmra.mxu0 %v3935
      %v4816 = vpop.f32.mrf.mxu0
      %v4817 = vadd.f32 %v4628, %v4816
      %v4818 = vpop.f32.mrf.mxu0
      %v4819 = vadd.f32 %v4630, %v4818
      %4820 = vmatmul.bf16.gmra.mxu0 %v3939
      %v4821 = vpop.f32.mrf.mxu0
      %v4822 = vadd.f32 %v4633, %v4821
      %v4823 = vpop.f32.mrf.mxu0
      %v4824 = vadd.f32 %v4635, %v4823
      %4825 = vmatmul.bf16.gmra.mxu0 %v3943
      %v4826 = vpop.f32.mrf.mxu0
      %v4827 = vadd.f32 %v4638, %v4826
      %v4828 = vpop.f32.mrf.mxu0
      %v4829 = vadd.f32 %v4640, %v4828
      %4830 = vmatmul.bf16.gmra.mxu0 %v3947
      %v4831 = vpop.f32.mrf.mxu0
      %v4832 = vadd.f32 %v4643, %v4831
      %v4833 = vpop.f32.mrf.mxu0
      %v4834 = vadd.f32 %v4645, %v4833
      %4835 = vmatmul.bf16.gmra.mxu0 %v3951
      %v4836 = vpop.f32.mrf.mxu0
      %v4837 = vadd.f32 %v4648, %v4836
      %v4838 = vpop.f32.mrf.mxu0
      %v4839 = vadd.f32 %v4650, %v4838
      %4840 = vmatmul.bf16.gmra.mxu0 %v3955
      %v4841 = vpop.f32.mrf.mxu0
      %v4842 = vadd.f32 %v4653, %v4841
      %v4843 = vpop.f32.mrf.mxu0
      %v4844 = vadd.f32 %v4655, %v4843
      %4845 = vmatmul.bf16.gmra.mxu0 %v3959
      %v4846 = vpop.f32.mrf.mxu0
      %v4847 = vadd.f32 %v4658, %v4846
      %v4848 = vpop.f32.mrf.mxu0
      %v4849 = vadd.f32 %v4660, %v4848
      %4850 = vmatmul.bf16.gmra.mxu0 %v3963
      %v4851 = vpop.f32.mrf.mxu0
      %v4852 = vadd.f32 %v4663, %v4851
      %v4853 = vpop.f32.mrf.mxu0
      %v4854 = vadd.f32 %v4665, %v4853
      %4855 = vmatmul.bf16.gmra.mxu0 %v3967
      %v4856 = vpop.f32.mrf.mxu0
      %v4857 = vadd.f32 %v4668, %v4856
      %v4858 = vpop.f32.mrf.mxu0
      %v4859 = vadd.f32 %v4670, %v4858
      %4860 = vmatmul.bf16.gmra.mxu0 %v3971
      %v4861 = vpop.f32.mrf.mxu0
      %v4862 = vadd.f32 %v4673, %v4861
      %v4863 = vpop.f32.mrf.mxu0
      %v4864 = vadd.f32 %v4675, %v4863
      %4865 = vmatmul.bf16.gmra.mxu0 %v3975
      %v4866 = vpop.f32.mrf.mxu0
      %v4867 = vadd.f32 %v4678, %v4866
      %v4868 = vpop.f32.mrf.mxu0
      %v4869 = vadd.f32 %v4680, %v4868
      %4870 = vmatmul.bf16.gmra.mxu0 %v3979
      %v4871 = vpop.f32.mrf.mxu0
      %v4872 = vadd.f32 %v4683, %v4871
      %v4873 = vpop.f32.mrf.mxu0
      %v4874 = vadd.f32 %v4685, %v4873
      %4875 = vmatmul.bf16.gmra.mxu0 %v3983
      %v4876 = vpop.f32.mrf.mxu0
      %v4877 = vadd.f32 %v4688, %v4876
      %v4878 = vpop.f32.mrf.mxu0
      %v4879 = vadd.f32 %v4690, %v4878
      %4880 = vmatmul.bf16.gmra.mxu0 %v3987
      %v4881 = vpop.f32.mrf.mxu0
      %v4882 = vadd.f32 %v4693, %v4881
      %v4883 = vpop.f32.mrf.mxu0
      %v4884 = vadd.f32 %v4695, %v4883
      %4885 = vmatmul.bf16.gmra.mxu0 %v3991
      %v4886 = vpop.f32.mrf.mxu0
      %v4887 = vadd.f32 %v4698, %v4886
      %v4888 = vpop.f32.mrf.mxu0
      %v4889 = vadd.f32 %v4700, %v4888
      %4890 = vmatmul.bf16.gmra.mxu0 %v3995
      %v4891 = vpop.f32.mrf.mxu0
      %v4892 = vadd.f32 %v4703, %v4891
      %v4893 = vpop.f32.mrf.mxu0
      %v4894 = vadd.f32 %v4705, %v4893
      %4895 = vdwg.mxu0
      %v4896 = vmax.f32 %v3097, %v4717
      %v4897 = vmax.f32 %v3099, %v4719
      %v4898 = vmax.f32 %v3102, %v4722
      %v4899 = vmax.f32 %v3104, %v4724
      %v4900 = vmax.f32 %v3107, %v4727
      %v4901 = vmax.f32 %v3109, %v4729
      %v4902 = vmax.f32 %v3112, %v4732
      %v4903 = vmax.f32 %v3114, %v4734
      %v4904 = vmax.f32 %v3117, %v4737
      %v4905 = vmax.f32 %v3119, %v4739
      %v4906 = vmax.f32 %v3122, %v4742
      %v4907 = vmax.f32 %v3124, %v4744
      %v4908 = vmax.f32 %v3127, %v4747
      %v4909 = vmax.f32 %v3129, %v4749
      %v4910 = vmax.f32 %v3132, %v4752
      %v4911 = vmax.f32 %v3134, %v4754
      %v4912 = vmax.f32 %v3137, %v4757
      %v4913 = vmax.f32 %v3139, %v4759
      %v4914 = vmax.f32 %v3142, %v4762
      %v4915 = vmax.f32 %v3144, %v4764
      %v4916 = vmax.f32 %v3147, %v4767
      %v4917 = vmax.f32 %v3149, %v4769
      %v4918 = vmax.f32 %v3152, %v4772
      %v4919 = vmax.f32 %v3154, %v4774
      %v4920 = vmax.f32 %v3157, %v4777
      %v4921 = vmax.f32 %v3159, %v4779
      %v4922 = vmax.f32 %v3162, %v4782
      %v4923 = vmax.f32 %v3164, %v4784
      %v4924 = vmax.f32 %v3167, %v4787
      %v4925 = vmax.f32 %v3169, %v4789
      %v4926 = vmax.f32 %v3172, %v4792
      %v4927 = vmax.f32 %v3174, %v4794
      %v4928 = vmax.f32 %v3177, %v4797
      %v4929 = vmax.f32 %v3179, %v4799
      %v4930 = vmax.f32 %v3182, %v4802
      %v4931 = vmax.f32 %v3184, %v4804
      %v4932 = vmax.f32 %v3187, %v4807
      %v4933 = vmax.f32 %v3189, %v4809
      %v4934 = vmax.f32 %v3192, %v4812
      %v4935 = vmax.f32 %v3194, %v4814
      %v4936 = vmax.f32 %v3197, %v4817
      %v4937 = vmax.f32 %v3199, %v4819
      %v4938 = vmax.f32 %v3202, %v4822
      %v4939 = vmax.f32 %v3204, %v4824
      %v4940 = vmax.f32 %v3207, %v4827
      %v4941 = vmax.f32 %v3209, %v4829
      %v4942 = vmax.f32 %v3212, %v4832
      %v4943 = vmax.f32 %v3214, %v4834
      %v4944 = vmax.f32 %v3217, %v4837
      %v4945 = vmax.f32 %v3219, %v4839
      %v4946 = vmax.f32 %v3222, %v4842
      %v4947 = vmax.f32 %v3224, %v4844
      %v4948 = vmax.f32 %v3227, %v4847
      %v4949 = vmax.f32 %v3229, %v4849
      %v4950 = vmax.f32 %v3232, %v4852
      %v4951 = vmax.f32 %v3234, %v4854
      %v4952 = vmax.f32 %v3237, %v4857
      %v4953 = vmax.f32 %v3239, %v4859
      %v4954 = vmax.f32 %v3242, %v4862
      %v4955 = vmax.f32 %v3244, %v4864
      %v4956 = vmax.f32 %v3247, %v4867
      %v4957 = vmax.f32 %v3249, %v4869
      %v4958 = vmax.f32 %v3252, %v4872
      %v4959 = vmax.f32 %v3254, %v4874
      %v4960 = vmax.f32 %v3257, %v4877
      %v4961 = vmax.f32 %v3259, %v4879
      %v4962 = vmax.f32 %v3262, %v4882
      %v4963 = vmax.f32 %v3264, %v4884
      %v4964 = vmax.f32 %v3267, %v4887
      %v4965 = vmax.f32 %v3269, %v4889
      %v4966 = vmax.f32 %v3272, %v4892
      %v4967 = vmax.f32 %v3274, %v4894
      %4968 = vst.msk [vmem:[#allocation2] sm:$0xff] %vm910, %v4896
      %4969 = vst.msk [vmem:[#allocation2 + $0x8] sm:$0xff] %vm910, %v4897
      %4970 = vst.msk [vmem:[#allocation2 + $0x10] sm:$0xff] %vm910, %v4898
      %4971 = vst.msk [vmem:[#allocation2 + $0x18] sm:$0xff] %vm910, %v4899
      %4972 = vst.msk [vmem:[#allocation2 + $0x20] sm:$0xff] %vm910, %v4900
      %4973 = vst.msk [vmem:[#allocation2 + $0x28] sm:$0xff] %vm910, %v4901
      %4974 = vst.msk [vmem:[#allocation2 + $0x30] sm:$0xff] %vm910, %v4902
      %4975 = vst.msk [vmem:[#allocation2 + $0x38] sm:$0xff] %vm910, %v4903
      %4976 = vst.msk [vmem:[#allocation2 + $0x40] sm:$0xff] %vm910, %v4904
      %4977 = vst.msk [vmem:[#allocation2 + $0x48] sm:$0xff] %vm910, %v4905
      %4978 = vst.msk [vmem:[#allocation2 + $0x50] sm:$0xff] %vm910, %v4906
      %4979 = vst.msk [vmem:[#allocation2 + $0x58] sm:$0xff] %vm910, %v4907
      %4980 = vst.msk [vmem:[#allocation2 + $0x60] sm:$0xff] %vm910, %v4908
      %4981 = vst.msk [vmem:[#allocation2 + $0x68] sm:$0xff] %vm910, %v4909
      %4982 = vst.msk [vmem:[#allocation2 + $0x70] sm:$0xff] %vm910, %v4910
      %4983 = vst.msk [vmem:[#allocation2 + $0x78] sm:$0xff] %vm910, %v4911
      %4984 = vst.msk [vmem:[#allocation2 + $0x80] sm:$0xff] %vm910, %v4912
      %4985 = vst.msk [vmem:[#allocation2 + $0x88] sm:$0xff] %vm910, %v4913
      %4986 = vst.msk [vmem:[#allocation2 + $0x90] sm:$0xff] %vm910, %v4914
      %4987 = vst.msk [vmem:[#allocation2 + $0x98] sm:$0xff] %vm910, %v4915
      %4988 = vst.msk [vmem:[#allocation2 + $0xa0] sm:$0xff] %vm910, %v4916
      %4989 = vst.msk [vmem:[#allocation2 + $0xa8] sm:$0xff] %vm910, %v4917
      %4990 = vst.msk [vmem:[#allocation2 + $0xb0] sm:$0xff] %vm910, %v4918
      %4991 = vst.msk [vmem:[#allocation2 + $0xb8] sm:$0xff] %vm910, %v4919
      %4992 = vst.msk [vmem:[#allocation2 + $0xc0] sm:$0xff] %vm910, %v4920
      %4993 = vst.msk [vmem:[#allocation2 + $0xc8] sm:$0xff] %vm910, %v4921
      %4994 = vst.msk [vmem:[#allocation2 + $0xd0] sm:$0xff] %vm910, %v4922
      %4995 = vst.msk [vmem:[#allocation2 + $0xd8] sm:$0xff] %vm910, %v4923
      %4996 = vst.msk [vmem:[#allocation2 + $0xe0] sm:$0xff] %vm910, %v4924
      %4997 = vst.msk [vmem:[#allocation2 + $0xe8] sm:$0xff] %vm910, %v4925
      %4998 = vst.msk [vmem:[#allocation2 + $0xf0] sm:$0xff] %vm910, %v4926
      %4999 = vst.msk [vmem:[#allocation2 + $0xf8] sm:$0xff] %vm910, %v4927
      %5000 = vst.msk [vmem:[#allocation2 + $0x100] sm:$0xff] %vm910, %v4928
      %5001 = vst.msk [vmem:[#allocation2 + $0x108] sm:$0xff] %vm910, %v4929
      %5002 = vst.msk [vmem:[#allocation2 + $0x110] sm:$0xff] %vm910, %v4930
      %5003 = vst.msk [vmem:[#allocation2 + $0x118] sm:$0xff] %vm910, %v4931
      %5004 = vst.msk [vmem:[#allocation2 + $0x120] sm:$0xff] %vm910, %v4932
      %5005 = vst.msk [vmem:[#allocation2 + $0x128] sm:$0xff] %vm910, %v4933
      %5006 = vst.msk [vmem:[#allocation2 + $0x130] sm:$0xff] %vm910, %v4934
      %5007 = vst.msk [vmem:[#allocation2 + $0x138] sm:$0xff] %vm910, %v4935
      %5008 = vst.msk [vmem:[#allocation2 + $0x140] sm:$0xff] %vm910, %v4936
      %5009 = vst.msk [vmem:[#allocation2 + $0x148] sm:$0xff] %vm910, %v4937
      %5010 = vst.msk [vmem:[#allocation2 + $0x150] sm:$0xff] %vm910, %v4938
      %5011 = vst.msk [vmem:[#allocation2 + $0x158] sm:$0xff] %vm910, %v4939
      %5012 = vst.msk [vmem:[#allocation2 + $0x160] sm:$0xff] %vm910, %v4940
      %5013 = vst.msk [vmem:[#allocation2 + $0x168] sm:$0xff] %vm910, %v4941
      %5014 = vst.msk [vmem:[#allocation2 + $0x170] sm:$0xff] %vm910, %v4942
      %5015 = vst.msk [vmem:[#allocation2 + $0x178] sm:$0xff] %vm910, %v4943
      %5016 = vst.msk [vmem:[#allocation2 + $0x180] sm:$0xff] %vm910, %v4944
      %5017 = vst.msk [vmem:[#allocation2 + $0x188] sm:$0xff] %vm910, %v4945
      %5018 = vst.msk [vmem:[#allocation2 + $0x190] sm:$0xff] %vm910, %v4946
      %5019 = vst.msk [vmem:[#allocation2 + $0x198] sm:$0xff] %vm910, %v4947
      %5020 = vst.msk [vmem:[#allocation2 + $0x1a0] sm:$0xff] %vm910, %v4948
      %5021 = vst.msk [vmem:[#allocation2 + $0x1a8] sm:$0xff] %vm910, %v4949
      %5022 = vst.msk [vmem:[#allocation2 + $0x1b0] sm:$0xff] %vm910, %v4950
      %5023 = vst.msk [vmem:[#allocation2 + $0x1b8] sm:$0xff] %vm910, %v4951
      %5024 = vst.msk [vmem:[#allocation2 + $0x1c0] sm:$0xff] %vm910, %v4952
      %5025 = vst.msk [vmem:[#allocation2 + $0x1c8] sm:$0xff] %vm910, %v4953
      %5026 = vst.msk [vmem:[#allocation2 + $0x1d0] sm:$0xff] %vm910, %v4954
      %5027 = vst.msk [vmem:[#allocation2 + $0x1d8] sm:$0xff] %vm910, %v4955
      %5028 = vst.msk [vmem:[#allocation2 + $0x1e0] sm:$0xff] %vm910, %v4956
      %5029 = vst.msk [vmem:[#allocation2 + $0x1e8] sm:$0xff] %vm910, %v4957
      %5030 = vst.msk [vmem:[#allocation2 + $0x1f0] sm:$0xff] %vm910, %v4958
      %5031 = vst.msk [vmem:[#allocation2 + $0x1f8] sm:$0xff] %vm910, %v4959
      %5032 = vst.msk [vmem:[#allocation2 + $0x200] sm:$0xff] %vm910, %v4960
      %5033 = vst.msk [vmem:[#allocation2 + $0x208] sm:$0xff] %vm910, %v4961
      %5034 = vst.msk [vmem:[#allocation2 + $0x210] sm:$0xff] %vm910, %v4962
      %5035 = vst.msk [vmem:[#allocation2 + $0x218] sm:$0xff] %vm910, %v4963
      %5036 = vst.msk [vmem:[#allocation2 + $0x220] sm:$0xff] %vm910, %v4964
      %5037 = vst.msk [vmem:[#allocation2 + $0x228] sm:$0xff] %vm910, %v4965
      %5038 = vst.msk [vmem:[#allocation2 + $0x230] sm:$0xff] %vm910, %v4966
      %5039 = vst.msk [vmem:[#allocation2 + $0x238] sm:$0xff] %vm910, %v4967
      %v5040 = vld [vmem:[#allocation2 + $0x7] sm:$0xff]
      %v5041 = vld [vmem:[#allocation2 + $0xf] sm:$0xff]
      %v5042 = vld [vmem:[#allocation2 + $0x27] sm:$0xff]
      %v5043 = vld [vmem:[#allocation2 + $0x2f] sm:$0xff]
      %v5044 = vld [vmem:[#allocation2 + $0x47] sm:$0xff]
      %v5045 = vld [vmem:[#allocation2 + $0x4f] sm:$0xff]
      %v5046 = vld [vmem:[#allocation2 + $0x67] sm:$0xff]
      %v5047 = vld [vmem:[#allocation2 + $0x6f] sm:$0xff]
      %v5048 = vld [vmem:[#allocation2 + $0x87] sm:$0xff]
      %v5049 = vld [vmem:[#allocation2 + $0x8f] sm:$0xff]
      %v5050 = vld [vmem:[#allocation2 + $0xa7] sm:$0xff]
      %v5051 = vld [vmem:[#allocation2 + $0xaf] sm:$0xff]
      %v5052 = vld [vmem:[#allocation2 + $0xc7] sm:$0xff]
      %v5053 = vld [vmem:[#allocation2 + $0xcf] sm:$0xff]
      %v5054 = vld [vmem:[#allocation2 + $0xe7] sm:$0xff]
      %v5055 = vld [vmem:[#allocation2 + $0xef] sm:$0xff]
      %v5056 = vld [vmem:[#allocation2 + $0x107] sm:$0xff]
      %v5057 = vld [vmem:[#allocation2 + $0x10f] sm:$0xff]
      %v5058 = vld [vmem:[#allocation2 + $0x127] sm:$0xff]
      %v5059 = vld [vmem:[#allocation2 + $0x12f] sm:$0xff]
      %v5060 = vld [vmem:[#allocation2 + $0x147] sm:$0xff]
      %v5061 = vld [vmem:[#allocation2 + $0x14f] sm:$0xff]
      %v5062 = vld [vmem:[#allocation2 + $0x167] sm:$0xff]
      %v5063 = vld [vmem:[#allocation2 + $0x16f] sm:$0xff]
      %v5064 = vld [vmem:[#allocation2 + $0x187] sm:$0xff]
      %v5065 = vld [vmem:[#allocation2 + $0x18f] sm:$0xff]
      %v5066 = vld [vmem:[#allocation2 + $0x1a7] sm:$0xff]
      %v5067 = vld [vmem:[#allocation2 + $0x1af] sm:$0xff]
      %v5068 = vld [vmem:[#allocation2 + $0x1c7] sm:$0xff]
      %v5069 = vld [vmem:[#allocation2 + $0x1cf] sm:$0xff]
      %v5070 = vld [vmem:[#allocation2 + $0x1e7] sm:$0xff]
      %v5071 = vld [vmem:[#allocation2 + $0x1ef] sm:$0xff]
      %v5072 = vpack.c.bf16 %v5041, %v5040
      %v5073 = vpack.c.bf16 %v5043, %v5042
      %v5074 = vpack.c.bf16 %v5045, %v5044
      %v5075 = vpack.c.bf16 %v5047, %v5046
      %v5076 = vpack.c.bf16 %v5049, %v5048
      %v5077 = vpack.c.bf16 %v5051, %v5050
      %v5078 = vpack.c.bf16 %v5053, %v5052
      %v5079 = vpack.c.bf16 %v5055, %v5054
      %v5080 = vpack.c.bf16 %v5057, %v5056
      %v5081 = vpack.c.bf16 %v5059, %v5058
      %v5082 = vpack.c.bf16 %v5061, %v5060
      %v5083 = vpack.c.bf16 %v5063, %v5062
      %v5084 = vpack.c.bf16 %v5065, %v5064
      %v5085 = vpack.c.bf16 %v5067, %v5066
      %v5086 = vpack.c.bf16 %v5069, %v5068
      %v5087 = vpack.c.bf16 %v5071, %v5070
      %v5088 = vld [vmem:[%s3] sm:$0xf]
      %v5089 = vld [vmem:[%s3 + $0x4] sm:$0xf]
      %v5090 = vld [vmem:[%s3 + $0x8] sm:$0xf]
      %v5091 = vld [vmem:[%s3 + $0xc] sm:$0xf]
      %v5092 = vld [vmem:[#allocation2 + $0x8] sm:$0xff]
      %v5093 = vld [vmem:[#allocation2 + $0x10] sm:$0xff]
      %v5094 = vld [vmem:[#allocation2 + $0x28] sm:$0xff]
      %v5095 = vld [vmem:[#allocation2 + $0x30] sm:$0xff]
      %v5096 = vld [vmem:[#allocation2 + $0x48] sm:$0xff]
      %v5097 = vld [vmem:[#allocation2 + $0x50] sm:$0xff]
      %v5098 = vld [vmem:[#allocation2 + $0x68] sm:$0xff]
      %v5099 = vld [vmem:[#allocation2 + $0x70] sm:$0xff]
      %v5100 = vld [vmem:[#allocation2 + $0x88] sm:$0xff]
      %v5101 = vld [vmem:[#allocation2 + $0x90] sm:$0xff]
      %v5102 = vld [vmem:[#allocation2 + $0xa8] sm:$0xff]
      %v5103 = vld [vmem:[#allocation2 + $0xb0] sm:$0xff]
      %v5104 = vld [vmem:[#allocation2 + $0xc8] sm:$0xff]
      %v5105 = vld [vmem:[#allocation2 + $0xd0] sm:$0xff]
      %v5106 = vld [vmem:[#allocation2 + $0xe8] sm:$0xff]
      %v5107 = vld [vmem:[#allocation2 + $0xf0] sm:$0xff]
      %v5108 = vld [vmem:[#allocation2 + $0x108] sm:$0xff]
      %v5109 = vld [vmem:[#allocation2 + $0x110] sm:$0xff]
      %v5110 = vld [vmem:[#allocation2 + $0x128] sm:$0xff]
      %v5111 = vld [vmem:[#allocation2 + $0x130] sm:$0xff]
      %v5112 = vld [vmem:[#allocation2 + $0x148] sm:$0xff]
      %v5113 = vld [vmem:[#allocation2 + $0x150] sm:$0xff]
      %v5114 = vld [vmem:[#allocation2 + $0x168] sm:$0xff]
      %v5115 = vld [vmem:[#allocation2 + $0x170] sm:$0xff]
      %v5116 = vld [vmem:[#allocation2 + $0x188] sm:$0xff]
      %v5117 = vld [vmem:[#allocation2 + $0x190] sm:$0xff]
      %v5118 = vld [vmem:[#allocation2 + $0x1a8] sm:$0xff]
      %v5119 = vld [vmem:[#allocation2 + $0x1b0] sm:$0xff]
      %v5120 = vld [vmem:[#allocation2 + $0x1c8] sm:$0xff]
      %v5121 = vld [vmem:[#allocation2 + $0x1d0] sm:$0xff]
      %v5122 = vld [vmem:[#allocation2 + $0x1e8] sm:$0xff]
      %v5123 = vld [vmem:[#allocation2 + $0x1f0] sm:$0xff]
      %v5124 = vpack.c.bf16 %v5093, %v5092
      %v5125 = vpack.c.bf16 %v5095, %v5094
      %v5126 = vpack.c.bf16 %v5097, %v5096
      %v5127 = vpack.c.bf16 %v5099, %v5098
      %v5128 = vpack.c.bf16 %v5101, %v5100
      %v5129 = vpack.c.bf16 %v5103, %v5102
      %v5130 = vpack.c.bf16 %v5105, %v5104
      %v5131 = vpack.c.bf16 %v5107, %v5106
      %v5132 = vpack.c.bf16 %v5109, %v5108
      %v5133 = vpack.c.bf16 %v5111, %v5110
      %v5134 = vpack.c.bf16 %v5113, %v5112
      %v5135 = vpack.c.bf16 %v5115, %v5114
      %v5136 = vpack.c.bf16 %v5117, %v5116
      %v5137 = vpack.c.bf16 %v5119, %v5118
      %v5138 = vpack.c.bf16 %v5121, %v5120
      %v5139 = vpack.c.bf16 %v5123, %v5122
      %v5140 = vld [vmem:[%s3 + $0x10] sm:$0xf]
      %v5141 = vld [vmem:[%s3 + $0x14] sm:$0xf]
      %v5142 = vld [vmem:[%s3 + $0x18] sm:$0xf]
      %v5143 = vld [vmem:[%s3 + $0x1c] sm:$0xf]
      %v5148 = vunpack.c.l.b16 %v5140
      %v5149 = vunpack.c.l.b16 %v5141
      %v5150 = vunpack.c.l.b16 %v5142
      %v5151 = vunpack.c.l.b16 %v5143
      %v5152 = vpack.c.b16 %v5149, %v5148
      %v5153 = vpack.c.b16 %v5151, %v5150
      %v5157 = vsel %vm910, %v5124, 0
      %v5160 = vsel %vm910, %v5125, 0
      %v5163 = vsel %vm910, %v5126, 0
      %v5166 = vsel %vm910, %v5127, 0
      %v5169 = vsel %vm910, %v5128, 0
      %v5172 = vsel %vm910, %v5129, 0
      %v5175 = vsel %vm910, %v5130, 0
      %v5178 = vsel %vm910, %v5131, 0
      %v5181 = vsel %vm910, %v5132, 0
      %v5184 = vsel %vm910, %v5133, 0
      %v5187 = vsel %vm910, %v5134, 0
      %v5190 = vsel %vm910, %v5135, 0
      %v5193 = vsel %vm910, %v5136, 0
      %v5196 = vsel %vm910, %v5137, 0
      %v5199 = vsel %vm910, %v5138, 0
      %v5202 = vsel %vm910, %v5139, 0
      %5204 = vmatpush.bf16.msra.mxu0 0
      %5205 = vmatpush.bf16.msra.mxu0 0
      %5206 = vmatpush.bf16.msra.mxu0 0
      %5207 = vmatpush.bf16.msra.mxu0 0
      %5208 = vmatpush.bf16.msra.mxu0 0
      %5209 = vmatpush.bf16.msra.mxu0 0
      %5210 = vmatpush.bf16.msra.mxu0 %v5153
      %5211 = vmatpush.bf16.msra.mxu0 %v5152
      %5212 = vmatmul.bf16.gmra.mxu0 %v5157
      %v5213 = vpop.f32.mrf.mxu0
      %v5214 = vadd.f32 0.0, %v5213
      %v5215 = vpop.f32.mrf.mxu0
      %v5216 = vadd.f32 0.0, %v5215
      %5217 = vmatmul.bf16.gmra.mxu0 %v5160
      %v5218 = vpop.f32.mrf.mxu0
      %v5219 = vadd.f32 0.0, %v5218
      %v5220 = vpop.f32.mrf.mxu0
      %v5221 = vadd.f32 0.0, %v5220
      %5222 = vmatmul.bf16.gmra.mxu0 %v5163
      %v5223 = vpop.f32.mrf.mxu0
      %v5224 = vadd.f32 0.0, %v5223
      %v5225 = vpop.f32.mrf.mxu0
      %v5226 = vadd.f32 0.0, %v5225
      %5227 = vmatmul.bf16.gmra.mxu0 %v5166
      %v5228 = vpop.f32.mrf.mxu0
      %v5229 = vadd.f32 0.0, %v5228
      %v5230 = vpop.f32.mrf.mxu0
      %v5231 = vadd.f32 0.0, %v5230
      %5232 = vmatmul.bf16.gmra.mxu0 %v5169
      %v5233 = vpop.f32.mrf.mxu0
      %v5234 = vadd.f32 0.0, %v5233
      %v5235 = vpop.f32.mrf.mxu0
      %v5236 = vadd.f32 0.0, %v5235
      %5237 = vmatmul.bf16.gmra.mxu0 %v5172
      %v5238 = vpop.f32.mrf.mxu0
      %v5239 = vadd.f32 0.0, %v5238
      %v5240 = vpop.f32.mrf.mxu0
      %v5241 = vadd.f32 0.0, %v5240
      %5242 = vmatmul.bf16.gmra.mxu0 %v5175
      %v5243 = vpop.f32.mrf.mxu0
      %v5244 = vadd.f32 0.0, %v5243
      %v5245 = vpop.f32.mrf.mxu0
      %v5246 = vadd.f32 0.0, %v5245
      %5247 = vmatmul.bf16.gmra.mxu0 %v5178
      %v5248 = vpop.f32.mrf.mxu0
      %v5249 = vadd.f32 0.0, %v5248
      %v5250 = vpop.f32.mrf.mxu0
      %v5251 = vadd.f32 0.0, %v5250
      %5252 = vmatmul.bf16.gmra.mxu0 %v5181
      %v5253 = vpop.f32.mrf.mxu0
      %v5254 = vadd.f32 0.0, %v5253
      %v5255 = vpop.f32.mrf.mxu0
      %v5256 = vadd.f32 0.0, %v5255
      %5257 = vmatmul.bf16.gmra.mxu0 %v5184
      %v5258 = vpop.f32.mrf.mxu0
      %v5259 = vadd.f32 0.0, %v5258
      %v5260 = vpop.f32.mrf.mxu0
      %v5261 = vadd.f32 0.0, %v5260
      %5262 = vmatmul.bf16.gmra.mxu0 %v5187
      %v5263 = vpop.f32.mrf.mxu0
      %v5264 = vadd.f32 0.0, %v5263
      %v5265 = vpop.f32.mrf.mxu0
      %v5266 = vadd.f32 0.0, %v5265
      %5267 = vmatmul.bf16.gmra.mxu0 %v5190
      %v5268 = vpop.f32.mrf.mxu0
      %v5269 = vadd.f32 0.0, %v5268
      %v5270 = vpop.f32.mrf.mxu0
      %v5271 = vadd.f32 0.0, %v5270
      %5272 = vmatmul.bf16.gmra.mxu0 %v5193
      %v5273 = vpop.f32.mrf.mxu0
      %v5274 = vadd.f32 0.0, %v5273
      %v5275 = vpop.f32.mrf.mxu0
      %v5276 = vadd.f32 0.0, %v5275
      %5277 = vmatmul.bf16.gmra.mxu0 %v5196
      %v5278 = vpop.f32.mrf.mxu0
      %v5279 = vadd.f32 0.0, %v5278
      %v5280 = vpop.f32.mrf.mxu0
      %v5281 = vadd.f32 0.0, %v5280
      %5282 = vmatmul.bf16.gmra.mxu0 %v5199
      %v5283 = vpop.f32.mrf.mxu0
      %v5284 = vadd.f32 0.0, %v5283
      %v5285 = vpop.f32.mrf.mxu0
      %v5286 = vadd.f32 0.0, %v5285
      %5287 = vmatmul.bf16.gmra.mxu0 %v5202
      %v5288 = vpop.f32.mrf.mxu0
      %v5289 = vadd.f32 0.0, %v5288
      %v5290 = vpop.f32.mrf.mxu0
      %v5291 = vadd.f32 0.0, %v5290
      %5292 = vdwg.mxu0
      %v5297 = vunpack.c.l.b16 %v5088
      %v5298 = vunpack.c.l.b16 %v5089
      %v5299 = vunpack.c.l.b16 %v5090
      %v5300 = vunpack.c.l.b16 %v5091
      %v5301 = vpack.c.b16 %v5298, %v5297
      %v5302 = vpack.c.b16 %v5300, %v5299
      %v5306 = vsel %vm910, %v5072, 0
      %v5309 = vsel %vm910, %v5073, 0
      %v5312 = vsel %vm910, %v5074, 0
      %v5315 = vsel %vm910, %v5075, 0
      %v5318 = vsel %vm910, %v5076, 0
      %v5321 = vsel %vm910, %v5077, 0
      %v5324 = vsel %vm910, %v5078, 0
      %v5327 = vsel %vm910, %v5079, 0
      %v5330 = vsel %vm910, %v5080, 0
      %v5333 = vsel %vm910, %v5081, 0
      %v5336 = vsel %vm910, %v5082, 0
      %v5339 = vsel %vm910, %v5083, 0
      %v5342 = vsel %vm910, %v5084, 0
      %v5345 = vsel %vm910, %v5085, 0
      %v5348 = vsel %vm910, %v5086, 0
      %v5351 = vsel %vm910, %v5087, 0
      %5353 = vmatpush.bf16.msra.mxu0 0
      %5354 = vmatpush.bf16.msra.mxu0 0
      %5355 = vmatpush.bf16.msra.mxu0 0
      %5356 = vmatpush.bf16.msra.mxu0 0
      %5357 = vmatpush.bf16.msra.mxu0 0
      %5358 = vmatpush.bf16.msra.mxu0 0
      %5359 = vmatpush.bf16.msra.mxu0 %v5302
      %5360 = vmatpush.bf16.msra.mxu0 %v5301
      %5361 = vmatmul.bf16.gmra.mxu0 %v5306
      %v5362 = vpop.f32.mrf.mxu0
      %v5363 = vadd.f32 %v5214, %v5362
      %v5364 = vpop.f32.mrf.mxu0
      %v5365 = vadd.f32 %v5216, %v5364
      %5366 = vmatmul.bf16.gmra.mxu0 %v5309
      %v5367 = vpop.f32.mrf.mxu0
      %v5368 = vadd.f32 %v5219, %v5367
      %v5369 = vpop.f32.mrf.mxu0
      %v5370 = vadd.f32 %v5221, %v5369
      %5371 = vmatmul.bf16.gmra.mxu0 %v5312
      %v5372 = vpop.f32.mrf.mxu0
      %v5373 = vadd.f32 %v5224, %v5372
      %v5374 = vpop.f32.mrf.mxu0
      %v5375 = vadd.f32 %v5226, %v5374
      %5376 = vmatmul.bf16.gmra.mxu0 %v5315
      %v5377 = vpop.f32.mrf.mxu0
      %v5378 = vadd.f32 %v5229, %v5377
      %v5379 = vpop.f32.mrf.mxu0
      %v5380 = vadd.f32 %v5231, %v5379
      %5381 = vmatmul.bf16.gmra.mxu0 %v5318
      %v5382 = vpop.f32.mrf.mxu0
      %v5383 = vadd.f32 %v5234, %v5382
      %v5384 = vpop.f32.mrf.mxu0
      %v5385 = vadd.f32 %v5236, %v5384
      %5386 = vmatmul.bf16.gmra.mxu0 %v5321
      %v5387 = vpop.f32.mrf.mxu0
      %v5388 = vadd.f32 %v5239, %v5387
      %v5389 = vpop.f32.mrf.mxu0
      %v5390 = vadd.f32 %v5241, %v5389
      %5391 = vmatmul.bf16.gmra.mxu0 %v5324
      %v5392 = vpop.f32.mrf.mxu0
      %v5393 = vadd.f32 %v5244, %v5392
      %v5394 = vpop.f32.mrf.mxu0
      %v5395 = vadd.f32 %v5246, %v5394
      %5396 = vmatmul.bf16.gmra.mxu0 %v5327
      %v5397 = vpop.f32.mrf.mxu0
      %v5398 = vadd.f32 %v5249, %v5397
      %v5399 = vpop.f32.mrf.mxu0
      %v5400 = vadd.f32 %v5251, %v5399
      %5401 = vmatmul.bf16.gmra.mxu0 %v5330
      %v5402 = vpop.f32.mrf.mxu0
      %v5403 = vadd.f32 %v5254, %v5402
      %v5404 = vpop.f32.mrf.mxu0
      %v5405 = vadd.f32 %v5256, %v5404
      %5406 = vmatmul.bf16.gmra.mxu0 %v5333
      %v5407 = vpop.f32.mrf.mxu0
      %v5408 = vadd.f32 %v5259, %v5407
      %v5409 = vpop.f32.mrf.mxu0
      %v5410 = vadd.f32 %v5261, %v5409
      %5411 = vmatmul.bf16.gmra.mxu0 %v5336
      %v5412 = vpop.f32.mrf.mxu0
      %v5413 = vadd.f32 %v5264, %v5412
      %v5414 = vpop.f32.mrf.mxu0
      %v5415 = vadd.f32 %v5266, %v5414
      %5416 = vmatmul.bf16.gmra.mxu0 %v5339
      %v5417 = vpop.f32.mrf.mxu0
      %v5418 = vadd.f32 %v5269, %v5417
      %v5419 = vpop.f32.mrf.mxu0
      %v5420 = vadd.f32 %v5271, %v5419
      %5421 = vmatmul.bf16.gmra.mxu0 %v5342
      %v5422 = vpop.f32.mrf.mxu0
      %v5423 = vadd.f32 %v5274, %v5422
      %v5424 = vpop.f32.mrf.mxu0
      %v5425 = vadd.f32 %v5276, %v5424
      %5426 = vmatmul.bf16.gmra.mxu0 %v5345
      %v5427 = vpop.f32.mrf.mxu0
      %v5428 = vadd.f32 %v5279, %v5427
      %v5429 = vpop.f32.mrf.mxu0
      %v5430 = vadd.f32 %v5281, %v5429
      %5431 = vmatmul.bf16.gmra.mxu0 %v5348
      %v5432 = vpop.f32.mrf.mxu0
      %v5433 = vadd.f32 %v5284, %v5432
      %v5434 = vpop.f32.mrf.mxu0
      %v5435 = vadd.f32 %v5286, %v5434
      %5436 = vmatmul.bf16.gmra.mxu0 %v5351
      %v5437 = vpop.f32.mrf.mxu0
      %v5438 = vadd.f32 %v5289, %v5437
      %v5439 = vpop.f32.mrf.mxu0
      %v5440 = vadd.f32 %v5291, %v5439
      %5441 = vdwg.mxu0
      %v5442 = vld [vmem:[#allocation2 + $0x9] sm:$0xff]
      %v5443 = vld [vmem:[#allocation2 + $0x11] sm:$0xff]
      %v5444 = vld [vmem:[#allocation2 + $0x29] sm:$0xff]
      %v5445 = vld [vmem:[#allocation2 + $0x31] sm:$0xff]
      %v5446 = vld [vmem:[#allocation2 + $0x49] sm:$0xff]
      %v5447 = vld [vmem:[#allocation2 + $0x51] sm:$0xff]
      %v5448 = vld [vmem:[#allocation2 + $0x69] sm:$0xff]
      %v5449 = vld [vmem:[#allocation2 + $0x71] sm:$0xff]
      %v5450 = vld [vmem:[#allocation2 + $0x89] sm:$0xff]
      %v5451 = vld [vmem:[#allocation2 + $0x91] sm:$0xff]
      %v5452 = vld [vmem:[#allocation2 + $0xa9] sm:$0xff]
      %v5453 = vld [vmem:[#allocation2 + $0xb1] sm:$0xff]
      %v5454 = vld [vmem:[#allocation2 + $0xc9] sm:$0xff]
      %v5455 = vld [vmem:[#allocation2 + $0xd1] sm:$0xff]
      %v5456 = vld [vmem:[#allocation2 + $0xe9] sm:$0xff]
      %v5457 = vld [vmem:[#allocation2 + $0xf1] sm:$0xff]
      %v5458 = vld [vmem:[#allocation2 + $0x109] sm:$0xff]
      %v5459 = vld [vmem:[#allocation2 + $0x111] sm:$0xff]
      %v5460 = vld [vmem:[#allocation2 + $0x129] sm:$0xff]
      %v5461 = vld [vmem:[#allocation2 + $0x131] sm:$0xff]
      %v5462 = vld [vmem:[#allocation2 + $0x149] sm:$0xff]
      %v5463 = vld [vmem:[#allocation2 + $0x151] sm:$0xff]
      %v5464 = vld [vmem:[#allocation2 + $0x169] sm:$0xff]
      %v5465 = vld [vmem:[#allocation2 + $0x171] sm:$0xff]
      %v5466 = vld [vmem:[#allocation2 + $0x189] sm:$0xff]
      %v5467 = vld [vmem:[#allocation2 + $0x191] sm:$0xff]
      %v5468 = vld [vmem:[#allocation2 + $0x1a9] sm:$0xff]
      %v5469 = vld [vmem:[#allocation2 + $0x1b1] sm:$0xff]
      %v5470 = vld [vmem:[#allocation2 + $0x1c9] sm:$0xff]
      %v5471 = vld [vmem:[#allocation2 + $0x1d1] sm:$0xff]
      %v5472 = vld [vmem:[#allocation2 + $0x1e9] sm:$0xff]
      %v5473 = vld [vmem:[#allocation2 + $0x1f1] sm:$0xff]
      %v5474 = vpack.c.bf16 %v5443, %v5442
      %v5475 = vpack.c.bf16 %v5445, %v5444
      %v5476 = vpack.c.bf16 %v5447, %v5446
      %v5477 = vpack.c.bf16 %v5449, %v5448
      %v5478 = vpack.c.bf16 %v5451, %v5450
      %v5479 = vpack.c.bf16 %v5453, %v5452
      %v5480 = vpack.c.bf16 %v5455, %v5454
      %v5481 = vpack.c.bf16 %v5457, %v5456
      %v5482 = vpack.c.bf16 %v5459, %v5458
      %v5483 = vpack.c.bf16 %v5461, %v5460
      %v5484 = vpack.c.bf16 %v5463, %v5462
      %v5485 = vpack.c.bf16 %v5465, %v5464
      %v5486 = vpack.c.bf16 %v5467, %v5466
      %v5487 = vpack.c.bf16 %v5469, %v5468
      %v5488 = vpack.c.bf16 %v5471, %v5470
      %v5489 = vpack.c.bf16 %v5473, %v5472
      %v5490 = vld [vmem:[%s3 + $0x20] sm:$0xf]
      %v5491 = vld [vmem:[%s3 + $0x24] sm:$0xf]
      %v5492 = vld [vmem:[%s3 + $0x28] sm:$0xf]
      %v5493 = vld [vmem:[%s3 + $0x2c] sm:$0xf]
      %v5498 = vunpack.c.l.b16 %v5490
      %v5499 = vunpack.c.l.b16 %v5491
      %v5500 = vunpack.c.l.b16 %v5492
      %v5501 = vunpack.c.l.b16 %v5493
      %v5502 = vpack.c.b16 %v5499, %v5498
      %v5503 = vpack.c.b16 %v5501, %v5500
      %v5507 = vsel %vm910, %v5474, 0
      %v5510 = vsel %vm910, %v5475, 0
      %v5513 = vsel %vm910, %v5476, 0
      %v5516 = vsel %vm910, %v5477, 0
      %v5519 = vsel %vm910, %v5478, 0
      %v5522 = vsel %vm910, %v5479, 0
      %v5525 = vsel %vm910, %v5480, 0
      %v5528 = vsel %vm910, %v5481, 0
      %v5531 = vsel %vm910, %v5482, 0
      %v5534 = vsel %vm910, %v5483, 0
      %v5537 = vsel %vm910, %v5484, 0
      %v5540 = vsel %vm910, %v5485, 0
      %v5543 = vsel %vm910, %v5486, 0
      %v5546 = vsel %vm910, %v5487, 0
      %v5549 = vsel %vm910, %v5488, 0
      %v5552 = vsel %vm910, %v5489, 0
      %5554 = vmatpush.bf16.msra.mxu0 0
      %5555 = vmatpush.bf16.msra.mxu0 0
      %5556 = vmatpush.bf16.msra.mxu0 0
      %5557 = vmatpush.bf16.msra.mxu0 0
      %5558 = vmatpush.bf16.msra.mxu0 0
      %5559 = vmatpush.bf16.msra.mxu0 0
      %5560 = vmatpush.bf16.msra.mxu0 %v5503
      %5561 = vmatpush.bf16.msra.mxu0 %v5502
      %5562 = vmatmul.bf16.gmra.mxu0 %v5507
      %v5563 = vpop.f32.mrf.mxu0
      %v5564 = vadd.f32 0.0, %v5563
      %v5565 = vpop.f32.mrf.mxu0
      %v5566 = vadd.f32 0.0, %v5565
      %5567 = vmatmul.bf16.gmra.mxu0 %v5510
      %v5568 = vpop.f32.mrf.mxu0
      %v5569 = vadd.f32 0.0, %v5568
      %v5570 = vpop.f32.mrf.mxu0
      %v5571 = vadd.f32 0.0, %v5570
      %5572 = vmatmul.bf16.gmra.mxu0 %v5513
      %v5573 = vpop.f32.mrf.mxu0
      %v5574 = vadd.f32 0.0, %v5573
      %v5575 = vpop.f32.mrf.mxu0
      %v5576 = vadd.f32 0.0, %v5575
      %5577 = vmatmul.bf16.gmra.mxu0 %v5516
      %v5578 = vpop.f32.mrf.mxu0
      %v5579 = vadd.f32 0.0, %v5578
      %v5580 = vpop.f32.mrf.mxu0
      %v5581 = vadd.f32 0.0, %v5580
      %5582 = vmatmul.bf16.gmra.mxu0 %v5519
      %v5583 = vpop.f32.mrf.mxu0
      %v5584 = vadd.f32 0.0, %v5583
      %v5585 = vpop.f32.mrf.mxu0
      %v5586 = vadd.f32 0.0, %v5585
      %5587 = vmatmul.bf16.gmra.mxu0 %v5522
      %v5588 = vpop.f32.mrf.mxu0
      %v5589 = vadd.f32 0.0, %v5588
      %v5590 = vpop.f32.mrf.mxu0
      %v5591 = vadd.f32 0.0, %v5590
      %5592 = vmatmul.bf16.gmra.mxu0 %v5525
      %v5593 = vpop.f32.mrf.mxu0
      %v5594 = vadd.f32 0.0, %v5593
      %v5595 = vpop.f32.mrf.mxu0
      %v5596 = vadd.f32 0.0, %v5595
      %5597 = vmatmul.bf16.gmra.mxu0 %v5528
      %v5598 = vpop.f32.mrf.mxu0
      %v5599 = vadd.f32 0.0, %v5598
      %v5600 = vpop.f32.mrf.mxu0
      %v5601 = vadd.f32 0.0, %v5600
      %5602 = vmatmul.bf16.gmra.mxu0 %v5531
      %v5603 = vpop.f32.mrf.mxu0
      %v5604 = vadd.f32 0.0, %v5603
      %v5605 = vpop.f32.mrf.mxu0
      %v5606 = vadd.f32 0.0, %v5605
      %5607 = vmatmul.bf16.gmra.mxu0 %v5534
      %v5608 = vpop.f32.mrf.mxu0
      %v5609 = vadd.f32 0.0, %v5608
      %v5610 = vpop.f32.mrf.mxu0
      %v5611 = vadd.f32 0.0, %v5610
      %5612 = vmatmul.bf16.gmra.mxu0 %v5537
      %v5613 = vpop.f32.mrf.mxu0
      %v5614 = vadd.f32 0.0, %v5613
      %v5615 = vpop.f32.mrf.mxu0
      %v5616 = vadd.f32 0.0, %v5615
      %5617 = vmatmul.bf16.gmra.mxu0 %v5540
      %v5618 = vpop.f32.mrf.mxu0
      %v5619 = vadd.f32 0.0, %v5618
      %v5620 = vpop.f32.mrf.mxu0
      %v5621 = vadd.f32 0.0, %v5620
      %5622 = vmatmul.bf16.gmra.mxu0 %v5543
      %v5623 = vpop.f32.mrf.mxu0
      %v5624 = vadd.f32 0.0, %v5623
      %v5625 = vpop.f32.mrf.mxu0
      %v5626 = vadd.f32 0.0, %v5625
      %5627 = vmatmul.bf16.gmra.mxu0 %v5546
      %v5628 = vpop.f32.mrf.mxu0
      %v5629 = vadd.f32 0.0, %v5628
      %v5630 = vpop.f32.mrf.mxu0
      %v5631 = vadd.f32 0.0, %v5630
      %5632 = vmatmul.bf16.gmra.mxu0 %v5549
      %v5633 = vpop.f32.mrf.mxu0
      %v5634 = vadd.f32 0.0, %v5633
      %v5635 = vpop.f32.mrf.mxu0
      %v5636 = vadd.f32 0.0, %v5635
      %5637 = vmatmul.bf16.gmra.mxu0 %v5552
      %v5638 = vpop.f32.mrf.mxu0
      %v5639 = vadd.f32 0.0, %v5638
      %v5640 = vpop.f32.mrf.mxu0
      %v5641 = vadd.f32 0.0, %v5640
      %5642 = vdwg.mxu0
      %v5643 = vadd.f32 %v5363, %v5564
      %v5644 = vadd.f32 %v5365, %v5566
      %v5645 = vadd.f32 %v5368, %v5569
      %v5646 = vadd.f32 %v5370, %v5571
      %v5647 = vadd.f32 %v5373, %v5574
      %v5648 = vadd.f32 %v5375, %v5576
      %v5649 = vadd.f32 %v5378, %v5579
      %v5650 = vadd.f32 %v5380, %v5581
      %v5651 = vadd.f32 %v5383, %v5584
      %v5652 = vadd.f32 %v5385, %v5586
      %v5653 = vadd.f32 %v5388, %v5589
      %v5654 = vadd.f32 %v5390, %v5591
      %v5655 = vadd.f32 %v5393, %v5594
      %v5656 = vadd.f32 %v5395, %v5596
      %v5657 = vadd.f32 %v5398, %v5599
      %v5658 = vadd.f32 %v5400, %v5601
      %v5659 = vadd.f32 %v5403, %v5604
      %v5660 = vadd.f32 %v5405, %v5606
      %v5661 = vadd.f32 %v5408, %v5609
      %v5662 = vadd.f32 %v5410, %v5611
      %v5663 = vadd.f32 %v5413, %v5614
      %v5664 = vadd.f32 %v5415, %v5616
      %v5665 = vadd.f32 %v5418, %v5619
      %v5666 = vadd.f32 %v5420, %v5621
      %v5667 = vadd.f32 %v5423, %v5624
      %v5668 = vadd.f32 %v5425, %v5626
      %v5669 = vadd.f32 %v5428, %v5629
      %v5670 = vadd.f32 %v5430, %v5631
      %v5671 = vadd.f32 %v5433, %v5634
      %v5672 = vadd.f32 %v5435, %v5636
      %v5673 = vadd.f32 %v5438, %v5639
      %v5674 = vadd.f32 %v5440, %v5641
      %s5675 = scalar_lea.vmem [#allocation2], 32
      %v5676 = vld [vmem:[%s5675 + $0x7] sm:$0xff]
      %v5677 = vld [vmem:[%s5675 + $0xf] sm:$0xff]
      %v5678 = vld [vmem:[%s5675 + $0x27] sm:$0xff]
      %v5679 = vld [vmem:[%s5675 + $0x2f] sm:$0xff]
      %v5680 = vld [vmem:[%s5675 + $0x47] sm:$0xff]
      %v5681 = vld [vmem:[%s5675 + $0x4f] sm:$0xff]
      %v5682 = vld [vmem:[%s5675 + $0x67] sm:$0xff]
      %v5683 = vld [vmem:[%s5675 + $0x6f] sm:$0xff]
      %v5684 = vld [vmem:[%s5675 + $0x87] sm:$0xff]
      %v5685 = vld [vmem:[%s5675 + $0x8f] sm:$0xff]
      %v5686 = vld [vmem:[%s5675 + $0xa7] sm:$0xff]
      %v5687 = vld [vmem:[%s5675 + $0xaf] sm:$0xff]
      %v5688 = vld [vmem:[%s5675 + $0xc7] sm:$0xff]
      %v5689 = vld [vmem:[%s5675 + $0xcf] sm:$0xff]
      %v5690 = vld [vmem:[%s5675 + $0xe7] sm:$0xff]
      %v5691 = vld [vmem:[%s5675 + $0xef] sm:$0xff]
      %v5692 = vld [vmem:[%s5675 + $0x107] sm:$0xff]
      %v5693 = vld [vmem:[%s5675 + $0x10f] sm:$0xff]
      %v5694 = vld [vmem:[%s5675 + $0x127] sm:$0xff]
      %v5695 = vld [vmem:[%s5675 + $0x12f] sm:$0xff]
      %v5696 = vld [vmem:[%s5675 + $0x147] sm:$0xff]
      %v5697 = vld [vmem:[%s5675 + $0x14f] sm:$0xff]
      %v5698 = vld [vmem:[%s5675 + $0x167] sm:$0xff]
      %v5699 = vld [vmem:[%s5675 + $0x16f] sm:$0xff]
      %v5700 = vld [vmem:[%s5675 + $0x187] sm:$0xff]
      %v5701 = vld [vmem:[%s5675 + $0x18f] sm:$0xff]
      %v5702 = vld [vmem:[%s5675 + $0x1a7] sm:$0xff]
      %v5703 = vld [vmem:[%s5675 + $0x1af] sm:$0xff]
      %v5704 = vld [vmem:[%s5675 + $0x1c7] sm:$0xff]
      %v5705 = vld [vmem:[%s5675 + $0x1cf] sm:$0xff]
      %v5706 = vld [vmem:[%s5675 + $0x1e7] sm:$0xff]
      %v5707 = vld [vmem:[%s5675 + $0x1ef] sm:$0xff]
      %v5708 = vpack.c.bf16 %v5677, %v5676
      %v5709 = vpack.c.bf16 %v5679, %v5678
      %v5710 = vpack.c.bf16 %v5681, %v5680
      %v5711 = vpack.c.bf16 %v5683, %v5682
      %v5712 = vpack.c.bf16 %v5685, %v5684
      %v5713 = vpack.c.bf16 %v5687, %v5686
      %v5714 = vpack.c.bf16 %v5689, %v5688
      %v5715 = vpack.c.bf16 %v5691, %v5690
      %v5716 = vpack.c.bf16 %v5693, %v5692
      %v5717 = vpack.c.bf16 %v5695, %v5694
      %v5718 = vpack.c.bf16 %v5697, %v5696
      %v5719 = vpack.c.bf16 %v5699, %v5698
      %v5720 = vpack.c.bf16 %v5701, %v5700
      %v5721 = vpack.c.bf16 %v5703, %v5702
      %v5722 = vpack.c.bf16 %v5705, %v5704
      %v5723 = vpack.c.bf16 %v5707, %v5706
      %v5724 = vld [vmem:[%s3 + $0x30] sm:$0xf]
      %v5725 = vld [vmem:[%s3 + $0x34] sm:$0xf]
      %v5726 = vld [vmem:[%s3 + $0x38] sm:$0xf]
      %v5727 = vld [vmem:[%s3 + $0x3c] sm:$0xf]
      %v5732 = vunpack.c.l.b16 %v5724
      %v5733 = vunpack.c.l.b16 %v5725
      %v5734 = vunpack.c.l.b16 %v5726
      %v5735 = vunpack.c.l.b16 %v5727
      %v5736 = vpack.c.b16 %v5733, %v5732
      %v5737 = vpack.c.b16 %v5735, %v5734
      %v5741 = vsel %vm910, %v5708, 0
      %v5744 = vsel %vm910, %v5709, 0
      %v5747 = vsel %vm910, %v5710, 0
      %v5750 = vsel %vm910, %v5711, 0
      %v5753 = vsel %vm910, %v5712, 0
      %v5756 = vsel %vm910, %v5713, 0
      %v5759 = vsel %vm910, %v5714, 0
      %v5762 = vsel %vm910, %v5715, 0
      %v5765 = vsel %vm910, %v5716, 0
      %v5768 = vsel %vm910, %v5717, 0
      %v5771 = vsel %vm910, %v5718, 0
      %v5774 = vsel %vm910, %v5719, 0
      %v5777 = vsel %vm910, %v5720, 0
      %v5780 = vsel %vm910, %v5721, 0
      %v5783 = vsel %vm910, %v5722, 0
      %v5786 = vsel %vm910, %v5723, 0
      %5788 = vmatpush.bf16.msra.mxu0 0
      %5789 = vmatpush.bf16.msra.mxu0 0
      %5790 = vmatpush.bf16.msra.mxu0 0
      %5791 = vmatpush.bf16.msra.mxu0 0
      %5792 = vmatpush.bf16.msra.mxu0 0
      %5793 = vmatpush.bf16.msra.mxu0 0
      %5794 = vmatpush.bf16.msra.mxu0 %v5737
      %5795 = vmatpush.bf16.msra.mxu0 %v5736
      %5796 = vmatmul.bf16.gmra.mxu0 %v5741
      %v5797 = vpop.f32.mrf.mxu0
      %v5798 = vadd.f32 0.0, %v5797
      %v5799 = vpop.f32.mrf.mxu0
      %v5800 = vadd.f32 0.0, %v5799
      %5801 = vmatmul.bf16.gmra.mxu0 %v5744
      %v5802 = vpop.f32.mrf.mxu0
      %v5803 = vadd.f32 0.0, %v5802
      %v5804 = vpop.f32.mrf.mxu0
      %v5805 = vadd.f32 0.0, %v5804
      %5806 = vmatmul.bf16.gmra.mxu0 %v5747
      %v5807 = vpop.f32.mrf.mxu0
      %v5808 = vadd.f32 0.0, %v5807
      %v5809 = vpop.f32.mrf.mxu0
      %v5810 = vadd.f32 0.0, %v5809
      %5811 = vmatmul.bf16.gmra.mxu0 %v5750
      %v5812 = vpop.f32.mrf.mxu0
      %v5813 = vadd.f32 0.0, %v5812
      %v5814 = vpop.f32.mrf.mxu0
      %v5815 = vadd.f32 0.0, %v5814
      %5816 = vmatmul.bf16.gmra.mxu0 %v5753
      %v5817 = vpop.f32.mrf.mxu0
      %v5818 = vadd.f32 0.0, %v5817
      %v5819 = vpop.f32.mrf.mxu0
      %v5820 = vadd.f32 0.0, %v5819
      %5821 = vmatmul.bf16.gmra.mxu0 %v5756
      %v5822 = vpop.f32.mrf.mxu0
      %v5823 = vadd.f32 0.0, %v5822
      %v5824 = vpop.f32.mrf.mxu0
      %v5825 = vadd.f32 0.0, %v5824
      %5826 = vmatmul.bf16.gmra.mxu0 %v5759
      %v5827 = vpop.f32.mrf.mxu0
      %v5828 = vadd.f32 0.0, %v5827
      %v5829 = vpop.f32.mrf.mxu0
      %v5830 = vadd.f32 0.0, %v5829
      %5831 = vmatmul.bf16.gmra.mxu0 %v5762
      %v5832 = vpop.f32.mrf.mxu0
      %v5833 = vadd.f32 0.0, %v5832
      %v5834 = vpop.f32.mrf.mxu0
      %v5835 = vadd.f32 0.0, %v5834
      %5836 = vmatmul.bf16.gmra.mxu0 %v5765
      %v5837 = vpop.f32.mrf.mxu0
      %v5838 = vadd.f32 0.0, %v5837
      %v5839 = vpop.f32.mrf.mxu0
      %v5840 = vadd.f32 0.0, %v5839
      %5841 = vmatmul.bf16.gmra.mxu0 %v5768
      %v5842 = vpop.f32.mrf.mxu0
      %v5843 = vadd.f32 0.0, %v5842
      %v5844 = vpop.f32.mrf.mxu0
      %v5845 = vadd.f32 0.0, %v5844
      %5846 = vmatmul.bf16.gmra.mxu0 %v5771
      %v5847 = vpop.f32.mrf.mxu0
      %v5848 = vadd.f32 0.0, %v5847
      %v5849 = vpop.f32.mrf.mxu0
      %v5850 = vadd.f32 0.0, %v5849
      %5851 = vmatmul.bf16.gmra.mxu0 %v5774
      %v5852 = vpop.f32.mrf.mxu0
      %v5853 = vadd.f32 0.0, %v5852
      %v5854 = vpop.f32.mrf.mxu0
      %v5855 = vadd.f32 0.0, %v5854
      %5856 = vmatmul.bf16.gmra.mxu0 %v5777
      %v5857 = vpop.f32.mrf.mxu0
      %v5858 = vadd.f32 0.0, %v5857
      %v5859 = vpop.f32.mrf.mxu0
      %v5860 = vadd.f32 0.0, %v5859
      %5861 = vmatmul.bf16.gmra.mxu0 %v5780
      %v5862 = vpop.f32.mrf.mxu0
      %v5863 = vadd.f32 0.0, %v5862
      %v5864 = vpop.f32.mrf.mxu0
      %v5865 = vadd.f32 0.0, %v5864
      %5866 = vmatmul.bf16.gmra.mxu0 %v5783
      %v5867 = vpop.f32.mrf.mxu0
      %v5868 = vadd.f32 0.0, %v5867
      %v5869 = vpop.f32.mrf.mxu0
      %v5870 = vadd.f32 0.0, %v5869
      %5871 = vmatmul.bf16.gmra.mxu0 %v5786
      %v5872 = vpop.f32.mrf.mxu0
      %v5873 = vadd.f32 0.0, %v5872
      %v5874 = vpop.f32.mrf.mxu0
      %v5875 = vadd.f32 0.0, %v5874
      %5876 = vdwg.mxu0
      %v5877 = vadd.f32 %v5643, %v5798
      %v5878 = vadd.f32 %v5644, %v5800
      %v5879 = vadd.f32 %v5645, %v5803
      %v5880 = vadd.f32 %v5646, %v5805
      %v5881 = vadd.f32 %v5647, %v5808
      %v5882 = vadd.f32 %v5648, %v5810
      %v5883 = vadd.f32 %v5649, %v5813
      %v5884 = vadd.f32 %v5650, %v5815
      %v5885 = vadd.f32 %v5651, %v5818
      %v5886 = vadd.f32 %v5652, %v5820
      %v5887 = vadd.f32 %v5653, %v5823
      %v5888 = vadd.f32 %v5654, %v5825
      %v5889 = vadd.f32 %v5655, %v5828
      %v5890 = vadd.f32 %v5656, %v5830
      %v5891 = vadd.f32 %v5657, %v5833
      %v5892 = vadd.f32 %v5658, %v5835
      %v5893 = vadd.f32 %v5659, %v5838
      %v5894 = vadd.f32 %v5660, %v5840
      %v5895 = vadd.f32 %v5661, %v5843
      %v5896 = vadd.f32 %v5662, %v5845
      %v5897 = vadd.f32 %v5663, %v5848
      %v5898 = vadd.f32 %v5664, %v5850
      %v5899 = vadd.f32 %v5665, %v5853
      %v5900 = vadd.f32 %v5666, %v5855
      %v5901 = vadd.f32 %v5667, %v5858
      %v5902 = vadd.f32 %v5668, %v5860
      %v5903 = vadd.f32 %v5669, %v5863
      %v5904 = vadd.f32 %v5670, %v5865
      %v5905 = vadd.f32 %v5671, %v5868
      %v5906 = vadd.f32 %v5672, %v5870
      %v5907 = vadd.f32 %v5673, %v5873
      %v5908 = vadd.f32 %v5674, %v5875
      %v5909 = vld [vmem:[%s5675 + $0x8] sm:$0xff]
      %v5910 = vld [vmem:[%s5675 + $0x10] sm:$0xff]
      %v5911 = vld [vmem:[%s5675 + $0x28] sm:$0xff]
      %v5912 = vld [vmem:[%s5675 + $0x30] sm:$0xff]
      %v5913 = vld [vmem:[%s5675 + $0x48] sm:$0xff]
      %v5914 = vld [vmem:[%s5675 + $0x50] sm:$0xff]
      %v5915 = vld [vmem:[%s5675 + $0x68] sm:$0xff]
      %v5916 = vld [vmem:[%s5675 + $0x70] sm:$0xff]
      %v5917 = vld [vmem:[%s5675 + $0x88] sm:$0xff]
      %v5918 = vld [vmem:[%s5675 + $0x90] sm:$0xff]
      %v5919 = vld [vmem:[%s5675 + $0xa8] sm:$0xff]
      %v5920 = vld [vmem:[%s5675 + $0xb0] sm:$0xff]
      %v5921 = vld [vmem:[%s5675 + $0xc8] sm:$0xff]
      %v5922 = vld [vmem:[%s5675 + $0xd0] sm:$0xff]
      %v5923 = vld [vmem:[%s5675 + $0xe8] sm:$0xff]
      %v5924 = vld [vmem:[%s5675 + $0xf0] sm:$0xff]
      %v5925 = vld [vmem:[%s5675 + $0x108] sm:$0xff]
      %v5926 = vld [vmem:[%s5675 + $0x110] sm:$0xff]
      %v5927 = vld [vmem:[%s5675 + $0x128] sm:$0xff]
      %v5928 = vld [vmem:[%s5675 + $0x130] sm:$0xff]
      %v5929 = vld [vmem:[%s5675 + $0x148] sm:$0xff]
      %v5930 = vld [vmem:[%s5675 + $0x150] sm:$0xff]
      %v5931 = vld [vmem:[%s5675 + $0x168] sm:$0xff]
      %v5932 = vld [vmem:[%s5675 + $0x170] sm:$0xff]
      %v5933 = vld [vmem:[%s5675 + $0x188] sm:$0xff]
      %v5934 = vld [vmem:[%s5675 + $0x190] sm:$0xff]
      %v5935 = vld [vmem:[%s5675 + $0x1a8] sm:$0xff]
      %v5936 = vld [vmem:[%s5675 + $0x1b0] sm:$0xff]
      %v5937 = vld [vmem:[%s5675 + $0x1c8] sm:$0xff]
      %v5938 = vld [vmem:[%s5675 + $0x1d0] sm:$0xff]
      %v5939 = vld [vmem:[%s5675 + $0x1e8] sm:$0xff]
      %v5940 = vld [vmem:[%s5675 + $0x1f0] sm:$0xff]
      %v5941 = vpack.c.bf16 %v5910, %v5909
      %v5942 = vpack.c.bf16 %v5912, %v5911
      %v5943 = vpack.c.bf16 %v5914, %v5913
      %v5944 = vpack.c.bf16 %v5916, %v5915
      %v5945 = vpack.c.bf16 %v5918, %v5917
      %v5946 = vpack.c.bf16 %v5920, %v5919
      %v5947 = vpack.c.bf16 %v5922, %v5921
      %v5948 = vpack.c.bf16 %v5924, %v5923
      %v5949 = vpack.c.bf16 %v5926, %v5925
      %v5950 = vpack.c.bf16 %v5928, %v5927
      %v5951 = vpack.c.bf16 %v5930, %v5929
      %v5952 = vpack.c.bf16 %v5932, %v5931
      %v5953 = vpack.c.bf16 %v5934, %v5933
      %v5954 = vpack.c.bf16 %v5936, %v5935
      %v5955 = vpack.c.bf16 %v5938, %v5937
      %v5956 = vpack.c.bf16 %v5940, %v5939
      %v5957 = vld [vmem:[%s3 + $0x40] sm:$0xf]
      %v5958 = vld [vmem:[%s3 + $0x44] sm:$0xf]
      %v5959 = vld [vmem:[%s3 + $0x48] sm:$0xf]
      %v5960 = vld [vmem:[%s3 + $0x4c] sm:$0xf]
      %v5965 = vunpack.c.l.b16 %v5957
      %v5966 = vunpack.c.l.b16 %v5958
      %v5967 = vunpack.c.l.b16 %v5959
      %v5968 = vunpack.c.l.b16 %v5960
      %v5969 = vpack.c.b16 %v5966, %v5965
      %v5970 = vpack.c.b16 %v5968, %v5967
      %v5974 = vsel %vm910, %v5941, 0
      %v5977 = vsel %vm910, %v5942, 0
      %v5980 = vsel %vm910, %v5943, 0
      %v5983 = vsel %vm910, %v5944, 0
      %v5986 = vsel %vm910, %v5945, 0
      %v5989 = vsel %vm910, %v5946, 0
      %v5992 = vsel %vm910, %v5947, 0
      %v5995 = vsel %vm910, %v5948, 0
      %v5998 = vsel %vm910, %v5949, 0
      %v6001 = vsel %vm910, %v5950, 0
      %v6004 = vsel %vm910, %v5951, 0
      %v6007 = vsel %vm910, %v5952, 0
      %v6010 = vsel %vm910, %v5953, 0
      %v6013 = vsel %vm910, %v5954, 0
      %v6016 = vsel %vm910, %v5955, 0
      %v6019 = vsel %vm910, %v5956, 0
      %6021 = vmatpush.bf16.msra.mxu0 0
      %6022 = vmatpush.bf16.msra.mxu0 0
      %6023 = vmatpush.bf16.msra.mxu0 0
      %6024 = vmatpush.bf16.msra.mxu0 0
      %6025 = vmatpush.bf16.msra.mxu0 0
      %6026 = vmatpush.bf16.msra.mxu0 0
      %6027 = vmatpush.bf16.msra.mxu0 %v5970
      %6028 = vmatpush.bf16.msra.mxu0 %v5969
      %6029 = vmatmul.bf16.gmra.mxu0 %v5974
      %v6030 = vpop.f32.mrf.mxu0
      %v6031 = vadd.f32 0.0, %v6030
      %v6032 = vpop.f32.mrf.mxu0
      %v6033 = vadd.f32 0.0, %v6032
      %6034 = vmatmul.bf16.gmra.mxu0 %v5977
      %v6035 = vpop.f32.mrf.mxu0
      %v6036 = vadd.f32 0.0, %v6035
      %v6037 = vpop.f32.mrf.mxu0
      %v6038 = vadd.f32 0.0, %v6037
      %6039 = vmatmul.bf16.gmra.mxu0 %v5980
      %v6040 = vpop.f32.mrf.mxu0
      %v6041 = vadd.f32 0.0, %v6040
      %v6042 = vpop.f32.mrf.mxu0
      %v6043 = vadd.f32 0.0, %v6042
      %6044 = vmatmul.bf16.gmra.mxu0 %v5983
      %v6045 = vpop.f32.mrf.mxu0
      %v6046 = vadd.f32 0.0, %v6045
      %v6047 = vpop.f32.mrf.mxu0
      %v6048 = vadd.f32 0.0, %v6047
      %6049 = vmatmul.bf16.gmra.mxu0 %v5986
      %v6050 = vpop.f32.mrf.mxu0
      %v6051 = vadd.f32 0.0, %v6050
      %v6052 = vpop.f32.mrf.mxu0
      %v6053 = vadd.f32 0.0, %v6052
      %6054 = vmatmul.bf16.gmra.mxu0 %v5989
      %v6055 = vpop.f32.mrf.mxu0
      %v6056 = vadd.f32 0.0, %v6055
      %v6057 = vpop.f32.mrf.mxu0
      %v6058 = vadd.f32 0.0, %v6057
      %6059 = vmatmul.bf16.gmra.mxu0 %v5992
      %v6060 = vpop.f32.mrf.mxu0
      %v6061 = vadd.f32 0.0, %v6060
      %v6062 = vpop.f32.mrf.mxu0
      %v6063 = vadd.f32 0.0, %v6062
      %6064 = vmatmul.bf16.gmra.mxu0 %v5995
      %v6065 = vpop.f32.mrf.mxu0
      %v6066 = vadd.f32 0.0, %v6065
      %v6067 = vpop.f32.mrf.mxu0
      %v6068 = vadd.f32 0.0, %v6067
      %6069 = vmatmul.bf16.gmra.mxu0 %v5998
      %v6070 = vpop.f32.mrf.mxu0
      %v6071 = vadd.f32 0.0, %v6070
      %v6072 = vpop.f32.mrf.mxu0
      %v6073 = vadd.f32 0.0, %v6072
      %6074 = vmatmul.bf16.gmra.mxu0 %v6001
      %v6075 = vpop.f32.mrf.mxu0
      %v6076 = vadd.f32 0.0, %v6075
      %v6077 = vpop.f32.mrf.mxu0
      %v6078 = vadd.f32 0.0, %v6077
      %6079 = vmatmul.bf16.gmra.mxu0 %v6004
      %v6080 = vpop.f32.mrf.mxu0
      %v6081 = vadd.f32 0.0, %v6080
      %v6082 = vpop.f32.mrf.mxu0
      %v6083 = vadd.f32 0.0, %v6082
      %6084 = vmatmul.bf16.gmra.mxu0 %v6007
      %v6085 = vpop.f32.mrf.mxu0
      %v6086 = vadd.f32 0.0, %v6085
      %v6087 = vpop.f32.mrf.mxu0
      %v6088 = vadd.f32 0.0, %v6087
      %6089 = vmatmul.bf16.gmra.mxu0 %v6010
      %v6090 = vpop.f32.mrf.mxu0
      %v6091 = vadd.f32 0.0, %v6090
      %v6092 = vpop.f32.mrf.mxu0
      %v6093 = vadd.f32 0.0, %v6092
      %6094 = vmatmul.bf16.gmra.mxu0 %v6013
      %v6095 = vpop.f32.mrf.mxu0
      %v6096 = vadd.f32 0.0, %v6095
      %v6097 = vpop.f32.mrf.mxu0
      %v6098 = vadd.f32 0.0, %v6097
      %6099 = vmatmul.bf16.gmra.mxu0 %v6016
      %v6100 = vpop.f32.mrf.mxu0
      %v6101 = vadd.f32 0.0, %v6100
      %v6102 = vpop.f32.mrf.mxu0
      %v6103 = vadd.f32 0.0, %v6102
      %6104 = vmatmul.bf16.gmra.mxu0 %v6019
      %v6105 = vpop.f32.mrf.mxu0
      %v6106 = vadd.f32 0.0, %v6105
      %v6107 = vpop.f32.mrf.mxu0
      %v6108 = vadd.f32 0.0, %v6107
      %6109 = vdwg.mxu0
      %v6110 = vadd.f32 %v5877, %v6031
      %v6111 = vadd.f32 %v5878, %v6033
      %v6112 = vadd.f32 %v5879, %v6036
      %v6113 = vadd.f32 %v5880, %v6038
      %v6114 = vadd.f32 %v5881, %v6041
      %v6115 = vadd.f32 %v5882, %v6043
      %v6116 = vadd.f32 %v5883, %v6046
      %v6117 = vadd.f32 %v5884, %v6048
      %v6118 = vadd.f32 %v5885, %v6051
      %v6119 = vadd.f32 %v5886, %v6053
      %v6120 = vadd.f32 %v5887, %v6056
      %v6121 = vadd.f32 %v5888, %v6058
      %v6122 = vadd.f32 %v5889, %v6061
      %v6123 = vadd.f32 %v5890, %v6063
      %v6124 = vadd.f32 %v5891, %v6066
      %v6125 = vadd.f32 %v5892, %v6068
      %v6126 = vadd.f32 %v5893, %v6071
      %v6127 = vadd.f32 %v5894, %v6073
      %v6128 = vadd.f32 %v5895, %v6076
      %v6129 = vadd.f32 %v5896, %v6078
      %v6130 = vadd.f32 %v5897, %v6081
      %v6131 = vadd.f32 %v5898, %v6083
      %v6132 = vadd.f32 %v5899, %v6086
      %v6133 = vadd.f32 %v5900, %v6088
      %v6134 = vadd.f32 %v5901, %v6091
      %v6135 = vadd.f32 %v5902, %v6093
      %v6136 = vadd.f32 %v5903, %v6096
      %v6137 = vadd.f32 %v5904, %v6098
      %v6138 = vadd.f32 %v5905, %v6101
      %v6139 = vadd.f32 %v5906, %v6103
      %v6140 = vadd.f32 %v5907, %v6106
      %v6141 = vadd.f32 %v5908, %v6108
      %v6142 = vld [vmem:[%s5675 + $0x9] sm:$0xff]
      %v6143 = vld [vmem:[%s5675 + $0x11] sm:$0xff]
      %v6144 = vld [vmem:[%s5675 + $0x29] sm:$0xff]
      %v6145 = vld [vmem:[%s5675 + $0x31] sm:$0xff]
      %v6146 = vld [vmem:[%s5675 + $0x49] sm:$0xff]
      %v6147 = vld [vmem:[%s5675 + $0x51] sm:$0xff]
      %v6148 = vld [vmem:[%s5675 + $0x69] sm:$0xff]
      %v6149 = vld [vmem:[%s5675 + $0x71] sm:$0xff]
      %v6150 = vld [vmem:[%s5675 + $0x89] sm:$0xff]
      %v6151 = vld [vmem:[%s5675 + $0x91] sm:$0xff]
      %v6152 = vld [vmem:[%s5675 + $0xa9] sm:$0xff]
      %v6153 = vld [vmem:[%s5675 + $0xb1] sm:$0xff]
      %v6154 = vld [vmem:[%s5675 + $0xc9] sm:$0xff]
      %v6155 = vld [vmem:[%s5675 + $0xd1] sm:$0xff]
      %v6156 = vld [vmem:[%s5675 + $0xe9] sm:$0xff]
      %v6157 = vld [vmem:[%s5675 + $0xf1] sm:$0xff]
      %v6158 = vld [vmem:[%s5675 + $0x109] sm:$0xff]
      %v6159 = vld [vmem:[%s5675 + $0x111] sm:$0xff]
      %v6160 = vld [vmem:[%s5675 + $0x129] sm:$0xff]
      %v6161 = vld [vmem:[%s5675 + $0x131] sm:$0xff]
      %v6162 = vld [vmem:[%s5675 + $0x149] sm:$0xff]
      %v6163 = vld [vmem:[%s5675 + $0x151] sm:$0xff]
      %v6164 = vld [vmem:[%s5675 + $0x169] sm:$0xff]
      %v6165 = vld [vmem:[%s5675 + $0x171] sm:$0xff]
      %v6166 = vld [vmem:[%s5675 + $0x189] sm:$0xff]
      %v6167 = vld [vmem:[%s5675 + $0x191] sm:$0xff]
      %v6168 = vld [vmem:[%s5675 + $0x1a9] sm:$0xff]
      %v6169 = vld [vmem:[%s5675 + $0x1b1] sm:$0xff]
      %v6170 = vld [vmem:[%s5675 + $0x1c9] sm:$0xff]
      %v6171 = vld [vmem:[%s5675 + $0x1d1] sm:$0xff]
      %v6172 = vld [vmem:[%s5675 + $0x1e9] sm:$0xff]
      %v6173 = vld [vmem:[%s5675 + $0x1f1] sm:$0xff]
      %v6174 = vpack.c.bf16 %v6143, %v6142
      %v6175 = vpack.c.bf16 %v6145, %v6144
      %v6176 = vpack.c.bf16 %v6147, %v6146
      %v6177 = vpack.c.bf16 %v6149, %v6148
      %v6178 = vpack.c.bf16 %v6151, %v6150
      %v6179 = vpack.c.bf16 %v6153, %v6152
      %v6180 = vpack.c.bf16 %v6155, %v6154
      %v6181 = vpack.c.bf16 %v6157, %v6156
      %v6182 = vpack.c.bf16 %v6159, %v6158
      %v6183 = vpack.c.bf16 %v6161, %v6160
      %v6184 = vpack.c.bf16 %v6163, %v6162
      %v6185 = vpack.c.bf16 %v6165, %v6164
      %v6186 = vpack.c.bf16 %v6167, %v6166
      %v6187 = vpack.c.bf16 %v6169, %v6168
      %v6188 = vpack.c.bf16 %v6171, %v6170
      %v6189 = vpack.c.bf16 %v6173, %v6172
      %v6190 = vld [vmem:[%s3 + $0x50] sm:$0xf]
      %v6191 = vld [vmem:[%s3 + $0x54] sm:$0xf]
      %v6192 = vld [vmem:[%s3 + $0x58] sm:$0xf]
      %v6193 = vld [vmem:[%s3 + $0x5c] sm:$0xf]
      %v6198 = vunpack.c.l.b16 %v6190
      %v6199 = vunpack.c.l.b16 %v6191
      %v6200 = vunpack.c.l.b16 %v6192
      %v6201 = vunpack.c.l.b16 %v6193
      %v6202 = vpack.c.b16 %v6199, %v6198
      %v6203 = vpack.c.b16 %v6201, %v6200
      %v6207 = vsel %vm910, %v6174, 0
      %v6210 = vsel %vm910, %v6175, 0
      %v6213 = vsel %vm910, %v6176, 0
      %v6216 = vsel %vm910, %v6177, 0
      %v6219 = vsel %vm910, %v6178, 0
      %v6222 = vsel %vm910, %v6179, 0
      %v6225 = vsel %vm910, %v6180, 0
      %v6228 = vsel %vm910, %v6181, 0
      %v6231 = vsel %vm910, %v6182, 0
      %v6234 = vsel %vm910, %v6183, 0
      %v6237 = vsel %vm910, %v6184, 0
      %v6240 = vsel %vm910, %v6185, 0
      %v6243 = vsel %vm910, %v6186, 0
      %v6246 = vsel %vm910, %v6187, 0
      %v6249 = vsel %vm910, %v6188, 0
      %v6252 = vsel %vm910, %v6189, 0
      %6254 = vmatpush.bf16.msra.mxu0 0
      %6255 = vmatpush.bf16.msra.mxu0 0
      %6256 = vmatpush.bf16.msra.mxu0 0
      %6257 = vmatpush.bf16.msra.mxu0 0
      %6258 = vmatpush.bf16.msra.mxu0 0
      %6259 = vmatpush.bf16.msra.mxu0 0
      %6260 = vmatpush.bf16.msra.mxu0 %v6203
      %6261 = vmatpush.bf16.msra.mxu0 %v6202
      %6262 = vmatmul.bf16.gmra.mxu0 %v6207
      %v6263 = vpop.f32.mrf.mxu0
      %v6264 = vadd.f32 0.0, %v6263
      %v6265 = vpop.f32.mrf.mxu0
      %v6266 = vadd.f32 0.0, %v6265
      %6267 = vmatmul.bf16.gmra.mxu0 %v6210
      %v6268 = vpop.f32.mrf.mxu0
      %v6269 = vadd.f32 0.0, %v6268
      %v6270 = vpop.f32.mrf.mxu0
      %v6271 = vadd.f32 0.0, %v6270
      %6272 = vmatmul.bf16.gmra.mxu0 %v6213
      %v6273 = vpop.f32.mrf.mxu0
      %v6274 = vadd.f32 0.0, %v6273
      %v6275 = vpop.f32.mrf.mxu0
      %v6276 = vadd.f32 0.0, %v6275
      %6277 = vmatmul.bf16.gmra.mxu0 %v6216
      %v6278 = vpop.f32.mrf.mxu0
      %v6279 = vadd.f32 0.0, %v6278
      %v6280 = vpop.f32.mrf.mxu0
      %v6281 = vadd.f32 0.0, %v6280
      %6282 = vmatmul.bf16.gmra.mxu0 %v6219
      %v6283 = vpop.f32.mrf.mxu0
      %v6284 = vadd.f32 0.0, %v6283
      %v6285 = vpop.f32.mrf.mxu0
      %v6286 = vadd.f32 0.0, %v6285
      %6287 = vmatmul.bf16.gmra.mxu0 %v6222
      %v6288 = vpop.f32.mrf.mxu0
      %v6289 = vadd.f32 0.0, %v6288
      %v6290 = vpop.f32.mrf.mxu0
      %v6291 = vadd.f32 0.0, %v6290
      %6292 = vmatmul.bf16.gmra.mxu0 %v6225
      %v6293 = vpop.f32.mrf.mxu0
      %v6294 = vadd.f32 0.0, %v6293
      %v6295 = vpop.f32.mrf.mxu0
      %v6296 = vadd.f32 0.0, %v6295
      %6297 = vmatmul.bf16.gmra.mxu0 %v6228
      %v6298 = vpop.f32.mrf.mxu0
      %v6299 = vadd.f32 0.0, %v6298
      %v6300 = vpop.f32.mrf.mxu0
      %v6301 = vadd.f32 0.0, %v6300
      %6302 = vmatmul.bf16.gmra.mxu0 %v6231
      %v6303 = vpop.f32.mrf.mxu0
      %v6304 = vadd.f32 0.0, %v6303
      %v6305 = vpop.f32.mrf.mxu0
      %v6306 = vadd.f32 0.0, %v6305
      %6307 = vmatmul.bf16.gmra.mxu0 %v6234
      %v6308 = vpop.f32.mrf.mxu0
      %v6309 = vadd.f32 0.0, %v6308
      %v6310 = vpop.f32.mrf.mxu0
      %v6311 = vadd.f32 0.0, %v6310
      %6312 = vmatmul.bf16.gmra.mxu0 %v6237
      %v6313 = vpop.f32.mrf.mxu0
      %v6314 = vadd.f32 0.0, %v6313
      %v6315 = vpop.f32.mrf.mxu0
      %v6316 = vadd.f32 0.0, %v6315
      %6317 = vmatmul.bf16.gmra.mxu0 %v6240
      %v6318 = vpop.f32.mrf.mxu0
      %v6319 = vadd.f32 0.0, %v6318
      %v6320 = vpop.f32.mrf.mxu0
      %v6321 = vadd.f32 0.0, %v6320
      %6322 = vmatmul.bf16.gmra.mxu0 %v6243
      %v6323 = vpop.f32.mrf.mxu0
      %v6324 = vadd.f32 0.0, %v6323
      %v6325 = vpop.f32.mrf.mxu0
      %v6326 = vadd.f32 0.0, %v6325
      %6327 = vmatmul.bf16.gmra.mxu0 %v6246
      %v6328 = vpop.f32.mrf.mxu0
      %v6329 = vadd.f32 0.0, %v6328
      %v6330 = vpop.f32.mrf.mxu0
      %v6331 = vadd.f32 0.0, %v6330
      %6332 = vmatmul.bf16.gmra.mxu0 %v6249
      %v6333 = vpop.f32.mrf.mxu0
      %v6334 = vadd.f32 0.0, %v6333
      %v6335 = vpop.f32.mrf.mxu0
      %v6336 = vadd.f32 0.0, %v6335
      %6337 = vmatmul.bf16.gmra.mxu0 %v6252
      %v6338 = vpop.f32.mrf.mxu0
      %v6339 = vadd.f32 0.0, %v6338
      %v6340 = vpop.f32.mrf.mxu0
      %v6341 = vadd.f32 0.0, %v6340
      %6342 = vdwg.mxu0
      %v6343 = vadd.f32 %v6110, %v6264
      %v6344 = vadd.f32 %v6111, %v6266
      %v6345 = vadd.f32 %v6112, %v6269
      %v6346 = vadd.f32 %v6113, %v6271
      %v6347 = vadd.f32 %v6114, %v6274
      %v6348 = vadd.f32 %v6115, %v6276
      %v6349 = vadd.f32 %v6116, %v6279
      %v6350 = vadd.f32 %v6117, %v6281
      %v6351 = vadd.f32 %v6118, %v6284
      %v6352 = vadd.f32 %v6119, %v6286
      %v6353 = vadd.f32 %v6120, %v6289
      %v6354 = vadd.f32 %v6121, %v6291
      %v6355 = vadd.f32 %v6122, %v6294
      %v6356 = vadd.f32 %v6123, %v6296
      %v6357 = vadd.f32 %v6124, %v6299
      %v6358 = vadd.f32 %v6125, %v6301
      %v6359 = vadd.f32 %v6126, %v6304
      %v6360 = vadd.f32 %v6127, %v6306
      %v6361 = vadd.f32 %v6128, %v6309
      %v6362 = vadd.f32 %v6129, %v6311
      %v6363 = vadd.f32 %v6130, %v6314
      %v6364 = vadd.f32 %v6131, %v6316
      %v6365 = vadd.f32 %v6132, %v6319
      %v6366 = vadd.f32 %v6133, %v6321
      %v6367 = vadd.f32 %v6134, %v6324
      %v6368 = vadd.f32 %v6135, %v6326
      %v6369 = vadd.f32 %v6136, %v6329
      %v6370 = vadd.f32 %v6137, %v6331
      %v6371 = vadd.f32 %v6138, %v6334
      %v6372 = vadd.f32 %v6139, %v6336
      %v6373 = vadd.f32 %v6140, %v6339
      %v6374 = vadd.f32 %v6141, %v6341
      %s6375 = scalar_lea.vmem [#allocation2], 64
      %v6376 = vld [vmem:[%s6375 + $0x7] sm:$0xff]
      %v6377 = vld [vmem:[%s6375 + $0xf] sm:$0xff]
      %v6378 = vld [vmem:[%s6375 + $0x27] sm:$0xff]
      %v6379 = vld [vmem:[%s6375 + $0x2f] sm:$0xff]
      %v6380 = vld [vmem:[%s6375 + $0x47] sm:$0xff]
      %v6381 = vld [vmem:[%s6375 + $0x4f] sm:$0xff]
      %v6382 = vld [vmem:[%s6375 + $0x67] sm:$0xff]
      %v6383 = vld [vmem:[%s6375 + $0x6f] sm:$0xff]
      %v6384 = vld [vmem:[%s6375 + $0x87] sm:$0xff]
      %v6385 = vld [vmem:[%s6375 + $0x8f] sm:$0xff]
      %v6386 = vld [vmem:[%s6375 + $0xa7] sm:$0xff]
      %v6387 = vld [vmem:[%s6375 + $0xaf] sm:$0xff]
      %v6388 = vld [vmem:[%s6375 + $0xc7] sm:$0xff]
      %v6389 = vld [vmem:[%s6375 + $0xcf] sm:$0xff]
      %v6390 = vld [vmem:[%s6375 + $0xe7] sm:$0xff]
      %v6391 = vld [vmem:[%s6375 + $0xef] sm:$0xff]
      %v6392 = vld [vmem:[%s6375 + $0x107] sm:$0xff]
      %v6393 = vld [vmem:[%s6375 + $0x10f] sm:$0xff]
      %v6394 = vld [vmem:[%s6375 + $0x127] sm:$0xff]
      %v6395 = vld [vmem:[%s6375 + $0x12f] sm:$0xff]
      %v6396 = vld [vmem:[%s6375 + $0x147] sm:$0xff]
      %v6397 = vld [vmem:[%s6375 + $0x14f] sm:$0xff]
      %v6398 = vld [vmem:[%s6375 + $0x167] sm:$0xff]
      %v6399 = vld [vmem:[%s6375 + $0x16f] sm:$0xff]
      %v6400 = vld [vmem:[%s6375 + $0x187] sm:$0xff]
      %v6401 = vld [vmem:[%s6375 + $0x18f] sm:$0xff]
      %v6402 = vld [vmem:[%s6375 + $0x1a7] sm:$0xff]
      %v6403 = vld [vmem:[%s6375 + $0x1af] sm:$0xff]
      %v6404 = vld [vmem:[%s6375 + $0x1c7] sm:$0xff]
      %v6405 = vld [vmem:[%s6375 + $0x1cf] sm:$0xff]
      %v6406 = vld [vmem:[%s6375 + $0x1e7] sm:$0xff]
      %v6407 = vld [vmem:[%s6375 + $0x1ef] sm:$0xff]
      %v6408 = vpack.c.bf16 %v6377, %v6376
      %v6409 = vpack.c.bf16 %v6379, %v6378
      %v6410 = vpack.c.bf16 %v6381, %v6380
      %v6411 = vpack.c.bf16 %v6383, %v6382
      %v6412 = vpack.c.bf16 %v6385, %v6384
      %v6413 = vpack.c.bf16 %v6387, %v6386
      %v6414 = vpack.c.bf16 %v6389, %v6388
      %v6415 = vpack.c.bf16 %v6391, %v6390
      %v6416 = vpack.c.bf16 %v6393, %v6392
      %v6417 = vpack.c.bf16 %v6395, %v6394
      %v6418 = vpack.c.bf16 %v6397, %v6396
      %v6419 = vpack.c.bf16 %v6399, %v6398
      %v6420 = vpack.c.bf16 %v6401, %v6400
      %v6421 = vpack.c.bf16 %v6403, %v6402
      %v6422 = vpack.c.bf16 %v6405, %v6404
      %v6423 = vpack.c.bf16 %v6407, %v6406
      %v6424 = vld [vmem:[%s3 + $0x60] sm:$0xf]
      %v6425 = vld [vmem:[%s3 + $0x64] sm:$0xf]
      %v6426 = vld [vmem:[%s3 + $0x68] sm:$0xf]
      %v6427 = vld [vmem:[%s3 + $0x6c] sm:$0xf]
      %v6432 = vunpack.c.l.b16 %v6424
      %v6433 = vunpack.c.l.b16 %v6425
      %v6434 = vunpack.c.l.b16 %v6426
      %v6435 = vunpack.c.l.b16 %v6427
      %v6436 = vpack.c.b16 %v6433, %v6432
      %v6437 = vpack.c.b16 %v6435, %v6434
      %v6441 = vsel %vm910, %v6408, 0
      %v6444 = vsel %vm910, %v6409, 0
      %v6447 = vsel %vm910, %v6410, 0
      %v6450 = vsel %vm910, %v6411, 0
      %v6453 = vsel %vm910, %v6412, 0
      %v6456 = vsel %vm910, %v6413, 0
      %v6459 = vsel %vm910, %v6414, 0
      %v6462 = vsel %vm910, %v6415, 0
      %v6465 = vsel %vm910, %v6416, 0
      %v6468 = vsel %vm910, %v6417, 0
      %v6471 = vsel %vm910, %v6418, 0
      %v6474 = vsel %vm910, %v6419, 0
      %v6477 = vsel %vm910, %v6420, 0
      %v6480 = vsel %vm910, %v6421, 0
      %v6483 = vsel %vm910, %v6422, 0
      %v6486 = vsel %vm910, %v6423, 0
      %6488 = vmatpush.bf16.msra.mxu0 0
      %6489 = vmatpush.bf16.msra.mxu0 0
      %6490 = vmatpush.bf16.msra.mxu0 0
      %6491 = vmatpush.bf16.msra.mxu0 0
      %6492 = vmatpush.bf16.msra.mxu0 0
      %6493 = vmatpush.bf16.msra.mxu0 0
      %6494 = vmatpush.bf16.msra.mxu0 %v6437
      %6495 = vmatpush.bf16.msra.mxu0 %v6436
      %6496 = vmatmul.bf16.gmra.mxu0 %v6441
      %v6497 = vpop.f32.mrf.mxu0
      %v6498 = vadd.f32 0.0, %v6497
      %v6499 = vpop.f32.mrf.mxu0
      %v6500 = vadd.f32 0.0, %v6499
      %6501 = vmatmul.bf16.gmra.mxu0 %v6444
      %v6502 = vpop.f32.mrf.mxu0
      %v6503 = vadd.f32 0.0, %v6502
      %v6504 = vpop.f32.mrf.mxu0
      %v6505 = vadd.f32 0.0, %v6504
      %6506 = vmatmul.bf16.gmra.mxu0 %v6447
      %v6507 = vpop.f32.mrf.mxu0
      %v6508 = vadd.f32 0.0, %v6507
      %v6509 = vpop.f32.mrf.mxu0
      %v6510 = vadd.f32 0.0, %v6509
      %6511 = vmatmul.bf16.gmra.mxu0 %v6450
      %v6512 = vpop.f32.mrf.mxu0
      %v6513 = vadd.f32 0.0, %v6512
      %v6514 = vpop.f32.mrf.mxu0
      %v6515 = vadd.f32 0.0, %v6514
      %6516 = vmatmul.bf16.gmra.mxu0 %v6453
      %v6517 = vpop.f32.mrf.mxu0
      %v6518 = vadd.f32 0.0, %v6517
      %v6519 = vpop.f32.mrf.mxu0
      %v6520 = vadd.f32 0.0, %v6519
      %6521 = vmatmul.bf16.gmra.mxu0 %v6456
      %v6522 = vpop.f32.mrf.mxu0
      %v6523 = vadd.f32 0.0, %v6522
      %v6524 = vpop.f32.mrf.mxu0
      %v6525 = vadd.f32 0.0, %v6524
      %6526 = vmatmul.bf16.gmra.mxu0 %v6459
      %v6527 = vpop.f32.mrf.mxu0
      %v6528 = vadd.f32 0.0, %v6527
      %v6529 = vpop.f32.mrf.mxu0
      %v6530 = vadd.f32 0.0, %v6529
      %6531 = vmatmul.bf16.gmra.mxu0 %v6462
      %v6532 = vpop.f32.mrf.mxu0
      %v6533 = vadd.f32 0.0, %v6532
      %v6534 = vpop.f32.mrf.mxu0
      %v6535 = vadd.f32 0.0, %v6534
      %6536 = vmatmul.bf16.gmra.mxu0 %v6465
      %v6537 = vpop.f32.mrf.mxu0
      %v6538 = vadd.f32 0.0, %v6537
      %v6539 = vpop.f32.mrf.mxu0
      %v6540 = vadd.f32 0.0, %v6539
      %6541 = vmatmul.bf16.gmra.mxu0 %v6468
      %v6542 = vpop.f32.mrf.mxu0
      %v6543 = vadd.f32 0.0, %v6542
      %v6544 = vpop.f32.mrf.mxu0
      %v6545 = vadd.f32 0.0, %v6544
      %6546 = vmatmul.bf16.gmra.mxu0 %v6471
      %v6547 = vpop.f32.mrf.mxu0
      %v6548 = vadd.f32 0.0, %v6547
      %v6549 = vpop.f32.mrf.mxu0
      %v6550 = vadd.f32 0.0, %v6549
      %6551 = vmatmul.bf16.gmra.mxu0 %v6474
      %v6552 = vpop.f32.mrf.mxu0
      %v6553 = vadd.f32 0.0, %v6552
      %v6554 = vpop.f32.mrf.mxu0
      %v6555 = vadd.f32 0.0, %v6554
      %6556 = vmatmul.bf16.gmra.mxu0 %v6477
      %v6557 = vpop.f32.mrf.mxu0
      %v6558 = vadd.f32 0.0, %v6557
      %v6559 = vpop.f32.mrf.mxu0
      %v6560 = vadd.f32 0.0, %v6559
      %6561 = vmatmul.bf16.gmra.mxu0 %v6480
      %v6562 = vpop.f32.mrf.mxu0
      %v6563 = vadd.f32 0.0, %v6562
      %v6564 = vpop.f32.mrf.mxu0
      %v6565 = vadd.f32 0.0, %v6564
      %6566 = vmatmul.bf16.gmra.mxu0 %v6483
      %v6567 = vpop.f32.mrf.mxu0
      %v6568 = vadd.f32 0.0, %v6567
      %v6569 = vpop.f32.mrf.mxu0
      %v6570 = vadd.f32 0.0, %v6569
      %6571 = vmatmul.bf16.gmra.mxu0 %v6486
      %v6572 = vpop.f32.mrf.mxu0
      %v6573 = vadd.f32 0.0, %v6572
      %v6574 = vpop.f32.mrf.mxu0
      %v6575 = vadd.f32 0.0, %v6574
      %6576 = vdwg.mxu0
      %v6577 = vadd.f32 %v6343, %v6498
      %v6578 = vadd.f32 %v6344, %v6500
      %v6579 = vadd.f32 %v6345, %v6503
      %v6580 = vadd.f32 %v6346, %v6505
      %v6581 = vadd.f32 %v6347, %v6508
      %v6582 = vadd.f32 %v6348, %v6510
      %v6583 = vadd.f32 %v6349, %v6513
      %v6584 = vadd.f32 %v6350, %v6515
      %v6585 = vadd.f32 %v6351, %v6518
      %v6586 = vadd.f32 %v6352, %v6520
      %v6587 = vadd.f32 %v6353, %v6523
      %v6588 = vadd.f32 %v6354, %v6525
      %v6589 = vadd.f32 %v6355, %v6528
      %v6590 = vadd.f32 %v6356, %v6530
      %v6591 = vadd.f32 %v6357, %v6533
      %v6592 = vadd.f32 %v6358, %v6535
      %v6593 = vadd.f32 %v6359, %v6538
      %v6594 = vadd.f32 %v6360, %v6540
      %v6595 = vadd.f32 %v6361, %v6543
      %v6596 = vadd.f32 %v6362, %v6545
      %v6597 = vadd.f32 %v6363, %v6548
      %v6598 = vadd.f32 %v6364, %v6550
      %v6599 = vadd.f32 %v6365, %v6553
      %v6600 = vadd.f32 %v6366, %v6555
      %v6601 = vadd.f32 %v6367, %v6558
      %v6602 = vadd.f32 %v6368, %v6560
      %v6603 = vadd.f32 %v6369, %v6563
      %v6604 = vadd.f32 %v6370, %v6565
      %v6605 = vadd.f32 %v6371, %v6568
      %v6606 = vadd.f32 %v6372, %v6570
      %v6607 = vadd.f32 %v6373, %v6573
      %v6608 = vadd.f32 %v6374, %v6575
      %v6609 = vld [vmem:[%s6375 + $0x8] sm:$0xff]
      %v6610 = vld [vmem:[%s6375 + $0x10] sm:$0xff]
      %v6611 = vld [vmem:[%s6375 + $0x28] sm:$0xff]
      %v6612 = vld [vmem:[%s6375 + $0x30] sm:$0xff]
      %v6613 = vld [vmem:[%s6375 + $0x48] sm:$0xff]
      %v6614 = vld [vmem:[%s6375 + $0x50] sm:$0xff]
      %v6615 = vld [vmem:[%s6375 + $0x68] sm:$0xff]
      %v6616 = vld [vmem:[%s6375 + $0x70] sm:$0xff]
      %v6617 = vld [vmem:[%s6375 + $0x88] sm:$0xff]
      %v6618 = vld [vmem:[%s6375 + $0x90] sm:$0xff]
      %v6619 = vld [vmem:[%s6375 + $0xa8] sm:$0xff]
      %v6620 = vld [vmem:[%s6375 + $0xb0] sm:$0xff]
      %v6621 = vld [vmem:[%s6375 + $0xc8] sm:$0xff]
      %v6622 = vld [vmem:[%s6375 + $0xd0] sm:$0xff]
      %v6623 = vld [vmem:[%s6375 + $0xe8] sm:$0xff]
      %v6624 = vld [vmem:[%s6375 + $0xf0] sm:$0xff]
      %v6625 = vld [vmem:[%s6375 + $0x108] sm:$0xff]
      %v6626 = vld [vmem:[%s6375 + $0x110] sm:$0xff]
      %v6627 = vld [vmem:[%s6375 + $0x128] sm:$0xff]
      %v6628 = vld [vmem:[%s6375 + $0x130] sm:$0xff]
      %v6629 = vld [vmem:[%s6375 + $0x148] sm:$0xff]
      %v6630 = vld [vmem:[%s6375 + $0x150] sm:$0xff]
      %v6631 = vld [vmem:[%s6375 + $0x168] sm:$0xff]
      %v6632 = vld [vmem:[%s6375 + $0x170] sm:$0xff]
      %v6633 = vld [vmem:[%s6375 + $0x188] sm:$0xff]
      %v6634 = vld [vmem:[%s6375 + $0x190] sm:$0xff]
      %v6635 = vld [vmem:[%s6375 + $0x1a8] sm:$0xff]
      %v6636 = vld [vmem:[%s6375 + $0x1b0] sm:$0xff]
      %v6637 = vld [vmem:[%s6375 + $0x1c8] sm:$0xff]
      %v6638 = vld [vmem:[%s6375 + $0x1d0] sm:$0xff]
      %v6639 = vld [vmem:[%s6375 + $0x1e8] sm:$0xff]
      %v6640 = vld [vmem:[%s6375 + $0x1f0] sm:$0xff]
      %v6641 = vpack.c.bf16 %v6610, %v6609
      %v6642 = vpack.c.bf16 %v6612, %v6611
      %v6643 = vpack.c.bf16 %v6614, %v6613
      %v6644 = vpack.c.bf16 %v6616, %v6615
      %v6645 = vpack.c.bf16 %v6618, %v6617
      %v6646 = vpack.c.bf16 %v6620, %v6619
      %v6647 = vpack.c.bf16 %v6622, %v6621
      %v6648 = vpack.c.bf16 %v6624, %v6623
      %v6649 = vpack.c.bf16 %v6626, %v6625
      %v6650 = vpack.c.bf16 %v6628, %v6627
      %v6651 = vpack.c.bf16 %v6630, %v6629
      %v6652 = vpack.c.bf16 %v6632, %v6631
      %v6653 = vpack.c.bf16 %v6634, %v6633
      %v6654 = vpack.c.bf16 %v6636, %v6635
      %v6655 = vpack.c.bf16 %v6638, %v6637
      %v6656 = vpack.c.bf16 %v6640, %v6639
      %v6657 = vld [vmem:[%s3 + $0x70] sm:$0xf]
      %v6658 = vld [vmem:[%s3 + $0x74] sm:$0xf]
      %v6659 = vld [vmem:[%s3 + $0x78] sm:$0xf]
      %v6660 = vld [vmem:[%s3 + $0x7c] sm:$0xf]
      %v6665 = vunpack.c.l.b16 %v6657
      %v6666 = vunpack.c.l.b16 %v6658
      %v6667 = vunpack.c.l.b16 %v6659
      %v6668 = vunpack.c.l.b16 %v6660
      %v6669 = vpack.c.b16 %v6666, %v6665
      %v6670 = vpack.c.b16 %v6668, %v6667
      %v6674 = vsel %vm910, %v6641, 0
      %v6677 = vsel %vm910, %v6642, 0
      %v6680 = vsel %vm910, %v6643, 0
      %v6683 = vsel %vm910, %v6644, 0
      %v6686 = vsel %vm910, %v6645, 0
      %v6689 = vsel %vm910, %v6646, 0
      %v6692 = vsel %vm910, %v6647, 0
      %v6695 = vsel %vm910, %v6648, 0
      %v6698 = vsel %vm910, %v6649, 0
      %v6701 = vsel %vm910, %v6650, 0
      %v6704 = vsel %vm910, %v6651, 0
      %v6707 = vsel %vm910, %v6652, 0
      %v6710 = vsel %vm910, %v6653, 0
      %v6713 = vsel %vm910, %v6654, 0
      %v6716 = vsel %vm910, %v6655, 0
      %v6719 = vsel %vm910, %v6656, 0
      %6721 = vmatpush.bf16.msra.mxu0 0
      %6722 = vmatpush.bf16.msra.mxu0 0
      %6723 = vmatpush.bf16.msra.mxu0 0
      %6724 = vmatpush.bf16.msra.mxu0 0
      %6725 = vmatpush.bf16.msra.mxu0 0
      %6726 = vmatpush.bf16.msra.mxu0 0
      %6727 = vmatpush.bf16.msra.mxu0 %v6670
      %6728 = vmatpush.bf16.msra.mxu0 %v6669
      %6729 = vmatmul.bf16.gmra.mxu0 %v6674
      %v6730 = vpop.f32.mrf.mxu0
      %v6731 = vadd.f32 0.0, %v6730
      %v6732 = vpop.f32.mrf.mxu0
      %v6733 = vadd.f32 0.0, %v6732
      %6734 = vmatmul.bf16.gmra.mxu0 %v6677
      %v6735 = vpop.f32.mrf.mxu0
      %v6736 = vadd.f32 0.0, %v6735
      %v6737 = vpop.f32.mrf.mxu0
      %v6738 = vadd.f32 0.0, %v6737
      %6739 = vmatmul.bf16.gmra.mxu0 %v6680
      %v6740 = vpop.f32.mrf.mxu0
      %v6741 = vadd.f32 0.0, %v6740
      %v6742 = vpop.f32.mrf.mxu0
      %v6743 = vadd.f32 0.0, %v6742
      %6744 = vmatmul.bf16.gmra.mxu0 %v6683
      %v6745 = vpop.f32.mrf.mxu0
      %v6746 = vadd.f32 0.0, %v6745
      %v6747 = vpop.f32.mrf.mxu0
      %v6748 = vadd.f32 0.0, %v6747
      %6749 = vmatmul.bf16.gmra.mxu0 %v6686
      %v6750 = vpop.f32.mrf.mxu0
      %v6751 = vadd.f32 0.0, %v6750
      %v6752 = vpop.f32.mrf.mxu0
      %v6753 = vadd.f32 0.0, %v6752
      %6754 = vmatmul.bf16.gmra.mxu0 %v6689
      %v6755 = vpop.f32.mrf.mxu0
      %v6756 = vadd.f32 0.0, %v6755
      %v6757 = vpop.f32.mrf.mxu0
      %v6758 = vadd.f32 0.0, %v6757
      %6759 = vmatmul.bf16.gmra.mxu0 %v6692
      %v6760 = vpop.f32.mrf.mxu0
      %v6761 = vadd.f32 0.0, %v6760
      %v6762 = vpop.f32.mrf.mxu0
      %v6763 = vadd.f32 0.0, %v6762
      %6764 = vmatmul.bf16.gmra.mxu0 %v6695
      %v6765 = vpop.f32.mrf.mxu0
      %v6766 = vadd.f32 0.0, %v6765
      %v6767 = vpop.f32.mrf.mxu0
      %v6768 = vadd.f32 0.0, %v6767
      %6769 = vmatmul.bf16.gmra.mxu0 %v6698
      %v6770 = vpop.f32.mrf.mxu0
      %v6771 = vadd.f32 0.0, %v6770
      %v6772 = vpop.f32.mrf.mxu0
      %v6773 = vadd.f32 0.0, %v6772
      %6774 = vmatmul.bf16.gmra.mxu0 %v6701
      %v6775 = vpop.f32.mrf.mxu0
      %v6776 = vadd.f32 0.0, %v6775
      %v6777 = vpop.f32.mrf.mxu0
      %v6778 = vadd.f32 0.0, %v6777
      %6779 = vmatmul.bf16.gmra.mxu0 %v6704
      %v6780 = vpop.f32.mrf.mxu0
      %v6781 = vadd.f32 0.0, %v6780
      %v6782 = vpop.f32.mrf.mxu0
      %v6783 = vadd.f32 0.0, %v6782
      %6784 = vmatmul.bf16.gmra.mxu0 %v6707
      %v6785 = vpop.f32.mrf.mxu0
      %v6786 = vadd.f32 0.0, %v6785
      %v6787 = vpop.f32.mrf.mxu0
      %v6788 = vadd.f32 0.0, %v6787
      %6789 = vmatmul.bf16.gmra.mxu0 %v6710
      %v6790 = vpop.f32.mrf.mxu0
      %v6791 = vadd.f32 0.0, %v6790
      %v6792 = vpop.f32.mrf.mxu0
      %v6793 = vadd.f32 0.0, %v6792
      %6794 = vmatmul.bf16.gmra.mxu0 %v6713
      %v6795 = vpop.f32.mrf.mxu0
      %v6796 = vadd.f32 0.0, %v6795
      %v6797 = vpop.f32.mrf.mxu0
      %v6798 = vadd.f32 0.0, %v6797
      %6799 = vmatmul.bf16.gmra.mxu0 %v6716
      %v6800 = vpop.f32.mrf.mxu0
      %v6801 = vadd.f32 0.0, %v6800
      %v6802 = vpop.f32.mrf.mxu0
      %v6803 = vadd.f32 0.0, %v6802
      %6804 = vmatmul.bf16.gmra.mxu0 %v6719
      %v6805 = vpop.f32.mrf.mxu0
      %v6806 = vadd.f32 0.0, %v6805
      %v6807 = vpop.f32.mrf.mxu0
      %v6808 = vadd.f32 0.0, %v6807
      %6809 = vdwg.mxu0
      %v6810 = vadd.f32 %v6577, %v6731
      %v6811 = vadd.f32 %v6578, %v6733
      %v6812 = vadd.f32 %v6579, %v6736
      %v6813 = vadd.f32 %v6580, %v6738
      %v6814 = vadd.f32 %v6581, %v6741
      %v6815 = vadd.f32 %v6582, %v6743
      %v6816 = vadd.f32 %v6583, %v6746
      %v6817 = vadd.f32 %v6584, %v6748
      %v6818 = vadd.f32 %v6585, %v6751
      %v6819 = vadd.f32 %v6586, %v6753
      %v6820 = vadd.f32 %v6587, %v6756
      %v6821 = vadd.f32 %v6588, %v6758
      %v6822 = vadd.f32 %v6589, %v6761
      %v6823 = vadd.f32 %v6590, %v6763
      %v6824 = vadd.f32 %v6591, %v6766
      %v6825 = vadd.f32 %v6592, %v6768
      %v6826 = vadd.f32 %v6593, %v6771
      %v6827 = vadd.f32 %v6594, %v6773
      %v6828 = vadd.f32 %v6595, %v6776
      %v6829 = vadd.f32 %v6596, %v6778
      %v6830 = vadd.f32 %v6597, %v6781
      %v6831 = vadd.f32 %v6598, %v6783
      %v6832 = vadd.f32 %v6599, %v6786
      %v6833 = vadd.f32 %v6600, %v6788
      %v6834 = vadd.f32 %v6601, %v6791
      %v6835 = vadd.f32 %v6602, %v6793
      %v6836 = vadd.f32 %v6603, %v6796
      %v6837 = vadd.f32 %v6604, %v6798
      %v6838 = vadd.f32 %v6605, %v6801
      %v6839 = vadd.f32 %v6606, %v6803
      %v6840 = vadd.f32 %v6607, %v6806
      %v6841 = vadd.f32 %v6608, %v6808
      %v6842 = vld [vmem:[%s6375 + $0x9] sm:$0xff]
      %v6843 = vld [vmem:[%s6375 + $0x11] sm:$0xff]
      %v6844 = vld [vmem:[%s6375 + $0x29] sm:$0xff]
      %v6845 = vld [vmem:[%s6375 + $0x31] sm:$0xff]
      %v6846 = vld [vmem:[%s6375 + $0x49] sm:$0xff]
      %v6847 = vld [vmem:[%s6375 + $0x51] sm:$0xff]
      %v6848 = vld [vmem:[%s6375 + $0x69] sm:$0xff]
      %v6849 = vld [vmem:[%s6375 + $0x71] sm:$0xff]
      %v6850 = vld [vmem:[%s6375 + $0x89] sm:$0xff]
      %v6851 = vld [vmem:[%s6375 + $0x91] sm:$0xff]
      %v6852 = vld [vmem:[%s6375 + $0xa9] sm:$0xff]
      %v6853 = vld [vmem:[%s6375 + $0xb1] sm:$0xff]
      %v6854 = vld [vmem:[%s6375 + $0xc9] sm:$0xff]
      %v6855 = vld [vmem:[%s6375 + $0xd1] sm:$0xff]
      %v6856 = vld [vmem:[%s6375 + $0xe9] sm:$0xff]
      %v6857 = vld [vmem:[%s6375 + $0xf1] sm:$0xff]
      %v6858 = vld [vmem:[%s6375 + $0x109] sm:$0xff]
      %v6859 = vld [vmem:[%s6375 + $0x111] sm:$0xff]
      %v6860 = vld [vmem:[%s6375 + $0x129] sm:$0xff]
      %v6861 = vld [vmem:[%s6375 + $0x131] sm:$0xff]
      %v6862 = vld [vmem:[%s6375 + $0x149] sm:$0xff]
      %v6863 = vld [vmem:[%s6375 + $0x151] sm:$0xff]
      %v6864 = vld [vmem:[%s6375 + $0x169] sm:$0xff]
      %v6865 = vld [vmem:[%s6375 + $0x171] sm:$0xff]
      %v6866 = vld [vmem:[%s6375 + $0x189] sm:$0xff]
      %v6867 = vld [vmem:[%s6375 + $0x191] sm:$0xff]
      %v6868 = vld [vmem:[%s6375 + $0x1a9] sm:$0xff]
      %v6869 = vld [vmem:[%s6375 + $0x1b1] sm:$0xff]
      %v6870 = vld [vmem:[%s6375 + $0x1c9] sm:$0xff]
      %v6871 = vld [vmem:[%s6375 + $0x1d1] sm:$0xff]
      %v6872 = vld [vmem:[%s6375 + $0x1e9] sm:$0xff]
      %v6873 = vld [vmem:[%s6375 + $0x1f1] sm:$0xff]
      %v6874 = vpack.c.bf16 %v6843, %v6842
      %v6875 = vpack.c.bf16 %v6845, %v6844
      %v6876 = vpack.c.bf16 %v6847, %v6846
      %v6877 = vpack.c.bf16 %v6849, %v6848
      %v6878 = vpack.c.bf16 %v6851, %v6850
      %v6879 = vpack.c.bf16 %v6853, %v6852
      %v6880 = vpack.c.bf16 %v6855, %v6854
      %v6881 = vpack.c.bf16 %v6857, %v6856
      %v6882 = vpack.c.bf16 %v6859, %v6858
      %v6883 = vpack.c.bf16 %v6861, %v6860
      %v6884 = vpack.c.bf16 %v6863, %v6862
      %v6885 = vpack.c.bf16 %v6865, %v6864
      %v6886 = vpack.c.bf16 %v6867, %v6866
      %v6887 = vpack.c.bf16 %v6869, %v6868
      %v6888 = vpack.c.bf16 %v6871, %v6870
      %v6889 = vpack.c.bf16 %v6873, %v6872
      %v6890 = vld [vmem:[%s3 + $0x80] sm:$0xf]
      %v6891 = vld [vmem:[%s3 + $0x84] sm:$0xf]
      %v6892 = vld [vmem:[%s3 + $0x88] sm:$0xf]
      %v6893 = vld [vmem:[%s3 + $0x8c] sm:$0xf]
      %v6898 = vunpack.c.l.b16 %v6890
      %v6899 = vunpack.c.l.b16 %v6891
      %v6900 = vunpack.c.l.b16 %v6892
      %v6901 = vunpack.c.l.b16 %v6893
      %v6902 = vpack.c.b16 %v6899, %v6898
      %v6903 = vpack.c.b16 %v6901, %v6900
      %v6907 = vsel %vm910, %v6874, 0
      %v6910 = vsel %vm910, %v6875, 0
      %v6913 = vsel %vm910, %v6876, 0
      %v6916 = vsel %vm910, %v6877, 0
      %v6919 = vsel %vm910, %v6878, 0
      %v6922 = vsel %vm910, %v6879, 0
      %v6925 = vsel %vm910, %v6880, 0
      %v6928 = vsel %vm910, %v6881, 0
      %v6931 = vsel %vm910, %v6882, 0
      %v6934 = vsel %vm910, %v6883, 0
      %v6937 = vsel %vm910, %v6884, 0
      %v6940 = vsel %vm910, %v6885, 0
      %v6943 = vsel %vm910, %v6886, 0
      %v6946 = vsel %vm910, %v6887, 0
      %v6949 = vsel %vm910, %v6888, 0
      %v6952 = vsel %vm910, %v6889, 0
      %6954 = vmatpush.bf16.msra.mxu0 0
      %6955 = vmatpush.bf16.msra.mxu0 0
      %6956 = vmatpush.bf16.msra.mxu0 0
      %6957 = vmatpush.bf16.msra.mxu0 0
      %6958 = vmatpush.bf16.msra.mxu0 0
      %6959 = vmatpush.bf16.msra.mxu0 0
      %6960 = vmatpush.bf16.msra.mxu0 %v6903
      %6961 = vmatpush.bf16.msra.mxu0 %v6902
      %6962 = vmatmul.bf16.gmra.mxu0 %v6907
      %v6963 = vpop.f32.mrf.mxu0
      %v6964 = vadd.f32 0.0, %v6963
      %v6965 = vpop.f32.mrf.mxu0
      %v6966 = vadd.f32 0.0, %v6965
      %6967 = vmatmul.bf16.gmra.mxu0 %v6910
      %v6968 = vpop.f32.mrf.mxu0
      %v6969 = vadd.f32 0.0, %v6968
      %v6970 = vpop.f32.mrf.mxu0
      %v6971 = vadd.f32 0.0, %v6970
      %6972 = vmatmul.bf16.gmra.mxu0 %v6913
      %v6973 = vpop.f32.mrf.mxu0
      %v6974 = vadd.f32 0.0, %v6973
      %v6975 = vpop.f32.mrf.mxu0
      %v6976 = vadd.f32 0.0, %v6975
      %6977 = vmatmul.bf16.gmra.mxu0 %v6916
      %v6978 = vpop.f32.mrf.mxu0
      %v6979 = vadd.f32 0.0, %v6978
      %v6980 = vpop.f32.mrf.mxu0
      %v6981 = vadd.f32 0.0, %v6980
      %6982 = vmatmul.bf16.gmra.mxu0 %v6919
      %v6983 = vpop.f32.mrf.mxu0
      %v6984 = vadd.f32 0.0, %v6983
      %v6985 = vpop.f32.mrf.mxu0
      %v6986 = vadd.f32 0.0, %v6985
      %6987 = vmatmul.bf16.gmra.mxu0 %v6922
      %v6988 = vpop.f32.mrf.mxu0
      %v6989 = vadd.f32 0.0, %v6988
      %v6990 = vpop.f32.mrf.mxu0
      %v6991 = vadd.f32 0.0, %v6990
      %6992 = vmatmul.bf16.gmra.mxu0 %v6925
      %v6993 = vpop.f32.mrf.mxu0
      %v6994 = vadd.f32 0.0, %v6993
      %v6995 = vpop.f32.mrf.mxu0
      %v6996 = vadd.f32 0.0, %v6995
      %6997 = vmatmul.bf16.gmra.mxu0 %v6928
      %v6998 = vpop.f32.mrf.mxu0
      %v6999 = vadd.f32 0.0, %v6998
      %v7000 = vpop.f32.mrf.mxu0
      %v7001 = vadd.f32 0.0, %v7000
      %7002 = vmatmul.bf16.gmra.mxu0 %v6931
      %v7003 = vpop.f32.mrf.mxu0
      %v7004 = vadd.f32 0.0, %v7003
      %v7005 = vpop.f32.mrf.mxu0
      %v7006 = vadd.f32 0.0, %v7005
      %7007 = vmatmul.bf16.gmra.mxu0 %v6934
      %v7008 = vpop.f32.mrf.mxu0
      %v7009 = vadd.f32 0.0, %v7008
      %v7010 = vpop.f32.mrf.mxu0
      %v7011 = vadd.f32 0.0, %v7010
      %7012 = vmatmul.bf16.gmra.mxu0 %v6937
      %v7013 = vpop.f32.mrf.mxu0
      %v7014 = vadd.f32 0.0, %v7013
      %v7015 = vpop.f32.mrf.mxu0
      %v7016 = vadd.f32 0.0, %v7015
      %7017 = vmatmul.bf16.gmra.mxu0 %v6940
      %v7018 = vpop.f32.mrf.mxu0
      %v7019 = vadd.f32 0.0, %v7018
      %v7020 = vpop.f32.mrf.mxu0
      %v7021 = vadd.f32 0.0, %v7020
      %7022 = vmatmul.bf16.gmra.mxu0 %v6943
      %v7023 = vpop.f32.mrf.mxu0
      %v7024 = vadd.f32 0.0, %v7023
      %v7025 = vpop.f32.mrf.mxu0
      %v7026 = vadd.f32 0.0, %v7025
      %7027 = vmatmul.bf16.gmra.mxu0 %v6946
      %v7028 = vpop.f32.mrf.mxu0
      %v7029 = vadd.f32 0.0, %v7028
      %v7030 = vpop.f32.mrf.mxu0
      %v7031 = vadd.f32 0.0, %v7030
      %7032 = vmatmul.bf16.gmra.mxu0 %v6949
      %v7033 = vpop.f32.mrf.mxu0
      %v7034 = vadd.f32 0.0, %v7033
      %v7035 = vpop.f32.mrf.mxu0
      %v7036 = vadd.f32 0.0, %v7035
      %7037 = vmatmul.bf16.gmra.mxu0 %v6952
      %v7038 = vpop.f32.mrf.mxu0
      %v7039 = vadd.f32 0.0, %v7038
      %v7040 = vpop.f32.mrf.mxu0
      %v7041 = vadd.f32 0.0, %v7040
      %7042 = vdwg.mxu0
      %v7043 = vadd.f32 %v6810, %v6964
      %v7044 = vadd.f32 %v6811, %v6966
      %v7045 = vadd.f32 %v6812, %v6969
      %v7046 = vadd.f32 %v6813, %v6971
      %v7047 = vadd.f32 %v6814, %v6974
      %v7048 = vadd.f32 %v6815, %v6976
      %v7049 = vadd.f32 %v6816, %v6979
      %v7050 = vadd.f32 %v6817, %v6981
      %v7051 = vadd.f32 %v6818, %v6984
      %v7052 = vadd.f32 %v6819, %v6986
      %v7053 = vadd.f32 %v6820, %v6989
      %v7054 = vadd.f32 %v6821, %v6991
      %v7055 = vadd.f32 %v6822, %v6994
      %v7056 = vadd.f32 %v6823, %v6996
      %v7057 = vadd.f32 %v6824, %v6999
      %v7058 = vadd.f32 %v6825, %v7001
      %v7059 = vadd.f32 %v6826, %v7004
      %v7060 = vadd.f32 %v6827, %v7006
      %v7061 = vadd.f32 %v6828, %v7009
      %v7062 = vadd.f32 %v6829, %v7011
      %v7063 = vadd.f32 %v6830, %v7014
      %v7064 = vadd.f32 %v6831, %v7016
      %v7065 = vadd.f32 %v6832, %v7019
      %v7066 = vadd.f32 %v6833, %v7021
      %v7067 = vadd.f32 %v6834, %v7024
      %v7068 = vadd.f32 %v6835, %v7026
      %v7069 = vadd.f32 %v6836, %v7029
      %v7070 = vadd.f32 %v6837, %v7031
      %v7071 = vadd.f32 %v6838, %v7034
      %v7072 = vadd.f32 %v6839, %v7036
      %v7073 = vadd.f32 %v6840, %v7039
      %v7074 = vadd.f32 %v6841, %v7041
      %v7075 = vld [vmem:[%s4] sm:$0x1]
      %v7077 = vperm.slane %v7075, 0
      %v7079 = vadd.f32 %v7043, %v7077
      %v7080 = vadd.f32 %v7044, %v7077
      %v7081 = vadd.f32 %v7045, %v7077
      %v7082 = vadd.f32 %v7046, %v7077
      %v7083 = vadd.f32 %v7047, %v7077
      %v7084 = vadd.f32 %v7048, %v7077
      %v7085 = vadd.f32 %v7049, %v7077
      %v7086 = vadd.f32 %v7050, %v7077
      %v7087 = vadd.f32 %v7051, %v7077
      %v7088 = vadd.f32 %v7052, %v7077
      %v7089 = vadd.f32 %v7053, %v7077
      %v7090 = vadd.f32 %v7054, %v7077
      %v7091 = vadd.f32 %v7055, %v7077
      %v7092 = vadd.f32 %v7056, %v7077
      %v7093 = vadd.f32 %v7057, %v7077
      %v7094 = vadd.f32 %v7058, %v7077
      %v7095 = vadd.f32 %v7059, %v7077
      %v7096 = vadd.f32 %v7060, %v7077
      %v7097 = vadd.f32 %v7061, %v7077
      %v7098 = vadd.f32 %v7062, %v7077
      %v7099 = vadd.f32 %v7063, %v7077
      %v7100 = vadd.f32 %v7064, %v7077
      %v7101 = vadd.f32 %v7065, %v7077
      %v7102 = vadd.f32 %v7066, %v7077
      %v7103 = vadd.f32 %v7067, %v7077
      %v7104 = vadd.f32 %v7068, %v7077
      %v7105 = vadd.f32 %v7069, %v7077
      %v7106 = vadd.f32 %v7070, %v7077
      %v7107 = vadd.f32 %v7071, %v7077
      %v7108 = vadd.f32 %v7072, %v7077
      %v7109 = vadd.f32 %v7073, %v7077
      %v7110 = vadd.f32 %v7074, %v7077
      %v7111 = vmax.f32 %v7079, 0.0
      %v7112 = vmax.f32 %v7080, 0.0
      %v7113 = vmax.f32 %v7081, 0.0
      %v7114 = vmax.f32 %v7082, 0.0
      %v7115 = vmax.f32 %v7083, 0.0
      %v7116 = vmax.f32 %v7084, 0.0
      %v7117 = vmax.f32 %v7085, 0.0
      %v7118 = vmax.f32 %v7086, 0.0
      %v7119 = vmax.f32 %v7087, 0.0
      %v7120 = vmax.f32 %v7088, 0.0
      %v7121 = vmax.f32 %v7089, 0.0
      %v7122 = vmax.f32 %v7090, 0.0
      %v7123 = vmax.f32 %v7091, 0.0
      %v7124 = vmax.f32 %v7092, 0.0
      %v7125 = vmax.f32 %v7093, 0.0
      %v7126 = vmax.f32 %v7094, 0.0
      %v7127 = vmax.f32 %v7095, 0.0
      %v7128 = vmax.f32 %v7096, 0.0
      %v7129 = vmax.f32 %v7097, 0.0
      %v7130 = vmax.f32 %v7098, 0.0
      %v7131 = vmax.f32 %v7099, 0.0
      %v7132 = vmax.f32 %v7100, 0.0
      %v7133 = vmax.f32 %v7101, 0.0
      %v7134 = vmax.f32 %v7102, 0.0
      %v7135 = vmax.f32 %v7103, 0.0
      %v7136 = vmax.f32 %v7104, 0.0
      %v7137 = vmax.f32 %v7105, 0.0
      %v7138 = vmax.f32 %v7106, 0.0
      %v7139 = vmax.f32 %v7107, 0.0
      %v7140 = vmax.f32 %v7108, 0.0
      %v7141 = vmax.f32 %v7109, 0.0
      %v7142 = vmax.f32 %v7110, 0.0
      %v7143 = vmax.f32 %v7111, %v7113
      %v7144 = vmax.f32 %v7112, %v7114
      %v7145 = vmax.f32 %v7115, %v7117
      %v7146 = vmax.f32 %v7116, %v7118
      %v7147 = vmax.f32 %v7119, %v7121
      %v7148 = vmax.f32 %v7120, %v7122
      %v7149 = vmax.f32 %v7123, %v7125
      %v7150 = vmax.f32 %v7124, %v7126
      %v7151 = vmax.f32 %v7127, %v7129
      %v7152 = vmax.f32 %v7128, %v7130
      %v7153 = vmax.f32 %v7131, %v7133
      %v7154 = vmax.f32 %v7132, %v7134
      %v7155 = vmax.f32 %v7135, %v7137
      %v7156 = vmax.f32 %v7136, %v7138
      %v7157 = vmax.f32 %v7139, %v7141
      %v7158 = vmax.f32 %v7140, %v7142
      %v7159 = vpack.c.bf16 %v7144, %v7143
      %v7160 = vpack.c.bf16 %v7146, %v7145
      %v7161 = vpack.c.bf16 %v7148, %v7147
      %v7162 = vpack.c.bf16 %v7150, %v7149
      %v7163 = vpack.c.bf16 %v7152, %v7151
      %v7164 = vpack.c.bf16 %v7154, %v7153
      %v7165 = vpack.c.bf16 %v7156, %v7155
      %v7166 = vpack.c.bf16 %v7158, %v7157
      %v7167 = vld [vmem:[%s9] sm:$0xf]
      %v7168 = vld [vmem:[%s9 + $0x4] sm:$0xf]
      %v7169 = vld [vmem:[%s9 + $0x8] sm:$0xf]
      %v7170 = vld [vmem:[%s9 + $0xc] sm:$0xf]
      %v7171 = vld [vmem:[%s9 + $0x10] sm:$0xf]
      %v7172 = vld [vmem:[%s9 + $0x14] sm:$0xf]
      %v7173 = vld [vmem:[%s9 + $0x18] sm:$0xf]
      %v7174 = vld [vmem:[%s9 + $0x1c] sm:$0xf]
      %v7175 = vld [vmem:[%s9 + $0x20] sm:$0xf]
      %v7176 = vld [vmem:[%s9 + $0x24] sm:$0xf]
      %v7177 = vld [vmem:[%s9 + $0x28] sm:$0xf]
      %v7178 = vld [vmem:[%s9 + $0x2c] sm:$0xf]
      %v7179 = vld [vmem:[%s9 + $0x30] sm:$0xf]
      %v7180 = vld [vmem:[%s9 + $0x34] sm:$0xf]
      %v7181 = vld [vmem:[%s9 + $0x38] sm:$0xf]
      %v7182 = vld [vmem:[%s9 + $0x3c] sm:$0xf]
      %v7183 = vld [vmem:[%s9 + $0x40] sm:$0xf]
      %v7184 = vld [vmem:[%s9 + $0x44] sm:$0xf]
      %v7185 = vld [vmem:[%s9 + $0x48] sm:$0xf]
      %v7186 = vld [vmem:[%s9 + $0x4c] sm:$0xf]
      %v7187 = vld [vmem:[%s9 + $0x50] sm:$0xf]
      %v7188 = vld [vmem:[%s9 + $0x54] sm:$0xf]
      %v7189 = vld [vmem:[%s9 + $0x58] sm:$0xf]
      %v7190 = vld [vmem:[%s9 + $0x5c] sm:$0xf]
      %v7191 = vld [vmem:[%s9 + $0x60] sm:$0xf]
      %v7192 = vld [vmem:[%s9 + $0x64] sm:$0xf]
      %v7193 = vld [vmem:[%s9 + $0x68] sm:$0xf]
      %v7194 = vld [vmem:[%s9 + $0x6c] sm:$0xf]
      %v7195 = vld [vmem:[%s9 + $0x70] sm:$0xf]
      %v7196 = vld [vmem:[%s9 + $0x74] sm:$0xf]
      %v7227 = vunpack.c.l.b16 %v7167
      %v7228 = vunpack.c.l.b16 %v7168
      %v7229 = vunpack.c.l.b16 %v7169
      %v7230 = vunpack.c.l.b16 %v7170
      %v7231 = vunpack.c.l.b16 %v7171
      %v7232 = vunpack.c.l.b16 %v7172
      %v7233 = vunpack.c.l.b16 %v7173
      %v7234 = vunpack.c.l.b16 %v7174
      %v7235 = vunpack.c.l.b16 %v7175
      %v7236 = vunpack.c.l.b16 %v7176
      %v7237 = vunpack.c.l.b16 %v7177
      %v7238 = vunpack.c.l.b16 %v7178
      %v7239 = vunpack.c.l.b16 %v7179
      %v7240 = vunpack.c.l.b16 %v7180
      %v7241 = vunpack.c.l.b16 %v7181
      %v7242 = vunpack.c.l.b16 %v7182
      %v7243 = vunpack.c.l.b16 %v7183
      %v7244 = vunpack.c.l.b16 %v7184
      %v7245 = vunpack.c.l.b16 %v7185
      %v7246 = vunpack.c.l.b16 %v7186
      %v7247 = vunpack.c.l.b16 %v7187
      %v7248 = vunpack.c.l.b16 %v7188
      %v7249 = vunpack.c.l.b16 %v7189
      %v7250 = vunpack.c.l.b16 %v7190
      %v7251 = vunpack.c.l.b16 %v7191
      %v7252 = vunpack.c.l.b16 %v7192
      %v7253 = vunpack.c.l.b16 %v7193
      %v7254 = vunpack.c.l.b16 %v7194
      %v7255 = vunpack.c.l.b16 %v7195
      %v7256 = vunpack.c.l.b16 %v7196
      %v7257 = vpack.c.b16 %v7228, %v7227
      %v7258 = vpack.c.b16 %v7230, %v7229
      %v7259 = vpack.c.b16 %v7232, %v7231
      %v7260 = vpack.c.b16 %v7234, %v7233
      %v7261 = vpack.c.b16 %v7236, %v7235
      %v7262 = vpack.c.b16 %v7238, %v7237
      %v7263 = vpack.c.b16 %v7240, %v7239
      %v7264 = vpack.c.b16 %v7242, %v7241
      %v7265 = vpack.c.b16 %v7244, %v7243
      %v7266 = vpack.c.b16 %v7246, %v7245
      %v7267 = vpack.c.b16 %v7248, %v7247
      %v7268 = vpack.c.b16 %v7250, %v7249
      %v7269 = vpack.c.b16 %v7252, %v7251
      %v7270 = vpack.c.b16 %v7254, %v7253
      %v7271 = vpack.c.b16 %v7256, %v7255
      %7287 = vmatpush.bf16.msra.mxu0 %v7166
      %7288 = vmatpush.bf16.msra.mxu0 %v7165
      %7289 = vmatpush.bf16.msra.mxu0 %v7164
      %7290 = vmatpush.bf16.msra.mxu0 %v7163
      %7291 = vmatpush.bf16.msra.mxu0 %v7162
      %7292 = vmatpush.bf16.msra.mxu0 %v7161
      %7293 = vmatpush.bf16.msra.mxu0 %v7160
      %7294 = vmatpush.bf16.msra.mxu0 %v7159
      %7295 = vmatmul.bf16.gmra.mxu0 %v7257
      %v7296 = vpop.f32.mrf.mxu0
      %v7297 = vadd.f32 0.0, %v7296
      %v7298 = vpop.f32.mrf.mxu0
      %v7299 = vadd.f32 0.0, %v7298
      %7300 = vmatmul.bf16.gmra.mxu0 %v7258
      %v7301 = vpop.f32.mrf.mxu0
      %v7302 = vadd.f32 0.0, %v7301
      %v7303 = vpop.f32.mrf.mxu0
      %v7304 = vadd.f32 0.0, %v7303
      %7305 = vmatmul.bf16.gmra.mxu0 %v7259
      %v7306 = vpop.f32.mrf.mxu0
      %v7307 = vadd.f32 0.0, %v7306
      %v7308 = vpop.f32.mrf.mxu0
      %v7309 = vadd.f32 0.0, %v7308
      %7310 = vmatmul.bf16.gmra.mxu0 %v7260
      %v7311 = vpop.f32.mrf.mxu0
      %v7312 = vadd.f32 0.0, %v7311
      %v7313 = vpop.f32.mrf.mxu0
      %v7314 = vadd.f32 0.0, %v7313
      %7315 = vmatmul.bf16.gmra.mxu0 %v7261
      %v7316 = vpop.f32.mrf.mxu0
      %v7317 = vadd.f32 0.0, %v7316
      %v7318 = vpop.f32.mrf.mxu0
      %v7319 = vadd.f32 0.0, %v7318
      %7320 = vmatmul.bf16.gmra.mxu0 %v7262
      %v7321 = vpop.f32.mrf.mxu0
      %v7322 = vadd.f32 0.0, %v7321
      %v7323 = vpop.f32.mrf.mxu0
      %v7324 = vadd.f32 0.0, %v7323
      %7325 = vmatmul.bf16.gmra.mxu0 %v7263
      %v7326 = vpop.f32.mrf.mxu0
      %v7327 = vadd.f32 0.0, %v7326
      %v7328 = vpop.f32.mrf.mxu0
      %v7329 = vadd.f32 0.0, %v7328
      %7330 = vmatmul.bf16.gmra.mxu0 %v7264
      %v7331 = vpop.f32.mrf.mxu0
      %v7332 = vadd.f32 0.0, %v7331
      %v7333 = vpop.f32.mrf.mxu0
      %v7334 = vadd.f32 0.0, %v7333
      %7335 = vmatmul.bf16.gmra.mxu0 %v7265
      %v7336 = vpop.f32.mrf.mxu0
      %v7337 = vadd.f32 0.0, %v7336
      %v7338 = vpop.f32.mrf.mxu0
      %v7339 = vadd.f32 0.0, %v7338
      %7340 = vmatmul.bf16.gmra.mxu0 %v7266
      %v7341 = vpop.f32.mrf.mxu0
      %v7342 = vadd.f32 0.0, %v7341
      %v7343 = vpop.f32.mrf.mxu0
      %v7344 = vadd.f32 0.0, %v7343
      %7345 = vmatmul.bf16.gmra.mxu0 %v7267
      %v7346 = vpop.f32.mrf.mxu0
      %v7347 = vadd.f32 0.0, %v7346
      %v7348 = vpop.f32.mrf.mxu0
      %v7349 = vadd.f32 0.0, %v7348
      %7350 = vmatmul.bf16.gmra.mxu0 %v7268
      %v7351 = vpop.f32.mrf.mxu0
      %v7352 = vadd.f32 0.0, %v7351
      %v7353 = vpop.f32.mrf.mxu0
      %v7354 = vadd.f32 0.0, %v7353
      %7355 = vmatmul.bf16.gmra.mxu0 %v7269
      %v7356 = vpop.f32.mrf.mxu0
      %v7357 = vadd.f32 0.0, %v7356
      %v7358 = vpop.f32.mrf.mxu0
      %v7359 = vadd.f32 0.0, %v7358
      %7360 = vmatmul.bf16.gmra.mxu0 %v7270
      %v7361 = vpop.f32.mrf.mxu0
      %v7362 = vadd.f32 0.0, %v7361
      %v7363 = vpop.f32.mrf.mxu0
      %v7364 = vadd.f32 0.0, %v7363
      %7365 = vmatmul.bf16.gmra.mxu0 %v7271
      %v7366 = vpop.f32.mrf.mxu0
      %v7367 = vadd.f32 0.0, %v7366
      %v7368 = vpop.f32.mrf.mxu0
      %v7369 = vadd.f32 0.0, %v7368
      %7370 = vdwg.mxu0
      %v7371 = vld [vmem:[%s10] sm:$0xf]
      %v7372 = vld [vmem:[%s10 + $0x4] sm:$0xf]
      %v7373 = vld [vmem:[%s10 + $0x8] sm:$0xf]
      %v7374 = vld [vmem:[%s10 + $0xc] sm:$0xf]
      %v7375 = vld [vmem:[%s10 + $0x10] sm:$0xf]
      %v7376 = vld [vmem:[%s10 + $0x14] sm:$0xf]
      %v7377 = vld [vmem:[%s10 + $0x18] sm:$0xf]
      %v7378 = vld [vmem:[%s10 + $0x1c] sm:$0xf]
      %v7379 = vld [vmem:[%s10 + $0x20] sm:$0xf]
      %v7380 = vld [vmem:[%s10 + $0x24] sm:$0xf]
      %v7381 = vld [vmem:[%s10 + $0x28] sm:$0xf]
      %v7382 = vld [vmem:[%s10 + $0x2c] sm:$0xf]
      %v7383 = vld [vmem:[%s10 + $0x30] sm:$0xf]
      %v7384 = vld [vmem:[%s10 + $0x34] sm:$0xf]
      %v7385 = vld [vmem:[%s10 + $0x38] sm:$0xf]
      %v7386 = vld [vmem:[%s10 + $0x3c] sm:$0xf]
      %v7387 = vld [vmem:[%s10 + $0x40] sm:$0xf]
      %v7388 = vld [vmem:[%s10 + $0x44] sm:$0xf]
      %v7389 = vld [vmem:[%s10 + $0x48] sm:$0xf]
      %v7390 = vld [vmem:[%s10 + $0x4c] sm:$0xf]
      %v7391 = vld [vmem:[%s10 + $0x50] sm:$0xf]
      %v7392 = vld [vmem:[%s10 + $0x54] sm:$0xf]
      %v7393 = vld [vmem:[%s10 + $0x58] sm:$0xf]
      %v7394 = vld [vmem:[%s10 + $0x5c] sm:$0xf]
      %v7395 = vld [vmem:[%s10 + $0x60] sm:$0xf]
      %v7396 = vld [vmem:[%s10 + $0x64] sm:$0xf]
      %v7397 = vld [vmem:[%s10 + $0x68] sm:$0xf]
      %v7398 = vld [vmem:[%s10 + $0x6c] sm:$0xf]
      %v7399 = vld [vmem:[%s10 + $0x70] sm:$0xf]
      %v7400 = vld [vmem:[%s10 + $0x74] sm:$0xf]
      %v7431 = vunpack.c.l.b16 %v7371
      %v7432 = vunpack.c.l.b16 %v7372
      %v7433 = vunpack.c.l.b16 %v7373
      %v7434 = vunpack.c.l.b16 %v7374
      %v7435 = vunpack.c.l.b16 %v7375
      %v7436 = vunpack.c.l.b16 %v7376
      %v7437 = vunpack.c.l.b16 %v7377
      %v7438 = vunpack.c.l.b16 %v7378
      %v7439 = vunpack.c.l.b16 %v7379
      %v7440 = vunpack.c.l.b16 %v7380
      %v7441 = vunpack.c.l.b16 %v7381
      %v7442 = vunpack.c.l.b16 %v7382
      %v7443 = vunpack.c.l.b16 %v7383
      %v7444 = vunpack.c.l.b16 %v7384
      %v7445 = vunpack.c.l.b16 %v7385
      %v7446 = vunpack.c.l.b16 %v7386
      %v7447 = vunpack.c.l.b16 %v7387
      %v7448 = vunpack.c.l.b16 %v7388
      %v7449 = vunpack.c.l.b16 %v7389
      %v7450 = vunpack.c.l.b16 %v7390
      %v7451 = vunpack.c.l.b16 %v7391
      %v7452 = vunpack.c.l.b16 %v7392
      %v7453 = vunpack.c.l.b16 %v7393
      %v7454 = vunpack.c.l.b16 %v7394
      %v7455 = vunpack.c.l.b16 %v7395
      %v7456 = vunpack.c.l.b16 %v7396
      %v7457 = vunpack.c.l.b16 %v7397
      %v7458 = vunpack.c.l.b16 %v7398
      %v7459 = vunpack.c.l.b16 %v7399
      %v7460 = vunpack.c.l.b16 %v7400
      %v7461 = vpack.c.b16 %v7432, %v7431
      %v7462 = vpack.c.b16 %v7434, %v7433
      %v7463 = vpack.c.b16 %v7436, %v7435
      %v7464 = vpack.c.b16 %v7438, %v7437
      %v7465 = vpack.c.b16 %v7440, %v7439
      %v7466 = vpack.c.b16 %v7442, %v7441
      %v7467 = vpack.c.b16 %v7444, %v7443
      %v7468 = vpack.c.b16 %v7446, %v7445
      %v7469 = vpack.c.b16 %v7448, %v7447
      %v7470 = vpack.c.b16 %v7450, %v7449
      %v7471 = vpack.c.b16 %v7452, %v7451
      %v7472 = vpack.c.b16 %v7454, %v7453
      %v7473 = vpack.c.b16 %v7456, %v7455
      %v7474 = vpack.c.b16 %v7458, %v7457
      %v7475 = vpack.c.b16 %v7460, %v7459
      %7491 = vmatpush.bf16.msra.mxu0 %v7166
      %7492 = vmatpush.bf16.msra.mxu0 %v7165
      %7493 = vmatpush.bf16.msra.mxu0 %v7164
      %7494 = vmatpush.bf16.msra.mxu0 %v7163
      %7495 = vmatpush.bf16.msra.mxu0 %v7162
      %7496 = vmatpush.bf16.msra.mxu0 %v7161
      %7497 = vmatpush.bf16.msra.mxu0 %v7160
      %7498 = vmatpush.bf16.msra.mxu0 %v7159
      %7499 = vmatmul.bf16.gmra.mxu0 %v7461
      %v7500 = vpop.f32.mrf.mxu0
      %v7501 = vadd.f32 0.0, %v7500
      %v7502 = vpop.f32.mrf.mxu0
      %v7503 = vadd.f32 0.0, %v7502
      %7504 = vmatmul.bf16.gmra.mxu0 %v7462
      %v7505 = vpop.f32.mrf.mxu0
      %v7506 = vadd.f32 0.0, %v7505
      %v7507 = vpop.f32.mrf.mxu0
      %v7508 = vadd.f32 0.0, %v7507
      %7509 = vmatmul.bf16.gmra.mxu0 %v7463
      %v7510 = vpop.f32.mrf.mxu0
      %v7511 = vadd.f32 0.0, %v7510
      %v7512 = vpop.f32.mrf.mxu0
      %v7513 = vadd.f32 0.0, %v7512
      %7514 = vmatmul.bf16.gmra.mxu0 %v7464
      %v7515 = vpop.f32.mrf.mxu0
      %v7516 = vadd.f32 0.0, %v7515
      %v7517 = vpop.f32.mrf.mxu0
      %v7518 = vadd.f32 0.0, %v7517
      %7519 = vmatmul.bf16.gmra.mxu0 %v7465
      %v7520 = vpop.f32.mrf.mxu0
      %v7521 = vadd.f32 0.0, %v7520
      %v7522 = vpop.f32.mrf.mxu0
      %v7523 = vadd.f32 0.0, %v7522
      %7524 = vmatmul.bf16.gmra.mxu0 %v7466
      %v7525 = vpop.f32.mrf.mxu0
      %v7526 = vadd.f32 0.0, %v7525
      %v7527 = vpop.f32.mrf.mxu0
      %v7528 = vadd.f32 0.0, %v7527
      %7529 = vmatmul.bf16.gmra.mxu0 %v7467
      %v7530 = vpop.f32.mrf.mxu0
      %v7531 = vadd.f32 0.0, %v7530
      %v7532 = vpop.f32.mrf.mxu0
      %v7533 = vadd.f32 0.0, %v7532
      %7534 = vmatmul.bf16.gmra.mxu0 %v7468
      %v7535 = vpop.f32.mrf.mxu0
      %v7536 = vadd.f32 0.0, %v7535
      %v7537 = vpop.f32.mrf.mxu0
      %v7538 = vadd.f32 0.0, %v7537
      %7539 = vmatmul.bf16.gmra.mxu0 %v7469
      %v7540 = vpop.f32.mrf.mxu0
      %v7541 = vadd.f32 0.0, %v7540
      %v7542 = vpop.f32.mrf.mxu0
      %v7543 = vadd.f32 0.0, %v7542
      %7544 = vmatmul.bf16.gmra.mxu0 %v7470
      %v7545 = vpop.f32.mrf.mxu0
      %v7546 = vadd.f32 0.0, %v7545
      %v7547 = vpop.f32.mrf.mxu0
      %v7548 = vadd.f32 0.0, %v7547
      %7549 = vmatmul.bf16.gmra.mxu0 %v7471
      %v7550 = vpop.f32.mrf.mxu0
      %v7551 = vadd.f32 0.0, %v7550
      %v7552 = vpop.f32.mrf.mxu0
      %v7553 = vadd.f32 0.0, %v7552
      %7554 = vmatmul.bf16.gmra.mxu0 %v7472
      %v7555 = vpop.f32.mrf.mxu0
      %v7556 = vadd.f32 0.0, %v7555
      %v7557 = vpop.f32.mrf.mxu0
      %v7558 = vadd.f32 0.0, %v7557
      %7559 = vmatmul.bf16.gmra.mxu0 %v7473
      %v7560 = vpop.f32.mrf.mxu0
      %v7561 = vadd.f32 0.0, %v7560
      %v7562 = vpop.f32.mrf.mxu0
      %v7563 = vadd.f32 0.0, %v7562
      %7564 = vmatmul.bf16.gmra.mxu0 %v7474
      %v7565 = vpop.f32.mrf.mxu0
      %v7566 = vadd.f32 0.0, %v7565
      %v7567 = vpop.f32.mrf.mxu0
      %v7568 = vadd.f32 0.0, %v7567
      %7569 = vmatmul.bf16.gmra.mxu0 %v7475
      %v7570 = vpop.f32.mrf.mxu0
      %v7571 = vadd.f32 0.0, %v7570
      %v7572 = vpop.f32.mrf.mxu0
      %v7573 = vadd.f32 0.0, %v7572
      %7574 = vdwg.mxu0
      %v7575 = vmax.f32 %v7297, %v7501
      %v7576 = vmax.f32 %v7299, %v7503
      %v7577 = vmax.f32 %v7302, %v7506
      %v7578 = vmax.f32 %v7304, %v7508
      %v7579 = vmax.f32 %v7307, %v7511
      %v7580 = vmax.f32 %v7309, %v7513
      %v7581 = vmax.f32 %v7312, %v7516
      %v7582 = vmax.f32 %v7314, %v7518
      %v7583 = vmax.f32 %v7317, %v7521
      %v7584 = vmax.f32 %v7319, %v7523
      %v7585 = vmax.f32 %v7322, %v7526
      %v7586 = vmax.f32 %v7324, %v7528
      %v7587 = vmax.f32 %v7327, %v7531
      %v7588 = vmax.f32 %v7329, %v7533
      %v7589 = vmax.f32 %v7332, %v7536
      %v7590 = vmax.f32 %v7334, %v7538
      %v7591 = vmax.f32 %v7337, %v7541
      %v7592 = vmax.f32 %v7339, %v7543
      %v7593 = vmax.f32 %v7342, %v7546
      %v7594 = vmax.f32 %v7344, %v7548
      %v7595 = vmax.f32 %v7347, %v7551
      %v7596 = vmax.f32 %v7349, %v7553
      %v7597 = vmax.f32 %v7352, %v7556
      %v7598 = vmax.f32 %v7354, %v7558
      %v7599 = vmax.f32 %v7357, %v7561
      %v7600 = vmax.f32 %v7359, %v7563
      %v7601 = vmax.f32 %v7362, %v7566
      %v7602 = vmax.f32 %v7364, %v7568
      %v7603 = vmax.f32 %v7367, %v7571
      %v7604 = vmax.f32 %v7369, %v7573
      %vm7605 = vcmask 523264
      %7606 = vst.msk [vmem:[#allocation3] sm:$0xff] %vm7605, %v7575
      %7607 = vst.msk [vmem:[#allocation3 + $0x8] sm:$0xff] %vm7605, %v7576
      %7608 = vst.msk [vmem:[#allocation3 + $0x10] sm:$0xff] %vm7605, %v7577
      %7609 = vst.msk [vmem:[#allocation3 + $0x18] sm:$0xff] %vm7605, %v7578
      %7610 = vst.msk [vmem:[#allocation3 + $0x20] sm:$0xff] %vm7605, %v7579
      %7611 = vst.msk [vmem:[#allocation3 + $0x28] sm:$0xff] %vm7605, %v7580
      %7612 = vst.msk [vmem:[#allocation3 + $0x30] sm:$0xff] %vm7605, %v7581
      %7613 = vst.msk [vmem:[#allocation3 + $0x38] sm:$0xff] %vm7605, %v7582
      %7614 = vst.msk [vmem:[#allocation3 + $0x40] sm:$0xff] %vm7605, %v7583
      %7615 = vst.msk [vmem:[#allocation3 + $0x48] sm:$0xff] %vm7605, %v7584
      %7616 = vst.msk [vmem:[#allocation3 + $0x50] sm:$0xff] %vm7605, %v7585
      %7617 = vst.msk [vmem:[#allocation3 + $0x58] sm:$0xff] %vm7605, %v7586
      %7618 = vst.msk [vmem:[#allocation3 + $0x60] sm:$0xff] %vm7605, %v7587
      %7619 = vst.msk [vmem:[#allocation3 + $0x68] sm:$0xff] %vm7605, %v7588
      %7620 = vst.msk [vmem:[#allocation3 + $0x70] sm:$0xff] %vm7605, %v7589
      %7621 = vst.msk [vmem:[#allocation3 + $0x78] sm:$0xff] %vm7605, %v7590
      %7622 = vst.msk [vmem:[#allocation3 + $0x80] sm:$0xff] %vm7605, %v7591
      %7623 = vst.msk [vmem:[#allocation3 + $0x88] sm:$0xff] %vm7605, %v7592
      %7624 = vst.msk [vmem:[#allocation3 + $0x90] sm:$0xff] %vm7605, %v7593
      %7625 = vst.msk [vmem:[#allocation3 + $0x98] sm:$0xff] %vm7605, %v7594
      %7626 = vst.msk [vmem:[#allocation3 + $0xa0] sm:$0xff] %vm7605, %v7595
      %7627 = vst.msk [vmem:[#allocation3 + $0xa8] sm:$0xff] %vm7605, %v7596
      %7628 = vst.msk [vmem:[#allocation3 + $0xb0] sm:$0xff] %vm7605, %v7597
      %7629 = vst.msk [vmem:[#allocation3 + $0xb8] sm:$0xff] %vm7605, %v7598
      %7630 = vst.msk [vmem:[#allocation3 + $0xc0] sm:$0xff] %vm7605, %v7599
      %7631 = vst.msk [vmem:[#allocation3 + $0xc8] sm:$0xff] %vm7605, %v7600
      %7632 = vst.msk [vmem:[#allocation3 + $0xd0] sm:$0xff] %vm7605, %v7601
      %7633 = vst.msk [vmem:[#allocation3 + $0xd8] sm:$0xff] %vm7605, %v7602
      %7634 = vst.msk [vmem:[#allocation3 + $0xe0] sm:$0xff] %vm7605, %v7603
      %7635 = vst.msk [vmem:[#allocation3 + $0xe8] sm:$0xff] %vm7605, %v7604
      %v7636 = vld [vmem:[#allocation3 + $0x7] sm:$0xff]
      %v7637 = vld [vmem:[#allocation3 + $0x1f] sm:$0xff]
      %v7638 = vld [vmem:[#allocation3 + $0x37] sm:$0xff]
      %v7639 = vld [vmem:[#allocation3 + $0x4f] sm:$0xff]
      %v7640 = vld [vmem:[#allocation3 + $0x67] sm:$0xff]
      %v7641 = vld [vmem:[#allocation3 + $0x7f] sm:$0xff]
      %v7642 = vld [vmem:[#allocation3 + $0x97] sm:$0xff]
      %v7643 = vld [vmem:[#allocation3 + $0xaf] sm:$0xff]
      %v7644 = vpack.c.bf16 %v7637, %v7636
      %v7645 = vpack.c.bf16 %v7639, %v7638
      %v7646 = vpack.c.bf16 %v7641, %v7640
      %v7647 = vpack.c.bf16 %v7643, %v7642
      %v7648 = vld [vmem:[%s5] sm:$0xf]
      %v7649 = vld [vmem:[%s5 + $0x4] sm:$0xf]
      %v7650 = vld [vmem:[%s5 + $0x8] sm:$0xf]
      %v7651 = vld [vmem:[%s5 + $0xc] sm:$0xf]
      %v7652 = vld [vmem:[%s5 + $0x10] sm:$0xf]
      %v7653 = vld [vmem:[%s5 + $0x14] sm:$0xf]
      %v7654 = vld [vmem:[%s5 + $0x18] sm:$0xf]
      %v7655 = vld [vmem:[%s5 + $0x1c] sm:$0xf]
      %v7656 = vld [vmem:[#allocation3 + $0x8] sm:$0xff]
      %v7657 = vld [vmem:[#allocation3 + $0x20] sm:$0xff]
      %v7658 = vld [vmem:[#allocation3 + $0x38] sm:$0xff]
      %v7659 = vld [vmem:[#allocation3 + $0x50] sm:$0xff]
      %v7660 = vld [vmem:[#allocation3 + $0x68] sm:$0xff]
      %v7661 = vld [vmem:[#allocation3 + $0x80] sm:$0xff]
      %v7662 = vld [vmem:[#allocation3 + $0x98] sm:$0xff]
      %v7663 = vld [vmem:[#allocation3 + $0xb0] sm:$0xff]
      %v7664 = vpack.c.bf16 %v7657, %v7656
      %v7665 = vpack.c.bf16 %v7659, %v7658
      %v7666 = vpack.c.bf16 %v7661, %v7660
      %v7667 = vpack.c.bf16 %v7663, %v7662
      %v7668 = vld [vmem:[%s5 + $0x20] sm:$0xf]
      %v7669 = vld [vmem:[%s5 + $0x24] sm:$0xf]
      %v7670 = vld [vmem:[%s5 + $0x28] sm:$0xf]
      %v7671 = vld [vmem:[%s5 + $0x2c] sm:$0xf]
      %v7672 = vld [vmem:[%s5 + $0x30] sm:$0xf]
      %v7673 = vld [vmem:[%s5 + $0x34] sm:$0xf]
      %v7674 = vld [vmem:[%s5 + $0x38] sm:$0xf]
      %v7675 = vld [vmem:[%s5 + $0x3c] sm:$0xf]
      %v7684 = vunpack.c.l.b16 %v7668
      %v7685 = vunpack.c.l.b16 %v7669
      %v7686 = vunpack.c.l.b16 %v7670
      %v7687 = vunpack.c.l.b16 %v7671
      %v7688 = vunpack.c.l.b16 %v7672
      %v7689 = vunpack.c.l.b16 %v7673
      %v7690 = vunpack.c.l.b16 %v7674
      %v7691 = vunpack.c.l.b16 %v7675
      %v7692 = vpack.c.b16 %v7685, %v7684
      %v7693 = vpack.c.b16 %v7687, %v7686
      %v7694 = vpack.c.b16 %v7689, %v7688
      %v7695 = vpack.c.b16 %v7691, %v7690
      %v7701 = vsel %vm7605, %v7664, 0
      %v7704 = vsel %vm7605, %v7665, 0
      %v7707 = vsel %vm7605, %v7666, 0
      %v7710 = vsel %vm7605, %v7667, 0
      %7712 = vmatpush.bf16.msra.mxu0 0
      %7713 = vmatpush.bf16.msra.mxu0 0
      %7714 = vmatpush.bf16.msra.mxu0 0
      %7715 = vmatpush.bf16.msra.mxu0 0
      %7716 = vmatpush.bf16.msra.mxu0 %v7695
      %7717 = vmatpush.bf16.msra.mxu0 %v7694
      %7718 = vmatpush.bf16.msra.mxu0 %v7693
      %7719 = vmatpush.bf16.msra.mxu0 %v7692
      %7720 = vmatmul.bf16.gmra.mxu0 %v7701
      %v7721 = vpop.f32.mrf.mxu0
      %v7722 = vadd.f32 0.0, %v7721
      %v7723 = vpop.f32.mrf.mxu0
      %v7724 = vadd.f32 0.0, %v7723
      %7725 = vmatmul.bf16.gmra.mxu0 %v7704
      %v7726 = vpop.f32.mrf.mxu0
      %v7727 = vadd.f32 0.0, %v7726
      %v7728 = vpop.f32.mrf.mxu0
      %v7729 = vadd.f32 0.0, %v7728
      %7730 = vmatmul.bf16.gmra.mxu0 %v7707
      %v7731 = vpop.f32.mrf.mxu0
      %v7732 = vadd.f32 0.0, %v7731
      %v7733 = vpop.f32.mrf.mxu0
      %v7734 = vadd.f32 0.0, %v7733
      %7735 = vmatmul.bf16.gmra.mxu0 %v7710
      %v7736 = vpop.f32.mrf.mxu0
      %v7737 = vadd.f32 0.0, %v7736
      %v7738 = vpop.f32.mrf.mxu0
      %v7739 = vadd.f32 0.0, %v7738
      %7740 = vdwg.mxu0
      %v7749 = vunpack.c.l.b16 %v7648
      %v7750 = vunpack.c.l.b16 %v7649
      %v7751 = vunpack.c.l.b16 %v7650
      %v7752 = vunpack.c.l.b16 %v7651
      %v7753 = vunpack.c.l.b16 %v7652
      %v7754 = vunpack.c.l.b16 %v7653
      %v7755 = vunpack.c.l.b16 %v7654
      %v7756 = vunpack.c.l.b16 %v7655
      %v7757 = vpack.c.b16 %v7750, %v7749
      %v7758 = vpack.c.b16 %v7752, %v7751
      %v7759 = vpack.c.b16 %v7754, %v7753
      %v7760 = vpack.c.b16 %v7756, %v7755
      %v7766 = vsel %vm7605, %v7644, 0
      %v7769 = vsel %vm7605, %v7645, 0
      %v7772 = vsel %vm7605, %v7646, 0
      %v7775 = vsel %vm7605, %v7647, 0
      %7777 = vmatpush.bf16.msra.mxu0 0
      %7778 = vmatpush.bf16.msra.mxu0 0
      %7779 = vmatpush.bf16.msra.mxu0 0
      %7780 = vmatpush.bf16.msra.mxu0 0
      %7781 = vmatpush.bf16.msra.mxu0 %v7760
      %7782 = vmatpush.bf16.msra.mxu0 %v7759
      %7783 = vmatpush.bf16.msra.mxu0 %v7758
      %7784 = vmatpush.bf16.msra.mxu0 %v7757
      %7785 = vmatmul.bf16.gmra.mxu0 %v7766
      %v7786 = vpop.f32.mrf.mxu0
      %v7787 = vadd.f32 %v7722, %v7786
      %v7788 = vpop.f32.mrf.mxu0
      %v7789 = vadd.f32 %v7724, %v7788
      %7790 = vmatmul.bf16.gmra.mxu0 %v7769
      %v7791 = vpop.f32.mrf.mxu0
      %v7792 = vadd.f32 %v7727, %v7791
      %v7793 = vpop.f32.mrf.mxu0
      %v7794 = vadd.f32 %v7729, %v7793
      %7795 = vmatmul.bf16.gmra.mxu0 %v7772
      %v7796 = vpop.f32.mrf.mxu0
      %v7797 = vadd.f32 %v7732, %v7796
      %v7798 = vpop.f32.mrf.mxu0
      %v7799 = vadd.f32 %v7734, %v7798
      %7800 = vmatmul.bf16.gmra.mxu0 %v7775
      %v7801 = vpop.f32.mrf.mxu0
      %v7802 = vadd.f32 %v7737, %v7801
      %v7803 = vpop.f32.mrf.mxu0
      %v7804 = vadd.f32 %v7739, %v7803
      %7805 = vdwg.mxu0
      %v7806 = vld [vmem:[#allocation3 + $0x9] sm:$0xff]
      %v7807 = vld [vmem:[#allocation3 + $0x21] sm:$0xff]
      %v7808 = vld [vmem:[#allocation3 + $0x39] sm:$0xff]
      %v7809 = vld [vmem:[#allocation3 + $0x51] sm:$0xff]
      %v7810 = vld [vmem:[#allocation3 + $0x69] sm:$0xff]
      %v7811 = vld [vmem:[#allocation3 + $0x81] sm:$0xff]
      %v7812 = vld [vmem:[#allocation3 + $0x99] sm:$0xff]
      %v7813 = vld [vmem:[#allocation3 + $0xb1] sm:$0xff]
      %v7814 = vpack.c.bf16 %v7807, %v7806
      %v7815 = vpack.c.bf16 %v7809, %v7808
      %v7816 = vpack.c.bf16 %v7811, %v7810
      %v7817 = vpack.c.bf16 %v7813, %v7812
      %v7818 = vld [vmem:[%s5 + $0x40] sm:$0xf]
      %v7819 = vld [vmem:[%s5 + $0x44] sm:$0xf]
      %v7820 = vld [vmem:[%s5 + $0x48] sm:$0xf]
      %v7821 = vld [vmem:[%s5 + $0x4c] sm:$0xf]
      %v7822 = vld [vmem:[%s5 + $0x50] sm:$0xf]
      %v7823 = vld [vmem:[%s5 + $0x54] sm:$0xf]
      %v7824 = vld [vmem:[%s5 + $0x58] sm:$0xf]
      %v7825 = vld [vmem:[%s5 + $0x5c] sm:$0xf]
      %v7834 = vunpack.c.l.b16 %v7818
      %v7835 = vunpack.c.l.b16 %v7819
      %v7836 = vunpack.c.l.b16 %v7820
      %v7837 = vunpack.c.l.b16 %v7821
      %v7838 = vunpack.c.l.b16 %v7822
      %v7839 = vunpack.c.l.b16 %v7823
      %v7840 = vunpack.c.l.b16 %v7824
      %v7841 = vunpack.c.l.b16 %v7825
      %v7842 = vpack.c.b16 %v7835, %v7834
      %v7843 = vpack.c.b16 %v7837, %v7836
      %v7844 = vpack.c.b16 %v7839, %v7838
      %v7845 = vpack.c.b16 %v7841, %v7840
      %v7851 = vsel %vm7605, %v7814, 0
      %v7854 = vsel %vm7605, %v7815, 0
      %v7857 = vsel %vm7605, %v7816, 0
      %v7860 = vsel %vm7605, %v7817, 0
      %7862 = vmatpush.bf16.msra.mxu0 0
      %7863 = vmatpush.bf16.msra.mxu0 0
      %7864 = vmatpush.bf16.msra.mxu0 0
      %7865 = vmatpush.bf16.msra.mxu0 0
      %7866 = vmatpush.bf16.msra.mxu0 %v7845
      %7867 = vmatpush.bf16.msra.mxu0 %v7844
      %7868 = vmatpush.bf16.msra.mxu0 %v7843
      %7869 = vmatpush.bf16.msra.mxu0 %v7842
      %7870 = vmatmul.bf16.gmra.mxu0 %v7851
      %v7871 = vpop.f32.mrf.mxu0
      %v7872 = vadd.f32 0.0, %v7871
      %v7873 = vpop.f32.mrf.mxu0
      %v7874 = vadd.f32 0.0, %v7873
      %7875 = vmatmul.bf16.gmra.mxu0 %v7854
      %v7876 = vpop.f32.mrf.mxu0
      %v7877 = vadd.f32 0.0, %v7876
      %v7878 = vpop.f32.mrf.mxu0
      %v7879 = vadd.f32 0.0, %v7878
      %7880 = vmatmul.bf16.gmra.mxu0 %v7857
      %v7881 = vpop.f32.mrf.mxu0
      %v7882 = vadd.f32 0.0, %v7881
      %v7883 = vpop.f32.mrf.mxu0
      %v7884 = vadd.f32 0.0, %v7883
      %7885 = vmatmul.bf16.gmra.mxu0 %v7860
      %v7886 = vpop.f32.mrf.mxu0
      %v7887 = vadd.f32 0.0, %v7886
      %v7888 = vpop.f32.mrf.mxu0
      %v7889 = vadd.f32 0.0, %v7888
      %7890 = vdwg.mxu0
      %v7891 = vadd.f32 %v7787, %v7872
      %v7892 = vadd.f32 %v7789, %v7874
      %v7893 = vadd.f32 %v7792, %v7877
      %v7894 = vadd.f32 %v7794, %v7879
      %v7895 = vadd.f32 %v7797, %v7882
      %v7896 = vadd.f32 %v7799, %v7884
      %v7897 = vadd.f32 %v7802, %v7887
      %v7898 = vadd.f32 %v7804, %v7889
      %s7899 = scalar_lea.vmem [#allocation3], 24
      %v7900 = vld [vmem:[%s7899 + $0x7] sm:$0xff]
      %v7901 = vld [vmem:[%s7899 + $0x1f] sm:$0xff]
      %v7902 = vld [vmem:[%s7899 + $0x37] sm:$0xff]
      %v7903 = vld [vmem:[%s7899 + $0x4f] sm:$0xff]
      %v7904 = vld [vmem:[%s7899 + $0x67] sm:$0xff]
      %v7905 = vld [vmem:[%s7899 + $0x7f] sm:$0xff]
      %v7906 = vld [vmem:[%s7899 + $0x97] sm:$0xff]
      %v7907 = vld [vmem:[%s7899 + $0xaf] sm:$0xff]
      %v7908 = vpack.c.bf16 %v7901, %v7900
      %v7909 = vpack.c.bf16 %v7903, %v7902
      %v7910 = vpack.c.bf16 %v7905, %v7904
      %v7911 = vpack.c.bf16 %v7907, %v7906
      %v7912 = vld [vmem:[%s5 + $0x60] sm:$0xf]
      %v7913 = vld [vmem:[%s5 + $0x64] sm:$0xf]
      %v7914 = vld [vmem:[%s5 + $0x68] sm:$0xf]
      %v7915 = vld [vmem:[%s5 + $0x6c] sm:$0xf]
      %v7916 = vld [vmem:[%s5 + $0x70] sm:$0xf]
      %v7917 = vld [vmem:[%s5 + $0x74] sm:$0xf]
      %v7918 = vld [vmem:[%s5 + $0x78] sm:$0xf]
      %v7919 = vld [vmem:[%s5 + $0x7c] sm:$0xf]
      %v7928 = vunpack.c.l.b16 %v7912
      %v7929 = vunpack.c.l.b16 %v7913
      %v7930 = vunpack.c.l.b16 %v7914
      %v7931 = vunpack.c.l.b16 %v7915
      %v7932 = vunpack.c.l.b16 %v7916
      %v7933 = vunpack.c.l.b16 %v7917
      %v7934 = vunpack.c.l.b16 %v7918
      %v7935 = vunpack.c.l.b16 %v7919
      %v7936 = vpack.c.b16 %v7929, %v7928
      %v7937 = vpack.c.b16 %v7931, %v7930
      %v7938 = vpack.c.b16 %v7933, %v7932
      %v7939 = vpack.c.b16 %v7935, %v7934
      %v7945 = vsel %vm7605, %v7908, 0
      %v7948 = vsel %vm7605, %v7909, 0
      %v7951 = vsel %vm7605, %v7910, 0
      %v7954 = vsel %vm7605, %v7911, 0
      %7956 = vmatpush.bf16.msra.mxu0 0
      %7957 = vmatpush.bf16.msra.mxu0 0
      %7958 = vmatpush.bf16.msra.mxu0 0
      %7959 = vmatpush.bf16.msra.mxu0 0
      %7960 = vmatpush.bf16.msra.mxu0 %v7939
      %7961 = vmatpush.bf16.msra.mxu0 %v7938
      %7962 = vmatpush.bf16.msra.mxu0 %v7937
      %7963 = vmatpush.bf16.msra.mxu0 %v7936
      %7964 = vmatmul.bf16.gmra.mxu0 %v7945
      %v7965 = vpop.f32.mrf.mxu0
      %v7966 = vadd.f32 0.0, %v7965
      %v7967 = vpop.f32.mrf.mxu0
      %v7968 = vadd.f32 0.0, %v7967
      %7969 = vmatmul.bf16.gmra.mxu0 %v7948
      %v7970 = vpop.f32.mrf.mxu0
      %v7971 = vadd.f32 0.0, %v7970
      %v7972 = vpop.f32.mrf.mxu0
      %v7973 = vadd.f32 0.0, %v7972
      %7974 = vmatmul.bf16.gmra.mxu0 %v7951
      %v7975 = vpop.f32.mrf.mxu0
      %v7976 = vadd.f32 0.0, %v7975
      %v7977 = vpop.f32.mrf.mxu0
      %v7978 = vadd.f32 0.0, %v7977
      %7979 = vmatmul.bf16.gmra.mxu0 %v7954
      %v7980 = vpop.f32.mrf.mxu0
      %v7981 = vadd.f32 0.0, %v7980
      %v7982 = vpop.f32.mrf.mxu0
      %v7983 = vadd.f32 0.0, %v7982
      %7984 = vdwg.mxu0
      %v7985 = vadd.f32 %v7891, %v7966
      %v7986 = vadd.f32 %v7892, %v7968
      %v7987 = vadd.f32 %v7893, %v7971
      %v7988 = vadd.f32 %v7894, %v7973
      %v7989 = vadd.f32 %v7895, %v7976
      %v7990 = vadd.f32 %v7896, %v7978
      %v7991 = vadd.f32 %v7897, %v7981
      %v7992 = vadd.f32 %v7898, %v7983
      %v7993 = vld [vmem:[%s7899 + $0x8] sm:$0xff]
      %v7994 = vld [vmem:[%s7899 + $0x20] sm:$0xff]
      %v7995 = vld [vmem:[%s7899 + $0x38] sm:$0xff]
      %v7996 = vld [vmem:[%s7899 + $0x50] sm:$0xff]
      %v7997 = vld [vmem:[%s7899 + $0x68] sm:$0xff]
      %v7998 = vld [vmem:[%s7899 + $0x80] sm:$0xff]
      %v7999 = vld [vmem:[%s7899 + $0x98] sm:$0xff]
      %v8000 = vld [vmem:[%s7899 + $0xb0] sm:$0xff]
      %v8001 = vpack.c.bf16 %v7994, %v7993
      %v8002 = vpack.c.bf16 %v7996, %v7995
      %v8003 = vpack.c.bf16 %v7998, %v7997
      %v8004 = vpack.c.bf16 %v8000, %v7999
      %v8005 = vld [vmem:[%s5 + $0x80] sm:$0xf]
      %v8006 = vld [vmem:[%s5 + $0x84] sm:$0xf]
      %v8007 = vld [vmem:[%s5 + $0x88] sm:$0xf]
      %v8008 = vld [vmem:[%s5 + $0x8c] sm:$0xf]
      %v8009 = vld [vmem:[%s5 + $0x90] sm:$0xf]
      %v8010 = vld [vmem:[%s5 + $0x94] sm:$0xf]
      %v8011 = vld [vmem:[%s5 + $0x98] sm:$0xf]
      %v8012 = vld [vmem:[%s5 + $0x9c] sm:$0xf]
      %v8021 = vunpack.c.l.b16 %v8005
      %v8022 = vunpack.c.l.b16 %v8006
      %v8023 = vunpack.c.l.b16 %v8007
      %v8024 = vunpack.c.l.b16 %v8008
      %v8025 = vunpack.c.l.b16 %v8009
      %v8026 = vunpack.c.l.b16 %v8010
      %v8027 = vunpack.c.l.b16 %v8011
      %v8028 = vunpack.c.l.b16 %v8012
      %v8029 = vpack.c.b16 %v8022, %v8021
      %v8030 = vpack.c.b16 %v8024, %v8023
      %v8031 = vpack.c.b16 %v8026, %v8025
      %v8032 = vpack.c.b16 %v8028, %v8027
      %v8038 = vsel %vm7605, %v8001, 0
      %v8041 = vsel %vm7605, %v8002, 0
      %v8044 = vsel %vm7605, %v8003, 0
      %v8047 = vsel %vm7605, %v8004, 0
      %8049 = vmatpush.bf16.msra.mxu0 0
      %8050 = vmatpush.bf16.msra.mxu0 0
      %8051 = vmatpush.bf16.msra.mxu0 0
      %8052 = vmatpush.bf16.msra.mxu0 0
      %8053 = vmatpush.bf16.msra.mxu0 %v8032
      %8054 = vmatpush.bf16.msra.mxu0 %v8031
      %8055 = vmatpush.bf16.msra.mxu0 %v8030
      %8056 = vmatpush.bf16.msra.mxu0 %v8029
      %8057 = vmatmul.bf16.gmra.mxu0 %v8038
      %v8058 = vpop.f32.mrf.mxu0
      %v8059 = vadd.f32 0.0, %v8058
      %v8060 = vpop.f32.mrf.mxu0
      %v8061 = vadd.f32 0.0, %v8060
      %8062 = vmatmul.bf16.gmra.mxu0 %v8041
      %v8063 = vpop.f32.mrf.mxu0
      %v8064 = vadd.f32 0.0, %v8063
      %v8065 = vpop.f32.mrf.mxu0
      %v8066 = vadd.f32 0.0, %v8065
      %8067 = vmatmul.bf16.gmra.mxu0 %v8044
      %v8068 = vpop.f32.mrf.mxu0
      %v8069 = vadd.f32 0.0, %v8068
      %v8070 = vpop.f32.mrf.mxu0
      %v8071 = vadd.f32 0.0, %v8070
      %8072 = vmatmul.bf16.gmra.mxu0 %v8047
      %v8073 = vpop.f32.mrf.mxu0
      %v8074 = vadd.f32 0.0, %v8073
      %v8075 = vpop.f32.mrf.mxu0
      %v8076 = vadd.f32 0.0, %v8075
      %8077 = vdwg.mxu0
      %v8078 = vadd.f32 %v7985, %v8059
      %v8079 = vadd.f32 %v7986, %v8061
      %v8080 = vadd.f32 %v7987, %v8064
      %v8081 = vadd.f32 %v7988, %v8066
      %v8082 = vadd.f32 %v7989, %v8069
      %v8083 = vadd.f32 %v7990, %v8071
      %v8084 = vadd.f32 %v7991, %v8074
      %v8085 = vadd.f32 %v7992, %v8076
      %v8086 = vld [vmem:[%s7899 + $0x9] sm:$0xff]
      %v8087 = vld [vmem:[%s7899 + $0x21] sm:$0xff]
      %v8088 = vld [vmem:[%s7899 + $0x39] sm:$0xff]
      %v8089 = vld [vmem:[%s7899 + $0x51] sm:$0xff]
      %v8090 = vld [vmem:[%s7899 + $0x69] sm:$0xff]
      %v8091 = vld [vmem:[%s7899 + $0x81] sm:$0xff]
      %v8092 = vld [vmem:[%s7899 + $0x99] sm:$0xff]
      %v8093 = vld [vmem:[%s7899 + $0xb1] sm:$0xff]
      %v8094 = vpack.c.bf16 %v8087, %v8086
      %v8095 = vpack.c.bf16 %v8089, %v8088
      %v8096 = vpack.c.bf16 %v8091, %v8090
      %v8097 = vpack.c.bf16 %v8093, %v8092
      %v8098 = vld [vmem:[%s5 + $0xa0] sm:$0xf]
      %v8099 = vld [vmem:[%s5 + $0xa4] sm:$0xf]
      %v8100 = vld [vmem:[%s5 + $0xa8] sm:$0xf]
      %v8101 = vld [vmem:[%s5 + $0xac] sm:$0xf]
      %v8102 = vld [vmem:[%s5 + $0xb0] sm:$0xf]
      %v8103 = vld [vmem:[%s5 + $0xb4] sm:$0xf]
      %v8104 = vld [vmem:[%s5 + $0xb8] sm:$0xf]
      %v8105 = vld [vmem:[%s5 + $0xbc] sm:$0xf]
      %v8114 = vunpack.c.l.b16 %v8098
      %v8115 = vunpack.c.l.b16 %v8099
      %v8116 = vunpack.c.l.b16 %v8100
      %v8117 = vunpack.c.l.b16 %v8101
      %v8118 = vunpack.c.l.b16 %v8102
      %v8119 = vunpack.c.l.b16 %v8103
      %v8120 = vunpack.c.l.b16 %v8104
      %v8121 = vunpack.c.l.b16 %v8105
      %v8122 = vpack.c.b16 %v8115, %v8114
      %v8123 = vpack.c.b16 %v8117, %v8116
      %v8124 = vpack.c.b16 %v8119, %v8118
      %v8125 = vpack.c.b16 %v8121, %v8120
      %v8131 = vsel %vm7605, %v8094, 0
      %v8134 = vsel %vm7605, %v8095, 0
      %v8137 = vsel %vm7605, %v8096, 0
      %v8140 = vsel %vm7605, %v8097, 0
      %8142 = vmatpush.bf16.msra.mxu0 0
      %8143 = vmatpush.bf16.msra.mxu0 0
      %8144 = vmatpush.bf16.msra.mxu0 0
      %8145 = vmatpush.bf16.msra.mxu0 0
      %8146 = vmatpush.bf16.msra.mxu0 %v8125
      %8147 = vmatpush.bf16.msra.mxu0 %v8124
      %8148 = vmatpush.bf16.msra.mxu0 %v8123
      %8149 = vmatpush.bf16.msra.mxu0 %v8122
      %8150 = vmatmul.bf16.gmra.mxu0 %v8131
      %v8151 = vpop.f32.mrf.mxu0
      %v8152 = vadd.f32 0.0, %v8151
      %v8153 = vpop.f32.mrf.mxu0
      %v8154 = vadd.f32 0.0, %v8153
      %8155 = vmatmul.bf16.gmra.mxu0 %v8134
      %v8156 = vpop.f32.mrf.mxu0
      %v8157 = vadd.f32 0.0, %v8156
      %v8158 = vpop.f32.mrf.mxu0
      %v8159 = vadd.f32 0.0, %v8158
      %8160 = vmatmul.bf16.gmra.mxu0 %v8137
      %v8161 = vpop.f32.mrf.mxu0
      %v8162 = vadd.f32 0.0, %v8161
      %v8163 = vpop.f32.mrf.mxu0
      %v8164 = vadd.f32 0.0, %v8163
      %8165 = vmatmul.bf16.gmra.mxu0 %v8140
      %v8166 = vpop.f32.mrf.mxu0
      %v8167 = vadd.f32 0.0, %v8166
      %v8168 = vpop.f32.mrf.mxu0
      %v8169 = vadd.f32 0.0, %v8168
      %8170 = vdwg.mxu0
      %v8171 = vadd.f32 %v8078, %v8152
      %v8172 = vadd.f32 %v8079, %v8154
      %v8173 = vadd.f32 %v8080, %v8157
      %v8174 = vadd.f32 %v8081, %v8159
      %v8175 = vadd.f32 %v8082, %v8162
      %v8176 = vadd.f32 %v8083, %v8164
      %v8177 = vadd.f32 %v8084, %v8167
      %v8178 = vadd.f32 %v8085, %v8169
      %s8179 = scalar_lea.vmem [#allocation3], 48
      %v8180 = vld [vmem:[%s8179 + $0x7] sm:$0xff]
      %v8181 = vld [vmem:[%s8179 + $0x1f] sm:$0xff]
      %v8182 = vld [vmem:[%s8179 + $0x37] sm:$0xff]
      %v8183 = vld [vmem:[%s8179 + $0x4f] sm:$0xff]
      %v8184 = vld [vmem:[%s8179 + $0x67] sm:$0xff]
      %v8185 = vld [vmem:[%s8179 + $0x7f] sm:$0xff]
      %v8186 = vld [vmem:[%s8179 + $0x97] sm:$0xff]
      %v8187 = vld [vmem:[%s8179 + $0xaf] sm:$0xff]
      %v8188 = vpack.c.bf16 %v8181, %v8180
      %v8189 = vpack.c.bf16 %v8183, %v8182
      %v8190 = vpack.c.bf16 %v8185, %v8184
      %v8191 = vpack.c.bf16 %v8187, %v8186
      %v8192 = vld [vmem:[%s5 + $0xc0] sm:$0xf]
      %v8193 = vld [vmem:[%s5 + $0xc4] sm:$0xf]
      %v8194 = vld [vmem:[%s5 + $0xc8] sm:$0xf]
      %v8195 = vld [vmem:[%s5 + $0xcc] sm:$0xf]
      %v8196 = vld [vmem:[%s5 + $0xd0] sm:$0xf]
      %v8197 = vld [vmem:[%s5 + $0xd4] sm:$0xf]
      %v8198 = vld [vmem:[%s5 + $0xd8] sm:$0xf]
      %v8199 = vld [vmem:[%s5 + $0xdc] sm:$0xf]
      %v8208 = vunpack.c.l.b16 %v8192
      %v8209 = vunpack.c.l.b16 %v8193
      %v8210 = vunpack.c.l.b16 %v8194
      %v8211 = vunpack.c.l.b16 %v8195
      %v8212 = vunpack.c.l.b16 %v8196
      %v8213 = vunpack.c.l.b16 %v8197
      %v8214 = vunpack.c.l.b16 %v8198
      %v8215 = vunpack.c.l.b16 %v8199
      %v8216 = vpack.c.b16 %v8209, %v8208
      %v8217 = vpack.c.b16 %v8211, %v8210
      %v8218 = vpack.c.b16 %v8213, %v8212
      %v8219 = vpack.c.b16 %v8215, %v8214
      %v8225 = vsel %vm7605, %v8188, 0
      %v8228 = vsel %vm7605, %v8189, 0
      %v8231 = vsel %vm7605, %v8190, 0
      %v8234 = vsel %vm7605, %v8191, 0
      %8236 = vmatpush.bf16.msra.mxu0 0
      %8237 = vmatpush.bf16.msra.mxu0 0
      %8238 = vmatpush.bf16.msra.mxu0 0
      %8239 = vmatpush.bf16.msra.mxu0 0
      %8240 = vmatpush.bf16.msra.mxu0 %v8219
      %8241 = vmatpush.bf16.msra.mxu0 %v8218
      %8242 = vmatpush.bf16.msra.mxu0 %v8217
      %8243 = vmatpush.bf16.msra.mxu0 %v8216
      %8244 = vmatmul.bf16.gmra.mxu0 %v8225
      %v8245 = vpop.f32.mrf.mxu0
      %v8246 = vadd.f32 0.0, %v8245
      %v8247 = vpop.f32.mrf.mxu0
      %v8248 = vadd.f32 0.0, %v8247
      %8249 = vmatmul.bf16.gmra.mxu0 %v8228
      %v8250 = vpop.f32.mrf.mxu0
      %v8251 = vadd.f32 0.0, %v8250
      %v8252 = vpop.f32.mrf.mxu0
      %v8253 = vadd.f32 0.0, %v8252
      %8254 = vmatmul.bf16.gmra.mxu0 %v8231
      %v8255 = vpop.f32.mrf.mxu0
      %v8256 = vadd.f32 0.0, %v8255
      %v8257 = vpop.f32.mrf.mxu0
      %v8258 = vadd.f32 0.0, %v8257
      %8259 = vmatmul.bf16.gmra.mxu0 %v8234
      %v8260 = vpop.f32.mrf.mxu0
      %v8261 = vadd.f32 0.0, %v8260
      %v8262 = vpop.f32.mrf.mxu0
      %v8263 = vadd.f32 0.0, %v8262
      %8264 = vdwg.mxu0
      %v8265 = vadd.f32 %v8171, %v8246
      %v8266 = vadd.f32 %v8172, %v8248
      %v8267 = vadd.f32 %v8173, %v8251
      %v8268 = vadd.f32 %v8174, %v8253
      %v8269 = vadd.f32 %v8175, %v8256
      %v8270 = vadd.f32 %v8176, %v8258
      %v8271 = vadd.f32 %v8177, %v8261
      %v8272 = vadd.f32 %v8178, %v8263
      %v8273 = vld [vmem:[%s8179 + $0x8] sm:$0xff]
      %v8274 = vld [vmem:[%s8179 + $0x20] sm:$0xff]
      %v8275 = vld [vmem:[%s8179 + $0x38] sm:$0xff]
      %v8276 = vld [vmem:[%s8179 + $0x50] sm:$0xff]
      %v8277 = vld [vmem:[%s8179 + $0x68] sm:$0xff]
      %v8278 = vld [vmem:[%s8179 + $0x80] sm:$0xff]
      %v8279 = vld [vmem:[%s8179 + $0x98] sm:$0xff]
      %v8280 = vld [vmem:[%s8179 + $0xb0] sm:$0xff]
      %v8281 = vpack.c.bf16 %v8274, %v8273
      %v8282 = vpack.c.bf16 %v8276, %v8275
      %v8283 = vpack.c.bf16 %v8278, %v8277
      %v8284 = vpack.c.bf16 %v8280, %v8279
      %v8285 = vld [vmem:[%s5 + $0xe0] sm:$0xf]
      %v8286 = vld [vmem:[%s5 + $0xe4] sm:$0xf]
      %v8287 = vld [vmem:[%s5 + $0xe8] sm:$0xf]
      %v8288 = vld [vmem:[%s5 + $0xec] sm:$0xf]
      %v8289 = vld [vmem:[%s5 + $0xf0] sm:$0xf]
      %v8290 = vld [vmem:[%s5 + $0xf4] sm:$0xf]
      %v8291 = vld [vmem:[%s5 + $0xf8] sm:$0xf]
      %v8292 = vld [vmem:[%s5 + $0xfc] sm:$0xf]
      %v8301 = vunpack.c.l.b16 %v8285
      %v8302 = vunpack.c.l.b16 %v8286
      %v8303 = vunpack.c.l.b16 %v8287
      %v8304 = vunpack.c.l.b16 %v8288
      %v8305 = vunpack.c.l.b16 %v8289
      %v8306 = vunpack.c.l.b16 %v8290
      %v8307 = vunpack.c.l.b16 %v8291
      %v8308 = vunpack.c.l.b16 %v8292
      %v8309 = vpack.c.b16 %v8302, %v8301
      %v8310 = vpack.c.b16 %v8304, %v8303
      %v8311 = vpack.c.b16 %v8306, %v8305
      %v8312 = vpack.c.b16 %v8308, %v8307
      %v8318 = vsel %vm7605, %v8281, 0
      %v8321 = vsel %vm7605, %v8282, 0
      %v8324 = vsel %vm7605, %v8283, 0
      %v8327 = vsel %vm7605, %v8284, 0
      %8329 = vmatpush.bf16.msra.mxu0 0
      %8330 = vmatpush.bf16.msra.mxu0 0
      %8331 = vmatpush.bf16.msra.mxu0 0
      %8332 = vmatpush.bf16.msra.mxu0 0
      %8333 = vmatpush.bf16.msra.mxu0 %v8312
      %8334 = vmatpush.bf16.msra.mxu0 %v8311
      %8335 = vmatpush.bf16.msra.mxu0 %v8310
      %8336 = vmatpush.bf16.msra.mxu0 %v8309
      %8337 = vmatmul.bf16.gmra.mxu0 %v8318
      %v8338 = vpop.f32.mrf.mxu0
      %v8339 = vadd.f32 0.0, %v8338
      %v8340 = vpop.f32.mrf.mxu0
      %v8341 = vadd.f32 0.0, %v8340
      %8342 = vmatmul.bf16.gmra.mxu0 %v8321
      %v8343 = vpop.f32.mrf.mxu0
      %v8344 = vadd.f32 0.0, %v8343
      %v8345 = vpop.f32.mrf.mxu0
      %v8346 = vadd.f32 0.0, %v8345
      %8347 = vmatmul.bf16.gmra.mxu0 %v8324
      %v8348 = vpop.f32.mrf.mxu0
      %v8349 = vadd.f32 0.0, %v8348
      %v8350 = vpop.f32.mrf.mxu0
      %v8351 = vadd.f32 0.0, %v8350
      %8352 = vmatmul.bf16.gmra.mxu0 %v8327
      %v8353 = vpop.f32.mrf.mxu0
      %v8354 = vadd.f32 0.0, %v8353
      %v8355 = vpop.f32.mrf.mxu0
      %v8356 = vadd.f32 0.0, %v8355
      %8357 = vdwg.mxu0
      %v8358 = vadd.f32 %v8265, %v8339
      %v8359 = vadd.f32 %v8266, %v8341
      %v8360 = vadd.f32 %v8267, %v8344
      %v8361 = vadd.f32 %v8268, %v8346
      %v8362 = vadd.f32 %v8269, %v8349
      %v8363 = vadd.f32 %v8270, %v8351
      %v8364 = vadd.f32 %v8271, %v8354
      %v8365 = vadd.f32 %v8272, %v8356
      %v8366 = vld [vmem:[%s8179 + $0x9] sm:$0xff]
      %v8367 = vld [vmem:[%s8179 + $0x21] sm:$0xff]
      %v8368 = vld [vmem:[%s8179 + $0x39] sm:$0xff]
      %v8369 = vld [vmem:[%s8179 + $0x51] sm:$0xff]
      %v8370 = vld [vmem:[%s8179 + $0x69] sm:$0xff]
      %v8371 = vld [vmem:[%s8179 + $0x81] sm:$0xff]
      %v8372 = vld [vmem:[%s8179 + $0x99] sm:$0xff]
      %v8373 = vld [vmem:[%s8179 + $0xb1] sm:$0xff]
      %v8374 = vpack.c.bf16 %v8367, %v8366
      %v8375 = vpack.c.bf16 %v8369, %v8368
      %v8376 = vpack.c.bf16 %v8371, %v8370
      %v8377 = vpack.c.bf16 %v8373, %v8372
      %v8378 = vld [vmem:[%s5 + $0x100] sm:$0xf]
      %v8379 = vld [vmem:[%s5 + $0x104] sm:$0xf]
      %v8380 = vld [vmem:[%s5 + $0x108] sm:$0xf]
      %v8381 = vld [vmem:[%s5 + $0x10c] sm:$0xf]
      %v8382 = vld [vmem:[%s5 + $0x110] sm:$0xf]
      %v8383 = vld [vmem:[%s5 + $0x114] sm:$0xf]
      %v8384 = vld [vmem:[%s5 + $0x118] sm:$0xf]
      %v8385 = vld [vmem:[%s5 + $0x11c] sm:$0xf]
      %v8394 = vunpack.c.l.b16 %v8378
      %v8395 = vunpack.c.l.b16 %v8379
      %v8396 = vunpack.c.l.b16 %v8380
      %v8397 = vunpack.c.l.b16 %v8381
      %v8398 = vunpack.c.l.b16 %v8382
      %v8399 = vunpack.c.l.b16 %v8383
      %v8400 = vunpack.c.l.b16 %v8384
      %v8401 = vunpack.c.l.b16 %v8385
      %v8402 = vpack.c.b16 %v8395, %v8394
      %v8403 = vpack.c.b16 %v8397, %v8396
      %v8404 = vpack.c.b16 %v8399, %v8398
      %v8405 = vpack.c.b16 %v8401, %v8400
      %v8411 = vsel %vm7605, %v8374, 0
      %v8414 = vsel %vm7605, %v8375, 0
      %v8417 = vsel %vm7605, %v8376, 0
      %v8420 = vsel %vm7605, %v8377, 0
      %8422 = vmatpush.bf16.msra.mxu0 0
      %8423 = vmatpush.bf16.msra.mxu0 0
      %8424 = vmatpush.bf16.msra.mxu0 0
      %8425 = vmatpush.bf16.msra.mxu0 0
      %8426 = vmatpush.bf16.msra.mxu0 %v8405
      %8427 = vmatpush.bf16.msra.mxu0 %v8404
      %8428 = vmatpush.bf16.msra.mxu0 %v8403
      %8429 = vmatpush.bf16.msra.mxu0 %v8402
      %8430 = vmatmul.bf16.gmra.mxu0 %v8411
      %v8431 = vpop.f32.mrf.mxu0
      %v8432 = vadd.f32 0.0, %v8431
      %v8433 = vpop.f32.mrf.mxu0
      %v8434 = vadd.f32 0.0, %v8433
      %8435 = vmatmul.bf16.gmra.mxu0 %v8414
      %v8436 = vpop.f32.mrf.mxu0
      %v8437 = vadd.f32 0.0, %v8436
      %v8438 = vpop.f32.mrf.mxu0
      %v8439 = vadd.f32 0.0, %v8438
      %8440 = vmatmul.bf16.gmra.mxu0 %v8417
      %v8441 = vpop.f32.mrf.mxu0
      %v8442 = vadd.f32 0.0, %v8441
      %v8443 = vpop.f32.mrf.mxu0
      %v8444 = vadd.f32 0.0, %v8443
      %8445 = vmatmul.bf16.gmra.mxu0 %v8420
      %v8446 = vpop.f32.mrf.mxu0
      %v8447 = vadd.f32 0.0, %v8446
      %v8448 = vpop.f32.mrf.mxu0
      %v8449 = vadd.f32 0.0, %v8448
      %8450 = vdwg.mxu0
      %v8451 = vadd.f32 %v8358, %v8432
      %v8452 = vadd.f32 %v8359, %v8434
      %v8453 = vadd.f32 %v8360, %v8437
      %v8454 = vadd.f32 %v8361, %v8439
      %v8455 = vadd.f32 %v8362, %v8442
      %v8456 = vadd.f32 %v8363, %v8444
      %v8457 = vadd.f32 %v8364, %v8447
      %v8458 = vadd.f32 %v8365, %v8449
      %v8459 = vld [vmem:[%s6] sm:$0x1]
      %v8461 = vperm.slane %v8459, 0
      %v8463 = vadd.f32 %v8451, %v8461
      %v8464 = vadd.f32 %v8452, %v8461
      %v8465 = vadd.f32 %v8453, %v8461
      %v8466 = vadd.f32 %v8454, %v8461
      %v8467 = vadd.f32 %v8455, %v8461
      %v8468 = vadd.f32 %v8456, %v8461
      %v8469 = vadd.f32 %v8457, %v8461
      %v8470 = vadd.f32 %v8458, %v8461
      %v8471 = vmax.f32 %v8463, 0.0
      %v8472 = vmax.f32 %v8464, 0.0
      %v8473 = vmax.f32 %v8465, 0.0
      %v8474 = vmax.f32 %v8466, 0.0
      %v8475 = vmax.f32 %v8467, 0.0
      %v8476 = vmax.f32 %v8468, 0.0
      %v8477 = vmax.f32 %v8469, 0.0
      %v8478 = vmax.f32 %v8470, 0.0
      %v8479 = vmax.f32 %v8471, %v8472
      %v8480 = vmax.f32 %v8473, %v8474
      %v8481 = vmax.f32 %v8475, %v8476
      %v8482 = vmax.f32 %v8477, %v8478
      %v8483 = vpack.c.bf16 %v8480, %v8479
      %v8484 = vpack.c.bf16 %v8482, %v8481
      %v8485 = vld [vmem:[%s11] sm:$0xf]
      %v8486 = vld [vmem:[%s11 + $0x4] sm:$0xf]
      %v8489 = vunpack.c.l.b16 %v8485
      %v8490 = vunpack.c.l.b16 %v8486
      %v8491 = vpack.c.b16 %v8490, %v8489
      %v8493 = vsel %vm910, %v8491, 0
      %8495 = vmatpush.bf16.msra.mxu0 0
      %8496 = vmatpush.bf16.msra.mxu0 0
      %8497 = vmatpush.bf16.msra.mxu0 0
      %8498 = vmatpush.bf16.msra.mxu0 0
      %8499 = vmatpush.bf16.msra.mxu0 0
      %8500 = vmatpush.bf16.msra.mxu0 0
      %8501 = vmatpush.bf16.msra.mxu0 %v8484
      %8502 = vmatpush.bf16.msra.mxu0 %v8483
      %8503 = vmatmul.bf16.gmra.mxu0 %v8493
      %v8504 = vpop.f32.mrf.mxu0
      %v8505 = vadd.f32 0.0, %v8504
      %v8506 = vpop.f32.mrf.mxu0
      %v8507 = vadd.f32 0.0, %v8506
      %8508 = vdwg.mxu0
      %v8509 = vld [vmem:[%s12] sm:$0xf]
      %v8510 = vld [vmem:[%s12 + $0x4] sm:$0xf]
      %v8513 = vunpack.c.l.b16 %v8509
      %v8514 = vunpack.c.l.b16 %v8510
      %v8515 = vpack.c.b16 %v8514, %v8513
      %v8517 = vsel %vm910, %v8515, 0
      %8519 = vmatpush.bf16.msra.mxu0 0
      %8520 = vmatpush.bf16.msra.mxu0 0
      %8521 = vmatpush.bf16.msra.mxu0 0
      %8522 = vmatpush.bf16.msra.mxu0 0
      %8523 = vmatpush.bf16.msra.mxu0 0
      %8524 = vmatpush.bf16.msra.mxu0 0
      %8525 = vmatpush.bf16.msra.mxu0 %v8484
      %8526 = vmatpush.bf16.msra.mxu0 %v8483
      %8527 = vmatmul.bf16.gmra.mxu0 %v8517
      %v8528 = vpop.f32.mrf.mxu0
      %v8529 = vadd.f32 0.0, %v8528
      %v8530 = vpop.f32.mrf.mxu0
      %v8531 = vadd.f32 0.0, %v8530
      %8532 = vdwg.mxu0
      %v8533 = vmax.f32 %v8505, %v8529
      %v8534 = vmax.f32 %v8507, %v8531
      %v8535 = vpack.c.bf16 %v8533, %v8533
      %v8536 = vpack.c.bf16 %v8534, %v8534
      %8537 = vst [vmem:[%s440] sm:$0xf] %v8535
      %8538 = vst [vmem:[%s440 + $0x4] sm:$0xf] %v8536
      %p8539 = scmp.lt.s32.totalorder %s24, 1
      %s8540 = scalar_select %p8539, %s24, 1
      %s8541 = smul.addr %s8540, 2
      %s8542 = smul.addr %s8541, 4
      %s8543 = scalar_lea.vmem %s13, %s8542
      // Predicated region
      $region73: #{simple_cnn_forward.2} parent=71 // pred_check
        %p8544 = pneg %p320
      $region74: #{simple_cnn_forward.2} parent=71 // pred_check_branch
        %8546 = sbr.rel (%p8544) target = $region76
      $region75: #{simple_cnn_forward.2} parent=71 // pred_region
        _
      $region76: #{simple_cnn_forward.2} parent=71 // pred_fallthru
        _
    $region72: #{simple_cnn_forward.2} parent=5 // pred_fallthru
      _
    %p8547 = scmp.le.s32.totalorder 2, %s19
    // Predicated region
    $region77: #{simple_cnn_forward.2} parent=5 // pred_check
      %p8548 = pneg %p8547
    $region78: #{simple_cnn_forward.2} parent=5 // pred_check_branch
      %8550 = sbr.rel (%p8548) target = $region80
    $region79: #{simple_cnn_forward.2} parent=5 // pred_region
      %s8551 = ssub.s32 %s19, 2
      // Predicated region
      $region81: #{simple_cnn_forward.2} parent=79 // pred_check
        %p8552 = pneg %p326
      $region82: #{simple_cnn_forward.2} parent=79 // pred_check_branch
        %8554 = sbr.rel (%p8552) target = $region84
      $region83: #{simple_cnn_forward.2} parent=79 // pred_region
        %p8555 = scmp.lt.s32.totalorder %s25, 1
        %s8556 = scalar_select %p8555, %s25, 1
        %s8557 = smul.addr %s8556, 2
        %s8558 = smul.addr %s8557, 4
        %s8559 = scalar_lea.vmem %s13, %s8558
      $region84: #{simple_cnn_forward.2} parent=79 // pred_fallthru
        _
    $region80: #{simple_cnn_forward.2} parent=5 // pred_fallthru
      _
  $region6: #{simple_cnn_forward.2} parent=0 // loop_footer
    %s23 = sadd.s32 1, %s19
  $region7: #{simple_cnn_forward.2} parent=0 // loop_footer_branch
    %18 = sbr.rel target = $region3
  $region8: #{simple_cnn_forward.2} parent=0 // loop_exit
    _

</llo_original>
